<compile_context>
chip_gen: v7x
topology: tpu7x:2x2x1
jax: 0.10.0
libtpu: 0.0.40
codegen_flags: <defaults>
</compile_context>

<pallas_src>
import numpy as np
import jax
import jax.numpy as jnp
from jax.experimental import pallas as pl
from jax.experimental.pallas import tpu as pltpu

# ---- static problem sizes (small synthetic config; implies p = 4 in the module) ----
H_IN = 30                      # input spatial size (square)
C_IN = 6                       # inc = 6 (two 3-channel frames concatenated)
K1, C1 = 7, 8                  # conv1: 6 -> 8, kernel 7
K2, C2 = 5, 10                 # conv2: 8 -> 10, kernel 5
H1 = H_IN - (K1 - 1)           # 24  conv1 output
P1 = H1 // 2                   # 12  after first max-pool
H2 = P1 - (K2 - 1)             # 8   conv2 output
P2 = H2 // 2                   # 4   after second max-pool (== p)
NPOS1 = H1 * H1                # 576
NFEAT1 = C_IN * K1 * K1        # 294
NPOOL1 = P1 * P1               # 144
NPOS2 = H2 * H2                # 64
NPOOL2 = P2 * P2               # 16
FC_HID = 32
FC_IN = C2 * NPOOL2            # 160
FC_OUT = 6                     # 2x3 affine matrix

BB = 8                         # samples per grid step (batch block)


def _affine_kernel(pT_ref, w1T_ref, b1_ref, m2_ref, b2_ref,
                   fw1_ref, fb1_ref, fw2_ref, fb2_ref, out_ref, lhs_scr):
    # ---- conv1, transposed / lane-dense: (8, 294) @ (294, BB*576) -> (8, BB*576) ----
    conv1 = jnp.dot(w1T_ref[...], pT_ref[0],
                    preferred_element_type=jnp.float32)              # (8, 4*BB*144)

    # ---- maxpool 2x2: max over the 4 contiguous pooling-phase slabs; +bias, ReLU ----
    s1 = BB * NPOOL1                                                 # 1152 (lane aligned)
    m1 = jnp.maximum(jnp.maximum(conv1[:, 0 * s1:1 * s1], conv1[:, 1 * s1:2 * s1]),
                     jnp.maximum(conv1[:, 2 * s1:3 * s1], conv1[:, 3 * s1:4 * s1]))
    a1 = jnp.maximum(m1 + b1_ref[...], 0.0)                          # (8, BB*144), cols (b, m)

    # ---- relayout: batch lanes -> sublanes.  lhs[b, c*144 + m] = a1[c, b*144 + m] ----
    # (64 small static stores into VMEM scratch; avoids in-kernel reshape/transpose.)
    for b in range(BB):
        for c in range(C1):
            lhs_scr[b:b + 1, c * NPOOL1:(c + 1) * NPOOL1] = \
                a1[c:c + 1, b * NPOOL1:(b + 1) * NPOOL1]
    lhs = lhs_scr[...]                                               # (BB, 1152)

    # ---- conv2: all 25 taps folded into one matmul -> (BB, 640), cols (s2, c2, p2) ----
    conv2 = jnp.dot(lhs, m2_ref[...], preferred_element_type=jnp.float32)

    # ---- maxpool 2x2 over 4 contiguous slabs; +bias, ReLU ----
    t2 = C2 * NPOOL2                                                 # 160
    m2 = jnp.maximum(jnp.maximum(conv2[:, 0 * t2:1 * t2], conv2[:, 1 * t2:2 * t2]),
                     jnp.maximum(conv2[:, 2 * t2:3 * t2], conv2[:, 3 * t2:4 * t2]))
    a2 = jnp.maximum(m2 + b2_ref[...], 0.0)                          # (BB, 160) == torch flatten

    # ---- fc1 (160 -> 32) + ReLU, fc2 (32 -> 6), whole batch block at once ----
    h = jnp.maximum(jnp.dot(a2, fw1_ref[...],
                            preferred_element_type=jnp.float32) + fb1_ref[...], 0.0)
    out_ref[...] = (jnp.dot(h, fw2_ref[...],
                            preferred_element_type=jnp.float32) + fb2_ref[...])   # (BB, 6)


def _build_patch_indices():
    """Transposed im2col gather indices: patchesT[f, col] with f = (ci, di, dj),
       col = (pooling phase s, sample-in-block b, pooled position m)."""
    f = np.arange(NFEAT1)
    ci = f // (K1 * K1)
    di = (f % (K1 * K1)) // K1
    dj = f % K1
    col = np.arange(4 * BB * NPOOL1)
    s = col // (BB * NPOOL1)
    b = (col % (BB * NPOOL1)) // NPOOL1
    m = col % NPOOL1
    i0 = 2 * (m // P1) + s // 2
    j0 = 2 * (m % P1) + s % 2
    bmat = np.broadcast_to(b[None, :], (NFEAT1, col.size))
    cmat = np.broadcast_to(ci[:, None], (NFEAT1, col.size))
    imat = i0[None, :] + di[:, None]
    jmat = j0[None, :] + dj[:, None]
    return (jnp.asarray(bmat), jnp.asarray(cmat), jnp.asarray(imat), jnp.asarray(jmat))


def _build_conv2_selection():
    """SEL[m, k, s2, p2] = 1 iff pooled1 position m feeds conv2 tap k for conv2
       output (pooling phase s2, pooled2 position p2)."""
    sel = np.zeros((NPOOL1, K2 * K2, 4, NPOOL2), np.float32)
    for s2 in range(4):
        for a in range(P2):
            for b in range(P2):
                i2 = 2 * a + s2 // 2
                j2 = 2 * b + s2 % 2
                for dy in range(K2):
                    for dx in range(K2):
                        sel[(i2 + dy) * P1 + (j2 + dx), dy * K2 + dx, s2, a * P2 + b] = 1.0
    return jnp.asarray(sel)


_B_IDX, _C_IDX, _I_IDX, _J_IDX = _build_patch_indices()
_SEL2 = _build_conv2_selection()


@jax.jit
def affine_regression_forward(x, y, params):
    n = x.shape[0]
    frames = jnp.concatenate([x, y], axis=1).astype(jnp.float32)     # (n, 6, 30, 30)
    n_pad = ((n + BB - 1) // BB) * BB
    if n_pad != n:
        frames = jnp.pad(frames, ((0, n_pad - n), (0, 0), (0, 0), (0, 0)))
    g = n_pad // BB

    # glue: transposed im2col gather, one (294, BB*576) slab per batch block
    # TODO(synk): for v5e, move im2col in-kernel (DMA raw frames) to cut HBM traffic ~31x.
    fb = frames.reshape(g, BB, C_IN, H_IN, H_IN)
    patchesT = fb[:, _B_IDX, _C_IDX, _I_IDX, _J_IDX]                 # (g, 294, BB*576)

    # glue: kernel-friendly parameter layouts
    w1T = params["w1"].reshape(C1, NFEAT1)                           # (8, 294)
    b1c = params["b1"].reshape(C1, 1)
    w2r = params["w2"].reshape(C2, C1, K2 * K2)                      # (10, 8, 25)
    # fold the 25 conv2 taps + pooling-phase ordering into one matrix:
    #   M[c1*144 + m, s2*160 + c2*16 + p2] = sum_k SEL[m,k,s2,p2] * w2[c2,c1,k]
    m2mat = jnp.einsum("mksp,xck->cmsxp", _SEL2, w2r).reshape(
        C1 * NPOOL1, 4 * C2 * NPOOL2)                                # (1152, 640)
    b2row = jnp.repeat(params["b2"], NPOOL2).reshape(1, FC_IN)       # (1, 160)
    fw1 = params["fc1_w"].T                                          # (160, 32)
    fb1 = params["fc1_b"].reshape(1, FC_HID)
    fw2 = params["fc2_w"].T                                          # (32, 6)
    fb2 = params["fc2_b"].reshape(1, FC_OUT)

    grid_spec = pltpu.PrefetchScalarGridSpec(
        num_scalar_prefetch=0,
        grid=(g,),
        in_specs=[
            pl.BlockSpec((1, NFEAT1, BB * NPOS1), lambda i: (i, 0, 0)),
            pl.BlockSpec((C1, NFEAT1), lambda i: (0, 0)),
            pl.BlockSpec((C1, 1), lambda i: (0, 0)),
            pl.BlockSpec((C1 * NPOOL1, 4 * C2 * NPOOL2), lambda i: (0, 0)),
            pl.BlockSpec((1, FC_IN), lambda i: (0, 0)),
            pl.BlockSpec((FC_IN, FC_HID), lambda i: (0, 0)),
            pl.BlockSpec((1, FC_HID), lambda i: (0, 0)),
            pl.BlockSpec((FC_HID, FC_OUT), lambda i: (0, 0)),
            pl.BlockSpec((1, FC_OUT), lambda i: (0, 0)),
        ],
        out_specs=pl.BlockSpec((BB, FC_OUT), lambda i: (i, 0)),
        scratch_shapes=[pltpu.VMEM((BB, C1 * NPOOL1), jnp.float32)],
    )

    theta = pl.pallas_call(
        _affine_kernel,
        out_shape=jax.ShapeDtypeStruct((n_pad, FC_OUT), jnp.float32),
        grid_spec=grid_spec,
        compiler_params=pltpu.CompilerParams(
            dimension_semantics=("parallel",),          # batch blocks shard across TCs (v7x)
            vmem_limit_bytes=32 * 1024 * 1024),
    )(patchesT, w1T, b1c, m2mat, b2row, fw1, fb1, fw2, fb2)

    return theta[:n].reshape(n, 2, 3)


def _reference_forward(x, y, params):
    """Pure-JAX reference matching the PyTorch module (only_alpha=False path)."""
    frames = jnp.concatenate([x, y], axis=1).astype(jnp.float32)

    def conv(z, w, b):
        out = jax.lax.conv_general_dilated(
            z, w, window_strides=(1, 1), padding="VALID",
            dimension_numbers=("NCHW", "OIHW", "NCHW"))
        return out + b[None, :, None, None]

    def pool2(z):
        nn, cc, hh, ww = z.shape
        return z.reshape(nn, cc, hh // 2, 2, ww // 2, 2).max(axis=(3, 5))

    z = jnp.maximum(pool2(conv(frames, params["w1"], params["b1"])), 0.0)
    z = jnp.maximum(pool2(conv(z, params["w2"], params["b2"])), 0.0)
    flat = z.reshape(z.shape[0], -1)
    h = jnp.maximum(flat @ params["fc1_w"].T + params["fc1_b"], 0.0)
    theta = h @ params["fc2_w"].T + params["fc2_b"]
    return theta.reshape(-1, 2, 3)


def init_params(key):
    k1, k2, k3, k4, k5, k6 = jax.random.split(key, 6)
    return {
        "w1": 0.05 * jax.random.normal(k1, (C1, C_IN, K1, K1), jnp.float32),
        "b1": 0.05 * jax.random.normal(k2, (C1,), jnp.float32),
        "w2": 0.05 * jax.random.normal(k3, (C2, C1, K2, K2), jnp.float32),
        "b2": 0.05 * jax.random.normal(k4, (C2,), jnp.float32),
        "fc1_w": 0.05 * jax.random.normal(k5, (FC_HID, FC_IN), jnp.float32),
        "fc1_b": 0.05 * jax.random.normal(k6, (FC_HID,), jnp.float32),
        # module __init__ zeroes fc_loc[2].weight and sets the identity-affine bias
        "fc2_w": jnp.zeros((FC_OUT, FC_HID), jnp.float32),
        "fc2_b": jnp.array([1.0, 0.0, 0.0, 0.0, 1.0, 0.0], jnp.float32),
    }


if __name__ == "__main__":
    root = jax.random.PRNGKey(0)
    kx, ky, kp, kw1, kw2 = jax.random.split(root, 5)
    n_batch = 2
    x = jax.random.normal(kx, (n_batch, 3, H_IN, H_IN), jnp.float32)
    y = jax.random.normal(ky, (n_batch, 3, H_IN, H_IN), jnp.float32)

    # 1) module-default params (fc2 weight zeroed): output must be the identity affine.
    params = init_params(kp)
    theta = jax.block_until_ready(affine_regression_forward(x, y, params))
    assert theta.shape == (n_batch, 2, 3), theta.shape
    ident = jnp.broadcast_to(
        jnp.array([[1.0, 0.0, 0.0], [0.0, 1.0, 0.0]], jnp.float32), (n_batch, 2, 3))
    assert bool(jnp.allclose(theta, ident, atol=1e-5)), theta

    # 2) nonzero fc2 weights: exercise the full conv/pool/fc pipeline vs pure-JAX reference.
    params2 = dict(params)
    params2["fc2_w"] = 0.5 * jax.random.normal(kw1, (FC_OUT, FC_HID), jnp.float32)
    params2["fc2_b"] = 0.1 * jax.random.normal(kw2, (FC_OUT,), jnp.float32)
    got = jax.block_until_ready(affine_regression_forward(x, y, params2))
    want = _reference_forward(x, y, params2)
    scale = float(jnp.max(jnp.abs(want))) + 1e-6
    err = float(jnp.max(jnp.abs(got - want)))
    assert err < 5e-2 * scale, f"max abs err {err} vs scale {scale}"

    print("KERNEL_OK")
</pallas_src>

<mosaic_0001>
module attributes {stable_mosaic.version = 11 : i64} {
  func.func @_affine_kernel(%arg0: i32, %arg1: memref<1x294x4608xf32, #tpu.memory_space<vmem>>, %arg2: memref<8x294xf32, #tpu.memory_space<vmem>>, %arg3: memref<8x1xf32, #tpu.memory_space<vmem>>, %arg4: memref<1152x640xf32, #tpu.memory_space<vmem>>, %arg5: memref<1x160xf32, #tpu.memory_space<vmem>>, %arg6: memref<160x32xf32, #tpu.memory_space<vmem>>, %arg7: memref<1x32xf32, #tpu.memory_space<vmem>>, %arg8: memref<32x6xf32, #tpu.memory_space<vmem>>, %arg9: memref<1x6xf32, #tpu.memory_space<vmem>>, %arg10: memref<8x6xf32, #tpu.memory_space<vmem>>, %arg11: memref<8x1152xf32, #tpu.memory_space<vmem>>) attributes {dimension_semantics = [#tpu.dimension_semantics<parallel>], iteration_bounds = array<i64: 1>, scalar_prefetch = 0 : i64, scratch_operands = 1 : i64, tpu.core_type = #tpu.core_type<tc>, window_params = [{transform_indices = @transform_0, window_bounds = array<i64: 1, 294, 4608>}, {pipeline_mode = #tpu.pipeline_mode<synchronous>, transform_indices = @transform_1, window_bounds = array<i64: 8, 294>}, {pipeline_mode = #tpu.pipeline_mode<synchronous>, transform_indices = @transform_2, window_bounds = array<i64: 8, 1>}, {pipeline_mode = #tpu.pipeline_mode<synchronous>, transform_indices = @transform_3, window_bounds = array<i64: 1152, 640>}, {pipeline_mode = #tpu.pipeline_mode<synchronous>, transform_indices = @transform_4, window_bounds = array<i64: 1, 160>}, {pipeline_mode = #tpu.pipeline_mode<synchronous>, transform_indices = @transform_5, window_bounds = array<i64: 160, 32>}, {pipeline_mode = #tpu.pipeline_mode<synchronous>, transform_indices = @transform_6, window_bounds = array<i64: 1, 32>}, {pipeline_mode = #tpu.pipeline_mode<synchronous>, transform_indices = @transform_7, window_bounds = array<i64: 32, 6>}, {pipeline_mode = #tpu.pipeline_mode<synchronous>, transform_indices = @transform_8, window_bounds = array<i64: 1, 6>}, {transform_indices = @transform_9, window_bounds = array<i64: 8, 6>}]} {
    %c0 = arith.constant 0 : index
    %c0_0 = arith.constant 0 : index
    %0 = vector.load %arg2[%c0, %c0_0] : memref<8x294xf32, #tpu.memory_space<vmem>>, vector<8x294xf32>
    %c0_1 = arith.constant 0 : index
    %c0_2 = arith.constant 0 : index
    %c0_3 = arith.constant 0 : index
    %1 = vector.load %arg1[%c0_1, %c0_2, %c0_3] : memref<1x294x4608xf32, #tpu.memory_space<vmem>>, vector<1x294x4608xf32>
    %2 = vector.shape_cast %1 : vector<1x294x4608xf32> to vector<294x4608xf32>
    %cst = arith.constant dense<0.000000e+00> : vector<8x4608xf32>
    %3 = tpu.matmul %0, %2, %cst {dimension_numbers = #tpu.dot_dimension_numbers<[1], [0], [0], [1], [0, 0, 1, 1], [], []>} : vector<8x294xf32>, vector<294x4608xf32>, vector<8x4608xf32> -> vector<8x4608xf32>
    %4 = vector.extract_strided_slice %3 {offsets = [0, 0], sizes = [8, 1152], strides = [1, 1]} : vector<8x4608xf32> to vector<8x1152xf32>
    %5 = vector.extract_strided_slice %3 {offsets = [0, 1152], sizes = [8, 1152], strides = [1, 1]} : vector<8x4608xf32> to vector<8x1152xf32>
    %6 = arith.maximumf %4, %5 : vector<8x1152xf32>
    %7 = vector.extract_strided_slice %3 {offsets = [0, 2304], sizes = [8, 1152], strides = [1, 1]} : vector<8x4608xf32> to vector<8x1152xf32>
    %8 = vector.extract_strided_slice %3 {offsets = [0, 3456], sizes = [8, 1152], strides = [1, 1]} : vector<8x4608xf32> to vector<8x1152xf32>
    %9 = arith.maximumf %7, %8 : vector<8x1152xf32>
    %10 = arith.maximumf %6, %9 : vector<8x1152xf32>
    %c0_4 = arith.constant 0 : index
    %c0_5 = arith.constant 0 : index
    %11 = vector.load %arg3[%c0_4, %c0_5] : memref<8x1xf32, #tpu.memory_space<vmem>>, vector<8x1xf32>
    %12 = vector.broadcast %11 : vector<8x1xf32> to vector<8x1152xf32>
    %13 = arith.addf %10, %12 : vector<8x1152xf32>
    %cst_6 = arith.constant 0.000000e+00 : f32
    %14 = vector.broadcast %cst_6 : f32 to vector<8x1152xf32>
    %15 = arith.maximumf %13, %14 : vector<8x1152xf32>
    %16 = vector.extract_strided_slice %15 {offsets = [0, 0], sizes = [1, 144], strides = [1, 1]} : vector<8x1152xf32> to vector<1x144xf32>
    %c0_7 = arith.constant 0 : index
    %c0_8 = arith.constant 0 : index
    %17 = vector.load %arg11[%c0_7, %c0_8] : memref<8x1152xf32, #tpu.memory_space<vmem>>, vector<1x144xf32>
    tpu.vector_store %arg11[%c0_7, %c0_8], %16 {strides = array<i32>} : memref<8x1152xf32, #tpu.memory_space<vmem>>, vector<1x144xf32>,
    %18 = vector.extract_strided_slice %15 {offsets = [1, 0], sizes = [1, 144], strides = [1, 1]} : vector<8x1152xf32> to vector<1x144xf32>
    %c0_9 = arith.constant 0 : index
    %c144 = arith.constant 144 : index
    %19 = vector.load %arg11[%c0_9, %c144] : memref<8x1152xf32, #tpu.memory_space<vmem>>, vector<1x144xf32>
    tpu.vector_store %arg11[%c0_9, %c144], %18 {strides = array<i32>} : memref<8x1152xf32, #tpu.memory_space<vmem>>, vector<1x144xf32>,
    %20 = vector.extract_strided_slice %15 {offsets = [2, 0], sizes = [1, 144], strides = [1, 1]} : vector<8x1152xf32> to vector<1x144xf32>
    %c0_10 = arith.constant 0 : index
    %c288 = arith.constant 288 : index
    %21 = vector.load %arg11[%c0_10, %c288] : memref<8x1152xf32, #tpu.memory_space<vmem>>, vector<1x144xf32>
    tpu.vector_store %arg11[%c0_10, %c288], %20 {strides = array<i32>} : memref<8x1152xf32, #tpu.memory_space<vmem>>, vector<1x144xf32>,
    %22 = vector.extract_strided_slice %15 {offsets = [3, 0], sizes = [1, 144], strides = [1, 1]} : vector<8x1152xf32> to vector<1x144xf32>
    %c0_11 = arith.constant 0 : index
    %c432 = arith.constant 432 : index
    %23 = vector.load %arg11[%c0_11, %c432] : memref<8x1152xf32, #tpu.memory_space<vmem>>, vector<1x144xf32>
    tpu.vector_store %arg11[%c0_11, %c432], %22 {strides = array<i32>} : memref<8x1152xf32, #tpu.memory_space<vmem>>, vector<1x144xf32>,
    %24 = vector.extract_strided_slice %15 {offsets = [4, 0], sizes = [1, 144], strides = [1, 1]} : vector<8x1152xf32> to vector<1x144xf32>
    %c0_12 = arith.constant 0 : index
    %c576 = arith.constant 576 : index
    %25 = vector.load %arg11[%c0_12, %c576] : memref<8x1152xf32, #tpu.memory_space<vmem>>, vector<1x144xf32>
    tpu.vector_store %arg11[%c0_12, %c576], %24 {strides = array<i32>} : memref<8x1152xf32, #tpu.memory_space<vmem>>, vector<1x144xf32>,
    %26 = vector.extract_strided_slice %15 {offsets = [5, 0], sizes = [1, 144], strides = [1, 1]} : vector<8x1152xf32> to vector<1x144xf32>
    %c0_13 = arith.constant 0 : index
    %c720 = arith.constant 720 : index
    %27 = vector.load %arg11[%c0_13, %c720] : memref<8x1152xf32, #tpu.memory_space<vmem>>, vector<1x144xf32>
    tpu.vector_store %arg11[%c0_13, %c720], %26 {strides = array<i32>} : memref<8x1152xf32, #tpu.memory_space<vmem>>, vector<1x144xf32>,
    %28 = vector.extract_strided_slice %15 {offsets = [6, 0], sizes = [1, 144], strides = [1, 1]} : vector<8x1152xf32> to vector<1x144xf32>
    %c0_14 = arith.constant 0 : index
    %c864 = arith.constant 864 : index
    %29 = vector.load %arg11[%c0_14, %c864] : memref<8x1152xf32, #tpu.memory_space<vmem>>, vector<1x144xf32>
    tpu.vector_store %arg11[%c0_14, %c864], %28 {strides = array<i32>} : memref<8x1152xf32, #tpu.memory_space<vmem>>, vector<1x144xf32>,
    %30 = vector.extract_strided_slice %15 {offsets = [7, 0], sizes = [1, 144], strides = [1, 1]} : vector<8x1152xf32> to vector<1x144xf32>
    %c0_15 = arith.constant 0 : index
    %c1008 = arith.constant 1008 : index
    %31 = vector.load %arg11[%c0_15, %c1008] : memref<8x1152xf32, #tpu.memory_space<vmem>>, vector<1x144xf32>
    tpu.vector_store %arg11[%c0_15, %c1008], %30 {strides = array<i32>} : memref<8x1152xf32, #tpu.memory_space<vmem>>, vector<1x144xf32>,
    %32 = vector.extract_strided_slice %15 {offsets = [0, 144], sizes = [1, 144], strides = [1, 1]} : vector<8x1152xf32> to vector<1x144xf32>
    %c1 = arith.constant 1 : index
    %c0_16 = arith.constant 0 : index
    %33 = vector.load %arg11[%c1, %c0_16] : memref<8x1152xf32, #tpu.memory_space<vmem>>, vector<1x144xf32>
    tpu.vector_store %arg11[%c1, %c0_16], %32 {strides = array<i32>} : memref<8x1152xf32, #tpu.memory_space<vmem>>, vector<1x144xf32>,
    %34 = vector.extract_strided_slice %15 {offsets = [1, 144], sizes = [1, 144], strides = [1, 1]} : vector<8x1152xf32> to vector<1x144xf32>
    %c1_17 = arith.constant 1 : index
    %c144_18 = arith.constant 144 : index
    %35 = vector.load %arg11[%c1_17, %c144_18] : memref<8x1152xf32, #tpu.memory_space<vmem>>, vector<1x144xf32>
    tpu.vector_store %arg11[%c1_17, %c144_18], %34 {strides = array<i32>} : memref<8x1152xf32, #tpu.memory_space<vmem>>, vector<1x144xf32>,
    %36 = vector.extract_strided_slice %15 {offsets = [2, 144], sizes = [1, 144], strides = [1, 1]} : vector<8x1152xf32> to vector<1x144xf32>
    %c1_19 = arith.constant 1 : index
    %c288_20 = arith.constant 288 : index
    %37 = vector.load %arg11[%c1_19, %c288_20] : memref<8x1152xf32, #tpu.memory_space<vmem>>, vector<1x144xf32>
    tpu.vector_store %arg11[%c1_19, %c288_20], %36 {strides = array<i32>} : memref<8x1152xf32, #tpu.memory_space<vmem>>, vector<1x144xf32>,
    %38 = vector.extract_strided_slice %15 {offsets = [3, 144], sizes = [1, 144], strides = [1, 1]} : vector<8x1152xf32> to vector<1x144xf32>
    %c1_21 = arith.constant 1 : index
    %c432_22 = arith.constant 432 : index
    %39 = vector.load %arg11[%c1_21, %c432_22] : memref<8x1152xf32, #tpu.memory_space<vmem>>, vector<1x144xf32>
    tpu.vector_store %arg11[%c1_21, %c432_22], %38 {strides = array<i32>} : memref<8x1152xf32, #tpu.memory_space<vmem>>, vector<1x144xf32>,
    %40 = vector.extract_strided_slice %15 {offsets = [4, 144], sizes = [1, 144], strides = [1, 1]} : vector<8x1152xf32> to vector<1x144xf32>
    %c1_23 = arith.constant 1 : index
    %c576_24 = arith.constant 576 : index
    %41 = vector.load %arg11[%c1_23, %c576_24] : memref<8x1152xf32, #tpu.memory_space<vmem>>, vector<1x144xf32>
    tpu.vector_store %arg11[%c1_23, %c576_24], %40 {strides = array<i32>} : memref<8x1152xf32, #tpu.memory_space<vmem>>, vector<1x144xf32>,
    %42 = vector.extract_strided_slice %15 {offsets = [5, 144], sizes = [1, 144], strides = [1, 1]} : vector<8x1152xf32> to vector<1x144xf32>
    %c1_25 = arith.constant 1 : index
    %c720_26 = arith.constant 720 : index
    %43 = vector.load %arg11[%c1_25, %c720_26] : memref<8x1152xf32, #tpu.memory_space<vmem>>, vector<1x144xf32>
    tpu.vector_store %arg11[%c1_25, %c720_26], %42 {strides = array<i32>} : memref<8x1152xf32, #tpu.memory_space<vmem>>, vector<1x144xf32>,
    %44 = vector.extract_strided_slice %15 {offsets = [6, 144], sizes = [1, 144], strides = [1, 1]} : vector<8x1152xf32> to vector<1x144xf32>
    %c1_27 = arith.constant 1 : index
    %c864_28 = arith.constant 864 : index
    %45 = vector.load %arg11[%c1_27, %c864_28] : memref<8x1152xf32, #tpu.memory_space<vmem>>, vector<1x144xf32>
    tpu.vector_store %arg11[%c1_27, %c864_28], %44 {strides = array<i32>} : memref<8x1152xf32, #tpu.memory_space<vmem>>, vector<1x144xf32>,
    %46 = vector.extract_strided_slice %15 {offsets = [7, 144], sizes = [1, 144], strides = [1, 1]} : vector<8x1152xf32> to vector<1x144xf32>
    %c1_29 = arith.constant 1 : index
    %c1008_30 = arith.constant 1008 : index
    %47 = vector.load %arg11[%c1_29, %c1008_30] : memref<8x1152xf32, #tpu.memory_space<vmem>>, vector<1x144xf32>
    tpu.vector_store %arg11[%c1_29, %c1008_30], %46 {strides = array<i32>} : memref<8x1152xf32, #tpu.memory_space<vmem>>, vector<1x144xf32>,
    %48 = vector.extract_strided_slice %15 {offsets = [0, 288], sizes = [1, 144], strides = [1, 1]} : vector<8x1152xf32> to vector<1x144xf32>
    %c2 = arith.constant 2 : index
    %c0_31 = arith.constant 0 : index
    %49 = vector.load %arg11[%c2, %c0_31] : memref<8x1152xf32, #tpu.memory_space<vmem>>, vector<1x144xf32>
    tpu.vector_store %arg11[%c2, %c0_31], %48 {strides = array<i32>} : memref<8x1152xf32, #tpu.memory_space<vmem>>, vector<1x144xf32>,
    %50 = vector.extract_strided_slice %15 {offsets = [1, 288], sizes = [1, 144], strides = [1, 1]} : vector<8x1152xf32> to vector<1x144xf32>
    %c2_32 = arith.constant 2 : index
    %c144_33 = arith.constant 144 : index
    %51 = vector.load %arg11[%c2_32, %c144_33] : memref<8x1152xf32, #tpu.memory_space<vmem>>, vector<1x144xf32>
    tpu.vector_store %arg11[%c2_32, %c144_33], %50 {strides = array<i32>} : memref<8x1152xf32, #tpu.memory_space<vmem>>, vector<1x144xf32>,
    %52 = vector.extract_strided_slice %15 {offsets = [2, 288], sizes = [1, 144], strides = [1, 1]} : vector<8x1152xf32> to vector<1x144xf32>
    %c2_34 = arith.constant 2 : index
    %c288_35 = arith.constant 288 : index
    %53 = vector.load %arg11[%c2_34, %c288_35] : memref<8x1152xf32, #tpu.memory_space<vmem>>, vector<1x144xf32>
    tpu.vector_store %arg11[%c2_34, %c288_35], %52 {strides = array<i32>} : memref<8x1152xf32, #tpu.memory_space<vmem>>, vector<1x144xf32>,
    %54 = vector.extract_strided_slice %15 {offsets = [3, 288], sizes = [1, 144], strides = [1, 1]} : vector<8x1152xf32> to vector<1x144xf32>
    %c2_36 = arith.constant 2 : index
    %c432_37 = arith.constant 432 : index
    %55 = vector.load %arg11[%c2_36, %c432_37] : memref<8x1152xf32, #tpu.memory_space<vmem>>, vector<1x144xf32>
    tpu.vector_store %arg11[%c2_36, %c432_37], %54 {strides = array<i32>} : memref<8x1152xf32, #tpu.memory_space<vmem>>, vector<1x144xf32>,
    %56 = vector.extract_strided_slice %15 {offsets = [4, 288], sizes = [1, 144], strides = [1, 1]} : vector<8x1152xf32> to vector<1x144xf32>
    %c2_38 = arith.constant 2 : index
    %c576_39 = arith.constant 576 : index
    %57 = vector.load %arg11[%c2_38, %c576_39] : memref<8x1152xf32, #tpu.memory_space<vmem>>, vector<1x144xf32>
    tpu.vector_store %arg11[%c2_38, %c576_39], %56 {strides = array<i32>} : memref<8x1152xf32, #tpu.memory_space<vmem>>, vector<1x144xf32>,
    %58 = vector.extract_strided_slice %15 {offsets = [5, 288], sizes = [1, 144], strides = [1, 1]} : vector<8x1152xf32> to vector<1x144xf32>
    %c2_40 = arith.constant 2 : index
    %c720_41 = arith.constant 720 : index
    %59 = vector.load %arg11[%c2_40, %c720_41] : memref<8x1152xf32, #tpu.memory_space<vmem>>, vector<1x144xf32>
    tpu.vector_store %arg11[%c2_40, %c720_41], %58 {strides = array<i32>} : memref<8x1152xf32, #tpu.memory_space<vmem>>, vector<1x144xf32>,
    %60 = vector.extract_strided_slice %15 {offsets = [6, 288], sizes = [1, 144], strides = [1, 1]} : vector<8x1152xf32> to vector<1x144xf32>
    %c2_42 = arith.constant 2 : index
    %c864_43 = arith.constant 864 : index
    %61 = vector.load %arg11[%c2_42, %c864_43] : memref<8x1152xf32, #tpu.memory_space<vmem>>, vector<1x144xf32>
    tpu.vector_store %arg11[%c2_42, %c864_43], %60 {strides = array<i32>} : memref<8x1152xf32, #tpu.memory_space<vmem>>, vector<1x144xf32>,
    %62 = vector.extract_strided_slice %15 {offsets = [7, 288], sizes = [1, 144], strides = [1, 1]} : vector<8x1152xf32> to vector<1x144xf32>
    %c2_44 = arith.constant 2 : index
    %c1008_45 = arith.constant 1008 : index
    %63 = vector.load %arg11[%c2_44, %c1008_45] : memref<8x1152xf32, #tpu.memory_space<vmem>>, vector<1x144xf32>
    tpu.vector_store %arg11[%c2_44, %c1008_45], %62 {strides = array<i32>} : memref<8x1152xf32, #tpu.memory_space<vmem>>, vector<1x144xf32>,
    %64 = vector.extract_strided_slice %15 {offsets = [0, 432], sizes = [1, 144], strides = [1, 1]} : vector<8x1152xf32> to vector<1x144xf32>
    %c3 = arith.constant 3 : index
    %c0_46 = arith.constant 0 : index
    %65 = vector.load %arg11[%c3, %c0_46] : memref<8x1152xf32, #tpu.memory_space<vmem>>, vector<1x144xf32>
    tpu.vector_store %arg11[%c3, %c0_46], %64 {strides = array<i32>} : memref<8x1152xf32, #tpu.memory_space<vmem>>, vector<1x144xf32>,
    %66 = vector.extract_strided_slice %15 {offsets = [1, 432], sizes = [1, 144], strides = [1, 1]} : vector<8x1152xf32> to vector<1x144xf32>
    %c3_47 = arith.constant 3 : index
    %c144_48 = arith.constant 144 : index
    %67 = vector.load %arg11[%c3_47, %c144_48] : memref<8x1152xf32, #tpu.memory_space<vmem>>, vector<1x144xf32>
    tpu.vector_store %arg11[%c3_47, %c144_48], %66 {strides = array<i32>} : memref<8x1152xf32, #tpu.memory_space<vmem>>, vector<1x144xf32>,
    %68 = vector.extract_strided_slice %15 {offsets = [2, 432], sizes = [1, 144], strides = [1, 1]} : vector<8x1152xf32> to vector<1x144xf32>
    %c3_49 = arith.constant 3 : index
    %c288_50 = arith.constant 288 : index
    %69 = vector.load %arg11[%c3_49, %c288_50] : memref<8x1152xf32, #tpu.memory_space<vmem>>, vector<1x144xf32>
    tpu.vector_store %arg11[%c3_49, %c288_50], %68 {strides = array<i32>} : memref<8x1152xf32, #tpu.memory_space<vmem>>, vector<1x144xf32>,
    %70 = vector.extract_strided_slice %15 {offsets = [3, 432], sizes = [1, 144], strides = [1, 1]} : vector<8x1152xf32> to vector<1x144xf32>
    %c3_51 = arith.constant 3 : index
    %c432_52 = arith.constant 432 : index
    %71 = vector.load %arg11[%c3_51, %c432_52] : memref<8x1152xf32, #tpu.memory_space<vmem>>, vector<1x144xf32>
    tpu.vector_store %arg11[%c3_51, %c432_52], %70 {strides = array<i32>} : memref<8x1152xf32, #tpu.memory_space<vmem>>, vector<1x144xf32>,
    %72 = vector.extract_strided_slice %15 {offsets = [4, 432], sizes = [1, 144], strides = [1, 1]} : vector<8x1152xf32> to vector<1x144xf32>
    %c3_53 = arith.constant 3 : index
    %c576_54 = arith.constant 576 : index
    %73 = vector.load %arg11[%c3_53, %c576_54] : memref<8x1152xf32, #tpu.memory_space<vmem>>, vector<1x144xf32>
    tpu.vector_store %arg11[%c3_53, %c576_54], %72 {strides = array<i32>} : memref<8x1152xf32, #tpu.memory_space<vmem>>, vector<1x144xf32>,
    %74 = vector.extract_strided_slice %15 {offsets = [5, 432], sizes = [1, 144], strides = [1, 1]} : vector<8x1152xf32> to vector<1x144xf32>
    %c3_55 = arith.constant 3 : index
    %c720_56 = arith.constant 720 : index
    %75 = vector.load %arg11[%c3_55, %c720_56] : memref<8x1152xf32, #tpu.memory_space<vmem>>, vector<1x144xf32>
    tpu.vector_store %arg11[%c3_55, %c720_56], %74 {strides = array<i32>} : memref<8x1152xf32, #tpu.memory_space<vmem>>, vector<1x144xf32>,
    %76 = vector.extract_strided_slice %15 {offsets = [6, 432], sizes = [1, 144], strides = [1, 1]} : vector<8x1152xf32> to vector<1x144xf32>
    %c3_57 = arith.constant 3 : index
    %c864_58 = arith.constant 864 : index
    %77 = vector.load %arg11[%c3_57, %c864_58] : memref<8x1152xf32, #tpu.memory_space<vmem>>, vector<1x144xf32>
    tpu.vector_store %arg11[%c3_57, %c864_58], %76 {strides = array<i32>} : memref<8x1152xf32, #tpu.memory_space<vmem>>, vector<1x144xf32>,
    %78 = vector.extract_strided_slice %15 {offsets = [7, 432], sizes = [1, 144], strides = [1, 1]} : vector<8x1152xf32> to vector<1x144xf32>
    %c3_59 = arith.constant 3 : index
    %c1008_60 = arith.constant 1008 : index
    %79 = vector.load %arg11[%c3_59, %c1008_60] : memref<8x1152xf32, #tpu.memory_space<vmem>>, vector<1x144xf32>
    tpu.vector_store %arg11[%c3_59, %c1008_60], %78 {strides = array<i32>} : memref<8x1152xf32, #tpu.memory_space<vmem>>, vector<1x144xf32>,
    %80 = vector.extract_strided_slice %15 {offsets = [0, 576], sizes = [1, 144], strides = [1, 1]} : vector<8x1152xf32> to vector<1x144xf32>
    %c4 = arith.constant 4 : index
    %c0_61 = arith.constant 0 : index
    %81 = vector.load %arg11[%c4, %c0_61] : memref<8x1152xf32, #tpu.memory_space<vmem>>, vector<1x144xf32>
    tpu.vector_store %arg11[%c4, %c0_61], %80 {strides = array<i32>} : memref<8x1152xf32, #tpu.memory_space<vmem>>, vector<1x144xf32>,
    %82 = vector.extract_strided_slice %15 {offsets = [1, 576], sizes = [1, 144], strides = [1, 1]} : vector<8x1152xf32> to vector<1x144xf32>
    %c4_62 = arith.constant 4 : index
    %c144_63 = arith.constant 144 : index
    %83 = vector.load %arg11[%c4_62, %c144_63] : memref<8x1152xf32, #tpu.memory_space<vmem>>, vector<1x144xf32>
    tpu.vector_store %arg11[%c4_62, %c144_63], %82 {strides = array<i32>} : memref<8x1152xf32, #tpu.memory_space<vmem>>, vector<1x144xf32>,
    %84 = vector.extract_strided_slice %15 {offsets = [2, 576], sizes = [1, 144], strides = [1, 1]} : vector<8x1152xf32> to vector<1x144xf32>
    %c4_64 = arith.constant 4 : index
    %c288_65 = arith.constant 288 : index
    %85 = vector.load %arg11[%c4_64, %c288_65] : memref<8x1152xf32, #tpu.memory_space<vmem>>, vector<1x144xf32>
    tpu.vector_store %arg11[%c4_64, %c288_65], %84 {strides = array<i32>} : memref<8x1152xf32, #tpu.memory_space<vmem>>, vector<1x144xf32>,
    %86 = vector.extract_strided_slice %15 {offsets = [3, 576], sizes = [1, 144], strides = [1, 1]} : vector<8x1152xf32> to vector<1x144xf32>
    %c4_66 = arith.constant 4 : index
    %c432_67 = arith.constant 432 : index
    %87 = vector.load %arg11[%c4_66, %c432_67] : memref<8x1152xf32, #tpu.memory_space<vmem>>, vector<1x144xf32>
    tpu.vector_store %arg11[%c4_66, %c432_67], %86 {strides = array<i32>} : memref<8x1152xf32, #tpu.memory_space<vmem>>, vector<1x144xf32>,
    %88 = vector.extract_strided_slice %15 {offsets = [4, 576], sizes = [1, 144], strides = [1, 1]} : vector<8x1152xf32> to vector<1x144xf32>
    %c4_68 = arith.constant 4 : index
    %c576_69 = arith.constant 576 : index
    %89 = vector.load %arg11[%c4_68, %c576_69] : memref<8x1152xf32, #tpu.memory_space<vmem>>, vector<1x144xf32>
    tpu.vector_store %arg11[%c4_68, %c576_69], %88 {strides = array<i32>} : memref<8x1152xf32, #tpu.memory_space<vmem>>, vector<1x144xf32>,
    %90 = vector.extract_strided_slice %15 {offsets = [5, 576], sizes = [1, 144], strides = [1, 1]} : vector<8x1152xf32> to vector<1x144xf32>
    %c4_70 = arith.constant 4 : index
    %c720_71 = arith.constant 720 : index
    %91 = vector.load %arg11[%c4_70, %c720_71] : memref<8x1152xf32, #tpu.memory_space<vmem>>, vector<1x144xf32>
    tpu.vector_store %arg11[%c4_70, %c720_71], %90 {strides = array<i32>} : memref<8x1152xf32, #tpu.memory_space<vmem>>, vector<1x144xf32>,
    %92 = vector.extract_strided_slice %15 {offsets = [6, 576], sizes = [1, 144], strides = [1, 1]} : vector<8x1152xf32> to vector<1x144xf32>
    %c4_72 = arith.constant 4 : index
    %c864_73 = arith.constant 864 : index
    %93 = vector.load %arg11[%c4_72, %c864_73] : memref<8x1152xf32, #tpu.memory_space<vmem>>, vector<1x144xf32>
    tpu.vector_store %arg11[%c4_72, %c864_73], %92 {strides = array<i32>} : memref<8x1152xf32, #tpu.memory_space<vmem>>, vector<1x144xf32>,
    %94 = vector.extract_strided_slice %15 {offsets = [7, 576], sizes = [1, 144], strides = [1, 1]} : vector<8x1152xf32> to vector<1x144xf32>
    %c4_74 = arith.constant 4 : index
    %c1008_75 = arith.constant 1008 : index
    %95 = vector.load %arg11[%c4_74, %c1008_75] : memref<8x1152xf32, #tpu.memory_space<vmem>>, vector<1x144xf32>
    tpu.vector_store %arg11[%c4_74, %c1008_75], %94 {strides = array<i32>} : memref<8x1152xf32, #tpu.memory_space<vmem>>, vector<1x144xf32>,
    %96 = vector.extract_strided_slice %15 {offsets = [0, 720], sizes = [1, 144], strides = [1, 1]} : vector<8x1152xf32> to vector<1x144xf32>
    %c5 = arith.constant 5 : index
    %c0_76 = arith.constant 0 : index
    %97 = vector.load %arg11[%c5, %c0_76] : memref<8x1152xf32, #tpu.memory_space<vmem>>, vector<1x144xf32>
    tpu.vector_store %arg11[%c5, %c0_76], %96 {strides = array<i32>} : memref<8x1152xf32, #tpu.memory_space<vmem>>, vector<1x144xf32>,
    %98 = vector.extract_strided_slice %15 {offsets = [1, 720], sizes = [1, 144], strides = [1, 1]} : vector<8x1152xf32> to vector<1x144xf32>
    %c5_77 = arith.constant 5 : index
    %c144_78 = arith.constant 144 : index
    %99 = vector.load %arg11[%c5_77, %c144_78] : memref<8x1152xf32, #tpu.memory_space<vmem>>, vector<1x144xf32>
    tpu.vector_store %arg11[%c5_77, %c144_78], %98 {strides = array<i32>} : memref<8x1152xf32, #tpu.memory_space<vmem>>, vector<1x144xf32>,
    %100 = vector.extract_strided_slice %15 {offsets = [2, 720], sizes = [1, 144], strides = [1, 1]} : vector<8x1152xf32> to vector<1x144xf32>
    %c5_79 = arith.constant 5 : index
    %c288_80 = arith.constant 288 : index
    %101 = vector.load %arg11[%c5_79, %c288_80] : memref<8x1152xf32, #tpu.memory_space<vmem>>, vector<1x144xf32>
    tpu.vector_store %arg11[%c5_79, %c288_80], %100 {strides = array<i32>} : memref<8x1152xf32, #tpu.memory_space<vmem>>, vector<1x144xf32>,
    %102 = vector.extract_strided_slice %15 {offsets = [3, 720], sizes = [1, 144], strides = [1, 1]} : vector<8x1152xf32> to vector<1x144xf32>
    %c5_81 = arith.constant 5 : index
    %c432_82 = arith.constant 432 : index
    %103 = vector.load %arg11[%c5_81, %c432_82] : memref<8x1152xf32, #tpu.memory_space<vmem>>, vector<1x144xf32>
    tpu.vector_store %arg11[%c5_81, %c432_82], %102 {strides = array<i32>} : memref<8x1152xf32, #tpu.memory_space<vmem>>, vector<1x144xf32>,
    %104 = vector.extract_strided_slice %15 {offsets = [4, 720], sizes = [1, 144], strides = [1, 1]} : vector<8x1152xf32> to vector<1x144xf32>
    %c5_83 = arith.constant 5 : index
    %c576_84 = arith.constant 576 : index
    %105 = vector.load %arg11[%c5_83, %c576_84] : memref<8x1152xf32, #tpu.memory_space<vmem>>, vector<1x144xf32>
    tpu.vector_store %arg11[%c5_83, %c576_84], %104 {strides = array<i32>} : memref<8x1152xf32, #tpu.memory_space<vmem>>, vector<1x144xf32>,
    %106 = vector.extract_strided_slice %15 {offsets = [5, 720], sizes = [1, 144], strides = [1, 1]} : vector<8x1152xf32> to vector<1x144xf32>
    %c5_85 = arith.constant 5 : index
    %c720_86 = arith.constant 720 : index
    %107 = vector.load %arg11[%c5_85, %c720_86] : memref<8x1152xf32, #tpu.memory_space<vmem>>, vector<1x144xf32>
    tpu.vector_store %arg11[%c5_85, %c720_86], %106 {strides = array<i32>} : memref<8x1152xf32, #tpu.memory_space<vmem>>, vector<1x144xf32>,
    %108 = vector.extract_strided_slice %15 {offsets = [6, 720], sizes = [1, 144], strides = [1, 1]} : vector<8x1152xf32> to vector<1x144xf32>
    %c5_87 = arith.constant 5 : index
    %c864_88 = arith.constant 864 : index
    %109 = vector.load %arg11[%c5_87, %c864_88] : memref<8x1152xf32, #tpu.memory_space<vmem>>, vector<1x144xf32>
    tpu.vector_store %arg11[%c5_87, %c864_88], %108 {strides = array<i32>} : memref<8x1152xf32, #tpu.memory_space<vmem>>, vector<1x144xf32>,
    %110 = vector.extract_strided_slice %15 {offsets = [7, 720], sizes = [1, 144], strides = [1, 1]} : vector<8x1152xf32> to vector<1x144xf32>
    %c5_89 = arith.constant 5 : index
    %c1008_90 = arith.constant 1008 : index
    %111 = vector.load %arg11[%c5_89, %c1008_90] : memref<8x1152xf32, #tpu.memory_space<vmem>>, vector<1x144xf32>
    tpu.vector_store %arg11[%c5_89, %c1008_90], %110 {strides = array<i32>} : memref<8x1152xf32, #tpu.memory_space<vmem>>, vector<1x144xf32>,
    %112 = vector.extract_strided_slice %15 {offsets = [0, 864], sizes = [1, 144], strides = [1, 1]} : vector<8x1152xf32> to vector<1x144xf32>
    %c6 = arith.constant 6 : index
    %c0_91 = arith.constant 0 : index
    %113 = vector.load %arg11[%c6, %c0_91] : memref<8x1152xf32, #tpu.memory_space<vmem>>, vector<1x144xf32>
    tpu.vector_store %arg11[%c6, %c0_91], %112 {strides = array<i32>} : memref<8x1152xf32, #tpu.memory_space<vmem>>, vector<1x144xf32>,
    %114 = vector.extract_strided_slice %15 {offsets = [1, 864], sizes = [1, 144], strides = [1, 1]} : vector<8x1152xf32> to vector<1x144xf32>
    %c6_92 = arith.constant 6 : index
    %c144_93 = arith.constant 144 : index
    %115 = vector.load %arg11[%c6_92, %c144_93] : memref<8x1152xf32, #tpu.memory_space<vmem>>, vector<1x144xf32>
    tpu.vector_store %arg11[%c6_92, %c144_93], %114 {strides = array<i32>} : memref<8x1152xf32, #tpu.memory_space<vmem>>, vector<1x144xf32>,
    %116 = vector.extract_strided_slice %15 {offsets = [2, 864], sizes = [1, 144], strides = [1, 1]} : vector<8x1152xf32> to vector<1x144xf32>
    %c6_94 = arith.constant 6 : index
    %c288_95 = arith.constant 288 : index
    %117 = vector.load %arg11[%c6_94, %c288_95] : memref<8x1152xf32, #tpu.memory_space<vmem>>, vector<1x144xf32>
    tpu.vector_store %arg11[%c6_94, %c288_95], %116 {strides = array<i32>} : memref<8x1152xf32, #tpu.memory_space<vmem>>, vector<1x144xf32>,
    %118 = vector.extract_strided_slice %15 {offsets = [3, 864], sizes = [1, 144], strides = [1, 1]} : vector<8x1152xf32> to vector<1x144xf32>
    %c6_96 = arith.constant 6 : index
    %c432_97 = arith.constant 432 : index
    %119 = vector.load %arg11[%c6_96, %c432_97] : memref<8x1152xf32, #tpu.memory_space<vmem>>, vector<1x144xf32>
    tpu.vector_store %arg11[%c6_96, %c432_97], %118 {strides = array<i32>} : memref<8x1152xf32, #tpu.memory_space<vmem>>, vector<1x144xf32>,
    %120 = vector.extract_strided_slice %15 {offsets = [4, 864], sizes = [1, 144], strides = [1, 1]} : vector<8x1152xf32> to vector<1x144xf32>
    %c6_98 = arith.constant 6 : index
    %c576_99 = arith.constant 576 : index
    %121 = vector.load %arg11[%c6_98, %c576_99] : memref<8x1152xf32, #tpu.memory_space<vmem>>, vector<1x144xf32>
    tpu.vector_store %arg11[%c6_98, %c576_99], %120 {strides = array<i32>} : memref<8x1152xf32, #tpu.memory_space<vmem>>, vector<1x144xf32>,
    %122 = vector.extract_strided_slice %15 {offsets = [5, 864], sizes = [1, 144], strides = [1, 1]} : vector<8x1152xf32> to vector<1x144xf32>
    %c6_100 = arith.constant 6 : index
    %c720_101 = arith.constant 720 : index
    %123 = vector.load %arg11[%c6_100, %c720_101] : memref<8x1152xf32, #tpu.memory_space<vmem>>, vector<1x144xf32>
    tpu.vector_store %arg11[%c6_100, %c720_101], %122 {strides = array<i32>} : memref<8x1152xf32, #tpu.memory_space<vmem>>, vector<1x144xf32>,
    %124 = vector.extract_strided_slice %15 {offsets = [6, 864], sizes = [1, 144], strides = [1, 1]} : vector<8x1152xf32> to vector<1x144xf32>
    %c6_102 = arith.constant 6 : index
    %c864_103 = arith.constant 864 : index
    %125 = vector.load %arg11[%c6_102, %c864_103] : memref<8x1152xf32, #tpu.memory_space<vmem>>, vector<1x144xf32>
    tpu.vector_store %arg11[%c6_102, %c864_103], %124 {strides = array<i32>} : memref<8x1152xf32, #tpu.memory_space<vmem>>, vector<1x144xf32>,
    %126 = vector.extract_strided_slice %15 {offsets = [7, 864], sizes = [1, 144], strides = [1, 1]} : vector<8x1152xf32> to vector<1x144xf32>
    %c6_104 = arith.constant 6 : index
    %c1008_105 = arith.constant 1008 : index
    %127 = vector.load %arg11[%c6_104, %c1008_105] : memref<8x1152xf32, #tpu.memory_space<vmem>>, vector<1x144xf32>
    tpu.vector_store %arg11[%c6_104, %c1008_105], %126 {strides = array<i32>} : memref<8x1152xf32, #tpu.memory_space<vmem>>, vector<1x144xf32>,
    %128 = vector.extract_strided_slice %15 {offsets = [0, 1008], sizes = [1, 144], strides = [1, 1]} : vector<8x1152xf32> to vector<1x144xf32>
    %c7 = arith.constant 7 : index
    %c0_106 = arith.constant 0 : index
    %129 = vector.load %arg11[%c7, %c0_106] : memref<8x1152xf32, #tpu.memory_space<vmem>>, vector<1x144xf32>
    tpu.vector_store %arg11[%c7, %c0_106], %128 {strides = array<i32>} : memref<8x1152xf32, #tpu.memory_space<vmem>>, vector<1x144xf32>,
    %130 = vector.extract_strided_slice %15 {offsets = [1, 1008], sizes = [1, 144], strides = [1, 1]} : vector<8x1152xf32> to vector<1x144xf32>
    %c7_107 = arith.constant 7 : index
    %c144_108 = arith.constant 144 : index
    %131 = vector.load %arg11[%c7_107, %c144_108] : memref<8x1152xf32, #tpu.memory_space<vmem>>, vector<1x144xf32>
    tpu.vector_store %arg11[%c7_107, %c144_108], %130 {strides = array<i32>} : memref<8x1152xf32, #tpu.memory_space<vmem>>, vector<1x144xf32>,
    %132 = vector.extract_strided_slice %15 {offsets = [2, 1008], sizes = [1, 144], strides = [1, 1]} : vector<8x1152xf32> to vector<1x144xf32>
    %c7_109 = arith.constant 7 : index
    %c288_110 = arith.constant 288 : index
    %133 = vector.load %arg11[%c7_109, %c288_110] : memref<8x1152xf32, #tpu.memory_space<vmem>>, vector<1x144xf32>
    tpu.vector_store %arg11[%c7_109, %c288_110], %132 {strides = array<i32>} : memref<8x1152xf32, #tpu.memory_space<vmem>>, vector<1x144xf32>,
    %134 = vector.extract_strided_slice %15 {offsets = [3, 1008], sizes = [1, 144], strides = [1, 1]} : vector<8x1152xf32> to vector<1x144xf32>
    %c7_111 = arith.constant 7 : index
    %c432_112 = arith.constant 432 : index
    %135 = vector.load %arg11[%c7_111, %c432_112] : memref<8x1152xf32, #tpu.memory_space<vmem>>, vector<1x144xf32>
    tpu.vector_store %arg11[%c7_111, %c432_112], %134 {strides = array<i32>} : memref<8x1152xf32, #tpu.memory_space<vmem>>, vector<1x144xf32>,
    %136 = vector.extract_strided_slice %15 {offsets = [4, 1008], sizes = [1, 144], strides = [1, 1]} : vector<8x1152xf32> to vector<1x144xf32>
    %c7_113 = arith.constant 7 : index
    %c576_114 = arith.constant 576 : index
    %137 = vector.load %arg11[%c7_113, %c576_114] : memref<8x1152xf32, #tpu.memory_space<vmem>>, vector<1x144xf32>
    tpu.vector_store %arg11[%c7_113, %c576_114], %136 {strides = array<i32>} : memref<8x1152xf32, #tpu.memory_space<vmem>>, vector<1x144xf32>,
    %138 = vector.extract_strided_slice %15 {offsets = [5, 1008], sizes = [1, 144], strides = [1, 1]} : vector<8x1152xf32> to vector<1x144xf32>
    %c7_115 = arith.constant 7 : index
    %c720_116 = arith.constant 720 : index
    %139 = vector.load %arg11[%c7_115, %c720_116] : memref<8x1152xf32, #tpu.memory_space<vmem>>, vector<1x144xf32>
    tpu.vector_store %arg11[%c7_115, %c720_116], %138 {strides = array<i32>} : memref<8x1152xf32, #tpu.memory_space<vmem>>, vector<1x144xf32>,
    %140 = vector.extract_strided_slice %15 {offsets = [6, 1008], sizes = [1, 144], strides = [1, 1]} : vector<8x1152xf32> to vector<1x144xf32>
    %c7_117 = arith.constant 7 : index
    %c864_118 = arith.constant 864 : index
    %141 = vector.load %arg11[%c7_117, %c864_118] : memref<8x1152xf32, #tpu.memory_space<vmem>>, vector<1x144xf32>
    tpu.vector_store %arg11[%c7_117, %c864_118], %140 {strides = array<i32>} : memref<8x1152xf32, #tpu.memory_space<vmem>>, vector<1x144xf32>,
    %142 = vector.extract_strided_slice %15 {offsets = [7, 1008], sizes = [1, 144], strides = [1, 1]} : vector<8x1152xf32> to vector<1x144xf32>
    %c7_119 = arith.constant 7 : index
    %c1008_120 = arith.constant 1008 : index
    %143 = vector.load %arg11[%c7_119, %c1008_120] : memref<8x1152xf32, #tpu.memory_space<vmem>>, vector<1x144xf32>
    tpu.vector_store %arg11[%c7_119, %c1008_120], %142 {strides = array<i32>} : memref<8x1152xf32, #tpu.memory_space<vmem>>, vector<1x144xf32>,
    %c0_121 = arith.constant 0 : index
    %c0_122 = arith.constant 0 : index
    %144 = vector.load %arg11[%c0_121, %c0_122] : memref<8x1152xf32, #tpu.memory_space<vmem>>, vector<8x1152xf32>
    %c0_123 = arith.constant 0 : index
    %c0_124 = arith.constant 0 : index
    %145 = vector.load %arg4[%c0_123, %c0_124] : memref<1152x640xf32, #tpu.memory_space<vmem>>, vector<1152x640xf32>
    %cst_125 = arith.constant dense<0.000000e+00> : vector<8x640xf32>
    %146 = tpu.matmul %144, %145, %cst_125 {dimension_numbers = #tpu.dot_dimension_numbers<[1], [0], [0], [1], [0, 0, 1, 1], [], []>} : vector<8x1152xf32>, vector<1152x640xf32>, vector<8x640xf32> -> vector<8x640xf32>
    %147 = vector.extract_strided_slice %146 {offsets = [0, 0], sizes = [8, 160], strides = [1, 1]} : vector<8x640xf32> to vector<8x160xf32>
    %148 = vector.extract_strided_slice %146 {offsets = [0, 160], sizes = [8, 160], strides = [1, 1]} : vector<8x640xf32> to vector<8x160xf32>
    %149 = arith.maximumf %147, %148 : vector<8x160xf32>
    %150 = vector.extract_strided_slice %146 {offsets = [0, 320], sizes = [8, 160], strides = [1, 1]} : vector<8x640xf32> to vector<8x160xf32>
    %151 = vector.extract_strided_slice %146 {offsets = [0, 480], sizes = [8, 160], strides = [1, 1]} : vector<8x640xf32> to vector<8x160xf32>
    %152 = arith.maximumf %150, %151 : vector<8x160xf32>
    %153 = arith.maximumf %149, %152 : vector<8x160xf32>
    %c0_126 = arith.constant 0 : index
    %c0_127 = arith.constant 0 : index
    %154 = vector.load %arg5[%c0_126, %c0_127] : memref<1x160xf32, #tpu.memory_space<vmem>>, vector<1x160xf32>
    %155 = vector.broadcast %154 : vector<1x160xf32> to vector<8x160xf32>
    %156 = arith.addf %153, %155 : vector<8x160xf32>
    %cst_128 = arith.constant 0.000000e+00 : f32
    %157 = vector.broadcast %cst_128 : f32 to vector<8x160xf32>
    %158 = arith.maximumf %156, %157 : vector<8x160xf32>
    %c0_129 = arith.constant 0 : index
    %c0_130 = arith.constant 0 : index
    %159 = vector.load %arg6[%c0_129, %c0_130] : memref<160x32xf32, #tpu.memory_space<vmem>>, vector<160x32xf32>
    %cst_131 = arith.constant dense<0.000000e+00> : vector<8x32xf32>
    %160 = tpu.matmul %158, %159, %cst_131 {dimension_numbers = #tpu.dot_dimension_numbers<[1], [0], [0], [1], [0, 0, 1, 1], [], []>} : vector<8x160xf32>, vector<160x32xf32>, vector<8x32xf32> -> vector<8x32xf32>
    %c0_132 = arith.constant 0 : index
    %c0_133 = arith.constant 0 : index
    %161 = vector.load %arg7[%c0_132, %c0_133] : memref<1x32xf32, #tpu.memory_space<vmem>>, vector<1x32xf32>
    %162 = vector.broadcast %161 : vector<1x32xf32> to vector<8x32xf32>
    %163 = arith.addf %160, %162 : vector<8x32xf32>
    %cst_134 = arith.constant 0.000000e+00 : f32
    %164 = vector.broadcast %cst_134 : f32 to vector<8x32xf32>
    %165 = arith.maximumf %163, %164 : vector<8x32xf32>
    %c0_135 = arith.constant 0 : index
    %c0_136 = arith.constant 0 : index
    %166 = vector.load %arg8[%c0_135, %c0_136] : memref<32x6xf32, #tpu.memory_space<vmem>>, vector<32x6xf32>
    %cst_137 = arith.constant dense<0.000000e+00> : vector<8x6xf32>
    %167 = tpu.matmul %165, %166, %cst_137 {dimension_numbers = #tpu.dot_dimension_numbers<[1], [0], [0], [1], [0, 0, 1, 1], [], []>} : vector<8x32xf32>, vector<32x6xf32>, vector<8x6xf32> -> vector<8x6xf32>
    %c0_138 = arith.constant 0 : index
    %c0_139 = arith.constant 0 : index
    %168 = vector.load %arg9[%c0_138, %c0_139] : memref<1x6xf32, #tpu.memory_space<vmem>>, vector<1x6xf32>
    %169 = vector.broadcast %168 : vector<1x6xf32> to vector<8x6xf32>
    %170 = arith.addf %167, %169 : vector<8x6xf32>
    %c0_140 = arith.constant 0 : index
    %c0_141 = arith.constant 0 : index
    %171 = vector.load %arg10[%c0_140, %c0_141] : memref<8x6xf32, #tpu.memory_space<vmem>>, vector<8x6xf32>
    tpu.vector_store %arg10[%c0_140, %c0_141], %170 {strides = array<i32>} : memref<8x6xf32, #tpu.memory_space<vmem>>, vector<8x6xf32>,
    return
  }
  func.func @transform_0(%arg0: i32) -> (i32, i32, i32) {
    %c0_i32 = arith.constant 0 : i32
    %c0_i32_0 = arith.constant 0 : i32
    %c0_i32_1 = arith.constant 0 : i32
    return %arg0, %c0_i32, %c0_i32_0 : i32, i32, i32
  }
  func.func @transform_1(%arg0: i32) -> (i32, i32) {
    %c0_i32 = arith.constant 0 : i32
    %c0_i32_0 = arith.constant 0 : i32
    %c0_i32_1 = arith.constant 0 : i32
    return %c0_i32, %c0_i32_0 : i32, i32
  }
  func.func @transform_2(%arg0: i32) -> (i32, i32) {
    %c0_i32 = arith.constant 0 : i32
    %c0_i32_0 = arith.constant 0 : i32
    %c0_i32_1 = arith.constant 0 : i32
    return %c0_i32, %c0_i32_0 : i32, i32
  }
  func.func @transform_3(%arg0: i32) -> (i32, i32) {
    %c0_i32 = arith.constant 0 : i32
    %c0_i32_0 = arith.constant 0 : i32
    %c0_i32_1 = arith.constant 0 : i32
    return %c0_i32, %c0_i32_0 : i32, i32
  }
  func.func @transform_4(%arg0: i32) -> (i32, i32) {
    %c0_i32 = arith.constant 0 : i32
    %c0_i32_0 = arith.constant 0 : i32
    %c0_i32_1 = arith.constant 0 : i32
    return %c0_i32, %c0_i32_0 : i32, i32
  }
  func.func @transform_5(%arg0: i32) -> (i32, i32) {
    %c0_i32 = arith.constant 0 : i32
    %c0_i32_0 = arith.constant 0 : i32
    %c0_i32_1 = arith.constant 0 : i32
    return %c0_i32, %c0_i32_0 : i32, i32
  }
  func.func @transform_6(%arg0: i32) -> (i32, i32) {
    %c0_i32 = arith.constant 0 : i32
    %c0_i32_0 = arith.constant 0 : i32
    %c0_i32_1 = arith.constant 0 : i32
    return %c0_i32, %c0_i32_0 : i32, i32
  }
  func.func @transform_7(%arg0: i32) -> (i32, i32) {
    %c0_i32 = arith.constant 0 : i32
    %c0_i32_0 = arith.constant 0 : i32
    %c0_i32_1 = arith.constant 0 : i32
    return %c0_i32, %c0_i32_0 : i32, i32
  }
  func.func @transform_8(%arg0: i32) -> (i32, i32) {
    %c0_i32 = arith.constant 0 : i32
    %c0_i32_0 = arith.constant 0 : i32
    %c0_i32_1 = arith.constant 0 : i32
    return %c0_i32, %c0_i32_0 : i32, i32
  }
  func.func @transform_9(%arg0: i32) -> (i32, i32) {
    %c0_i32 = arith.constant 0 : i32
    %c0_i32_0 = arith.constant 0 : i32
    return %arg0, %c0_i32 : i32, i32
  }
}

</mosaic_0001>

<llo_original>
// kernel: affine_regression_forward.1
$region0: #{affine_regression_forward.1}
  #allocation0 [shape = 'u32[]', space=smem, size = 0x4, offset = 0x4, fixed_abs, tag = 'smem constant byte address 0x4 - core index']
  #allocation1 [shape = 'u32[144,128]{1,0:T(1,128)}', space=vmem, size = 0x12000, scoped, tag = 'internal scratch']
  #allocation2 [shape = 'f32[8,1152]{1,0:T(8,128)}', space=vmem, size = 0x9000, scoped, tag = 'scratch operand']
  %s0 = inlined_call_operand.vmem [shape: f32[1,294,4608], index: 0, kind: input, shape index: {}]
  %s1 = inlined_call_operand.vmem [shape: f32[8,294], index: 1, kind: input, shape index: {}]
  %s2 = inlined_call_operand.vmem [shape: f32[8,1], index: 2, kind: input, shape index: {}]
  %s3 = inlined_call_operand.vmem [shape: f32[1152,640], index: 3, kind: input, shape index: {}]
  %s4 = inlined_call_operand.vmem [shape: f32[1,160], index: 4, kind: input, shape index: {}]
  %s5 = inlined_call_operand.vmem [shape: f32[160,32], index: 5, kind: input, shape index: {}]
  %s6 = inlined_call_operand.vmem [shape: f32[1,32], index: 6, kind: input, shape index: {}]
  %s7 = inlined_call_operand.vmem [shape: f32[32,6], index: 7, kind: input, shape index: {}]
  %s8 = inlined_call_operand.vmem [shape: f32[1,6], index: 8, kind: input, shape index: {}]
  %s9 = inlined_call_operand.vmem [shape: f32[8,6], index: 9, kind: output, shape index: {}]
  %s10 = sld [smem:[#allocation0]]
  $region46: #{affine_regression_forward.1} parent=0
    _
  %s12 = ssub.s32 1, %s10
  %s13 = scalar_select 0, %s12, %s10
  // Predicated region
  $region2: #{affine_regression_forward.1} parent=0 // pred_check
    _
  $region3: #{affine_regression_forward.1} parent=0 // pred_check_branch
    %15 = sbr.rel (0) target = $region5
  $region4: #{affine_regression_forward.1} parent=0 // pred_region
    _
  $region5: #{affine_regression_forward.1} parent=0 // pred_fallthru
    _
  // Predicated region
  $region6: #{affine_regression_forward.1} parent=0 // pred_check
    _
  $region7: #{affine_regression_forward.1} parent=0 // pred_check_branch
    %17 = sbr.rel (0) target = $region9
  $region8: #{affine_regression_forward.1} parent=0 // pred_region
    _
  $region9: #{affine_regression_forward.1} parent=0 // pred_fallthru
    _
  // Predicated region
  $region10: #{affine_regression_forward.1} parent=0 // pred_check
    _
  $region11: #{affine_regression_forward.1} parent=0 // pred_check_branch
    %19 = sbr.rel (0) target = $region13
  $region12: #{affine_regression_forward.1} parent=0 // pred_region
    _
  $region13: #{affine_regression_forward.1} parent=0 // pred_fallthru
    _
  // Predicated region
  $region14: #{affine_regression_forward.1} parent=0 // pred_check
    _
  $region15: #{affine_regression_forward.1} parent=0 // pred_check_branch
    %21 = sbr.rel (0) target = $region17
  $region16: #{affine_regression_forward.1} parent=0 // pred_region
    _
  $region17: #{affine_regression_forward.1} parent=0 // pred_fallthru
    _
  // Predicated region
  $region18: #{affine_regression_forward.1} parent=0 // pred_check
    _
  $region19: #{affine_regression_forward.1} parent=0 // pred_check_branch
    %23 = sbr.rel (0) target = $region21
  $region20: #{affine_regression_forward.1} parent=0 // pred_region
    _
  $region21: #{affine_regression_forward.1} parent=0 // pred_fallthru
    _
  // Predicated region
  $region22: #{affine_regression_forward.1} parent=0 // pred_check
    _
  $region23: #{affine_regression_forward.1} parent=0 // pred_check_branch
    %25 = sbr.rel (0) target = $region25
  $region24: #{affine_regression_forward.1} parent=0 // pred_region
    _
  $region25: #{affine_regression_forward.1} parent=0 // pred_fallthru
    _
  // Predicated region
  $region26: #{affine_regression_forward.1} parent=0 // pred_check
    _
  $region27: #{affine_regression_forward.1} parent=0 // pred_check_branch
    %27 = sbr.rel (0) target = $region29
  $region28: #{affine_regression_forward.1} parent=0 // pred_region
    _
  $region29: #{affine_regression_forward.1} parent=0 // pred_fallthru
    _
  // Predicated region
  $region30: #{affine_regression_forward.1} parent=0 // pred_check
    _
  $region31: #{affine_regression_forward.1} parent=0 // pred_check_branch
    %29 = sbr.rel (0) target = $region33
  $region32: #{affine_regression_forward.1} parent=0 // pred_region
    _
  $region33: #{affine_regression_forward.1} parent=0 // pred_fallthru
    _
  // Predicated region
  $region34: #{affine_regression_forward.1} parent=0 // pred_check
    _
  $region35: #{affine_regression_forward.1} parent=0 // pred_check_branch
    %31 = sbr.rel (0) target = $region37
  $region36: #{affine_regression_forward.1} parent=0 // pred_region
    _
  $region37: #{affine_regression_forward.1} parent=0 // pred_fallthru
    _
  %v32 = vld [vmem:[%s1] sm:$0xff]
  %v33 = vld [vmem:[%s1 + $0x8] sm:$0xff]
  %v34 = vld [vmem:[%s1 + $0x10] sm:$0xff]
  %v35 = vld [vmem:[%s0] sm:$0xff]
  %v36 = vld [vmem:[%s0 + $0x8] sm:$0xff]
  %v37 = vld [vmem:[%s0 + $0x10] sm:$0xff]
  %v38 = vld [vmem:[%s0 + $0x18] sm:$0xff]
  %v39 = vld [vmem:[%s0 + $0x20] sm:$0xff]
  %v40 = vld [vmem:[%s0 + $0x28] sm:$0xff]
  %v41 = vld [vmem:[%s0 + $0x30] sm:$0xff]
  %v42 = vld [vmem:[%s0 + $0x38] sm:$0xff]
  %v43 = vld [vmem:[%s0 + $0x40] sm:$0xff]
  %v44 = vld [vmem:[%s0 + $0x48] sm:$0xff]
  %v45 = vld [vmem:[%s0 + $0x50] sm:$0xff]
  %v46 = vld [vmem:[%s0 + $0x58] sm:$0xff]
  %v47 = vld [vmem:[%s0 + $0x60] sm:$0xff]
  %v48 = vld [vmem:[%s0 + $0x68] sm:$0xff]
  %v49 = vld [vmem:[%s0 + $0x70] sm:$0xff]
  %v50 = vld [vmem:[%s0 + $0x78] sm:$0xff]
  %v51 = vld [vmem:[%s0 + $0x80] sm:$0xff]
  %v52 = vld [vmem:[%s0 + $0x88] sm:$0xff]
  %v53 = vld [vmem:[%s0 + $0x90] sm:$0xff]
  %v54 = vld [vmem:[%s0 + $0x98] sm:$0xff]
  %v55 = vld [vmem:[%s0 + $0xa0] sm:$0xff]
  %v56 = vld [vmem:[%s0 + $0xa8] sm:$0xff]
  %v57 = vld [vmem:[%s0 + $0xb0] sm:$0xff]
  %v58 = vld [vmem:[%s0 + $0xb8] sm:$0xff]
  %v59 = vld [vmem:[%s0 + $0xc0] sm:$0xff]
  %v60 = vld [vmem:[%s0 + $0xc8] sm:$0xff]
  %v61 = vld [vmem:[%s0 + $0xd0] sm:$0xff]
  %v62 = vld [vmem:[%s0 + $0xd8] sm:$0xff]
  %v63 = vld [vmem:[%s0 + $0xe0] sm:$0xff]
  %v64 = vld [vmem:[%s0 + $0xe8] sm:$0xff]
  %v65 = vld [vmem:[%s0 + $0xf0] sm:$0xff]
  %v66 = vld [vmem:[%s0 + $0xf8] sm:$0xff]
  %v67 = vld [vmem:[%s0 + $0x100] sm:$0xff]
  %v68 = vld [vmem:[%s0 + $0x108] sm:$0xff]
  %v69 = vld [vmem:[%s0 + $0x110] sm:$0xff]
  %v70 = vld [vmem:[%s0 + $0x118] sm:$0xff]
  %v71 = vld [vmem:[%s0 + $0x120] sm:$0xff]
  %v72 = vld [vmem:[%s0 + $0x128] sm:$0xff]
  %v73 = vld [vmem:[%s0 + $0x130] sm:$0xff]
  %v74 = vld [vmem:[%s0 + $0x138] sm:$0xff]
  %v75 = vld [vmem:[%s0 + $0x140] sm:$0xff]
  %v76 = vld [vmem:[%s0 + $0x148] sm:$0xff]
  %v77 = vld [vmem:[%s0 + $0x150] sm:$0xff]
  %v78 = vld [vmem:[%s0 + $0x158] sm:$0xff]
  %v79 = vld [vmem:[%s0 + $0x160] sm:$0xff]
  %v80 = vld [vmem:[%s0 + $0x168] sm:$0xff]
  %v81 = vld [vmem:[%s0 + $0x170] sm:$0xff]
  %v82 = vld [vmem:[%s0 + $0x178] sm:$0xff]
  %v83 = vld [vmem:[%s0 + $0x180] sm:$0xff]
  %v84 = vld [vmem:[%s0 + $0x188] sm:$0xff]
  %v85 = vld [vmem:[%s0 + $0x190] sm:$0xff]
  %v86 = vld [vmem:[%s0 + $0x198] sm:$0xff]
  %v87 = vld [vmem:[%s0 + $0x1a0] sm:$0xff]
  %v88 = vld [vmem:[%s0 + $0x1a8] sm:$0xff]
  %v89 = vld [vmem:[%s0 + $0x1b0] sm:$0xff]
  %v90 = vld [vmem:[%s0 + $0x1b8] sm:$0xff]
  %v91 = vld [vmem:[%s0 + $0x1c0] sm:$0xff]
  %v92 = vld [vmem:[%s0 + $0x1c8] sm:$0xff]
  %v93 = vld [vmem:[%s0 + $0x1d0] sm:$0xff]
  %v94 = vld [vmem:[%s0 + $0x1d8] sm:$0xff]
  %v95 = vld [vmem:[%s0 + $0x1e0] sm:$0xff]
  %v96 = vld [vmem:[%s0 + $0x1e8] sm:$0xff]
  %v97 = vld [vmem:[%s0 + $0x1f0] sm:$0xff]
  %v98 = vld [vmem:[%s0 + $0x1f8] sm:$0xff]
  %v99 = vld [vmem:[%s0 + $0x200] sm:$0xff]
  %v100 = vld [vmem:[%s0 + $0x208] sm:$0xff]
  %v101 = vld [vmem:[%s0 + $0x210] sm:$0xff]
  %v102 = vld [vmem:[%s0 + $0x218] sm:$0xff]
  %v103 = vld [vmem:[%s0 + $0x220] sm:$0xff]
  %v104 = vld [vmem:[%s0 + $0x228] sm:$0xff]
  %v105 = vld [vmem:[%s0 + $0x230] sm:$0xff]
  %v106 = vld [vmem:[%s0 + $0x238] sm:$0xff]
  %v107 = vld [vmem:[%s0 + $0x240] sm:$0xff]
  %v108 = vld [vmem:[%s0 + $0x248] sm:$0xff]
  %v109 = vld [vmem:[%s0 + $0x250] sm:$0xff]
  %v110 = vld [vmem:[%s0 + $0x258] sm:$0xff]
  %v111 = vld [vmem:[%s0 + $0x260] sm:$0xff]
  %v112 = vld [vmem:[%s0 + $0x268] sm:$0xff]
  %v113 = vld [vmem:[%s0 + $0x270] sm:$0xff]
  %v114 = vld [vmem:[%s0 + $0x278] sm:$0xff]
  %v115 = vld [vmem:[%s0 + $0x280] sm:$0xff]
  %v116 = vld [vmem:[%s0 + $0x288] sm:$0xff]
  %v117 = vld [vmem:[%s0 + $0x290] sm:$0xff]
  %v118 = vld [vmem:[%s0 + $0x298] sm:$0xff]
  %v119 = vld [vmem:[%s0 + $0x2a0] sm:$0xff]
  %v120 = vld [vmem:[%s0 + $0x2a8] sm:$0xff]
  %v121 = vld [vmem:[%s0 + $0x2b0] sm:$0xff]
  %v122 = vld [vmem:[%s0 + $0x2b8] sm:$0xff]
  %v123 = vld [vmem:[%s0 + $0x2c0] sm:$0xff]
  %v124 = vld [vmem:[%s0 + $0x2c8] sm:$0xff]
  %v125 = vld [vmem:[%s0 + $0x2d0] sm:$0xff]
  %v126 = vld [vmem:[%s0 + $0x2d8] sm:$0xff]
  %v127 = vld [vmem:[%s0 + $0x2e0] sm:$0xff]
  %v128 = vld [vmem:[%s0 + $0x2e8] sm:$0xff]
  %v129 = vld [vmem:[%s0 + $0x2f0] sm:$0xff]
  %v130 = vld [vmem:[%s0 + $0x2f8] sm:$0xff]
  %v131 = vld [vmem:[%s0 + $0x300] sm:$0xff]
  %v132 = vld [vmem:[%s0 + $0x308] sm:$0xff]
  %v133 = vld [vmem:[%s0 + $0x310] sm:$0xff]
  %v134 = vld [vmem:[%s0 + $0x318] sm:$0xff]
  %v135 = vld [vmem:[%s0 + $0x320] sm:$0xff]
  %v136 = vld [vmem:[%s0 + $0x328] sm:$0xff]
  %v137 = vld [vmem:[%s0 + $0x330] sm:$0xff]
  %v138 = vld [vmem:[%s0 + $0x338] sm:$0xff]
  %v139 = vld [vmem:[%s0 + $0x340] sm:$0xff]
  %v140 = vld [vmem:[%s0 + $0x348] sm:$0xff]
  %v141 = vld [vmem:[%s0 + $0x350] sm:$0xff]
  %v142 = vld [vmem:[%s0 + $0x358] sm:$0xff]
  %v143 = vld [vmem:[%s0 + $0x360] sm:$0xff]
  %v144 = vld [vmem:[%s0 + $0x368] sm:$0xff]
  %v145 = vld [vmem:[%s0 + $0x370] sm:$0xff]
  %v146 = vld [vmem:[%s0 + $0x378] sm:$0xff]
  %v147 = vld [vmem:[%s0 + $0x380] sm:$0xff]
  %v148 = vld [vmem:[%s0 + $0x388] sm:$0xff]
  %v149 = vld [vmem:[%s0 + $0x390] sm:$0xff]
  %v150 = vld [vmem:[%s0 + $0x398] sm:$0xff]
  %v151 = vld [vmem:[%s0 + $0x3a0] sm:$0xff]
  %v152 = vld [vmem:[%s0 + $0x3a8] sm:$0xff]
  %v153 = vld [vmem:[%s0 + $0x3b0] sm:$0xff]
  %v154 = vld [vmem:[%s0 + $0x3b8] sm:$0xff]
  %v155 = vld [vmem:[%s0 + $0x3c0] sm:$0xff]
  %v156 = vld [vmem:[%s0 + $0x3c8] sm:$0xff]
  %v157 = vld [vmem:[%s0 + $0x3d0] sm:$0xff]
  %v158 = vld [vmem:[%s0 + $0x3d8] sm:$0xff]
  %v159 = vld [vmem:[%s0 + $0x3e0] sm:$0xff]
  %v160 = vld [vmem:[%s0 + $0x3e8] sm:$0xff]
  %v161 = vld [vmem:[%s0 + $0x3f0] sm:$0xff]
  %v162 = vld [vmem:[%s0 + $0x3f8] sm:$0xff]
  %v163 = vld [vmem:[%s0 + $0x400] sm:$0xff]
  %v164 = vld [vmem:[%s0 + $0x408] sm:$0xff]
  %v165 = vld [vmem:[%s0 + $0x410] sm:$0xff]
  %v166 = vld [vmem:[%s0 + $0x418] sm:$0xff]
  %v167 = vld [vmem:[%s0 + $0x420] sm:$0xff]
  %v168 = vld [vmem:[%s0 + $0x428] sm:$0xff]
  %v169 = vld [vmem:[%s0 + $0x430] sm:$0xff]
  %v170 = vld [vmem:[%s0 + $0x438] sm:$0xff]
  %v171 = vld [vmem:[%s0 + $0x440] sm:$0xff]
  %v172 = vld [vmem:[%s0 + $0x448] sm:$0xff]
  %v173 = vld [vmem:[%s0 + $0x450] sm:$0xff]
  %v174 = vld [vmem:[%s0 + $0x458] sm:$0xff]
  %v175 = vld [vmem:[%s0 + $0x460] sm:$0xff]
  %v176 = vld [vmem:[%s0 + $0x468] sm:$0xff]
  %v177 = vld [vmem:[%s0 + $0x470] sm:$0xff]
  %v178 = vld [vmem:[%s0 + $0x478] sm:$0xff]
  %v179 = vld [vmem:[%s0 + $0x480] sm:$0xff]
  %v180 = vld [vmem:[%s0 + $0x488] sm:$0xff]
  %v181 = vld [vmem:[%s0 + $0x490] sm:$0xff]
  %v182 = vld [vmem:[%s0 + $0x498] sm:$0xff]
  %v183 = vld [vmem:[%s0 + $0x4a0] sm:$0xff]
  %v184 = vld [vmem:[%s0 + $0x4a8] sm:$0xff]
  %v185 = vld [vmem:[%s0 + $0x4b0] sm:$0xff]
  %v186 = vld [vmem:[%s0 + $0x4b8] sm:$0xff]
  %v187 = vld [vmem:[%s0 + $0x4c0] sm:$0xff]
  %v188 = vld [vmem:[%s0 + $0x4c8] sm:$0xff]
  %v189 = vld [vmem:[%s0 + $0x4d0] sm:$0xff]
  %v190 = vld [vmem:[%s0 + $0x4d8] sm:$0xff]
  %v191 = vld [vmem:[%s0 + $0x4e0] sm:$0xff]
  %v192 = vld [vmem:[%s0 + $0x4e8] sm:$0xff]
  %v193 = vld [vmem:[%s0 + $0x4f0] sm:$0xff]
  %v194 = vld [vmem:[%s0 + $0x4f8] sm:$0xff]
  %v195 = vld [vmem:[%s0 + $0x500] sm:$0xff]
  %v196 = vld [vmem:[%s0 + $0x508] sm:$0xff]
  %v197 = vld [vmem:[%s0 + $0x510] sm:$0xff]
  %v198 = vld [vmem:[%s0 + $0x518] sm:$0xff]
  %v199 = vld [vmem:[%s0 + $0x520] sm:$0xff]
  %v200 = vld [vmem:[%s0 + $0x528] sm:$0xff]
  %v201 = vld [vmem:[%s0 + $0x530] sm:$0xff]
  %v202 = vld [vmem:[%s0 + $0x538] sm:$0xff]
  %v203 = vld [vmem:[%s0 + $0x540] sm:$0xff]
  %v204 = vld [vmem:[%s0 + $0x548] sm:$0xff]
  %v205 = vld [vmem:[%s0 + $0x550] sm:$0xff]
  %v206 = vld [vmem:[%s0 + $0x558] sm:$0xff]
  %v207 = vld [vmem:[%s0 + $0x560] sm:$0xff]
  %v208 = vld [vmem:[%s0 + $0x568] sm:$0xff]
  %v209 = vld [vmem:[%s0 + $0x570] sm:$0xff]
  %v210 = vld [vmem:[%s0 + $0x578] sm:$0xff]
  %v211 = vld [vmem:[%s0 + $0x580] sm:$0xff]
  %v212 = vld [vmem:[%s0 + $0x588] sm:$0xff]
  %v213 = vld [vmem:[%s0 + $0x590] sm:$0xff]
  %v214 = vld [vmem:[%s0 + $0x598] sm:$0xff]
  %v215 = vld [vmem:[%s0 + $0x5a0] sm:$0xff]
  %v216 = vld [vmem:[%s0 + $0x5a8] sm:$0xff]
  %v217 = vld [vmem:[%s0 + $0x5b0] sm:$0xff]
  %v218 = vld [vmem:[%s0 + $0x5b8] sm:$0xff]
  %v219 = vld [vmem:[%s0 + $0x5c0] sm:$0xff]
  %v220 = vld [vmem:[%s0 + $0x5c8] sm:$0xff]
  %v221 = vld [vmem:[%s0 + $0x5d0] sm:$0xff]
  %v222 = vld [vmem:[%s0 + $0x5d8] sm:$0xff]
  %v223 = vld [vmem:[%s0 + $0x5e0] sm:$0xff]
  %v224 = vld [vmem:[%s0 + $0x5e8] sm:$0xff]
  %v225 = vld [vmem:[%s0 + $0x5f0] sm:$0xff]
  %v226 = vld [vmem:[%s0 + $0x5f8] sm:$0xff]
  %v227 = vld [vmem:[%s0 + $0x600] sm:$0xff]
  %v228 = vld [vmem:[%s0 + $0x608] sm:$0xff]
  %v229 = vld [vmem:[%s0 + $0x610] sm:$0xff]
  %v230 = vld [vmem:[%s0 + $0x618] sm:$0xff]
  %v231 = vld [vmem:[%s0 + $0x620] sm:$0xff]
  %v232 = vld [vmem:[%s0 + $0x628] sm:$0xff]
  %v233 = vld [vmem:[%s0 + $0x630] sm:$0xff]
  %v234 = vld [vmem:[%s0 + $0x638] sm:$0xff]
  %v235 = vld [vmem:[%s0 + $0x640] sm:$0xff]
  %v236 = vld [vmem:[%s0 + $0x648] sm:$0xff]
  %v237 = vld [vmem:[%s0 + $0x650] sm:$0xff]
  %v238 = vld [vmem:[%s0 + $0x658] sm:$0xff]
  %v239 = vld [vmem:[%s0 + $0x660] sm:$0xff]
  %v240 = vld [vmem:[%s0 + $0x668] sm:$0xff]
  %v241 = vld [vmem:[%s0 + $0x670] sm:$0xff]
  %v242 = vld [vmem:[%s0 + $0x678] sm:$0xff]
  %v243 = vld [vmem:[%s0 + $0x680] sm:$0xff]
  %v244 = vld [vmem:[%s0 + $0x688] sm:$0xff]
  %v245 = vld [vmem:[%s0 + $0x690] sm:$0xff]
  %v246 = vld [vmem:[%s0 + $0x698] sm:$0xff]
  %v247 = vld [vmem:[%s0 + $0x6a0] sm:$0xff]
  %v248 = vld [vmem:[%s0 + $0x6a8] sm:$0xff]
  %v249 = vld [vmem:[%s0 + $0x6b0] sm:$0xff]
  %v250 = vld [vmem:[%s0 + $0x6b8] sm:$0xff]
  %v251 = vld [vmem:[%s0 + $0x6c0] sm:$0xff]
  %v252 = vld [vmem:[%s0 + $0x6c8] sm:$0xff]
  %v253 = vld [vmem:[%s0 + $0x6d0] sm:$0xff]
  %v254 = vld [vmem:[%s0 + $0x6d8] sm:$0xff]
  %v255 = vld [vmem:[%s0 + $0x6e0] sm:$0xff]
  %v256 = vld [vmem:[%s0 + $0x6e8] sm:$0xff]
  %v257 = vld [vmem:[%s0 + $0x6f0] sm:$0xff]
  %v258 = vld [vmem:[%s0 + $0x6f8] sm:$0xff]
  %v259 = vld [vmem:[%s0 + $0x700] sm:$0xff]
  %v260 = vld [vmem:[%s0 + $0x708] sm:$0xff]
  %v261 = vld [vmem:[%s0 + $0x710] sm:$0xff]
  %v262 = vld [vmem:[%s0 + $0x718] sm:$0xff]
  %v263 = vld [vmem:[%s0 + $0x720] sm:$0xff]
  %v264 = vld [vmem:[%s0 + $0x728] sm:$0xff]
  %v265 = vld [vmem:[%s0 + $0x730] sm:$0xff]
  %v266 = vld [vmem:[%s0 + $0x738] sm:$0xff]
  %v267 = vld [vmem:[%s0 + $0x740] sm:$0xff]
  %v268 = vld [vmem:[%s0 + $0x748] sm:$0xff]
  %v269 = vld [vmem:[%s0 + $0x750] sm:$0xff]
  %v270 = vld [vmem:[%s0 + $0x758] sm:$0xff]
  %v271 = vld [vmem:[%s0 + $0x760] sm:$0xff]
  %v272 = vld [vmem:[%s0 + $0x768] sm:$0xff]
  %v273 = vld [vmem:[%s0 + $0x770] sm:$0xff]
  %v274 = vld [vmem:[%s0 + $0x778] sm:$0xff]
  %v275 = vld [vmem:[%s0 + $0x780] sm:$0xff]
  %v276 = vld [vmem:[%s0 + $0x788] sm:$0xff]
  %v277 = vld [vmem:[%s0 + $0x790] sm:$0xff]
  %v278 = vld [vmem:[%s0 + $0x798] sm:$0xff]
  %v279 = vld [vmem:[%s0 + $0x7a0] sm:$0xff]
  %v280 = vld [vmem:[%s0 + $0x7a8] sm:$0xff]
  %v281 = vld [vmem:[%s0 + $0x7b0] sm:$0xff]
  %v282 = vld [vmem:[%s0 + $0x7b8] sm:$0xff]
  %v283 = vld [vmem:[%s0 + $0x7c0] sm:$0xff]
  %v284 = vld [vmem:[%s0 + $0x7c8] sm:$0xff]
  %v285 = vld [vmem:[%s0 + $0x7d0] sm:$0xff]
  %v286 = vld [vmem:[%s0 + $0x7d8] sm:$0xff]
  %v287 = vld [vmem:[%s0 + $0x7e0] sm:$0xff]
  %v288 = vld [vmem:[%s0 + $0x7e8] sm:$0xff]
  %v289 = vld [vmem:[%s0 + $0x7f0] sm:$0xff]
  %v290 = vld [vmem:[%s0 + $0x7f8] sm:$0xff]
  %v291 = vld [vmem:[%s0 + $0x800] sm:$0xff]
  %v292 = vld [vmem:[%s0 + $0x808] sm:$0xff]
  %v293 = vld [vmem:[%s0 + $0x810] sm:$0xff]
  %v294 = vld [vmem:[%s0 + $0x818] sm:$0xff]
  %v295 = vld [vmem:[%s0 + $0x820] sm:$0xff]
  %v296 = vld [vmem:[%s0 + $0x828] sm:$0xff]
  %v297 = vld [vmem:[%s0 + $0x830] sm:$0xff]
  %v298 = vld [vmem:[%s0 + $0x838] sm:$0xff]
  %v299 = vld [vmem:[%s0 + $0x840] sm:$0xff]
  %v300 = vld [vmem:[%s0 + $0x848] sm:$0xff]
  %v301 = vld [vmem:[%s0 + $0x850] sm:$0xff]
  %v302 = vld [vmem:[%s0 + $0x858] sm:$0xff]
  %v303 = vld [vmem:[%s0 + $0x860] sm:$0xff]
  %v304 = vld [vmem:[%s0 + $0x868] sm:$0xff]
  %v305 = vld [vmem:[%s0 + $0x870] sm:$0xff]
  %v306 = vld [vmem:[%s0 + $0x878] sm:$0xff]
  %v307 = vld [vmem:[%s0 + $0x880] sm:$0xff]
  %v308 = vld [vmem:[%s0 + $0x888] sm:$0xff]
  %v309 = vld [vmem:[%s0 + $0x890] sm:$0xff]
  %v310 = vld [vmem:[%s0 + $0x898] sm:$0xff]
  %v311 = vld [vmem:[%s0 + $0x8a0] sm:$0xff]
  %v312 = vld [vmem:[%s0 + $0x8a8] sm:$0xff]
  %v313 = vld [vmem:[%s0 + $0x8b0] sm:$0xff]
  %v314 = vld [vmem:[%s0 + $0x8b8] sm:$0xff]
  %v315 = vld [vmem:[%s0 + $0x8c0] sm:$0xff]
  %v316 = vld [vmem:[%s0 + $0x8c8] sm:$0xff]
  %v317 = vld [vmem:[%s0 + $0x8d0] sm:$0xff]
  %v318 = vld [vmem:[%s0 + $0x8d8] sm:$0xff]
  %v319 = vld [vmem:[%s0 + $0x8e0] sm:$0xff]
  %v320 = vld [vmem:[%s0 + $0x8e8] sm:$0xff]
  %v321 = vld [vmem:[%s0 + $0x8f0] sm:$0xff]
  %v322 = vld [vmem:[%s0 + $0x8f8] sm:$0xff]
  %v323 = vld [vmem:[%s0 + $0x900] sm:$0xff]
  %v324 = vld [vmem:[%s0 + $0x908] sm:$0xff]
  %v325 = vld [vmem:[%s0 + $0x910] sm:$0xff]
  %v326 = vld [vmem:[%s0 + $0x918] sm:$0xff]
  %v327 = vld [vmem:[%s0 + $0x920] sm:$0xff]
  %v328 = vld [vmem:[%s0 + $0x928] sm:$0xff]
  %v329 = vld [vmem:[%s0 + $0x930] sm:$0xff]
  %v330 = vld [vmem:[%s0 + $0x938] sm:$0xff]
  %v331 = vld [vmem:[%s0 + $0x940] sm:$0xff]
  %v332 = vld [vmem:[%s0 + $0x948] sm:$0xff]
  %v333 = vld [vmem:[%s0 + $0x950] sm:$0xff]
  %v334 = vld [vmem:[%s0 + $0x958] sm:$0xff]
  %v335 = vld [vmem:[%s0 + $0x960] sm:$0xff]
  %v336 = vld [vmem:[%s0 + $0x968] sm:$0xff]
  %v337 = vld [vmem:[%s0 + $0x970] sm:$0xff]
  %v338 = vld [vmem:[%s0 + $0x978] sm:$0xff]
  %v339 = vld [vmem:[%s0 + $0x980] sm:$0xff]
  %v340 = vld [vmem:[%s0 + $0x988] sm:$0xff]
  %v341 = vld [vmem:[%s0 + $0x990] sm:$0xff]
  %v342 = vld [vmem:[%s0 + $0x998] sm:$0xff]
  %v343 = vld [vmem:[%s0 + $0x9a0] sm:$0xff]
  %v344 = vld [vmem:[%s0 + $0x9a8] sm:$0xff]
  %v345 = vld [vmem:[%s0 + $0x9b0] sm:$0xff]
  %v346 = vld [vmem:[%s0 + $0x9b8] sm:$0xff]
  %v347 = vld [vmem:[%s0 + $0x9c0] sm:$0xff]
  %v348 = vld [vmem:[%s0 + $0x9c8] sm:$0xff]
  %v349 = vld [vmem:[%s0 + $0x9d0] sm:$0xff]
  %v350 = vld [vmem:[%s0 + $0x9d8] sm:$0xff]
  %v351 = vld [vmem:[%s0 + $0x9e0] sm:$0xff]
  %v352 = vld [vmem:[%s0 + $0x9e8] sm:$0xff]
  %v353 = vld [vmem:[%s0 + $0x9f0] sm:$0xff]
  %v354 = vld [vmem:[%s0 + $0x9f8] sm:$0xff]
  %v355 = vld [vmem:[%s0 + $0xa00] sm:$0xff]
  %v356 = vld [vmem:[%s0 + $0xa08] sm:$0xff]
  %v357 = vld [vmem:[%s0 + $0xa10] sm:$0xff]
  %v358 = vld [vmem:[%s0 + $0xa18] sm:$0xff]
  %v359 = vld [vmem:[%s0 + $0xa20] sm:$0xff]
  %v360 = vld [vmem:[%s0 + $0xa28] sm:$0xff]
  %v361 = vld [vmem:[%s0 + $0xa30] sm:$0xff]
  %v362 = vld [vmem:[%s0 + $0xa38] sm:$0xff]
  %v363 = vld [vmem:[%s0 + $0xa40] sm:$0xff]
  %v364 = vld [vmem:[%s0 + $0xa48] sm:$0xff]
  %v365 = vld [vmem:[%s0 + $0xa50] sm:$0xff]
  %v366 = vld [vmem:[%s0 + $0xa58] sm:$0xff]
  %v367 = vld [vmem:[%s0 + $0xa60] sm:$0xff]
  %v368 = vld [vmem:[%s0 + $0xa68] sm:$0xff]
  %v369 = vld [vmem:[%s0 + $0xa70] sm:$0xff]
  %v370 = vld [vmem:[%s0 + $0xa78] sm:$0xff]
  %v371 = vld [vmem:[%s0 + $0xa80] sm:$0xff]
  %v372 = vld [vmem:[%s0 + $0xa88] sm:$0xff]
  %v373 = vld [vmem:[%s0 + $0xa90] sm:$0xff]
  %v374 = vld [vmem:[%s0 + $0xa98] sm:$0xff]
  %v375 = vld [vmem:[%s0 + $0xaa0] sm:$0xff]
  %v376 = vld [vmem:[%s0 + $0xaa8] sm:$0xff]
  %v377 = vld [vmem:[%s0 + $0xab0] sm:$0xff]
  %v378 = vld [vmem:[%s0 + $0xab8] sm:$0xff]
  %v379 = vld [vmem:[%s0 + $0xac0] sm:$0xff]
  %v380 = vld [vmem:[%s0 + $0xac8] sm:$0xff]
  %v381 = vld [vmem:[%s0 + $0xad0] sm:$0xff]
  %v382 = vld [vmem:[%s0 + $0xad8] sm:$0xff]
  %v383 = vld [vmem:[%s0 + $0xae0] sm:$0xff]
  %v384 = vld [vmem:[%s0 + $0xae8] sm:$0xff]
  %v385 = vld [vmem:[%s0 + $0xaf0] sm:$0xff]
  %v386 = vld [vmem:[%s0 + $0xaf8] sm:$0xff]
  %v387 = vld [vmem:[%s0 + $0xb00] sm:$0xff]
  %v388 = vld [vmem:[%s0 + $0xb08] sm:$0xff]
  %v389 = vld [vmem:[%s0 + $0xb10] sm:$0xff]
  %v390 = vld [vmem:[%s0 + $0xb18] sm:$0xff]
  %v391 = vld [vmem:[%s0 + $0xb20] sm:$0xff]
  %v392 = vld [vmem:[%s0 + $0xb28] sm:$0xff]
  %v393 = vld [vmem:[%s0 + $0xb30] sm:$0xff]
  %v394 = vld [vmem:[%s0 + $0xb38] sm:$0xff]
  %v395 = vld [vmem:[%s0 + $0xb40] sm:$0xff]
  %v396 = vld [vmem:[%s0 + $0xb48] sm:$0xff]
  %v397 = vld [vmem:[%s0 + $0xb50] sm:$0xff]
  %v398 = vld [vmem:[%s0 + $0xb58] sm:$0xff]
  %v399 = vld [vmem:[%s0 + $0xb60] sm:$0xff]
  %v400 = vld [vmem:[%s0 + $0xb68] sm:$0xff]
  %v401 = vld [vmem:[%s0 + $0xb70] sm:$0xff]
  %v402 = vld [vmem:[%s0 + $0xb78] sm:$0xff]
  %v403 = vld [vmem:[%s0 + $0xb80] sm:$0xff]
  %v404 = vld [vmem:[%s0 + $0xb88] sm:$0xff]
  %v405 = vld [vmem:[%s0 + $0xb90] sm:$0xff]
  %v406 = vld [vmem:[%s0 + $0xb98] sm:$0xff]
  %v407 = vld [vmem:[%s0 + $0xba0] sm:$0xff]
  %v408 = vld [vmem:[%s0 + $0xba8] sm:$0xff]
  %v409 = vld [vmem:[%s0 + $0xbb0] sm:$0xff]
  %v410 = vld [vmem:[%s0 + $0xbb8] sm:$0xff]
  %v411 = vld [vmem:[%s0 + $0xbc0] sm:$0xff]
  %v412 = vld [vmem:[%s0 + $0xbc8] sm:$0xff]
  %v413 = vld [vmem:[%s0 + $0xbd0] sm:$0xff]
  %v414 = vld [vmem:[%s0 + $0xbd8] sm:$0xff]
  %v415 = vld [vmem:[%s0 + $0xbe0] sm:$0xff]
  %v416 = vld [vmem:[%s0 + $0xbe8] sm:$0xff]
  %v417 = vld [vmem:[%s0 + $0xbf0] sm:$0xff]
  %v418 = vld [vmem:[%s0 + $0xbf8] sm:$0xff]
  %v419 = vld [vmem:[%s0 + $0xc00] sm:$0xff]
  %v420 = vld [vmem:[%s0 + $0xc08] sm:$0xff]
  %v421 = vld [vmem:[%s0 + $0xc10] sm:$0xff]
  %v422 = vld [vmem:[%s0 + $0xc18] sm:$0xff]
  %v423 = vld [vmem:[%s0 + $0xc20] sm:$0xff]
  %v424 = vld [vmem:[%s0 + $0xc28] sm:$0xff]
  %v425 = vld [vmem:[%s0 + $0xc30] sm:$0xff]
  %v426 = vld [vmem:[%s0 + $0xc38] sm:$0xff]
  %v427 = vld [vmem:[%s0 + $0xc40] sm:$0xff]
  %v428 = vld [vmem:[%s0 + $0xc48] sm:$0xff]
  %v429 = vld [vmem:[%s0 + $0xc50] sm:$0xff]
  %v430 = vld [vmem:[%s0 + $0xc58] sm:$0xff]
  %v431 = vld [vmem:[%s0 + $0xc60] sm:$0xff]
  %v432 = vld [vmem:[%s0 + $0xc68] sm:$0xff]
  %v433 = vld [vmem:[%s0 + $0xc70] sm:$0xff]
  %v434 = vld [vmem:[%s0 + $0xc78] sm:$0xff]
  %v435 = vld [vmem:[%s0 + $0xc80] sm:$0xff]
  %v436 = vld [vmem:[%s0 + $0xc88] sm:$0xff]
  %v437 = vld [vmem:[%s0 + $0xc90] sm:$0xff]
  %v438 = vld [vmem:[%s0 + $0xc98] sm:$0xff]
  %v439 = vld [vmem:[%s0 + $0xca0] sm:$0xff]
  %v440 = vld [vmem:[%s0 + $0xca8] sm:$0xff]
  %v441 = vld [vmem:[%s0 + $0xcb0] sm:$0xff]
  %v442 = vld [vmem:[%s0 + $0xcb8] sm:$0xff]
  %v443 = vld [vmem:[%s0 + $0xcc0] sm:$0xff]
  %v444 = vld [vmem:[%s0 + $0xcc8] sm:$0xff]
  %v445 = vld [vmem:[%s0 + $0xcd0] sm:$0xff]
  %v446 = vld [vmem:[%s0 + $0xcd8] sm:$0xff]
  %v447 = vld [vmem:[%s0 + $0xce0] sm:$0xff]
  %v448 = vld [vmem:[%s0 + $0xce8] sm:$0xff]
  %v449 = vld [vmem:[%s0 + $0xcf0] sm:$0xff]
  %v450 = vld [vmem:[%s0 + $0xcf8] sm:$0xff]
  %v451 = vld [vmem:[%s0 + $0xd00] sm:$0xff]
  %v452 = vld [vmem:[%s0 + $0xd08] sm:$0xff]
  %v453 = vld [vmem:[%s0 + $0xd10] sm:$0xff]
  %v454 = vld [vmem:[%s0 + $0xd18] sm:$0xff]
  %v455 = vld [vmem:[%s0 + $0xd20] sm:$0xff]
  %v456 = vld [vmem:[%s0 + $0xd28] sm:$0xff]
  %v457 = vld [vmem:[%s0 + $0xd30] sm:$0xff]
  %v458 = vld [vmem:[%s0 + $0xd38] sm:$0xff]
  %v459 = vld [vmem:[%s0 + $0xd40] sm:$0xff]
  %v460 = vld [vmem:[%s0 + $0xd48] sm:$0xff]
  %v461 = vld [vmem:[%s0 + $0xd50] sm:$0xff]
  %v462 = vld [vmem:[%s0 + $0xd58] sm:$0xff]
  %v463 = vld [vmem:[%s0 + $0xd60] sm:$0xff]
  %v464 = vld [vmem:[%s0 + $0xd68] sm:$0xff]
  %v465 = vld [vmem:[%s0 + $0xd70] sm:$0xff]
  %v466 = vld [vmem:[%s0 + $0xd78] sm:$0xff]
  %v467 = vld [vmem:[%s0 + $0xd80] sm:$0xff]
  %v468 = vld [vmem:[%s0 + $0xd88] sm:$0xff]
  %v469 = vld [vmem:[%s0 + $0xd90] sm:$0xff]
  %v470 = vld [vmem:[%s0 + $0xd98] sm:$0xff]
  %v471 = vld [vmem:[%s0 + $0xda0] sm:$0xff]
  %v472 = vld [vmem:[%s0 + $0xda8] sm:$0xff]
  %v473 = vld [vmem:[%s0 + $0xdb0] sm:$0xff]
  %v474 = vld [vmem:[%s0 + $0xdb8] sm:$0xff]
  %v475 = vld [vmem:[%s0 + $0xdc0] sm:$0xff]
  %v476 = vld [vmem:[%s0 + $0xdc8] sm:$0xff]
  %v477 = vld [vmem:[%s0 + $0xdd0] sm:$0xff]
  %v478 = vld [vmem:[%s0 + $0xdd8] sm:$0xff]
  %v479 = vld [vmem:[%s0 + $0xde0] sm:$0xff]
  %v480 = vld [vmem:[%s0 + $0xde8] sm:$0xff]
  %v481 = vld [vmem:[%s0 + $0xdf0] sm:$0xff]
  %v482 = vld [vmem:[%s0 + $0xdf8] sm:$0xff]
  %v483 = vld [vmem:[%s0 + $0xe00] sm:$0xff]
  %v484 = vld [vmem:[%s0 + $0xe08] sm:$0xff]
  %v485 = vld [vmem:[%s0 + $0xe10] sm:$0xff]
  %v486 = vld [vmem:[%s0 + $0xe18] sm:$0xff]
  %v487 = vld [vmem:[%s0 + $0xe20] sm:$0xff]
  %v488 = vld [vmem:[%s0 + $0xe28] sm:$0xff]
  %v489 = vld [vmem:[%s0 + $0xe30] sm:$0xff]
  %v490 = vld [vmem:[%s0 + $0xe38] sm:$0xff]
  %v491 = vld [vmem:[%s0 + $0xe40] sm:$0xff]
  %v492 = vld [vmem:[%s0 + $0xe48] sm:$0xff]
  %v493 = vld [vmem:[%s0 + $0xe50] sm:$0xff]
  %v494 = vld [vmem:[%s0 + $0xe58] sm:$0xff]
  %v495 = vld [vmem:[%s0 + $0xe60] sm:$0xff]
  %v496 = vld [vmem:[%s0 + $0xe68] sm:$0xff]
  %v497 = vld [vmem:[%s0 + $0xe70] sm:$0xff]
  %v498 = vld [vmem:[%s0 + $0xe78] sm:$0xff]
  %v499 = vld [vmem:[%s0 + $0xe80] sm:$0xff]
  %v500 = vld [vmem:[%s0 + $0xe88] sm:$0xff]
  %v501 = vld [vmem:[%s0 + $0xe90] sm:$0xff]
  %v502 = vld [vmem:[%s0 + $0xe98] sm:$0xff]
  %v503 = vld [vmem:[%s0 + $0xea0] sm:$0xff]
  %v504 = vld [vmem:[%s0 + $0xea8] sm:$0xff]
  %v505 = vld [vmem:[%s0 + $0xeb0] sm:$0xff]
  %v506 = vld [vmem:[%s0 + $0xeb8] sm:$0xff]
  %v507 = vld [vmem:[%s0 + $0xec0] sm:$0xff]
  %v508 = vld [vmem:[%s0 + $0xec8] sm:$0xff]
  %v509 = vld [vmem:[%s0 + $0xed0] sm:$0xff]
  %v510 = vld [vmem:[%s0 + $0xed8] sm:$0xff]
  %v511 = vld [vmem:[%s0 + $0xee0] sm:$0xff]
  %v512 = vld [vmem:[%s0 + $0xee8] sm:$0xff]
  %v513 = vld [vmem:[%s0 + $0xef0] sm:$0xff]
  %v514 = vld [vmem:[%s0 + $0xef8] sm:$0xff]
  %v515 = vld [vmem:[%s0 + $0xf00] sm:$0xff]
  %v516 = vld [vmem:[%s0 + $0xf08] sm:$0xff]
  %v517 = vld [vmem:[%s0 + $0xf10] sm:$0xff]
  %v518 = vld [vmem:[%s0 + $0xf18] sm:$0xff]
  %v519 = vld [vmem:[%s0 + $0xf20] sm:$0xff]
  %v520 = vld [vmem:[%s0 + $0xf28] sm:$0xff]
  %v521 = vld [vmem:[%s0 + $0xf30] sm:$0xff]
  %v522 = vld [vmem:[%s0 + $0xf38] sm:$0xff]
  %v523 = vld [vmem:[%s0 + $0xf40] sm:$0xff]
  %v524 = vld [vmem:[%s0 + $0xf48] sm:$0xff]
  %v525 = vld [vmem:[%s0 + $0xf50] sm:$0xff]
  %v526 = vld [vmem:[%s0 + $0xf58] sm:$0xff]
  %v527 = vld [vmem:[%s0 + $0xf60] sm:$0xff]
  %v528 = vld [vmem:[%s0 + $0xf68] sm:$0xff]
  %v529 = vld [vmem:[%s0 + $0xf70] sm:$0xff]
  %v530 = vld [vmem:[%s0 + $0xf78] sm:$0xff]
  %v531 = vld [vmem:[%s0 + $0xf80] sm:$0xff]
  %v532 = vld [vmem:[%s0 + $0xf88] sm:$0xff]
  %v533 = vld [vmem:[%s0 + $0xf90] sm:$0xff]
  %v534 = vld [vmem:[%s0 + $0xf98] sm:$0xff]
  %v535 = vld [vmem:[%s0 + $0xfa0] sm:$0xff]
  %v536 = vld [vmem:[%s0 + $0xfa8] sm:$0xff]
  %v537 = vld [vmem:[%s0 + $0xfb0] sm:$0xff]
  %v538 = vld [vmem:[%s0 + $0xfb8] sm:$0xff]
  %v539 = vld [vmem:[%s0 + $0xfc0] sm:$0xff]
  %v540 = vld [vmem:[%s0 + $0xfc8] sm:$0xff]
  %v541 = vld [vmem:[%s0 + $0xfd0] sm:$0xff]
  %v542 = vld [vmem:[%s0 + $0xfd8] sm:$0xff]
  %v543 = vld [vmem:[%s0 + $0xfe0] sm:$0xff]
  %v544 = vld [vmem:[%s0 + $0xfe8] sm:$0xff]
  %v545 = vld [vmem:[%s0 + $0xff0] sm:$0xff]
  %v546 = vld [vmem:[%s0 + $0xff8] sm:$0xff]
  %v547 = vld [vmem:[%s0 + $0x1000] sm:$0xff]
  %v548 = vld [vmem:[%s0 + $0x1008] sm:$0xff]
  %v549 = vld [vmem:[%s0 + $0x1010] sm:$0xff]
  %v550 = vld [vmem:[%s0 + $0x1018] sm:$0xff]
  %v551 = vld [vmem:[%s0 + $0x1020] sm:$0xff]
  %v552 = vld [vmem:[%s0 + $0x1028] sm:$0xff]
  %v553 = vld [vmem:[%s0 + $0x1030] sm:$0xff]
  %v554 = vld [vmem:[%s0 + $0x1038] sm:$0xff]
  %v555 = vld [vmem:[%s0 + $0x1040] sm:$0xff]
  %v556 = vld [vmem:[%s0 + $0x1048] sm:$0xff]
  %v557 = vld [vmem:[%s0 + $0x1050] sm:$0xff]
  %v558 = vld [vmem:[%s0 + $0x1058] sm:$0xff]
  %v559 = vld [vmem:[%s0 + $0x1060] sm:$0xff]
  %v560 = vld [vmem:[%s0 + $0x1068] sm:$0xff]
  %v561 = vld [vmem:[%s0 + $0x1070] sm:$0xff]
  %v562 = vld [vmem:[%s0 + $0x1078] sm:$0xff]
  %v563 = vld [vmem:[%s0 + $0x1080] sm:$0xff]
  %v564 = vld [vmem:[%s0 + $0x1088] sm:$0xff]
  %v565 = vld [vmem:[%s0 + $0x1090] sm:$0xff]
  %v566 = vld [vmem:[%s0 + $0x1098] sm:$0xff]
  %v567 = vld [vmem:[%s0 + $0x10a0] sm:$0xff]
  %v568 = vld [vmem:[%s0 + $0x10a8] sm:$0xff]
  %v569 = vld [vmem:[%s0 + $0x10b0] sm:$0xff]
  %v570 = vld [vmem:[%s0 + $0x10b8] sm:$0xff]
  %v571 = vld [vmem:[%s0 + $0x10c0] sm:$0xff]
  %v572 = vld [vmem:[%s0 + $0x10c8] sm:$0xff]
  %v573 = vld [vmem:[%s0 + $0x10d0] sm:$0xff]
  %v574 = vld [vmem:[%s0 + $0x10d8] sm:$0xff]
  %v575 = vld [vmem:[%s0 + $0x10e0] sm:$0xff]
  %v576 = vld [vmem:[%s0 + $0x10e8] sm:$0xff]
  %v577 = vld [vmem:[%s0 + $0x10f0] sm:$0xff]
  %v578 = vld [vmem:[%s0 + $0x10f8] sm:$0xff]
  %v579 = vld [vmem:[%s0 + $0x1100] sm:$0xff]
  %v580 = vld [vmem:[%s0 + $0x1108] sm:$0xff]
  %v581 = vld [vmem:[%s0 + $0x1110] sm:$0xff]
  %v582 = vld [vmem:[%s0 + $0x1118] sm:$0xff]
  %v583 = vld [vmem:[%s0 + $0x1120] sm:$0xff]
  %v584 = vld [vmem:[%s0 + $0x1128] sm:$0xff]
  %v585 = vld [vmem:[%s0 + $0x1130] sm:$0xff]
  %v586 = vld [vmem:[%s0 + $0x1138] sm:$0xff]
  %v587 = vld [vmem:[%s0 + $0x1140] sm:$0xff]
  %v588 = vld [vmem:[%s0 + $0x1148] sm:$0xff]
  %v589 = vld [vmem:[%s0 + $0x1150] sm:$0xff]
  %v590 = vld [vmem:[%s0 + $0x1158] sm:$0xff]
  %v591 = vld [vmem:[%s0 + $0x1160] sm:$0xff]
  %v592 = vld [vmem:[%s0 + $0x1168] sm:$0xff]
  %v593 = vld [vmem:[%s0 + $0x1170] sm:$0xff]
  %v594 = vld [vmem:[%s0 + $0x1178] sm:$0xff]
  %v595 = vld [vmem:[%s0 + $0x1180] sm:$0xff]
  %v596 = vld [vmem:[%s0 + $0x1188] sm:$0xff]
  %v597 = vld [vmem:[%s0 + $0x1190] sm:$0xff]
  %v598 = vld [vmem:[%s0 + $0x1198] sm:$0xff]
  %v599 = vld [vmem:[%s0 + $0x11a0] sm:$0xff]
  %v600 = vld [vmem:[%s0 + $0x11a8] sm:$0xff]
  %v601 = vld [vmem:[%s0 + $0x11b0] sm:$0xff]
  %v602 = vld [vmem:[%s0 + $0x11b8] sm:$0xff]
  %v603 = vld [vmem:[%s0 + $0x11c0] sm:$0xff]
  %v604 = vld [vmem:[%s0 + $0x11c8] sm:$0xff]
  %v605 = vld [vmem:[%s0 + $0x11d0] sm:$0xff]
  %v606 = vld [vmem:[%s0 + $0x11d8] sm:$0xff]
  %v607 = vld [vmem:[%s0 + $0x11e0] sm:$0xff]
  %v608 = vld [vmem:[%s0 + $0x11e8] sm:$0xff]
  %v609 = vld [vmem:[%s0 + $0x11f0] sm:$0xff]
  %v610 = vld [vmem:[%s0 + $0x11f8] sm:$0xff]
  %v611 = vld [vmem:[%s0 + $0x1200] sm:$0xff]
  %v612 = vld [vmem:[%s0 + $0x1208] sm:$0xff]
  %v613 = vld [vmem:[%s0 + $0x1210] sm:$0xff]
  %v614 = vld [vmem:[%s0 + $0x1218] sm:$0xff]
  %v615 = vld [vmem:[%s0 + $0x1220] sm:$0xff]
  %v616 = vld [vmem:[%s0 + $0x1228] sm:$0xff]
  %v617 = vld [vmem:[%s0 + $0x1230] sm:$0xff]
  %v618 = vld [vmem:[%s0 + $0x1238] sm:$0xff]
  %v619 = vld [vmem:[%s0 + $0x1240] sm:$0xff]
  %v620 = vld [vmem:[%s0 + $0x1248] sm:$0xff]
  %v621 = vld [vmem:[%s0 + $0x1250] sm:$0xff]
  %v622 = vld [vmem:[%s0 + $0x1258] sm:$0xff]
  %v623 = vld [vmem:[%s0 + $0x1260] sm:$0xff]
  %v624 = vld [vmem:[%s0 + $0x1268] sm:$0xff]
  %v625 = vld [vmem:[%s0 + $0x1270] sm:$0xff]
  %v626 = vld [vmem:[%s0 + $0x1278] sm:$0xff]
  %v627 = vld [vmem:[%s0 + $0x1280] sm:$0xff]
  %v628 = vld [vmem:[%s0 + $0x1288] sm:$0xff]
  %v629 = vld [vmem:[%s0 + $0x1290] sm:$0xff]
  %v630 = vld [vmem:[%s0 + $0x1298] sm:$0xff]
  %v631 = vld [vmem:[%s0 + $0x12a0] sm:$0xff]
  %v632 = vld [vmem:[%s0 + $0x12a8] sm:$0xff]
  %v633 = vld [vmem:[%s0 + $0x12b0] sm:$0xff]
  %v634 = vld [vmem:[%s0 + $0x12b8] sm:$0xff]
  %v635 = vld [vmem:[%s0 + $0x12c0] sm:$0xff]
  %v636 = vld [vmem:[%s0 + $0x12c8] sm:$0xff]
  %v637 = vld [vmem:[%s0 + $0x12d0] sm:$0xff]
  %v638 = vld [vmem:[%s0 + $0x12d8] sm:$0xff]
  %v639 = vld [vmem:[%s0 + $0x12e0] sm:$0xff]
  %v640 = vld [vmem:[%s0 + $0x12e8] sm:$0xff]
  %v641 = vld [vmem:[%s0 + $0x12f0] sm:$0xff]
  %v642 = vld [vmem:[%s0 + $0x12f8] sm:$0xff]
  %v643 = vld [vmem:[%s0 + $0x1300] sm:$0xff]
  %v644 = vld [vmem:[%s0 + $0x1308] sm:$0xff]
  %v645 = vld [vmem:[%s0 + $0x1310] sm:$0xff]
  %v646 = vld [vmem:[%s0 + $0x1318] sm:$0xff]
  %v647 = vld [vmem:[%s0 + $0x1320] sm:$0xff]
  %v648 = vld [vmem:[%s0 + $0x1328] sm:$0xff]
  %v649 = vld [vmem:[%s0 + $0x1330] sm:$0xff]
  %v650 = vld [vmem:[%s0 + $0x1338] sm:$0xff]
  %v651 = vld [vmem:[%s0 + $0x1340] sm:$0xff]
  %v652 = vld [vmem:[%s0 + $0x1348] sm:$0xff]
  %v653 = vld [vmem:[%s0 + $0x1350] sm:$0xff]
  %v654 = vld [vmem:[%s0 + $0x1358] sm:$0xff]
  %v655 = vld [vmem:[%s0 + $0x1360] sm:$0xff]
  %v656 = vld [vmem:[%s0 + $0x1368] sm:$0xff]
  %v657 = vld [vmem:[%s0 + $0x1370] sm:$0xff]
  %v658 = vld [vmem:[%s0 + $0x1378] sm:$0xff]
  %v659 = vld [vmem:[%s0 + $0x1380] sm:$0xff]
  %v660 = vld [vmem:[%s0 + $0x1388] sm:$0xff]
  %v661 = vld [vmem:[%s0 + $0x1390] sm:$0xff]
  %v662 = vld [vmem:[%s0 + $0x1398] sm:$0xff]
  %v663 = vld [vmem:[%s0 + $0x13a0] sm:$0xff]
  %v664 = vld [vmem:[%s0 + $0x13a8] sm:$0xff]
  %v665 = vld [vmem:[%s0 + $0x13b0] sm:$0xff]
  %v666 = vld [vmem:[%s0 + $0x13b8] sm:$0xff]
  %v667 = vld [vmem:[%s0 + $0x13c0] sm:$0xff]
  %v668 = vld [vmem:[%s0 + $0x13c8] sm:$0xff]
  %v669 = vld [vmem:[%s0 + $0x13d0] sm:$0xff]
  %v670 = vld [vmem:[%s0 + $0x13d8] sm:$0xff]
  %v671 = vld [vmem:[%s0 + $0x13e0] sm:$0xff]
  %v672 = vld [vmem:[%s0 + $0x13e8] sm:$0xff]
  %v673 = vld [vmem:[%s0 + $0x13f0] sm:$0xff]
  %v674 = vld [vmem:[%s0 + $0x13f8] sm:$0xff]
  %v675 = vld [vmem:[%s0 + $0x1400] sm:$0xff]
  %v676 = vld [vmem:[%s0 + $0x1408] sm:$0xff]
  %v677 = vld [vmem:[%s0 + $0x1410] sm:$0xff]
  %v678 = vld [vmem:[%s0 + $0x1418] sm:$0xff]
  %v679 = vld [vmem:[%s0 + $0x1420] sm:$0xff]
  %v680 = vld [vmem:[%s0 + $0x1428] sm:$0xff]
  %v681 = vld [vmem:[%s0 + $0x1430] sm:$0xff]
  %v682 = vld [vmem:[%s0 + $0x1438] sm:$0xff]
  %v683 = vld [vmem:[%s0 + $0x1440] sm:$0xff]
  %v684 = vld [vmem:[%s0 + $0x1448] sm:$0xff]
  %v685 = vld [vmem:[%s0 + $0x1450] sm:$0xff]
  %v686 = vld [vmem:[%s0 + $0x1458] sm:$0xff]
  %v687 = vld [vmem:[%s0 + $0x1460] sm:$0xff]
  %v688 = vld [vmem:[%s0 + $0x1468] sm:$0xff]
  %v689 = vld [vmem:[%s0 + $0x1470] sm:$0xff]
  %v690 = vld [vmem:[%s0 + $0x1478] sm:$0xff]
  %v691 = vld [vmem:[%s0 + $0x1480] sm:$0xff]
  %v692 = vld [vmem:[%s0 + $0x1488] sm:$0xff]
  %v693 = vld [vmem:[%s0 + $0x1490] sm:$0xff]
  %v694 = vld [vmem:[%s0 + $0x1498] sm:$0xff]
  %v695 = vld [vmem:[%s0 + $0x14a0] sm:$0xff]
  %v696 = vld [vmem:[%s0 + $0x14a8] sm:$0xff]
  %v697 = vld [vmem:[%s0 + $0x14b0] sm:$0xff]
  %v698 = vld [vmem:[%s0 + $0x14b8] sm:$0xff]
  %v699 = vld [vmem:[%s0 + $0x14c0] sm:$0xff]
  %v700 = vld [vmem:[%s0 + $0x14c8] sm:$0xff]
  %v701 = vld [vmem:[%s0 + $0x14d0] sm:$0xff]
  %v702 = vld [vmem:[%s0 + $0x14d8] sm:$0xff]
  %v703 = vld [vmem:[%s0 + $0x14e0] sm:$0xff]
  %v704 = vld [vmem:[%s0 + $0x14e8] sm:$0xff]
  %v705 = vld [vmem:[%s0 + $0x14f0] sm:$0xff]
  %v706 = vld [vmem:[%s0 + $0x14f8] sm:$0xff]
  %v707 = vld [vmem:[%s0 + $0x1500] sm:$0xff]
  %v708 = vld [vmem:[%s0 + $0x1508] sm:$0xff]
  %v709 = vld [vmem:[%s0 + $0x1510] sm:$0xff]
  %v710 = vld [vmem:[%s0 + $0x1518] sm:$0xff]
  %v711 = vld [vmem:[%s0 + $0x1520] sm:$0xff]
  %v712 = vld [vmem:[%s0 + $0x1528] sm:$0xff]
  %v713 = vld [vmem:[%s0 + $0x1530] sm:$0xff]
  %v714 = vld [vmem:[%s0 + $0x1538] sm:$0xff]
  %v715 = vld [vmem:[%s0 + $0x1540] sm:$0xff]
  %v716 = vld [vmem:[%s0 + $0x1548] sm:$0xff]
  %v717 = vld [vmem:[%s0 + $0x1550] sm:$0xff]
  %v718 = vld [vmem:[%s0 + $0x1558] sm:$0xff]
  %v719 = vld [vmem:[%s0 + $0x1560] sm:$0xff]
  %v720 = vld [vmem:[%s0 + $0x1568] sm:$0xff]
  %v721 = vld [vmem:[%s0 + $0x1570] sm:$0xff]
  %v722 = vld [vmem:[%s0 + $0x1578] sm:$0xff]
  %v723 = vld [vmem:[%s0 + $0x1580] sm:$0xff]
  %v724 = vld [vmem:[%s0 + $0x1588] sm:$0xff]
  %v725 = vld [vmem:[%s0 + $0x1590] sm:$0xff]
  %v726 = vld [vmem:[%s0 + $0x1598] sm:$0xff]
  %v727 = vld [vmem:[%s0 + $0x15a0] sm:$0xff]
  %v728 = vld [vmem:[%s0 + $0x15a8] sm:$0xff]
  %v729 = vld [vmem:[%s0 + $0x15b0] sm:$0xff]
  %v730 = vld [vmem:[%s0 + $0x15b8] sm:$0xff]
  %v731 = vld [vmem:[%s0 + $0x15c0] sm:$0xff]
  %v732 = vld [vmem:[%s0 + $0x15c8] sm:$0xff]
  %v733 = vld [vmem:[%s0 + $0x15d0] sm:$0xff]
  %v734 = vld [vmem:[%s0 + $0x15d8] sm:$0xff]
  %v735 = vld [vmem:[%s0 + $0x15e0] sm:$0xff]
  %v736 = vld [vmem:[%s0 + $0x15e8] sm:$0xff]
  %v737 = vld [vmem:[%s0 + $0x15f0] sm:$0xff]
  %v738 = vld [vmem:[%s0 + $0x15f8] sm:$0xff]
  %v739 = vld [vmem:[%s0 + $0x1600] sm:$0xff]
  %v740 = vld [vmem:[%s0 + $0x1608] sm:$0xff]
  %v741 = vld [vmem:[%s0 + $0x1610] sm:$0xff]
  %v742 = vld [vmem:[%s0 + $0x1618] sm:$0xff]
  %v743 = vld [vmem:[%s0 + $0x1620] sm:$0xff]
  %v744 = vld [vmem:[%s0 + $0x1628] sm:$0xff]
  %v745 = vld [vmem:[%s0 + $0x1630] sm:$0xff]
  %v746 = vld [vmem:[%s0 + $0x1638] sm:$0xff]
  %v747 = vld [vmem:[%s0 + $0x1640] sm:$0xff]
  %v748 = vld [vmem:[%s0 + $0x1648] sm:$0xff]
  %v749 = vld [vmem:[%s0 + $0x1650] sm:$0xff]
  %v750 = vld [vmem:[%s0 + $0x1658] sm:$0xff]
  %v751 = vld [vmem:[%s0 + $0x1660] sm:$0xff]
  %v752 = vld [vmem:[%s0 + $0x1668] sm:$0xff]
  %v753 = vld [vmem:[%s0 + $0x1670] sm:$0xff]
  %v754 = vld [vmem:[%s0 + $0x1678] sm:$0xff]
  %v755 = vld [vmem:[%s0 + $0x1680] sm:$0xff]
  %v756 = vld [vmem:[%s0 + $0x1688] sm:$0xff]
  %v757 = vld [vmem:[%s0 + $0x1690] sm:$0xff]
  %v758 = vld [vmem:[%s0 + $0x1698] sm:$0xff]
  %v759 = vld [vmem:[%s0 + $0x16a0] sm:$0xff]
  %v760 = vld [vmem:[%s0 + $0x16a8] sm:$0xff]
  %v761 = vld [vmem:[%s0 + $0x16b0] sm:$0xff]
  %v762 = vld [vmem:[%s0 + $0x16b8] sm:$0xff]
  %v763 = vld [vmem:[%s0 + $0x16c0] sm:$0xff]
  %v764 = vld [vmem:[%s0 + $0x16c8] sm:$0xff]
  %v765 = vld [vmem:[%s0 + $0x16d0] sm:$0xff]
  %v766 = vld [vmem:[%s0 + $0x16d8] sm:$0xff]
  %v767 = vld [vmem:[%s0 + $0x16e0] sm:$0xff]
  %v768 = vld [vmem:[%s0 + $0x16e8] sm:$0xff]
  %v769 = vld [vmem:[%s0 + $0x16f0] sm:$0xff]
  %v770 = vld [vmem:[%s0 + $0x16f8] sm:$0xff]
  %v771 = vld [vmem:[%s0 + $0x1700] sm:$0xff]
  %v772 = vld [vmem:[%s0 + $0x1708] sm:$0xff]
  %v773 = vld [vmem:[%s0 + $0x1710] sm:$0xff]
  %v774 = vld [vmem:[%s0 + $0x1718] sm:$0xff]
  %v775 = vld [vmem:[%s0 + $0x1720] sm:$0xff]
  %v776 = vld [vmem:[%s0 + $0x1728] sm:$0xff]
  %v777 = vld [vmem:[%s0 + $0x1730] sm:$0xff]
  %v778 = vld [vmem:[%s0 + $0x1738] sm:$0xff]
  %v779 = vld [vmem:[%s0 + $0x1740] sm:$0xff]
  %v780 = vld [vmem:[%s0 + $0x1748] sm:$0xff]
  %v781 = vld [vmem:[%s0 + $0x1750] sm:$0xff]
  %v782 = vld [vmem:[%s0 + $0x1758] sm:$0xff]
  %v783 = vld [vmem:[%s0 + $0x1760] sm:$0xff]
  %v784 = vld [vmem:[%s0 + $0x1768] sm:$0xff]
  %v785 = vld [vmem:[%s0 + $0x1770] sm:$0xff]
  %v786 = vld [vmem:[%s0 + $0x1778] sm:$0xff]
  %v787 = vld [vmem:[%s0 + $0x1780] sm:$0xff]
  %v788 = vld [vmem:[%s0 + $0x1788] sm:$0xff]
  %v789 = vld [vmem:[%s0 + $0x1790] sm:$0xff]
  %v790 = vld [vmem:[%s0 + $0x1798] sm:$0xff]
  %v791 = vld [vmem:[%s0 + $0x17a0] sm:$0xff]
  %v792 = vld [vmem:[%s0 + $0x17a8] sm:$0xff]
  %v793 = vld [vmem:[%s0 + $0x17b0] sm:$0xff]
  %v794 = vld [vmem:[%s0 + $0x17b8] sm:$0xff]
  %v795 = vld [vmem:[%s0 + $0x17c0] sm:$0xff]
  %v796 = vld [vmem:[%s0 + $0x17c8] sm:$0xff]
  %v797 = vld [vmem:[%s0 + $0x17d0] sm:$0xff]
  %v798 = vld [vmem:[%s0 + $0x17d8] sm:$0xff]
  %v799 = vld [vmem:[%s0 + $0x17e0] sm:$0xff]
  %v800 = vld [vmem:[%s0 + $0x17e8] sm:$0xff]
  %v801 = vld [vmem:[%s0 + $0x17f0] sm:$0xff]
  %v802 = vld [vmem:[%s0 + $0x17f8] sm:$0xff]
  %v803 = vld [vmem:[%s0 + $0x1800] sm:$0xff]
  %v804 = vld [vmem:[%s0 + $0x1808] sm:$0xff]
  %v805 = vld [vmem:[%s0 + $0x1810] sm:$0xff]
  %v806 = vld [vmem:[%s0 + $0x1818] sm:$0xff]
  %v807 = vld [vmem:[%s0 + $0x1820] sm:$0xff]
  %v808 = vld [vmem:[%s0 + $0x1828] sm:$0xff]
  %v809 = vld [vmem:[%s0 + $0x1830] sm:$0xff]
  %v810 = vld [vmem:[%s0 + $0x1838] sm:$0xff]
  %v811 = vld [vmem:[%s0 + $0x1840] sm:$0xff]
  %v812 = vld [vmem:[%s0 + $0x1848] sm:$0xff]
  %v813 = vld [vmem:[%s0 + $0x1850] sm:$0xff]
  %v814 = vld [vmem:[%s0 + $0x1858] sm:$0xff]
  %v815 = vld [vmem:[%s0 + $0x1860] sm:$0xff]
  %v816 = vld [vmem:[%s0 + $0x1868] sm:$0xff]
  %v817 = vld [vmem:[%s0 + $0x1870] sm:$0xff]
  %v818 = vld [vmem:[%s0 + $0x1878] sm:$0xff]
  %v819 = vld [vmem:[%s0 + $0x1880] sm:$0xff]
  %v820 = vld [vmem:[%s0 + $0x1888] sm:$0xff]
  %v821 = vld [vmem:[%s0 + $0x1890] sm:$0xff]
  %v822 = vld [vmem:[%s0 + $0x1898] sm:$0xff]
  %v823 = vld [vmem:[%s0 + $0x18a0] sm:$0xff]
  %v824 = vld [vmem:[%s0 + $0x18a8] sm:$0xff]
  %v825 = vld [vmem:[%s0 + $0x18b0] sm:$0xff]
  %v826 = vld [vmem:[%s0 + $0x18b8] sm:$0xff]
  %v827 = vld [vmem:[%s0 + $0x18c0] sm:$0xff]
  %v828 = vld [vmem:[%s0 + $0x18c8] sm:$0xff]
  %v829 = vld [vmem:[%s0 + $0x18d0] sm:$0xff]
  %v830 = vld [vmem:[%s0 + $0x18d8] sm:$0xff]
  %v831 = vld [vmem:[%s0 + $0x18e0] sm:$0xff]
  %v832 = vld [vmem:[%s0 + $0x18e8] sm:$0xff]
  %v833 = vld [vmem:[%s0 + $0x18f0] sm:$0xff]
  %v834 = vld [vmem:[%s0 + $0x18f8] sm:$0xff]
  %v835 = vld [vmem:[%s0 + $0x1900] sm:$0xff]
  %v836 = vld [vmem:[%s0 + $0x1908] sm:$0xff]
  %v837 = vld [vmem:[%s0 + $0x1910] sm:$0xff]
  %v838 = vld [vmem:[%s0 + $0x1918] sm:$0xff]
  %v839 = vld [vmem:[%s0 + $0x1920] sm:$0xff]
  %v840 = vld [vmem:[%s0 + $0x1928] sm:$0xff]
  %v841 = vld [vmem:[%s0 + $0x1930] sm:$0xff]
  %v842 = vld [vmem:[%s0 + $0x1938] sm:$0xff]
  %v843 = vld [vmem:[%s0 + $0x1940] sm:$0xff]
  %v844 = vld [vmem:[%s0 + $0x1948] sm:$0xff]
  %v845 = vld [vmem:[%s0 + $0x1950] sm:$0xff]
  %v846 = vld [vmem:[%s0 + $0x1958] sm:$0xff]
  %v847 = vld [vmem:[%s0 + $0x1960] sm:$0xff]
  %v848 = vld [vmem:[%s0 + $0x1968] sm:$0xff]
  %v849 = vld [vmem:[%s0 + $0x1970] sm:$0xff]
  %v850 = vld [vmem:[%s0 + $0x1978] sm:$0xff]
  %v851 = vld [vmem:[%s0 + $0x1980] sm:$0xff]
  %v852 = vld [vmem:[%s0 + $0x1988] sm:$0xff]
  %v853 = vld [vmem:[%s0 + $0x1990] sm:$0xff]
  %v854 = vld [vmem:[%s0 + $0x1998] sm:$0xff]
  %v855 = vld [vmem:[%s0 + $0x19a0] sm:$0xff]
  %v856 = vld [vmem:[%s0 + $0x19a8] sm:$0xff]
  %v857 = vld [vmem:[%s0 + $0x19b0] sm:$0xff]
  %v858 = vld [vmem:[%s0 + $0x19b8] sm:$0xff]
  %v859 = vld [vmem:[%s0 + $0x19c0] sm:$0xff]
  %v860 = vld [vmem:[%s0 + $0x19c8] sm:$0xff]
  %v861 = vld [vmem:[%s0 + $0x19d0] sm:$0xff]
  %v862 = vld [vmem:[%s0 + $0x19d8] sm:$0xff]
  %v863 = vld [vmem:[%s0 + $0x19e0] sm:$0xff]
  %v864 = vld [vmem:[%s0 + $0x19e8] sm:$0xff]
  %v865 = vld [vmem:[%s0 + $0x19f0] sm:$0xff]
  %v866 = vld [vmem:[%s0 + $0x19f8] sm:$0xff]
  %v867 = vld [vmem:[%s0 + $0x1a00] sm:$0xff]
  %v868 = vld [vmem:[%s0 + $0x1a08] sm:$0xff]
  %v869 = vld [vmem:[%s0 + $0x1a10] sm:$0xff]
  %v870 = vld [vmem:[%s0 + $0x1a18] sm:$0xff]
  %v871 = vld [vmem:[%s0 + $0x1a20] sm:$0xff]
  %v872 = vld [vmem:[%s0 + $0x1a28] sm:$0xff]
  %v873 = vld [vmem:[%s0 + $0x1a30] sm:$0xff]
  %v874 = vld [vmem:[%s0 + $0x1a38] sm:$0xff]
  %v875 = vld [vmem:[%s0 + $0x1a40] sm:$0xff]
  %v876 = vld [vmem:[%s0 + $0x1a48] sm:$0xff]
  %v877 = vld [vmem:[%s0 + $0x1a50] sm:$0xff]
  %v878 = vld [vmem:[%s0 + $0x1a58] sm:$0xff]
  %v879 = vld [vmem:[%s0 + $0x1a60] sm:$0xff]
  %v880 = vld [vmem:[%s0 + $0x1a68] sm:$0xff]
  %v881 = vld [vmem:[%s0 + $0x1a70] sm:$0xff]
  %v882 = vld [vmem:[%s0 + $0x1a78] sm:$0xff]
  %v883 = vld [vmem:[%s0 + $0x1a80] sm:$0xff]
  %v884 = vld [vmem:[%s0 + $0x1a88] sm:$0xff]
  %v885 = vld [vmem:[%s0 + $0x1a90] sm:$0xff]
  %v886 = vld [vmem:[%s0 + $0x1a98] sm:$0xff]
  %v887 = vld [vmem:[%s0 + $0x1aa0] sm:$0xff]
  %v888 = vld [vmem:[%s0 + $0x1aa8] sm:$0xff]
  %v889 = vld [vmem:[%s0 + $0x1ab0] sm:$0xff]
  %v890 = vld [vmem:[%s0 + $0x1ab8] sm:$0xff]
  %v891 = vld [vmem:[%s0 + $0x1ac0] sm:$0xff]
  %v892 = vld [vmem:[%s0 + $0x1ac8] sm:$0xff]
  %v893 = vld [vmem:[%s0 + $0x1ad0] sm:$0xff]
  %v894 = vld [vmem:[%s0 + $0x1ad8] sm:$0xff]
  %v895 = vld [vmem:[%s0 + $0x1ae0] sm:$0xff]
  %v896 = vld [vmem:[%s0 + $0x1ae8] sm:$0xff]
  %v897 = vld [vmem:[%s0 + $0x1af0] sm:$0xff]
  %v898 = vld [vmem:[%s0 + $0x1af8] sm:$0xff]
  %v899 = vld [vmem:[%s0 + $0x1b00] sm:$0xff]
  %v900 = vld [vmem:[%s0 + $0x1b08] sm:$0xff]
  %v901 = vld [vmem:[%s0 + $0x1b10] sm:$0xff]
  %v902 = vld [vmem:[%s0 + $0x1b18] sm:$0xff]
  %v903 = vld [vmem:[%s0 + $0x1b20] sm:$0xff]
  %v904 = vld [vmem:[%s0 + $0x1b28] sm:$0xff]
  %v905 = vld [vmem:[%s0 + $0x1b30] sm:$0xff]
  %v906 = vld [vmem:[%s0 + $0x1b38] sm:$0xff]
  %v907 = vld [vmem:[%s0 + $0x1b40] sm:$0xff]
  %v908 = vld [vmem:[%s0 + $0x1b48] sm:$0xff]
  %v909 = vld [vmem:[%s0 + $0x1b50] sm:$0xff]
  %v910 = vld [vmem:[%s0 + $0x1b58] sm:$0xff]
  %v911 = vld [vmem:[%s0 + $0x1b60] sm:$0xff]
  %v912 = vld [vmem:[%s0 + $0x1b68] sm:$0xff]
  %v913 = vld [vmem:[%s0 + $0x1b70] sm:$0xff]
  %v914 = vld [vmem:[%s0 + $0x1b78] sm:$0xff]
  %v915 = vld [vmem:[%s0 + $0x1b80] sm:$0xff]
  %v916 = vld [vmem:[%s0 + $0x1b88] sm:$0xff]
  %v917 = vld [vmem:[%s0 + $0x1b90] sm:$0xff]
  %v918 = vld [vmem:[%s0 + $0x1b98] sm:$0xff]
  %v919 = vld [vmem:[%s0 + $0x1ba0] sm:$0xff]
  %v920 = vld [vmem:[%s0 + $0x1ba8] sm:$0xff]
  %v921 = vld [vmem:[%s0 + $0x1bb0] sm:$0xff]
  %v922 = vld [vmem:[%s0 + $0x1bb8] sm:$0xff]
  %v923 = vld [vmem:[%s0 + $0x1bc0] sm:$0xff]
  %v924 = vld [vmem:[%s0 + $0x1bc8] sm:$0xff]
  %v925 = vld [vmem:[%s0 + $0x1bd0] sm:$0xff]
  %v926 = vld [vmem:[%s0 + $0x1bd8] sm:$0xff]
  %v927 = vld [vmem:[%s0 + $0x1be0] sm:$0xff]
  %v928 = vld [vmem:[%s0 + $0x1be8] sm:$0xff]
  %v929 = vld [vmem:[%s0 + $0x1bf0] sm:$0xff]
  %v930 = vld [vmem:[%s0 + $0x1bf8] sm:$0xff]
  %v931 = vld [vmem:[%s0 + $0x1c00] sm:$0xff]
  %v932 = vld [vmem:[%s0 + $0x1c08] sm:$0xff]
  %v933 = vld [vmem:[%s0 + $0x1c10] sm:$0xff]
  %v934 = vld [vmem:[%s0 + $0x1c18] sm:$0xff]
  %v935 = vld [vmem:[%s0 + $0x1c20] sm:$0xff]
  %v936 = vld [vmem:[%s0 + $0x1c28] sm:$0xff]
  %v937 = vld [vmem:[%s0 + $0x1c30] sm:$0xff]
  %v938 = vld [vmem:[%s0 + $0x1c38] sm:$0xff]
  %v939 = vld [vmem:[%s0 + $0x1c40] sm:$0xff]
  %v940 = vld [vmem:[%s0 + $0x1c48] sm:$0xff]
  %v941 = vld [vmem:[%s0 + $0x1c50] sm:$0xff]
  %v942 = vld [vmem:[%s0 + $0x1c58] sm:$0xff]
  %v943 = vld [vmem:[%s0 + $0x1c60] sm:$0xff]
  %v944 = vld [vmem:[%s0 + $0x1c68] sm:$0xff]
  %v945 = vld [vmem:[%s0 + $0x1c70] sm:$0xff]
  %v946 = vld [vmem:[%s0 + $0x1c78] sm:$0xff]
  %v947 = vld [vmem:[%s0 + $0x1c80] sm:$0xff]
  %v948 = vld [vmem:[%s0 + $0x1c88] sm:$0xff]
  %v949 = vld [vmem:[%s0 + $0x1c90] sm:$0xff]
  %v950 = vld [vmem:[%s0 + $0x1c98] sm:$0xff]
  %v951 = vld [vmem:[%s0 + $0x1ca0] sm:$0xff]
  %v952 = vld [vmem:[%s0 + $0x1ca8] sm:$0xff]
  %v953 = vld [vmem:[%s0 + $0x1cb0] sm:$0xff]
  %v954 = vld [vmem:[%s0 + $0x1cb8] sm:$0xff]
  %v955 = vld [vmem:[%s0 + $0x1cc0] sm:$0xff]
  %v956 = vld [vmem:[%s0 + $0x1cc8] sm:$0xff]
  %v957 = vld [vmem:[%s0 + $0x1cd0] sm:$0xff]
  %v958 = vld [vmem:[%s0 + $0x1cd8] sm:$0xff]
  %v959 = vld [vmem:[%s0 + $0x1ce0] sm:$0xff]
  %v960 = vld [vmem:[%s0 + $0x1ce8] sm:$0xff]
  %v961 = vld [vmem:[%s0 + $0x1cf0] sm:$0xff]
  %v962 = vld [vmem:[%s0 + $0x1cf8] sm:$0xff]
  %v963 = vld [vmem:[%s0 + $0x1d00] sm:$0xff]
  %v964 = vld [vmem:[%s0 + $0x1d08] sm:$0xff]
  %v965 = vld [vmem:[%s0 + $0x1d10] sm:$0xff]
  %v966 = vld [vmem:[%s0 + $0x1d18] sm:$0xff]
  %v967 = vld [vmem:[%s0 + $0x1d20] sm:$0xff]
  %v968 = vld [vmem:[%s0 + $0x1d28] sm:$0xff]
  %v969 = vld [vmem:[%s0 + $0x1d30] sm:$0xff]
  %v970 = vld [vmem:[%s0 + $0x1d38] sm:$0xff]
  %v971 = vld [vmem:[%s0 + $0x1d40] sm:$0xff]
  %v972 = vld [vmem:[%s0 + $0x1d48] sm:$0xff]
  %v973 = vld [vmem:[%s0 + $0x1d50] sm:$0xff]
  %v974 = vld [vmem:[%s0 + $0x1d58] sm:$0xff]
  %v975 = vld [vmem:[%s0 + $0x1d60] sm:$0xff]
  %v976 = vld [vmem:[%s0 + $0x1d68] sm:$0xff]
  %v977 = vld [vmem:[%s0 + $0x1d70] sm:$0xff]
  %v978 = vld [vmem:[%s0 + $0x1d78] sm:$0xff]
  %v979 = vld [vmem:[%s0 + $0x1d80] sm:$0xff]
  %v980 = vld [vmem:[%s0 + $0x1d88] sm:$0xff]
  %v981 = vld [vmem:[%s0 + $0x1d90] sm:$0xff]
  %v982 = vld [vmem:[%s0 + $0x1d98] sm:$0xff]
  %v983 = vld [vmem:[%s0 + $0x1da0] sm:$0xff]
  %v984 = vld [vmem:[%s0 + $0x1da8] sm:$0xff]
  %v985 = vld [vmem:[%s0 + $0x1db0] sm:$0xff]
  %v986 = vld [vmem:[%s0 + $0x1db8] sm:$0xff]
  %v987 = vld [vmem:[%s0 + $0x1dc0] sm:$0xff]
  %v988 = vld [vmem:[%s0 + $0x1dc8] sm:$0xff]
  %v989 = vld [vmem:[%s0 + $0x1dd0] sm:$0xff]
  %v990 = vld [vmem:[%s0 + $0x1dd8] sm:$0xff]
  %v991 = vld [vmem:[%s0 + $0x1de0] sm:$0xff]
  %v992 = vld [vmem:[%s0 + $0x1de8] sm:$0xff]
  %v993 = vld [vmem:[%s0 + $0x1df0] sm:$0xff]
  %v994 = vld [vmem:[%s0 + $0x1df8] sm:$0xff]
  %v995 = vld [vmem:[%s0 + $0x1e00] sm:$0xff]
  %v996 = vld [vmem:[%s0 + $0x1e08] sm:$0xff]
  %v997 = vld [vmem:[%s0 + $0x1e10] sm:$0xff]
  %v998 = vld [vmem:[%s0 + $0x1e18] sm:$0xff]
  %v999 = vld [vmem:[%s0 + $0x1e20] sm:$0xff]
  %v1000 = vld [vmem:[%s0 + $0x1e28] sm:$0xff]
  %v1001 = vld [vmem:[%s0 + $0x1e30] sm:$0xff]
  %v1002 = vld [vmem:[%s0 + $0x1e38] sm:$0xff]
  %v1003 = vld [vmem:[%s0 + $0x1e40] sm:$0xff]
  %v1004 = vld [vmem:[%s0 + $0x1e48] sm:$0xff]
  %v1005 = vld [vmem:[%s0 + $0x1e50] sm:$0xff]
  %v1006 = vld [vmem:[%s0 + $0x1e58] sm:$0xff]
  %v1007 = vld [vmem:[%s0 + $0x1e60] sm:$0xff]
  %v1008 = vld [vmem:[%s0 + $0x1e68] sm:$0xff]
  %v1009 = vld [vmem:[%s0 + $0x1e70] sm:$0xff]
  %v1010 = vld [vmem:[%s0 + $0x1e78] sm:$0xff]
  %v1011 = vld [vmem:[%s0 + $0x1e80] sm:$0xff]
  %v1012 = vld [vmem:[%s0 + $0x1e88] sm:$0xff]
  %v1013 = vld [vmem:[%s0 + $0x1e90] sm:$0xff]
  %v1014 = vld [vmem:[%s0 + $0x1e98] sm:$0xff]
  %v1015 = vld [vmem:[%s0 + $0x1ea0] sm:$0xff]
  %v1016 = vld [vmem:[%s0 + $0x1ea8] sm:$0xff]
  %v1017 = vld [vmem:[%s0 + $0x1eb0] sm:$0xff]
  %v1018 = vld [vmem:[%s0 + $0x1eb8] sm:$0xff]
  %v1019 = vld [vmem:[%s0 + $0x1ec0] sm:$0xff]
  %v1020 = vld [vmem:[%s0 + $0x1ec8] sm:$0xff]
  %v1021 = vld [vmem:[%s0 + $0x1ed0] sm:$0xff]
  %v1022 = vld [vmem:[%s0 + $0x1ed8] sm:$0xff]
  %v1023 = vld [vmem:[%s0 + $0x1ee0] sm:$0xff]
  %v1024 = vld [vmem:[%s0 + $0x1ee8] sm:$0xff]
  %v1025 = vld [vmem:[%s0 + $0x1ef0] sm:$0xff]
  %v1026 = vld [vmem:[%s0 + $0x1ef8] sm:$0xff]
  %v1027 = vld [vmem:[%s0 + $0x1f00] sm:$0xff]
  %v1028 = vld [vmem:[%s0 + $0x1f08] sm:$0xff]
  %v1029 = vld [vmem:[%s0 + $0x1f10] sm:$0xff]
  %v1030 = vld [vmem:[%s0 + $0x1f18] sm:$0xff]
  %v1031 = vld [vmem:[%s0 + $0x1f20] sm:$0xff]
  %v1032 = vld [vmem:[%s0 + $0x1f28] sm:$0xff]
  %v1033 = vld [vmem:[%s0 + $0x1f30] sm:$0xff]
  %v1034 = vld [vmem:[%s0 + $0x1f38] sm:$0xff]
  %v1035 = vld [vmem:[%s0 + $0x1f40] sm:$0xff]
  %v1036 = vld [vmem:[%s0 + $0x1f48] sm:$0xff]
  %v1037 = vld [vmem:[%s0 + $0x1f50] sm:$0xff]
  %v1038 = vld [vmem:[%s0 + $0x1f58] sm:$0xff]
  %v1039 = vld [vmem:[%s0 + $0x1f60] sm:$0xff]
  %v1040 = vld [vmem:[%s0 + $0x1f68] sm:$0xff]
  %v1041 = vld [vmem:[%s0 + $0x1f70] sm:$0xff]
  %v1042 = vld [vmem:[%s0 + $0x1f78] sm:$0xff]
  %v1043 = vld [vmem:[%s0 + $0x1f80] sm:$0xff]
  %v1044 = vld [vmem:[%s0 + $0x1f88] sm:$0xff]
  %v1045 = vld [vmem:[%s0 + $0x1f90] sm:$0xff]
  %v1046 = vld [vmem:[%s0 + $0x1f98] sm:$0xff]
  %v1047 = vld [vmem:[%s0 + $0x1fa0] sm:$0xff]
  %v1048 = vld [vmem:[%s0 + $0x1fa8] sm:$0xff]
  %v1049 = vld [vmem:[%s0 + $0x1fb0] sm:$0xff]
  %v1050 = vld [vmem:[%s0 + $0x1fb8] sm:$0xff]
  %v1051 = vld [vmem:[%s0 + $0x1fc0] sm:$0xff]
  %v1052 = vld [vmem:[%s0 + $0x1fc8] sm:$0xff]
  %v1053 = vld [vmem:[%s0 + $0x1fd0] sm:$0xff]
  %v1054 = vld [vmem:[%s0 + $0x1fd8] sm:$0xff]
  %v1055 = vld [vmem:[%s0 + $0x1fe0] sm:$0xff]
  %v1056 = vld [vmem:[%s0 + $0x1fe8] sm:$0xff]
  %v1057 = vld [vmem:[%s0 + $0x1ff0] sm:$0xff]
  %v1058 = vld [vmem:[%s0 + $0x1ff8] sm:$0xff]
  %v1059 = vld [vmem:[%s0 + $0x2000] sm:$0xff]
  %v1060 = vld [vmem:[%s0 + $0x2008] sm:$0xff]
  %v1061 = vld [vmem:[%s0 + $0x2010] sm:$0xff]
  %v1062 = vld [vmem:[%s0 + $0x2018] sm:$0xff]
  %v1063 = vld [vmem:[%s0 + $0x2020] sm:$0xff]
  %v1064 = vld [vmem:[%s0 + $0x2028] sm:$0xff]
  %v1065 = vld [vmem:[%s0 + $0x2030] sm:$0xff]
  %v1066 = vld [vmem:[%s0 + $0x2038] sm:$0xff]
  %v1067 = vld [vmem:[%s0 + $0x2040] sm:$0xff]
  %v1068 = vld [vmem:[%s0 + $0x2048] sm:$0xff]
  %v1069 = vld [vmem:[%s0 + $0x2050] sm:$0xff]
  %v1070 = vld [vmem:[%s0 + $0x2058] sm:$0xff]
  %v1071 = vld [vmem:[%s0 + $0x2060] sm:$0xff]
  %v1072 = vld [vmem:[%s0 + $0x2068] sm:$0xff]
  %v1073 = vld [vmem:[%s0 + $0x2070] sm:$0xff]
  %v1074 = vld [vmem:[%s0 + $0x2078] sm:$0xff]
  %v1075 = vld [vmem:[%s0 + $0x2080] sm:$0xff]
  %v1076 = vld [vmem:[%s0 + $0x2088] sm:$0xff]
  %v1077 = vld [vmem:[%s0 + $0x2090] sm:$0xff]
  %v1078 = vld [vmem:[%s0 + $0x2098] sm:$0xff]
  %v1079 = vld [vmem:[%s0 + $0x20a0] sm:$0xff]
  %v1080 = vld [vmem:[%s0 + $0x20a8] sm:$0xff]
  %v1081 = vld [vmem:[%s0 + $0x20b0] sm:$0xff]
  %v1082 = vld [vmem:[%s0 + $0x20b8] sm:$0xff]
  %v1083 = vld [vmem:[%s0 + $0x20c0] sm:$0xff]
  %v1084 = vld [vmem:[%s0 + $0x20c8] sm:$0xff]
  %v1085 = vld [vmem:[%s0 + $0x20d0] sm:$0xff]
  %v1086 = vld [vmem:[%s0 + $0x20d8] sm:$0xff]
  %v1087 = vld [vmem:[%s0 + $0x20e0] sm:$0xff]
  %v1088 = vld [vmem:[%s0 + $0x20e8] sm:$0xff]
  %v1089 = vld [vmem:[%s0 + $0x20f0] sm:$0xff]
  %v1090 = vld [vmem:[%s0 + $0x20f8] sm:$0xff]
  %v1091 = vld [vmem:[%s0 + $0x2100] sm:$0xff]
  %v1092 = vld [vmem:[%s0 + $0x2108] sm:$0xff]
  %v1093 = vld [vmem:[%s0 + $0x2110] sm:$0xff]
  %v1094 = vld [vmem:[%s0 + $0x2118] sm:$0xff]
  %v1095 = vld [vmem:[%s0 + $0x2120] sm:$0xff]
  %v1096 = vld [vmem:[%s0 + $0x2128] sm:$0xff]
  %v1097 = vld [vmem:[%s0 + $0x2130] sm:$0xff]
  %v1098 = vld [vmem:[%s0 + $0x2138] sm:$0xff]
  %v1099 = vld [vmem:[%s0 + $0x2140] sm:$0xff]
  %v1100 = vld [vmem:[%s0 + $0x2148] sm:$0xff]
  %v1101 = vld [vmem:[%s0 + $0x2150] sm:$0xff]
  %v1102 = vld [vmem:[%s0 + $0x2158] sm:$0xff]
  %v1103 = vld [vmem:[%s0 + $0x2160] sm:$0xff]
  %v1104 = vld [vmem:[%s0 + $0x2168] sm:$0xff]
  %v1105 = vld [vmem:[%s0 + $0x2170] sm:$0xff]
  %v1106 = vld [vmem:[%s0 + $0x2178] sm:$0xff]
  %v1107 = vld [vmem:[%s0 + $0x2180] sm:$0xff]
  %v1108 = vld [vmem:[%s0 + $0x2188] sm:$0xff]
  %v1109 = vld [vmem:[%s0 + $0x2190] sm:$0xff]
  %v1110 = vld [vmem:[%s0 + $0x2198] sm:$0xff]
  %v1111 = vld [vmem:[%s0 + $0x21a0] sm:$0xff]
  %v1112 = vld [vmem:[%s0 + $0x21a8] sm:$0xff]
  %v1113 = vld [vmem:[%s0 + $0x21b0] sm:$0xff]
  %v1114 = vld [vmem:[%s0 + $0x21b8] sm:$0xff]
  %v1115 = vld [vmem:[%s0 + $0x21c0] sm:$0xff]
  %v1116 = vld [vmem:[%s0 + $0x21c8] sm:$0xff]
  %v1117 = vld [vmem:[%s0 + $0x21d0] sm:$0xff]
  %v1118 = vld [vmem:[%s0 + $0x21d8] sm:$0xff]
  %v1119 = vld [vmem:[%s0 + $0x21e0] sm:$0xff]
  %v1120 = vld [vmem:[%s0 + $0x21e8] sm:$0xff]
  %v1121 = vld [vmem:[%s0 + $0x21f0] sm:$0xff]
  %v1122 = vld [vmem:[%s0 + $0x21f8] sm:$0xff]
  %v1123 = vld [vmem:[%s0 + $0x2200] sm:$0xff]
  %v1124 = vld [vmem:[%s0 + $0x2208] sm:$0xff]
  %v1125 = vld [vmem:[%s0 + $0x2210] sm:$0xff]
  %v1126 = vld [vmem:[%s0 + $0x2218] sm:$0xff]
  %v1127 = vld [vmem:[%s0 + $0x2220] sm:$0xff]
  %v1128 = vld [vmem:[%s0 + $0x2228] sm:$0xff]
  %v1129 = vld [vmem:[%s0 + $0x2230] sm:$0xff]
  %v1130 = vld [vmem:[%s0 + $0x2238] sm:$0xff]
  %v1131 = vld [vmem:[%s0 + $0x2240] sm:$0xff]
  %v1132 = vld [vmem:[%s0 + $0x2248] sm:$0xff]
  %v1133 = vld [vmem:[%s0 + $0x2250] sm:$0xff]
  %v1134 = vld [vmem:[%s0 + $0x2258] sm:$0xff]
  %v1135 = vld [vmem:[%s0 + $0x2260] sm:$0xff]
  %v1136 = vld [vmem:[%s0 + $0x2268] sm:$0xff]
  %v1137 = vld [vmem:[%s0 + $0x2270] sm:$0xff]
  %v1138 = vld [vmem:[%s0 + $0x2278] sm:$0xff]
  %v1139 = vld [vmem:[%s0 + $0x2280] sm:$0xff]
  %v1140 = vld [vmem:[%s0 + $0x2288] sm:$0xff]
  %v1141 = vld [vmem:[%s0 + $0x2290] sm:$0xff]
  %v1142 = vld [vmem:[%s0 + $0x2298] sm:$0xff]
  %v1143 = vld [vmem:[%s0 + $0x22a0] sm:$0xff]
  %v1144 = vld [vmem:[%s0 + $0x22a8] sm:$0xff]
  %v1145 = vld [vmem:[%s0 + $0x22b0] sm:$0xff]
  %v1146 = vld [vmem:[%s0 + $0x22b8] sm:$0xff]
  %v1147 = vld [vmem:[%s0 + $0x22c0] sm:$0xff]
  %v1148 = vld [vmem:[%s0 + $0x22c8] sm:$0xff]
  %v1149 = vld [vmem:[%s0 + $0x22d0] sm:$0xff]
  %v1150 = vld [vmem:[%s0 + $0x22d8] sm:$0xff]
  %v1151 = vld [vmem:[%s0 + $0x22e0] sm:$0xff]
  %v1152 = vld [vmem:[%s0 + $0x22e8] sm:$0xff]
  %v1153 = vld [vmem:[%s0 + $0x22f0] sm:$0xff]
  %v1154 = vld [vmem:[%s0 + $0x22f8] sm:$0xff]
  %v1155 = vld [vmem:[%s0 + $0x2300] sm:$0xff]
  %v1156 = vld [vmem:[%s0 + $0x2308] sm:$0xff]
  %v1157 = vld [vmem:[%s0 + $0x2310] sm:$0xff]
  %v1158 = vld [vmem:[%s0 + $0x2318] sm:$0xff]
  %v1159 = vld [vmem:[%s0 + $0x2320] sm:$0xff]
  %v1160 = vld [vmem:[%s0 + $0x2328] sm:$0xff]
  %v1161 = vld [vmem:[%s0 + $0x2330] sm:$0xff]
  %v1162 = vld [vmem:[%s0 + $0x2338] sm:$0xff]
  %v1163 = vld [vmem:[%s0 + $0x2340] sm:$0xff]
  %v1164 = vld [vmem:[%s0 + $0x2348] sm:$0xff]
  %v1165 = vld [vmem:[%s0 + $0x2350] sm:$0xff]
  %v1166 = vld [vmem:[%s0 + $0x2358] sm:$0xff]
  %v1167 = vld [vmem:[%s0 + $0x2360] sm:$0xff]
  %v1168 = vld [vmem:[%s0 + $0x2368] sm:$0xff]
  %v1169 = vld [vmem:[%s0 + $0x2370] sm:$0xff]
  %v1170 = vld [vmem:[%s0 + $0x2378] sm:$0xff]
  %v1171 = vld [vmem:[%s0 + $0x2380] sm:$0xff]
  %v1172 = vld [vmem:[%s0 + $0x2388] sm:$0xff]
  %v1173 = vld [vmem:[%s0 + $0x2390] sm:$0xff]
  %v1174 = vld [vmem:[%s0 + $0x2398] sm:$0xff]
  %v1175 = vld [vmem:[%s0 + $0x23a0] sm:$0xff]
  %v1176 = vld [vmem:[%s0 + $0x23a8] sm:$0xff]
  %v1177 = vld [vmem:[%s0 + $0x23b0] sm:$0xff]
  %v1178 = vld [vmem:[%s0 + $0x23b8] sm:$0xff]
  %v1179 = vld [vmem:[%s0 + $0x23c0] sm:$0xff]
  %v1180 = vld [vmem:[%s0 + $0x23c8] sm:$0xff]
  %v1181 = vld [vmem:[%s0 + $0x23d0] sm:$0xff]
  %v1182 = vld [vmem:[%s0 + $0x23d8] sm:$0xff]
  %v1183 = vld [vmem:[%s0 + $0x23e0] sm:$0xff]
  %v1184 = vld [vmem:[%s0 + $0x23e8] sm:$0xff]
  %v1185 = vld [vmem:[%s0 + $0x23f0] sm:$0xff]
  %v1186 = vld [vmem:[%s0 + $0x23f8] sm:$0xff]
  %v1187 = vld [vmem:[%s0 + $0x2400] sm:$0xff]
  %v1188 = vld [vmem:[%s0 + $0x2408] sm:$0xff]
  %v1189 = vld [vmem:[%s0 + $0x2410] sm:$0xff]
  %v1190 = vld [vmem:[%s0 + $0x2418] sm:$0xff]
  %v1191 = vld [vmem:[%s0 + $0x2420] sm:$0xff]
  %v1192 = vld [vmem:[%s0 + $0x2428] sm:$0xff]
  %v1193 = vld [vmem:[%s0 + $0x2430] sm:$0xff]
  %v1194 = vld [vmem:[%s0 + $0x2438] sm:$0xff]
  %v1195 = vld [vmem:[%s0 + $0x2440] sm:$0xff]
  %v1196 = vld [vmem:[%s0 + $0x2448] sm:$0xff]
  %v1197 = vld [vmem:[%s0 + $0x2450] sm:$0xff]
  %v1198 = vld [vmem:[%s0 + $0x2458] sm:$0xff]
  %v1199 = vld [vmem:[%s0 + $0x2460] sm:$0xff]
  %v1200 = vld [vmem:[%s0 + $0x2468] sm:$0xff]
  %v1201 = vld [vmem:[%s0 + $0x2470] sm:$0xff]
  %v1202 = vld [vmem:[%s0 + $0x2478] sm:$0xff]
  %v1203 = vld [vmem:[%s0 + $0x2480] sm:$0xff]
  %v1204 = vld [vmem:[%s0 + $0x2488] sm:$0xff]
  %v1205 = vld [vmem:[%s0 + $0x2490] sm:$0xff]
  %v1206 = vld [vmem:[%s0 + $0x2498] sm:$0xff]
  %v1207 = vld [vmem:[%s0 + $0x24a0] sm:$0xff]
  %v1208 = vld [vmem:[%s0 + $0x24a8] sm:$0xff]
  %v1209 = vld [vmem:[%s0 + $0x24b0] sm:$0xff]
  %v1210 = vld [vmem:[%s0 + $0x24b8] sm:$0xff]
  %v1211 = vld [vmem:[%s0 + $0x24c0] sm:$0xff]
  %v1212 = vld [vmem:[%s0 + $0x24c8] sm:$0xff]
  %v1213 = vld [vmem:[%s0 + $0x24d0] sm:$0xff]
  %v1214 = vld [vmem:[%s0 + $0x24d8] sm:$0xff]
  %v1215 = vld [vmem:[%s0 + $0x24e0] sm:$0xff]
  %v1216 = vld [vmem:[%s0 + $0x24e8] sm:$0xff]
  %v1217 = vld [vmem:[%s0 + $0x24f0] sm:$0xff]
  %v1218 = vld [vmem:[%s0 + $0x24f8] sm:$0xff]
  %v1219 = vld [vmem:[%s0 + $0x2500] sm:$0xff]
  %v1220 = vld [vmem:[%s0 + $0x2508] sm:$0xff]
  %v1221 = vld [vmem:[%s0 + $0x2510] sm:$0xff]
  %v1222 = vld [vmem:[%s0 + $0x2518] sm:$0xff]
  %v1223 = vld [vmem:[%s0 + $0x2520] sm:$0xff]
  %v1224 = vld [vmem:[%s0 + $0x2528] sm:$0xff]
  %v1225 = vld [vmem:[%s0 + $0x2530] sm:$0xff]
  %v1226 = vld [vmem:[%s0 + $0x2538] sm:$0xff]
  %v1227 = vld [vmem:[%s0 + $0x2540] sm:$0xff]
  %v1228 = vld [vmem:[%s0 + $0x2548] sm:$0xff]
  %v1229 = vld [vmem:[%s0 + $0x2550] sm:$0xff]
  %v1230 = vld [vmem:[%s0 + $0x2558] sm:$0xff]
  %v1231 = vld [vmem:[%s0 + $0x2560] sm:$0xff]
  %v1232 = vld [vmem:[%s0 + $0x2568] sm:$0xff]
  %v1233 = vld [vmem:[%s0 + $0x2570] sm:$0xff]
  %v1234 = vld [vmem:[%s0 + $0x2578] sm:$0xff]
  %v1235 = vld [vmem:[%s0 + $0x2580] sm:$0xff]
  %v1236 = vld [vmem:[%s0 + $0x2588] sm:$0xff]
  %v1237 = vld [vmem:[%s0 + $0x2590] sm:$0xff]
  %v1238 = vld [vmem:[%s0 + $0x2598] sm:$0xff]
  %v1239 = vld [vmem:[%s0 + $0x25a0] sm:$0xff]
  %v1240 = vld [vmem:[%s0 + $0x25a8] sm:$0xff]
  %v1241 = vld [vmem:[%s0 + $0x25b0] sm:$0xff]
  %v1242 = vld [vmem:[%s0 + $0x25b8] sm:$0xff]
  %v1243 = vld [vmem:[%s0 + $0x25c0] sm:$0xff]
  %v1244 = vld [vmem:[%s0 + $0x25c8] sm:$0xff]
  %v1245 = vld [vmem:[%s0 + $0x25d0] sm:$0xff]
  %v1246 = vld [vmem:[%s0 + $0x25d8] sm:$0xff]
  %v1247 = vld [vmem:[%s0 + $0x25e0] sm:$0xff]
  %v1248 = vld [vmem:[%s0 + $0x25e8] sm:$0xff]
  %v1249 = vld [vmem:[%s0 + $0x25f0] sm:$0xff]
  %v1250 = vld [vmem:[%s0 + $0x25f8] sm:$0xff]
  %v1251 = vld [vmem:[%s0 + $0x2600] sm:$0xff]
  %v1252 = vld [vmem:[%s0 + $0x2608] sm:$0xff]
  %v1253 = vld [vmem:[%s0 + $0x2610] sm:$0xff]
  %v1254 = vld [vmem:[%s0 + $0x2618] sm:$0xff]
  %v1255 = vld [vmem:[%s0 + $0x2620] sm:$0xff]
  %v1256 = vld [vmem:[%s0 + $0x2628] sm:$0xff]
  %v1257 = vld [vmem:[%s0 + $0x2630] sm:$0xff]
  %v1258 = vld [vmem:[%s0 + $0x2638] sm:$0xff]
  %v1259 = vld [vmem:[%s0 + $0x2640] sm:$0xff]
  %v1260 = vld [vmem:[%s0 + $0x2648] sm:$0xff]
  %v1261 = vld [vmem:[%s0 + $0x2650] sm:$0xff]
  %v1262 = vld [vmem:[%s0 + $0x2658] sm:$0xff]
  %v1263 = vld [vmem:[%s0 + $0x2660] sm:$0xff]
  %v1264 = vld [vmem:[%s0 + $0x2668] sm:$0xff]
  %v1265 = vld [vmem:[%s0 + $0x2670] sm:$0xff]
  %v1266 = vld [vmem:[%s0 + $0x2678] sm:$0xff]
  %v1267 = vld [vmem:[%s0 + $0x2680] sm:$0xff]
  %v1268 = vld [vmem:[%s0 + $0x2688] sm:$0xff]
  %v1269 = vld [vmem:[%s0 + $0x2690] sm:$0xff]
  %v1270 = vld [vmem:[%s0 + $0x2698] sm:$0xff]
  %v1271 = vld [vmem:[%s0 + $0x26a0] sm:$0xff]
  %v1272 = vld [vmem:[%s0 + $0x26a8] sm:$0xff]
  %v1273 = vld [vmem:[%s0 + $0x26b0] sm:$0xff]
  %v1274 = vld [vmem:[%s0 + $0x26b8] sm:$0xff]
  %v1275 = vld [vmem:[%s0 + $0x26c0] sm:$0xff]
  %v1276 = vld [vmem:[%s0 + $0x26c8] sm:$0xff]
  %v1277 = vld [vmem:[%s0 + $0x26d0] sm:$0xff]
  %v1278 = vld [vmem:[%s0 + $0x26d8] sm:$0xff]
  %v1279 = vld [vmem:[%s0 + $0x26e0] sm:$0xff]
  %v1280 = vld [vmem:[%s0 + $0x26e8] sm:$0xff]
  %v1281 = vld [vmem:[%s0 + $0x26f0] sm:$0xff]
  %v1282 = vld [vmem:[%s0 + $0x26f8] sm:$0xff]
  %v1283 = vld [vmem:[%s0 + $0x2700] sm:$0xff]
  %v1284 = vld [vmem:[%s0 + $0x2708] sm:$0xff]
  %v1285 = vld [vmem:[%s0 + $0x2710] sm:$0xff]
  %v1286 = vld [vmem:[%s0 + $0x2718] sm:$0xff]
  %v1287 = vld [vmem:[%s0 + $0x2720] sm:$0xff]
  %v1288 = vld [vmem:[%s0 + $0x2728] sm:$0xff]
  %v1289 = vld [vmem:[%s0 + $0x2730] sm:$0xff]
  %v1290 = vld [vmem:[%s0 + $0x2738] sm:$0xff]
  %v1291 = vld [vmem:[%s0 + $0x2740] sm:$0xff]
  %v1292 = vld [vmem:[%s0 + $0x2748] sm:$0xff]
  %v1293 = vld [vmem:[%s0 + $0x2750] sm:$0xff]
  %v1294 = vld [vmem:[%s0 + $0x2758] sm:$0xff]
  %v1295 = vld [vmem:[%s0 + $0x2760] sm:$0xff]
  %v1296 = vld [vmem:[%s0 + $0x2768] sm:$0xff]
  %v1297 = vld [vmem:[%s0 + $0x2770] sm:$0xff]
  %v1298 = vld [vmem:[%s0 + $0x2778] sm:$0xff]
  %v1299 = vld [vmem:[%s0 + $0x2780] sm:$0xff]
  %v1300 = vld [vmem:[%s0 + $0x2788] sm:$0xff]
  %v1301 = vld [vmem:[%s0 + $0x2790] sm:$0xff]
  %v1302 = vld [vmem:[%s0 + $0x2798] sm:$0xff]
  %v1303 = vld [vmem:[%s0 + $0x27a0] sm:$0xff]
  %v1304 = vld [vmem:[%s0 + $0x27a8] sm:$0xff]
  %v1305 = vld [vmem:[%s0 + $0x27b0] sm:$0xff]
  %v1306 = vld [vmem:[%s0 + $0x27b8] sm:$0xff]
  %v1307 = vld [vmem:[%s0 + $0x27c0] sm:$0xff]
  %v1308 = vld [vmem:[%s0 + $0x27c8] sm:$0xff]
  %v1309 = vld [vmem:[%s0 + $0x27d0] sm:$0xff]
  %v1310 = vld [vmem:[%s0 + $0x27d8] sm:$0xff]
  %v1311 = vld [vmem:[%s0 + $0x27e0] sm:$0xff]
  %v1312 = vld [vmem:[%s0 + $0x27e8] sm:$0xff]
  %v1313 = vld [vmem:[%s0 + $0x27f0] sm:$0xff]
  %v1314 = vld [vmem:[%s0 + $0x27f8] sm:$0xff]
  %v1315 = vld [vmem:[%s0 + $0x2800] sm:$0xff]
  %v1316 = vld [vmem:[%s0 + $0x2808] sm:$0xff]
  %v1317 = vld [vmem:[%s0 + $0x2810] sm:$0xff]
  %v1318 = vld [vmem:[%s0 + $0x2818] sm:$0xff]
  %v1319 = vld [vmem:[%s0 + $0x2820] sm:$0xff]
  %v1320 = vld [vmem:[%s0 + $0x2828] sm:$0xff]
  %v1321 = vld [vmem:[%s0 + $0x2830] sm:$0xff]
  %v1322 = vld [vmem:[%s0 + $0x2838] sm:$0xff]
  %v1323 = vld [vmem:[%s0 + $0x2840] sm:$0xff]
  %v1324 = vld [vmem:[%s0 + $0x2848] sm:$0xff]
  %v1325 = vld [vmem:[%s0 + $0x2850] sm:$0xff]
  %v1326 = vld [vmem:[%s0 + $0x2858] sm:$0xff]
  %v1327 = vld [vmem:[%s0 + $0x2860] sm:$0xff]
  %v1328 = vld [vmem:[%s0 + $0x2868] sm:$0xff]
  %v1329 = vld [vmem:[%s0 + $0x2870] sm:$0xff]
  %v1330 = vld [vmem:[%s0 + $0x2878] sm:$0xff]
  %v1331 = vld [vmem:[%s0 + $0x2880] sm:$0x3f]
  %v1332 = vld [vmem:[%s0 + $0x2888] sm:$0x3f]
  %v1333 = vld [vmem:[%s0 + $0x2890] sm:$0x3f]
  %v1334 = vld [vmem:[%s0 + $0x2898] sm:$0x3f]
  %v1335 = vld [vmem:[%s0 + $0x28a0] sm:$0x3f]
  %v1336 = vld [vmem:[%s0 + $0x28a8] sm:$0x3f]
  %v1337 = vld [vmem:[%s0 + $0x28b0] sm:$0x3f]
  %v1338 = vld [vmem:[%s0 + $0x28b8] sm:$0x3f]
  %v1339 = vld [vmem:[%s0 + $0x28c0] sm:$0x3f]
  %v1340 = vld [vmem:[%s0 + $0x28c8] sm:$0x3f]
  %v1341 = vld [vmem:[%s0 + $0x28d0] sm:$0x3f]
  %v1342 = vld [vmem:[%s0 + $0x28d8] sm:$0x3f]
  %v1343 = vld [vmem:[%s0 + $0x28e0] sm:$0x3f]
  %v1344 = vld [vmem:[%s0 + $0x28e8] sm:$0x3f]
  %v1345 = vld [vmem:[%s0 + $0x28f0] sm:$0x3f]
  %v1346 = vld [vmem:[%s0 + $0x28f8] sm:$0x3f]
  %v1347 = vld [vmem:[%s0 + $0x2900] sm:$0x3f]
  %v1348 = vld [vmem:[%s0 + $0x2908] sm:$0x3f]
  %v1349 = vld [vmem:[%s0 + $0x2910] sm:$0x3f]
  %v1350 = vld [vmem:[%s0 + $0x2918] sm:$0x3f]
  %v1351 = vld [vmem:[%s0 + $0x2920] sm:$0x3f]
  %v1352 = vld [vmem:[%s0 + $0x2928] sm:$0x3f]
  %v1353 = vld [vmem:[%s0 + $0x2930] sm:$0x3f]
  %v1354 = vld [vmem:[%s0 + $0x2938] sm:$0x3f]
  %v1355 = vld [vmem:[%s0 + $0x2940] sm:$0x3f]
  %v1356 = vld [vmem:[%s0 + $0x2948] sm:$0x3f]
  %v1357 = vld [vmem:[%s0 + $0x2950] sm:$0x3f]
  %v1358 = vld [vmem:[%s0 + $0x2958] sm:$0x3f]
  %v1359 = vld [vmem:[%s0 + $0x2960] sm:$0x3f]
  %v1360 = vld [vmem:[%s0 + $0x2968] sm:$0x3f]
  %v1361 = vld [vmem:[%s0 + $0x2970] sm:$0x3f]
  %v1362 = vld [vmem:[%s0 + $0x2978] sm:$0x3f]
  %v1363 = vld [vmem:[%s0 + $0x2980] sm:$0x3f]
  %v1364 = vld [vmem:[%s0 + $0x2988] sm:$0x3f]
  %v1365 = vld [vmem:[%s0 + $0x2990] sm:$0x3f]
  %v1366 = vld [vmem:[%s0 + $0x2998] sm:$0x3f]
  %vm1367 = vcmask 310272
  %v1369 = vsel %vm1367, %v34, 0
  %vm1371 = vcmask 1045504
  %v1373 = vsel %vm1371, %v1331, 0
  %v1376 = vsel %vm1371, %v1332, 0
  %v1379 = vsel %vm1371, %v1333, 0
  %v1382 = vsel %vm1371, %v1334, 0
  %v1385 = vsel %vm1371, %v1335, 0
  %v1388 = vsel %vm1371, %v1336, 0
  %v1391 = vsel %vm1371, %v1337, 0
  %v1394 = vsel %vm1371, %v1338, 0
  %v1397 = vsel %vm1371, %v1339, 0
  %v1400 = vsel %vm1371, %v1340, 0
  %v1403 = vsel %vm1371, %v1341, 0
  %v1406 = vsel %vm1371, %v1342, 0
  %v1409 = vsel %vm1371, %v1343, 0
  %v1412 = vsel %vm1371, %v1344, 0
  %v1415 = vsel %vm1371, %v1345, 0
  %v1418 = vsel %vm1371, %v1346, 0
  %v1421 = vsel %vm1371, %v1347, 0
  %v1424 = vsel %vm1371, %v1348, 0
  %v1427 = vsel %vm1371, %v1349, 0
  %v1430 = vsel %vm1371, %v1350, 0
  %v1433 = vsel %vm1371, %v1351, 0
  %v1436 = vsel %vm1371, %v1352, 0
  %v1439 = vsel %vm1371, %v1353, 0
  %v1442 = vsel %vm1371, %v1354, 0
  %v1445 = vsel %vm1371, %v1355, 0
  %v1448 = vsel %vm1371, %v1356, 0
  %v1451 = vsel %vm1371, %v1357, 0
  %v1454 = vsel %vm1371, %v1358, 0
  %v1457 = vsel %vm1371, %v1359, 0
  %v1460 = vsel %vm1371, %v1360, 0
  %v1463 = vsel %vm1371, %v1361, 0
  %v1466 = vsel %vm1371, %v1362, 0
  %v1469 = vsel %vm1371, %v1363, 0
  %v1472 = vsel %vm1371, %v1364, 0
  %v1475 = vsel %vm1371, %v1365, 0
  %v1478 = vsel %vm1371, %v1366, 0
  %1480 = vmatprep.subr.mxu0 %v36
  %1481 = vmatpush1.msra.mxu0 %v35
  %1482 = vmatprep.subr.mxu0 %v72
  %1483 = vmatpush1.msra.mxu0 %v71
  %1484 = vmatprep.subr.mxu0 %v108
  %1485 = vmatpush1.msra.mxu0 %v107
  %1486 = vmatprep.subr.mxu0 %v144
  %1487 = vmatpush1.msra.mxu0 %v143
  %1488 = vmatprep.subr.mxu0 %v180
  %1489 = vmatpush1.msra.mxu0 %v179
  %1490 = vmatprep.subr.mxu0 %v216
  %1491 = vmatpush1.msra.mxu0 %v215
  %1492 = vmatprep.subr.mxu0 %v252
  %1493 = vmatpush1.msra.mxu0 %v251
  %1494 = vmatprep.subr.mxu0 %v288
  %1495 = vmatpush1.msra.mxu0 %v287
  %1496 = vmatprep.subr.mxu0 %v324
  %1497 = vmatpush1.msra.mxu0 %v323
  %1498 = vmatprep.subr.mxu0 %v360
  %1499 = vmatpush1.msra.mxu0 %v359
  %1500 = vmatprep.subr.mxu0 %v396
  %1501 = vmatpush1.msra.mxu0 %v395
  %1502 = vmatprep.subr.mxu0 %v432
  %1503 = vmatpush1.msra.mxu0 %v431
  %1504 = vmatprep.subr.mxu0 %v468
  %1505 = vmatpush1.msra.mxu0 %v467
  %1506 = vmatprep.subr.mxu0 %v504
  %1507 = vmatpush1.msra.mxu0 %v503
  %1508 = vmatprep.subr.mxu0 %v540
  %1509 = vmatpush1.msra.mxu0 %v539
  %1510 = vmatprep.subr.mxu0 %v576
  %1511 = vmatpush1.msra.mxu0 %v575
  %1512 = vmatprep.subr.mxu0 %v612
  %1513 = vmatpush1.msra.mxu0 %v611
  %1514 = vmatprep.subr.mxu0 %v648
  %1515 = vmatpush1.msra.mxu0 %v647
  %1516 = vmatprep.subr.mxu0 %v684
  %1517 = vmatpush1.msra.mxu0 %v683
  %1518 = vmatprep.subr.mxu0 %v720
  %1519 = vmatpush1.msra.mxu0 %v719
  %1520 = vmatprep.subr.mxu0 %v756
  %1521 = vmatpush1.msra.mxu0 %v755
  %1522 = vmatprep.subr.mxu0 %v792
  %1523 = vmatpush1.msra.mxu0 %v791
  %1524 = vmatprep.subr.mxu0 %v828
  %1525 = vmatpush1.msra.mxu0 %v827
  %1526 = vmatprep.subr.mxu0 %v864
  %1527 = vmatpush1.msra.mxu0 %v863
  %1528 = vmatprep.subr.mxu0 %v900
  %1529 = vmatpush1.msra.mxu0 %v899
  %1530 = vmatprep.subr.mxu0 %v936
  %1531 = vmatpush1.msra.mxu0 %v935
  %1532 = vmatprep.subr.mxu0 %v972
  %1533 = vmatpush1.msra.mxu0 %v971
  %1534 = vmatprep.subr.mxu0 %v1008
  %1535 = vmatpush1.msra.mxu0 %v1007
  %1536 = vmatprep.subr.mxu0 %v1044
  %1537 = vmatpush1.msra.mxu0 %v1043
  %1538 = vmatprep.subr.mxu0 %v1080
  %1539 = vmatpush1.msra.mxu0 %v1079
  %1540 = vmatprep.subr.mxu0 %v1116
  %1541 = vmatpush1.msra.mxu0 %v1115
  %1542 = vmatprep.subr.mxu0 %v1152
  %1543 = vmatpush1.msra.mxu0 %v1151
  %1544 = vmatprep.mubr.f32.mxu0 %v33
  %1545 = vmatmul.mubr.f32.gmra.mrb[0].mxu0 %v32
  %v1546 = vpop.f32.mrb[0].mxu0
  %v1547 = vadd.f32 0.0, %v1546
  %v1548 = vpop.f32.mrb[0].mxu0
  %v1549 = vadd.f32 0.0, %v1548
  %1550 = vdwg.mxu0
  %1551 = vmatprep.subr.mxu0 %v1188
  %1552 = vmatpush1.msra.mxu0 %v1187
  %1553 = vmatprep.subr.mxu0 %v1224
  %1554 = vmatpush1.msra.mxu0 %v1223
  %1555 = vmatprep.subr.mxu0 %v1260
  %1556 = vmatpush1.msra.mxu0 %v1259
  %1557 = vmatprep.subr.mxu0 %v1296
  %1558 = vmatpush1.msra.mxu0 %v1295
  %1559 = vmatprep.subr.mxu0 %v1376
  %1560 = vmatpush1.msra.mxu0 %v1373
  %1561 = vmatprep.subr.mxu0 0.0
  %1562 = vmatpush1.msra.mxu0 0.0
  %1563 = vmatprep.subr.mxu0 0.0
  %1564 = vmatpush1.msra.mxu0 0.0
  %1565 = vmatprep.subr.mxu0 0.0
  %1566 = vmatpush1.msra.mxu0 0.0
  %1567 = vmatprep.subr.mxu0 0.0
  %1568 = vmatpush1.msra.mxu0 0.0
  %1569 = vmatprep.subr.mxu0 0.0
  %1570 = vmatpush1.msra.mxu0 0.0
  %1571 = vmatprep.subr.mxu0 0.0
  %1572 = vmatpush1.msra.mxu0 0.0
  %1573 = vmatprep.subr.mxu0 0.0
  %1574 = vmatpush1.msra.mxu0 0.0
  %1575 = vmatprep.subr.mxu0 0.0
  %1576 = vmatpush1.msra.mxu0 0.0
  %1577 = vmatprep.subr.mxu0 0.0
  %1578 = vmatpush1.msra.mxu0 0.0
  %1579 = vmatprep.subr.mxu0 0.0
  %1580 = vmatpush1.msra.mxu0 0.0
  %1581 = vmatprep.subr.mxu0 0.0
  %1582 = vmatpush1.msra.mxu0 0.0
  %1583 = vmatprep.subr.mxu0 0.0
  %1584 = vmatpush1.msra.mxu0 0.0
  %1585 = vmatprep.subr.mxu0 0.0
  %1586 = vmatpush1.msra.mxu0 0.0
  %1587 = vmatprep.subr.mxu0 0.0
  %1588 = vmatpush1.msra.mxu0 0.0
  %1589 = vmatprep.subr.mxu0 0.0
  %1590 = vmatpush1.msra.mxu0 0.0
  %1591 = vmatprep.subr.mxu0 0.0
  %1592 = vmatpush1.msra.mxu0 0.0
  %1593 = vmatprep.subr.mxu0 0.0
  %1594 = vmatpush1.msra.mxu0 0.0
  %1595 = vmatprep.subr.mxu0 0.0
  %1596 = vmatpush1.msra.mxu0 0.0
  %1597 = vmatprep.subr.mxu0 0.0
  %1598 = vmatpush1.msra.mxu0 0.0
  %1599 = vmatprep.subr.mxu0 0.0
  %1600 = vmatpush1.msra.mxu0 0.0
  %1601 = vmatprep.subr.mxu0 0.0
  %1602 = vmatpush1.msra.mxu0 0.0
  %1603 = vmatprep.subr.mxu0 0.0
  %1604 = vmatpush1.msra.mxu0 0.0
  %1605 = vmatprep.subr.mxu0 0.0
  %1606 = vmatpush1.msra.mxu0 0.0
  %1607 = vmatprep.subr.mxu0 0.0
  %1608 = vmatpush1.msra.mxu0 0.0
  %1609 = vmatprep.subr.mxu0 0.0
  %1610 = vmatpush1.msra.mxu0 0.0
  %1611 = vmatprep.subr.mxu0 0.0
  %1612 = vmatpush1.msra.mxu0 0.0
  %1613 = vmatprep.subr.mxu0 0.0
  %1614 = vmatpush1.msra.mxu0 0.0
  %1615 = vmatprep.mubr.f32.mxu0 0.0
  %1616 = vmatmul.mubr.f32.gmra.mrb[0].mxu0 %v1369
  %v1617 = vpop.f32.mrb[0].mxu0
  %v1618 = vadd.f32 %v1547, %v1617
  %v1619 = vpop.f32.mrb[0].mxu0
  %v1620 = vadd.f32 %v1549, %v1619
  %1621 = vdwg.mxu0
  %1622 = vmatprep.subr.mxu0 %v38
  %1623 = vmatpush1.msra.mxu0 %v37
  %1624 = vmatprep.subr.mxu0 %v74
  %1625 = vmatpush1.msra.mxu0 %v73
  %1626 = vmatprep.subr.mxu0 %v110
  %1627 = vmatpush1.msra.mxu0 %v109
  %1628 = vmatprep.subr.mxu0 %v146
  %1629 = vmatpush1.msra.mxu0 %v145
  %1630 = vmatprep.subr.mxu0 %v182
  %1631 = vmatpush1.msra.mxu0 %v181
  %1632 = vmatprep.subr.mxu0 %v218
  %1633 = vmatpush1.msra.mxu0 %v217
  %1634 = vmatprep.subr.mxu0 %v254
  %1635 = vmatpush1.msra.mxu0 %v253
  %1636 = vmatprep.subr.mxu0 %v290
  %1637 = vmatpush1.msra.mxu0 %v289
  %1638 = vmatprep.subr.mxu0 %v326
  %1639 = vmatpush1.msra.mxu0 %v325
  %1640 = vmatprep.subr.mxu0 %v362
  %1641 = vmatpush1.msra.mxu0 %v361
  %1642 = vmatprep.subr.mxu0 %v398
  %1643 = vmatpush1.msra.mxu0 %v397
  %1644 = vmatprep.subr.mxu0 %v434
  %1645 = vmatpush1.msra.mxu0 %v433
  %1646 = vmatprep.subr.mxu0 %v470
  %1647 = vmatpush1.msra.mxu0 %v469
  %1648 = vmatprep.subr.mxu0 %v506
  %1649 = vmatpush1.msra.mxu0 %v505
  %1650 = vmatprep.subr.mxu0 %v542
  %1651 = vmatpush1.msra.mxu0 %v541
  %1652 = vmatprep.subr.mxu0 %v578
  %1653 = vmatpush1.msra.mxu0 %v577
  %1654 = vmatprep.subr.mxu0 %v614
  %1655 = vmatpush1.msra.mxu0 %v613
  %1656 = vmatprep.subr.mxu0 %v650
  %1657 = vmatpush1.msra.mxu0 %v649
  %1658 = vmatprep.subr.mxu0 %v686
  %1659 = vmatpush1.msra.mxu0 %v685
  %1660 = vmatprep.subr.mxu0 %v722
  %1661 = vmatpush1.msra.mxu0 %v721
  %1662 = vmatprep.subr.mxu0 %v758
  %1663 = vmatpush1.msra.mxu0 %v757
  %1664 = vmatprep.subr.mxu0 %v794
  %1665 = vmatpush1.msra.mxu0 %v793
  %1666 = vmatprep.subr.mxu0 %v830
  %1667 = vmatpush1.msra.mxu0 %v829
  %1668 = vmatprep.subr.mxu0 %v866
  %1669 = vmatpush1.msra.mxu0 %v865
  %1670 = vmatprep.subr.mxu0 %v902
  %1671 = vmatpush1.msra.mxu0 %v901
  %1672 = vmatprep.subr.mxu0 %v938
  %1673 = vmatpush1.msra.mxu0 %v937
  %1674 = vmatprep.subr.mxu0 %v974
  %1675 = vmatpush1.msra.mxu0 %v973
  %1676 = vmatprep.subr.mxu0 %v1010
  %1677 = vmatpush1.msra.mxu0 %v1009
  %1678 = vmatprep.subr.mxu0 %v1046
  %1679 = vmatpush1.msra.mxu0 %v1045
  %1680 = vmatprep.subr.mxu0 %v1082
  %1681 = vmatpush1.msra.mxu0 %v1081
  %1682 = vmatprep.subr.mxu0 %v1118
  %1683 = vmatpush1.msra.mxu0 %v1117
  %1684 = vmatprep.subr.mxu0 %v1154
  %1685 = vmatpush1.msra.mxu0 %v1153
  %1686 = vmatprep.mubr.f32.mxu0 %v33
  %1687 = vmatmul.mubr.f32.gmra.mrb[0].mxu0 %v32
  %v1688 = vpop.f32.mrb[0].mxu0
  %v1689 = vadd.f32 0.0, %v1688
  %v1690 = vpop.f32.mrb[0].mxu0
  %v1691 = vadd.f32 0.0, %v1690
  %1692 = vdwg.mxu0
  %1693 = vmatprep.subr.mxu0 %v1190
  %1694 = vmatpush1.msra.mxu0 %v1189
  %1695 = vmatprep.subr.mxu0 %v1226
  %1696 = vmatpush1.msra.mxu0 %v1225
  %1697 = vmatprep.subr.mxu0 %v1262
  %1698 = vmatpush1.msra.mxu0 %v1261
  %1699 = vmatprep.subr.mxu0 %v1298
  %1700 = vmatpush1.msra.mxu0 %v1297
  %1701 = vmatprep.subr.mxu0 %v1382
  %1702 = vmatpush1.msra.mxu0 %v1379
  %1703 = vmatprep.subr.mxu0 0.0
  %1704 = vmatpush1.msra.mxu0 0.0
  %1705 = vmatprep.subr.mxu0 0.0
  %1706 = vmatpush1.msra.mxu0 0.0
  %1707 = vmatprep.subr.mxu0 0.0
  %1708 = vmatpush1.msra.mxu0 0.0
  %1709 = vmatprep.subr.mxu0 0.0
  %1710 = vmatpush1.msra.mxu0 0.0
  %1711 = vmatprep.subr.mxu0 0.0
  %1712 = vmatpush1.msra.mxu0 0.0
  %1713 = vmatprep.subr.mxu0 0.0
  %1714 = vmatpush1.msra.mxu0 0.0
  %1715 = vmatprep.subr.mxu0 0.0
  %1716 = vmatpush1.msra.mxu0 0.0
  %1717 = vmatprep.subr.mxu0 0.0
  %1718 = vmatpush1.msra.mxu0 0.0
  %1719 = vmatprep.subr.mxu0 0.0
  %1720 = vmatpush1.msra.mxu0 0.0
  %1721 = vmatprep.subr.mxu0 0.0
  %1722 = vmatpush1.msra.mxu0 0.0
  %1723 = vmatprep.subr.mxu0 0.0
  %1724 = vmatpush1.msra.mxu0 0.0
  %1725 = vmatprep.subr.mxu0 0.0
  %1726 = vmatpush1.msra.mxu0 0.0
  %1727 = vmatprep.subr.mxu0 0.0
  %1728 = vmatpush1.msra.mxu0 0.0
  %1729 = vmatprep.subr.mxu0 0.0
  %1730 = vmatpush1.msra.mxu0 0.0
  %1731 = vmatprep.subr.mxu0 0.0
  %1732 = vmatpush1.msra.mxu0 0.0
  %1733 = vmatprep.subr.mxu0 0.0
  %1734 = vmatpush1.msra.mxu0 0.0
  %1735 = vmatprep.subr.mxu0 0.0
  %1736 = vmatpush1.msra.mxu0 0.0
  %1737 = vmatprep.subr.mxu0 0.0
  %1738 = vmatpush1.msra.mxu0 0.0
  %1739 = vmatprep.subr.mxu0 0.0
  %1740 = vmatpush1.msra.mxu0 0.0
  %1741 = vmatprep.subr.mxu0 0.0
  %1742 = vmatpush1.msra.mxu0 0.0
  %1743 = vmatprep.subr.mxu0 0.0
  %1744 = vmatpush1.msra.mxu0 0.0
  %1745 = vmatprep.subr.mxu0 0.0
  %1746 = vmatpush1.msra.mxu0 0.0
  %1747 = vmatprep.subr.mxu0 0.0
  %1748 = vmatpush1.msra.mxu0 0.0
  %1749 = vmatprep.subr.mxu0 0.0
  %1750 = vmatpush1.msra.mxu0 0.0
  %1751 = vmatprep.subr.mxu0 0.0
  %1752 = vmatpush1.msra.mxu0 0.0
  %1753 = vmatprep.subr.mxu0 0.0
  %1754 = vmatpush1.msra.mxu0 0.0
  %1755 = vmatprep.subr.mxu0 0.0
  %1756 = vmatpush1.msra.mxu0 0.0
  %1757 = vmatprep.mubr.f32.mxu0 0.0
  %1758 = vmatmul.mubr.f32.gmra.mrb[0].mxu0 %v1369
  %v1759 = vpop.f32.mrb[0].mxu0
  %v1760 = vadd.f32 %v1689, %v1759
  %v1761 = vpop.f32.mrb[0].mxu0
  %v1762 = vadd.f32 %v1691, %v1761
  %1763 = vdwg.mxu0
  %1764 = vmatprep.subr.mxu0 %v40
  %1765 = vmatpush1.msra.mxu0 %v39
  %1766 = vmatprep.subr.mxu0 %v76
  %1767 = vmatpush1.msra.mxu0 %v75
  %1768 = vmatprep.subr.mxu0 %v112
  %1769 = vmatpush1.msra.mxu0 %v111
  %1770 = vmatprep.subr.mxu0 %v148
  %1771 = vmatpush1.msra.mxu0 %v147
  %1772 = vmatprep.subr.mxu0 %v184
  %1773 = vmatpush1.msra.mxu0 %v183
  %1774 = vmatprep.subr.mxu0 %v220
  %1775 = vmatpush1.msra.mxu0 %v219
  %1776 = vmatprep.subr.mxu0 %v256
  %1777 = vmatpush1.msra.mxu0 %v255
  %1778 = vmatprep.subr.mxu0 %v292
  %1779 = vmatpush1.msra.mxu0 %v291
  %1780 = vmatprep.subr.mxu0 %v328
  %1781 = vmatpush1.msra.mxu0 %v327
  %1782 = vmatprep.subr.mxu0 %v364
  %1783 = vmatpush1.msra.mxu0 %v363
  %1784 = vmatprep.subr.mxu0 %v400
  %1785 = vmatpush1.msra.mxu0 %v399
  %1786 = vmatprep.subr.mxu0 %v436
  %1787 = vmatpush1.msra.mxu0 %v435
  %1788 = vmatprep.subr.mxu0 %v472
  %1789 = vmatpush1.msra.mxu0 %v471
  %1790 = vmatprep.subr.mxu0 %v508
  %1791 = vmatpush1.msra.mxu0 %v507
  %1792 = vmatprep.subr.mxu0 %v544
  %1793 = vmatpush1.msra.mxu0 %v543
  %1794 = vmatprep.subr.mxu0 %v580
  %1795 = vmatpush1.msra.mxu0 %v579
  %1796 = vmatprep.subr.mxu0 %v616
  %1797 = vmatpush1.msra.mxu0 %v615
  %1798 = vmatprep.subr.mxu0 %v652
  %1799 = vmatpush1.msra.mxu0 %v651
  %1800 = vmatprep.subr.mxu0 %v688
  %1801 = vmatpush1.msra.mxu0 %v687
  %1802 = vmatprep.subr.mxu0 %v724
  %1803 = vmatpush1.msra.mxu0 %v723
  %1804 = vmatprep.subr.mxu0 %v760
  %1805 = vmatpush1.msra.mxu0 %v759
  %1806 = vmatprep.subr.mxu0 %v796
  %1807 = vmatpush1.msra.mxu0 %v795
  %1808 = vmatprep.subr.mxu0 %v832
  %1809 = vmatpush1.msra.mxu0 %v831
  %1810 = vmatprep.subr.mxu0 %v868
  %1811 = vmatpush1.msra.mxu0 %v867
  %1812 = vmatprep.subr.mxu0 %v904
  %1813 = vmatpush1.msra.mxu0 %v903
  %1814 = vmatprep.subr.mxu0 %v940
  %1815 = vmatpush1.msra.mxu0 %v939
  %1816 = vmatprep.subr.mxu0 %v976
  %1817 = vmatpush1.msra.mxu0 %v975
  %1818 = vmatprep.subr.mxu0 %v1012
  %1819 = vmatpush1.msra.mxu0 %v1011
  %1820 = vmatprep.subr.mxu0 %v1048
  %1821 = vmatpush1.msra.mxu0 %v1047
  %1822 = vmatprep.subr.mxu0 %v1084
  %1823 = vmatpush1.msra.mxu0 %v1083
  %1824 = vmatprep.subr.mxu0 %v1120
  %1825 = vmatpush1.msra.mxu0 %v1119
  %1826 = vmatprep.subr.mxu0 %v1156
  %1827 = vmatpush1.msra.mxu0 %v1155
  %1828 = vmatprep.mubr.f32.mxu0 %v33
  %1829 = vmatmul.mubr.f32.gmra.mrb[0].mxu0 %v32
  %v1830 = vpop.f32.mrb[0].mxu0
  %v1831 = vadd.f32 0.0, %v1830
  %v1832 = vpop.f32.mrb[0].mxu0
  %v1833 = vadd.f32 0.0, %v1832
  %1834 = vdwg.mxu0
  %1835 = vmatprep.subr.mxu0 %v1192
  %1836 = vmatpush1.msra.mxu0 %v1191
  %1837 = vmatprep.subr.mxu0 %v1228
  %1838 = vmatpush1.msra.mxu0 %v1227
  %1839 = vmatprep.subr.mxu0 %v1264
  %1840 = vmatpush1.msra.mxu0 %v1263
  %1841 = vmatprep.subr.mxu0 %v1300
  %1842 = vmatpush1.msra.mxu0 %v1299
  %1843 = vmatprep.subr.mxu0 %v1388
  %1844 = vmatpush1.msra.mxu0 %v1385
  %1845 = vmatprep.subr.mxu0 0.0
  %1846 = vmatpush1.msra.mxu0 0.0
  %1847 = vmatprep.subr.mxu0 0.0
  %1848 = vmatpush1.msra.mxu0 0.0
  %1849 = vmatprep.subr.mxu0 0.0
  %1850 = vmatpush1.msra.mxu0 0.0
  %1851 = vmatprep.subr.mxu0 0.0
  %1852 = vmatpush1.msra.mxu0 0.0
  %1853 = vmatprep.subr.mxu0 0.0
  %1854 = vmatpush1.msra.mxu0 0.0
  %1855 = vmatprep.subr.mxu0 0.0
  %1856 = vmatpush1.msra.mxu0 0.0
  %1857 = vmatprep.subr.mxu0 0.0
  %1858 = vmatpush1.msra.mxu0 0.0
  %1859 = vmatprep.subr.mxu0 0.0
  %1860 = vmatpush1.msra.mxu0 0.0
  %1861 = vmatprep.subr.mxu0 0.0
  %1862 = vmatpush1.msra.mxu0 0.0
  %1863 = vmatprep.subr.mxu0 0.0
  %1864 = vmatpush1.msra.mxu0 0.0
  %1865 = vmatprep.subr.mxu0 0.0
  %1866 = vmatpush1.msra.mxu0 0.0
  %1867 = vmatprep.subr.mxu0 0.0
  %1868 = vmatpush1.msra.mxu0 0.0
  %1869 = vmatprep.subr.mxu0 0.0
  %1870 = vmatpush1.msra.mxu0 0.0
  %1871 = vmatprep.subr.mxu0 0.0
  %1872 = vmatpush1.msra.mxu0 0.0
  %1873 = vmatprep.subr.mxu0 0.0
  %1874 = vmatpush1.msra.mxu0 0.0
  %1875 = vmatprep.subr.mxu0 0.0
  %1876 = vmatpush1.msra.mxu0 0.0
  %1877 = vmatprep.subr.mxu0 0.0
  %1878 = vmatpush1.msra.mxu0 0.0
  %1879 = vmatprep.subr.mxu0 0.0
  %1880 = vmatpush1.msra.mxu0 0.0
  %1881 = vmatprep.subr.mxu0 0.0
  %1882 = vmatpush1.msra.mxu0 0.0
  %1883 = vmatprep.subr.mxu0 0.0
  %1884 = vmatpush1.msra.mxu0 0.0
  %1885 = vmatprep.subr.mxu0 0.0
  %1886 = vmatpush1.msra.mxu0 0.0
  %1887 = vmatprep.subr.mxu0 0.0
  %1888 = vmatpush1.msra.mxu0 0.0
  %1889 = vmatprep.subr.mxu0 0.0
  %1890 = vmatpush1.msra.mxu0 0.0
  %1891 = vmatprep.subr.mxu0 0.0
  %1892 = vmatpush1.msra.mxu0 0.0
  %1893 = vmatprep.subr.mxu0 0.0
  %1894 = vmatpush1.msra.mxu0 0.0
  %1895 = vmatprep.subr.mxu0 0.0
  %1896 = vmatpush1.msra.mxu0 0.0
  %1897 = vmatprep.subr.mxu0 0.0
  %1898 = vmatpush1.msra.mxu0 0.0
  %1899 = vmatprep.mubr.f32.mxu0 0.0
  %1900 = vmatmul.mubr.f32.gmra.mrb[0].mxu0 %v1369
  %v1901 = vpop.f32.mrb[0].mxu0
  %v1902 = vadd.f32 %v1831, %v1901
  %v1903 = vpop.f32.mrb[0].mxu0
  %v1904 = vadd.f32 %v1833, %v1903
  %1905 = vdwg.mxu0
  %1906 = vmatprep.subr.mxu0 %v42
  %1907 = vmatpush1.msra.mxu0 %v41
  %1908 = vmatprep.subr.mxu0 %v78
  %1909 = vmatpush1.msra.mxu0 %v77
  %1910 = vmatprep.subr.mxu0 %v114
  %1911 = vmatpush1.msra.mxu0 %v113
  %1912 = vmatprep.subr.mxu0 %v150
  %1913 = vmatpush1.msra.mxu0 %v149
  %1914 = vmatprep.subr.mxu0 %v186
  %1915 = vmatpush1.msra.mxu0 %v185
  %1916 = vmatprep.subr.mxu0 %v222
  %1917 = vmatpush1.msra.mxu0 %v221
  %1918 = vmatprep.subr.mxu0 %v258
  %1919 = vmatpush1.msra.mxu0 %v257
  %1920 = vmatprep.subr.mxu0 %v294
  %1921 = vmatpush1.msra.mxu0 %v293
  %1922 = vmatprep.subr.mxu0 %v330
  %1923 = vmatpush1.msra.mxu0 %v329
  %1924 = vmatprep.subr.mxu0 %v366
  %1925 = vmatpush1.msra.mxu0 %v365
  %1926 = vmatprep.subr.mxu0 %v402
  %1927 = vmatpush1.msra.mxu0 %v401
  %1928 = vmatprep.subr.mxu0 %v438
  %1929 = vmatpush1.msra.mxu0 %v437
  %1930 = vmatprep.subr.mxu0 %v474
  %1931 = vmatpush1.msra.mxu0 %v473
  %1932 = vmatprep.subr.mxu0 %v510
  %1933 = vmatpush1.msra.mxu0 %v509
  %1934 = vmatprep.subr.mxu0 %v546
  %1935 = vmatpush1.msra.mxu0 %v545
  %1936 = vmatprep.subr.mxu0 %v582
  %1937 = vmatpush1.msra.mxu0 %v581
  %1938 = vmatprep.subr.mxu0 %v618
  %1939 = vmatpush1.msra.mxu0 %v617
  %1940 = vmatprep.subr.mxu0 %v654
  %1941 = vmatpush1.msra.mxu0 %v653
  %1942 = vmatprep.subr.mxu0 %v690
  %1943 = vmatpush1.msra.mxu0 %v689
  %1944 = vmatprep.subr.mxu0 %v726
  %1945 = vmatpush1.msra.mxu0 %v725
  %1946 = vmatprep.subr.mxu0 %v762
  %1947 = vmatpush1.msra.mxu0 %v761
  %1948 = vmatprep.subr.mxu0 %v798
  %1949 = vmatpush1.msra.mxu0 %v797
  %1950 = vmatprep.subr.mxu0 %v834
  %1951 = vmatpush1.msra.mxu0 %v833
  %1952 = vmatprep.subr.mxu0 %v870
  %1953 = vmatpush1.msra.mxu0 %v869
  %1954 = vmatprep.subr.mxu0 %v906
  %1955 = vmatpush1.msra.mxu0 %v905
  %1956 = vmatprep.subr.mxu0 %v942
  %1957 = vmatpush1.msra.mxu0 %v941
  %1958 = vmatprep.subr.mxu0 %v978
  %1959 = vmatpush1.msra.mxu0 %v977
  %1960 = vmatprep.subr.mxu0 %v1014
  %1961 = vmatpush1.msra.mxu0 %v1013
  %1962 = vmatprep.subr.mxu0 %v1050
  %1963 = vmatpush1.msra.mxu0 %v1049
  %1964 = vmatprep.subr.mxu0 %v1086
  %1965 = vmatpush1.msra.mxu0 %v1085
  %1966 = vmatprep.subr.mxu0 %v1122
  %1967 = vmatpush1.msra.mxu0 %v1121
  %1968 = vmatprep.subr.mxu0 %v1158
  %1969 = vmatpush1.msra.mxu0 %v1157
  %1970 = vmatprep.mubr.f32.mxu0 %v33
  %1971 = vmatmul.mubr.f32.gmra.mrb[0].mxu0 %v32
  %v1972 = vpop.f32.mrb[0].mxu0
  %v1973 = vadd.f32 0.0, %v1972
  %v1974 = vpop.f32.mrb[0].mxu0
  %v1975 = vadd.f32 0.0, %v1974
  %1976 = vdwg.mxu0
  %1977 = vmatprep.subr.mxu0 %v1194
  %1978 = vmatpush1.msra.mxu0 %v1193
  %1979 = vmatprep.subr.mxu0 %v1230
  %1980 = vmatpush1.msra.mxu0 %v1229
  %1981 = vmatprep.subr.mxu0 %v1266
  %1982 = vmatpush1.msra.mxu0 %v1265
  %1983 = vmatprep.subr.mxu0 %v1302
  %1984 = vmatpush1.msra.mxu0 %v1301
  %1985 = vmatprep.subr.mxu0 %v1394
  %1986 = vmatpush1.msra.mxu0 %v1391
  %1987 = vmatprep.subr.mxu0 0.0
  %1988 = vmatpush1.msra.mxu0 0.0
  %1989 = vmatprep.subr.mxu0 0.0
  %1990 = vmatpush1.msra.mxu0 0.0
  %1991 = vmatprep.subr.mxu0 0.0
  %1992 = vmatpush1.msra.mxu0 0.0
  %1993 = vmatprep.subr.mxu0 0.0
  %1994 = vmatpush1.msra.mxu0 0.0
  %1995 = vmatprep.subr.mxu0 0.0
  %1996 = vmatpush1.msra.mxu0 0.0
  %1997 = vmatprep.subr.mxu0 0.0
  %1998 = vmatpush1.msra.mxu0 0.0
  %1999 = vmatprep.subr.mxu0 0.0
  %2000 = vmatpush1.msra.mxu0 0.0
  %2001 = vmatprep.subr.mxu0 0.0
  %2002 = vmatpush1.msra.mxu0 0.0
  %2003 = vmatprep.subr.mxu0 0.0
  %2004 = vmatpush1.msra.mxu0 0.0
  %2005 = vmatprep.subr.mxu0 0.0
  %2006 = vmatpush1.msra.mxu0 0.0
  %2007 = vmatprep.subr.mxu0 0.0
  %2008 = vmatpush1.msra.mxu0 0.0
  %2009 = vmatprep.subr.mxu0 0.0
  %2010 = vmatpush1.msra.mxu0 0.0
  %2011 = vmatprep.subr.mxu0 0.0
  %2012 = vmatpush1.msra.mxu0 0.0
  %2013 = vmatprep.subr.mxu0 0.0
  %2014 = vmatpush1.msra.mxu0 0.0
  %2015 = vmatprep.subr.mxu0 0.0
  %2016 = vmatpush1.msra.mxu0 0.0
  %2017 = vmatprep.subr.mxu0 0.0
  %2018 = vmatpush1.msra.mxu0 0.0
  %2019 = vmatprep.subr.mxu0 0.0
  %2020 = vmatpush1.msra.mxu0 0.0
  %2021 = vmatprep.subr.mxu0 0.0
  %2022 = vmatpush1.msra.mxu0 0.0
  %2023 = vmatprep.subr.mxu0 0.0
  %2024 = vmatpush1.msra.mxu0 0.0
  %2025 = vmatprep.subr.mxu0 0.0
  %2026 = vmatpush1.msra.mxu0 0.0
  %2027 = vmatprep.subr.mxu0 0.0
  %2028 = vmatpush1.msra.mxu0 0.0
  %2029 = vmatprep.subr.mxu0 0.0
  %2030 = vmatpush1.msra.mxu0 0.0
  %2031 = vmatprep.subr.mxu0 0.0
  %2032 = vmatpush1.msra.mxu0 0.0
  %2033 = vmatprep.subr.mxu0 0.0
  %2034 = vmatpush1.msra.mxu0 0.0
  %2035 = vmatprep.subr.mxu0 0.0
  %2036 = vmatpush1.msra.mxu0 0.0
  %2037 = vmatprep.subr.mxu0 0.0
  %2038 = vmatpush1.msra.mxu0 0.0
  %2039 = vmatprep.subr.mxu0 0.0
  %2040 = vmatpush1.msra.mxu0 0.0
  %2041 = vmatprep.mubr.f32.mxu0 0.0
  %2042 = vmatmul.mubr.f32.gmra.mrb[0].mxu0 %v1369
  %v2043 = vpop.f32.mrb[0].mxu0
  %v2044 = vadd.f32 %v1973, %v2043
  %v2045 = vpop.f32.mrb[0].mxu0
  %v2046 = vadd.f32 %v1975, %v2045
  %2047 = vdwg.mxu0
  %2048 = vmatprep.subr.mxu0 %v44
  %2049 = vmatpush1.msra.mxu0 %v43
  %2050 = vmatprep.subr.mxu0 %v80
  %2051 = vmatpush1.msra.mxu0 %v79
  %2052 = vmatprep.subr.mxu0 %v116
  %2053 = vmatpush1.msra.mxu0 %v115
  %2054 = vmatprep.subr.mxu0 %v152
  %2055 = vmatpush1.msra.mxu0 %v151
  %2056 = vmatprep.subr.mxu0 %v188
  %2057 = vmatpush1.msra.mxu0 %v187
  %2058 = vmatprep.subr.mxu0 %v224
  %2059 = vmatpush1.msra.mxu0 %v223
  %2060 = vmatprep.subr.mxu0 %v260
  %2061 = vmatpush1.msra.mxu0 %v259
  %2062 = vmatprep.subr.mxu0 %v296
  %2063 = vmatpush1.msra.mxu0 %v295
  %2064 = vmatprep.subr.mxu0 %v332
  %2065 = vmatpush1.msra.mxu0 %v331
  %2066 = vmatprep.subr.mxu0 %v368
  %2067 = vmatpush1.msra.mxu0 %v367
  %2068 = vmatprep.subr.mxu0 %v404
  %2069 = vmatpush1.msra.mxu0 %v403
  %2070 = vmatprep.subr.mxu0 %v440
  %2071 = vmatpush1.msra.mxu0 %v439
  %2072 = vmatprep.subr.mxu0 %v476
  %2073 = vmatpush1.msra.mxu0 %v475
  %2074 = vmatprep.subr.mxu0 %v512
  %2075 = vmatpush1.msra.mxu0 %v511
  %2076 = vmatprep.subr.mxu0 %v548
  %2077 = vmatpush1.msra.mxu0 %v547
  %2078 = vmatprep.subr.mxu0 %v584
  %2079 = vmatpush1.msra.mxu0 %v583
  %2080 = vmatprep.subr.mxu0 %v620
  %2081 = vmatpush1.msra.mxu0 %v619
  %2082 = vmatprep.subr.mxu0 %v656
  %2083 = vmatpush1.msra.mxu0 %v655
  %2084 = vmatprep.subr.mxu0 %v692
  %2085 = vmatpush1.msra.mxu0 %v691
  %2086 = vmatprep.subr.mxu0 %v728
  %2087 = vmatpush1.msra.mxu0 %v727
  %2088 = vmatprep.subr.mxu0 %v764
  %2089 = vmatpush1.msra.mxu0 %v763
  %2090 = vmatprep.subr.mxu0 %v800
  %2091 = vmatpush1.msra.mxu0 %v799
  %2092 = vmatprep.subr.mxu0 %v836
  %2093 = vmatpush1.msra.mxu0 %v835
  %2094 = vmatprep.subr.mxu0 %v872
  %2095 = vmatpush1.msra.mxu0 %v871
  %2096 = vmatprep.subr.mxu0 %v908
  %2097 = vmatpush1.msra.mxu0 %v907
  %2098 = vmatprep.subr.mxu0 %v944
  %2099 = vmatpush1.msra.mxu0 %v943
  %2100 = vmatprep.subr.mxu0 %v980
  %2101 = vmatpush1.msra.mxu0 %v979
  %2102 = vmatprep.subr.mxu0 %v1016
  %2103 = vmatpush1.msra.mxu0 %v1015
  %2104 = vmatprep.subr.mxu0 %v1052
  %2105 = vmatpush1.msra.mxu0 %v1051
  %2106 = vmatprep.subr.mxu0 %v1088
  %2107 = vmatpush1.msra.mxu0 %v1087
  %2108 = vmatprep.subr.mxu0 %v1124
  %2109 = vmatpush1.msra.mxu0 %v1123
  %2110 = vmatprep.subr.mxu0 %v1160
  %2111 = vmatpush1.msra.mxu0 %v1159
  %2112 = vmatprep.mubr.f32.mxu0 %v33
  %2113 = vmatmul.mubr.f32.gmra.mrb[0].mxu0 %v32
  %v2114 = vpop.f32.mrb[0].mxu0
  %v2115 = vadd.f32 0.0, %v2114
  %v2116 = vpop.f32.mrb[0].mxu0
  %v2117 = vadd.f32 0.0, %v2116
  %2118 = vdwg.mxu0
  %2119 = vmatprep.subr.mxu0 %v1196
  %2120 = vmatpush1.msra.mxu0 %v1195
  %2121 = vmatprep.subr.mxu0 %v1232
  %2122 = vmatpush1.msra.mxu0 %v1231
  %2123 = vmatprep.subr.mxu0 %v1268
  %2124 = vmatpush1.msra.mxu0 %v1267
  %2125 = vmatprep.subr.mxu0 %v1304
  %2126 = vmatpush1.msra.mxu0 %v1303
  %2127 = vmatprep.subr.mxu0 %v1400
  %2128 = vmatpush1.msra.mxu0 %v1397
  %2129 = vmatprep.subr.mxu0 0.0
  %2130 = vmatpush1.msra.mxu0 0.0
  %2131 = vmatprep.subr.mxu0 0.0
  %2132 = vmatpush1.msra.mxu0 0.0
  %2133 = vmatprep.subr.mxu0 0.0
  %2134 = vmatpush1.msra.mxu0 0.0
  %2135 = vmatprep.subr.mxu0 0.0
  %2136 = vmatpush1.msra.mxu0 0.0
  %2137 = vmatprep.subr.mxu0 0.0
  %2138 = vmatpush1.msra.mxu0 0.0
  %2139 = vmatprep.subr.mxu0 0.0
  %2140 = vmatpush1.msra.mxu0 0.0
  %2141 = vmatprep.subr.mxu0 0.0
  %2142 = vmatpush1.msra.mxu0 0.0
  %2143 = vmatprep.subr.mxu0 0.0
  %2144 = vmatpush1.msra.mxu0 0.0
  %2145 = vmatprep.subr.mxu0 0.0
  %2146 = vmatpush1.msra.mxu0 0.0
  %2147 = vmatprep.subr.mxu0 0.0
  %2148 = vmatpush1.msra.mxu0 0.0
  %2149 = vmatprep.subr.mxu0 0.0
  %2150 = vmatpush1.msra.mxu0 0.0
  %2151 = vmatprep.subr.mxu0 0.0
  %2152 = vmatpush1.msra.mxu0 0.0
  %2153 = vmatprep.subr.mxu0 0.0
  %2154 = vmatpush1.msra.mxu0 0.0
  %2155 = vmatprep.subr.mxu0 0.0
  %2156 = vmatpush1.msra.mxu0 0.0
  %2157 = vmatprep.subr.mxu0 0.0
  %2158 = vmatpush1.msra.mxu0 0.0
  %2159 = vmatprep.subr.mxu0 0.0
  %2160 = vmatpush1.msra.mxu0 0.0
  %2161 = vmatprep.subr.mxu0 0.0
  %2162 = vmatpush1.msra.mxu0 0.0
  %2163 = vmatprep.subr.mxu0 0.0
  %2164 = vmatpush1.msra.mxu0 0.0
  %2165 = vmatprep.subr.mxu0 0.0
  %2166 = vmatpush1.msra.mxu0 0.0
  %2167 = vmatprep.subr.mxu0 0.0
  %2168 = vmatpush1.msra.mxu0 0.0
  %2169 = vmatprep.subr.mxu0 0.0
  %2170 = vmatpush1.msra.mxu0 0.0
  %2171 = vmatprep.subr.mxu0 0.0
  %2172 = vmatpush1.msra.mxu0 0.0
  %2173 = vmatprep.subr.mxu0 0.0
  %2174 = vmatpush1.msra.mxu0 0.0
  %2175 = vmatprep.subr.mxu0 0.0
  %2176 = vmatpush1.msra.mxu0 0.0
  %2177 = vmatprep.subr.mxu0 0.0
  %2178 = vmatpush1.msra.mxu0 0.0
  %2179 = vmatprep.subr.mxu0 0.0
  %2180 = vmatpush1.msra.mxu0 0.0
  %2181 = vmatprep.subr.mxu0 0.0
  %2182 = vmatpush1.msra.mxu0 0.0
  %2183 = vmatprep.mubr.f32.mxu0 0.0
  %2184 = vmatmul.mubr.f32.gmra.mrb[0].mxu0 %v1369
  %v2185 = vpop.f32.mrb[0].mxu0
  %v2186 = vadd.f32 %v2115, %v2185
  %v2187 = vpop.f32.mrb[0].mxu0
  %v2188 = vadd.f32 %v2117, %v2187
  %2189 = vdwg.mxu0
  %2190 = vmatprep.subr.mxu0 %v46
  %2191 = vmatpush1.msra.mxu0 %v45
  %2192 = vmatprep.subr.mxu0 %v82
  %2193 = vmatpush1.msra.mxu0 %v81
  %2194 = vmatprep.subr.mxu0 %v118
  %2195 = vmatpush1.msra.mxu0 %v117
  %2196 = vmatprep.subr.mxu0 %v154
  %2197 = vmatpush1.msra.mxu0 %v153
  %2198 = vmatprep.subr.mxu0 %v190
  %2199 = vmatpush1.msra.mxu0 %v189
  %2200 = vmatprep.subr.mxu0 %v226
  %2201 = vmatpush1.msra.mxu0 %v225
  %2202 = vmatprep.subr.mxu0 %v262
  %2203 = vmatpush1.msra.mxu0 %v261
  %2204 = vmatprep.subr.mxu0 %v298
  %2205 = vmatpush1.msra.mxu0 %v297
  %2206 = vmatprep.subr.mxu0 %v334
  %2207 = vmatpush1.msra.mxu0 %v333
  %2208 = vmatprep.subr.mxu0 %v370
  %2209 = vmatpush1.msra.mxu0 %v369
  %2210 = vmatprep.subr.mxu0 %v406
  %2211 = vmatpush1.msra.mxu0 %v405
  %2212 = vmatprep.subr.mxu0 %v442
  %2213 = vmatpush1.msra.mxu0 %v441
  %2214 = vmatprep.subr.mxu0 %v478
  %2215 = vmatpush1.msra.mxu0 %v477
  %2216 = vmatprep.subr.mxu0 %v514
  %2217 = vmatpush1.msra.mxu0 %v513
  %2218 = vmatprep.subr.mxu0 %v550
  %2219 = vmatpush1.msra.mxu0 %v549
  %2220 = vmatprep.subr.mxu0 %v586
  %2221 = vmatpush1.msra.mxu0 %v585
  %2222 = vmatprep.subr.mxu0 %v622
  %2223 = vmatpush1.msra.mxu0 %v621
  %2224 = vmatprep.subr.mxu0 %v658
  %2225 = vmatpush1.msra.mxu0 %v657
  %2226 = vmatprep.subr.mxu0 %v694
  %2227 = vmatpush1.msra.mxu0 %v693
  %2228 = vmatprep.subr.mxu0 %v730
  %2229 = vmatpush1.msra.mxu0 %v729
  %2230 = vmatprep.subr.mxu0 %v766
  %2231 = vmatpush1.msra.mxu0 %v765
  %2232 = vmatprep.subr.mxu0 %v802
  %2233 = vmatpush1.msra.mxu0 %v801
  %2234 = vmatprep.subr.mxu0 %v838
  %2235 = vmatpush1.msra.mxu0 %v837
  %2236 = vmatprep.subr.mxu0 %v874
  %2237 = vmatpush1.msra.mxu0 %v873
  %2238 = vmatprep.subr.mxu0 %v910
  %2239 = vmatpush1.msra.mxu0 %v909
  %2240 = vmatprep.subr.mxu0 %v946
  %2241 = vmatpush1.msra.mxu0 %v945
  %2242 = vmatprep.subr.mxu0 %v982
  %2243 = vmatpush1.msra.mxu0 %v981
  %2244 = vmatprep.subr.mxu0 %v1018
  %2245 = vmatpush1.msra.mxu0 %v1017
  %2246 = vmatprep.subr.mxu0 %v1054
  %2247 = vmatpush1.msra.mxu0 %v1053
  %2248 = vmatprep.subr.mxu0 %v1090
  %2249 = vmatpush1.msra.mxu0 %v1089
  %2250 = vmatprep.subr.mxu0 %v1126
  %2251 = vmatpush1.msra.mxu0 %v1125
  %2252 = vmatprep.subr.mxu0 %v1162
  %2253 = vmatpush1.msra.mxu0 %v1161
  %2254 = vmatprep.mubr.f32.mxu0 %v33
  %2255 = vmatmul.mubr.f32.gmra.mrb[0].mxu0 %v32
  %v2256 = vpop.f32.mrb[0].mxu0
  %v2257 = vadd.f32 0.0, %v2256
  %v2258 = vpop.f32.mrb[0].mxu0
  %v2259 = vadd.f32 0.0, %v2258
  %2260 = vdwg.mxu0
  %2261 = vmatprep.subr.mxu0 %v1198
  %2262 = vmatpush1.msra.mxu0 %v1197
  %2263 = vmatprep.subr.mxu0 %v1234
  %2264 = vmatpush1.msra.mxu0 %v1233
  %2265 = vmatprep.subr.mxu0 %v1270
  %2266 = vmatpush1.msra.mxu0 %v1269
  %2267 = vmatprep.subr.mxu0 %v1306
  %2268 = vmatpush1.msra.mxu0 %v1305
  %2269 = vmatprep.subr.mxu0 %v1406
  %2270 = vmatpush1.msra.mxu0 %v1403
  %2271 = vmatprep.subr.mxu0 0.0
  %2272 = vmatpush1.msra.mxu0 0.0
  %2273 = vmatprep.subr.mxu0 0.0
  %2274 = vmatpush1.msra.mxu0 0.0
  %2275 = vmatprep.subr.mxu0 0.0
  %2276 = vmatpush1.msra.mxu0 0.0
  %2277 = vmatprep.subr.mxu0 0.0
  %2278 = vmatpush1.msra.mxu0 0.0
  %2279 = vmatprep.subr.mxu0 0.0
  %2280 = vmatpush1.msra.mxu0 0.0
  %2281 = vmatprep.subr.mxu0 0.0
  %2282 = vmatpush1.msra.mxu0 0.0
  %2283 = vmatprep.subr.mxu0 0.0
  %2284 = vmatpush1.msra.mxu0 0.0
  %2285 = vmatprep.subr.mxu0 0.0
  %2286 = vmatpush1.msra.mxu0 0.0
  %2287 = vmatprep.subr.mxu0 0.0
  %2288 = vmatpush1.msra.mxu0 0.0
  %2289 = vmatprep.subr.mxu0 0.0
  %2290 = vmatpush1.msra.mxu0 0.0
  %2291 = vmatprep.subr.mxu0 0.0
  %2292 = vmatpush1.msra.mxu0 0.0
  %2293 = vmatprep.subr.mxu0 0.0
  %2294 = vmatpush1.msra.mxu0 0.0
  %2295 = vmatprep.subr.mxu0 0.0
  %2296 = vmatpush1.msra.mxu0 0.0
  %2297 = vmatprep.subr.mxu0 0.0
  %2298 = vmatpush1.msra.mxu0 0.0
  %2299 = vmatprep.subr.mxu0 0.0
  %2300 = vmatpush1.msra.mxu0 0.0
  %2301 = vmatprep.subr.mxu0 0.0
  %2302 = vmatpush1.msra.mxu0 0.0
  %2303 = vmatprep.subr.mxu0 0.0
  %2304 = vmatpush1.msra.mxu0 0.0
  %2305 = vmatprep.subr.mxu0 0.0
  %2306 = vmatpush1.msra.mxu0 0.0
  %2307 = vmatprep.subr.mxu0 0.0
  %2308 = vmatpush1.msra.mxu0 0.0
  %2309 = vmatprep.subr.mxu0 0.0
  %2310 = vmatpush1.msra.mxu0 0.0
  %2311 = vmatprep.subr.mxu0 0.0
  %2312 = vmatpush1.msra.mxu0 0.0
  %2313 = vmatprep.subr.mxu0 0.0
  %2314 = vmatpush1.msra.mxu0 0.0
  %2315 = vmatprep.subr.mxu0 0.0
  %2316 = vmatpush1.msra.mxu0 0.0
  %2317 = vmatprep.subr.mxu0 0.0
  %2318 = vmatpush1.msra.mxu0 0.0
  %2319 = vmatprep.subr.mxu0 0.0
  %2320 = vmatpush1.msra.mxu0 0.0
  %2321 = vmatprep.subr.mxu0 0.0
  %2322 = vmatpush1.msra.mxu0 0.0
  %2323 = vmatprep.subr.mxu0 0.0
  %2324 = vmatpush1.msra.mxu0 0.0
  %2325 = vmatprep.mubr.f32.mxu0 0.0
  %2326 = vmatmul.mubr.f32.gmra.mrb[0].mxu0 %v1369
  %v2327 = vpop.f32.mrb[0].mxu0
  %v2328 = vadd.f32 %v2257, %v2327
  %v2329 = vpop.f32.mrb[0].mxu0
  %v2330 = vadd.f32 %v2259, %v2329
  %2331 = vdwg.mxu0
  %2332 = vmatprep.subr.mxu0 %v48
  %2333 = vmatpush1.msra.mxu0 %v47
  %2334 = vmatprep.subr.mxu0 %v84
  %2335 = vmatpush1.msra.mxu0 %v83
  %2336 = vmatprep.subr.mxu0 %v120
  %2337 = vmatpush1.msra.mxu0 %v119
  %2338 = vmatprep.subr.mxu0 %v156
  %2339 = vmatpush1.msra.mxu0 %v155
  %2340 = vmatprep.subr.mxu0 %v192
  %2341 = vmatpush1.msra.mxu0 %v191
  %2342 = vmatprep.subr.mxu0 %v228
  %2343 = vmatpush1.msra.mxu0 %v227
  %2344 = vmatprep.subr.mxu0 %v264
  %2345 = vmatpush1.msra.mxu0 %v263
  %2346 = vmatprep.subr.mxu0 %v300
  %2347 = vmatpush1.msra.mxu0 %v299
  %2348 = vmatprep.subr.mxu0 %v336
  %2349 = vmatpush1.msra.mxu0 %v335
  %2350 = vmatprep.subr.mxu0 %v372
  %2351 = vmatpush1.msra.mxu0 %v371
  %2352 = vmatprep.subr.mxu0 %v408
  %2353 = vmatpush1.msra.mxu0 %v407
  %2354 = vmatprep.subr.mxu0 %v444
  %2355 = vmatpush1.msra.mxu0 %v443
  %2356 = vmatprep.subr.mxu0 %v480
  %2357 = vmatpush1.msra.mxu0 %v479
  %2358 = vmatprep.subr.mxu0 %v516
  %2359 = vmatpush1.msra.mxu0 %v515
  %2360 = vmatprep.subr.mxu0 %v552
  %2361 = vmatpush1.msra.mxu0 %v551
  %2362 = vmatprep.subr.mxu0 %v588
  %2363 = vmatpush1.msra.mxu0 %v587
  %2364 = vmatprep.subr.mxu0 %v624
  %2365 = vmatpush1.msra.mxu0 %v623
  %2366 = vmatprep.subr.mxu0 %v660
  %2367 = vmatpush1.msra.mxu0 %v659
  %2368 = vmatprep.subr.mxu0 %v696
  %2369 = vmatpush1.msra.mxu0 %v695
  %2370 = vmatprep.subr.mxu0 %v732
  %2371 = vmatpush1.msra.mxu0 %v731
  %2372 = vmatprep.subr.mxu0 %v768
  %2373 = vmatpush1.msra.mxu0 %v767
  %2374 = vmatprep.subr.mxu0 %v804
  %2375 = vmatpush1.msra.mxu0 %v803
  %2376 = vmatprep.subr.mxu0 %v840
  %2377 = vmatpush1.msra.mxu0 %v839
  %2378 = vmatprep.subr.mxu0 %v876
  %2379 = vmatpush1.msra.mxu0 %v875
  %2380 = vmatprep.subr.mxu0 %v912
  %2381 = vmatpush1.msra.mxu0 %v911
  %2382 = vmatprep.subr.mxu0 %v948
  %2383 = vmatpush1.msra.mxu0 %v947
  %2384 = vmatprep.subr.mxu0 %v984
  %2385 = vmatpush1.msra.mxu0 %v983
  %2386 = vmatprep.subr.mxu0 %v1020
  %2387 = vmatpush1.msra.mxu0 %v1019
  %2388 = vmatprep.subr.mxu0 %v1056
  %2389 = vmatpush1.msra.mxu0 %v1055
  %2390 = vmatprep.subr.mxu0 %v1092
  %2391 = vmatpush1.msra.mxu0 %v1091
  %2392 = vmatprep.subr.mxu0 %v1128
  %2393 = vmatpush1.msra.mxu0 %v1127
  %2394 = vmatprep.subr.mxu0 %v1164
  %2395 = vmatpush1.msra.mxu0 %v1163
  %2396 = vmatprep.mubr.f32.mxu0 %v33
  %2397 = vmatmul.mubr.f32.gmra.mrb[0].mxu0 %v32
  %v2398 = vpop.f32.mrb[0].mxu0
  %v2399 = vadd.f32 0.0, %v2398
  %v2400 = vpop.f32.mrb[0].mxu0
  %v2401 = vadd.f32 0.0, %v2400
  %2402 = vdwg.mxu0
  %2403 = vmatprep.subr.mxu0 %v1200
  %2404 = vmatpush1.msra.mxu0 %v1199
  %2405 = vmatprep.subr.mxu0 %v1236
  %2406 = vmatpush1.msra.mxu0 %v1235
  %2407 = vmatprep.subr.mxu0 %v1272
  %2408 = vmatpush1.msra.mxu0 %v1271
  %2409 = vmatprep.subr.mxu0 %v1308
  %2410 = vmatpush1.msra.mxu0 %v1307
  %2411 = vmatprep.subr.mxu0 %v1412
  %2412 = vmatpush1.msra.mxu0 %v1409
  %2413 = vmatprep.subr.mxu0 0.0
  %2414 = vmatpush1.msra.mxu0 0.0
  %2415 = vmatprep.subr.mxu0 0.0
  %2416 = vmatpush1.msra.mxu0 0.0
  %2417 = vmatprep.subr.mxu0 0.0
  %2418 = vmatpush1.msra.mxu0 0.0
  %2419 = vmatprep.subr.mxu0 0.0
  %2420 = vmatpush1.msra.mxu0 0.0
  %2421 = vmatprep.subr.mxu0 0.0
  %2422 = vmatpush1.msra.mxu0 0.0
  %2423 = vmatprep.subr.mxu0 0.0
  %2424 = vmatpush1.msra.mxu0 0.0
  %2425 = vmatprep.subr.mxu0 0.0
  %2426 = vmatpush1.msra.mxu0 0.0
  %2427 = vmatprep.subr.mxu0 0.0
  %2428 = vmatpush1.msra.mxu0 0.0
  %2429 = vmatprep.subr.mxu0 0.0
  %2430 = vmatpush1.msra.mxu0 0.0
  %2431 = vmatprep.subr.mxu0 0.0
  %2432 = vmatpush1.msra.mxu0 0.0
  %2433 = vmatprep.subr.mxu0 0.0
  %2434 = vmatpush1.msra.mxu0 0.0
  %2435 = vmatprep.subr.mxu0 0.0
  %2436 = vmatpush1.msra.mxu0 0.0
  %2437 = vmatprep.subr.mxu0 0.0
  %2438 = vmatpush1.msra.mxu0 0.0
  %2439 = vmatprep.subr.mxu0 0.0
  %2440 = vmatpush1.msra.mxu0 0.0
  %2441 = vmatprep.subr.mxu0 0.0
  %2442 = vmatpush1.msra.mxu0 0.0
  %2443 = vmatprep.subr.mxu0 0.0
  %2444 = vmatpush1.msra.mxu0 0.0
  %2445 = vmatprep.subr.mxu0 0.0
  %2446 = vmatpush1.msra.mxu0 0.0
  %2447 = vmatprep.subr.mxu0 0.0
  %2448 = vmatpush1.msra.mxu0 0.0
  %2449 = vmatprep.subr.mxu0 0.0
  %2450 = vmatpush1.msra.mxu0 0.0
  %2451 = vmatprep.subr.mxu0 0.0
  %2452 = vmatpush1.msra.mxu0 0.0
  %2453 = vmatprep.subr.mxu0 0.0
  %2454 = vmatpush1.msra.mxu0 0.0
  %2455 = vmatprep.subr.mxu0 0.0
  %2456 = vmatpush1.msra.mxu0 0.0
  %2457 = vmatprep.subr.mxu0 0.0
  %2458 = vmatpush1.msra.mxu0 0.0
  %2459 = vmatprep.subr.mxu0 0.0
  %2460 = vmatpush1.msra.mxu0 0.0
  %2461 = vmatprep.subr.mxu0 0.0
  %2462 = vmatpush1.msra.mxu0 0.0
  %2463 = vmatprep.subr.mxu0 0.0
  %2464 = vmatpush1.msra.mxu0 0.0
  %2465 = vmatprep.subr.mxu0 0.0
  %2466 = vmatpush1.msra.mxu0 0.0
  %2467 = vmatprep.mubr.f32.mxu0 0.0
  %2468 = vmatmul.mubr.f32.gmra.mrb[0].mxu0 %v1369
  %v2469 = vpop.f32.mrb[0].mxu0
  %v2470 = vadd.f32 %v2399, %v2469
  %v2471 = vpop.f32.mrb[0].mxu0
  %v2472 = vadd.f32 %v2401, %v2471
  %2473 = vdwg.mxu0
  %2474 = vmatprep.subr.mxu0 %v50
  %2475 = vmatpush1.msra.mxu0 %v49
  %2476 = vmatprep.subr.mxu0 %v86
  %2477 = vmatpush1.msra.mxu0 %v85
  %2478 = vmatprep.subr.mxu0 %v122
  %2479 = vmatpush1.msra.mxu0 %v121
  %2480 = vmatprep.subr.mxu0 %v158
  %2481 = vmatpush1.msra.mxu0 %v157
  %2482 = vmatprep.subr.mxu0 %v194
  %2483 = vmatpush1.msra.mxu0 %v193
  %2484 = vmatprep.subr.mxu0 %v230
  %2485 = vmatpush1.msra.mxu0 %v229
  %2486 = vmatprep.subr.mxu0 %v266
  %2487 = vmatpush1.msra.mxu0 %v265
  %2488 = vmatprep.subr.mxu0 %v302
  %2489 = vmatpush1.msra.mxu0 %v301
  %2490 = vmatprep.subr.mxu0 %v338
  %2491 = vmatpush1.msra.mxu0 %v337
  %2492 = vmatprep.subr.mxu0 %v374
  %2493 = vmatpush1.msra.mxu0 %v373
  %2494 = vmatprep.subr.mxu0 %v410
  %2495 = vmatpush1.msra.mxu0 %v409
  %2496 = vmatprep.subr.mxu0 %v446
  %2497 = vmatpush1.msra.mxu0 %v445
  %2498 = vmatprep.subr.mxu0 %v482
  %2499 = vmatpush1.msra.mxu0 %v481
  %2500 = vmatprep.subr.mxu0 %v518
  %2501 = vmatpush1.msra.mxu0 %v517
  %2502 = vmatprep.subr.mxu0 %v554
  %2503 = vmatpush1.msra.mxu0 %v553
  %2504 = vmatprep.subr.mxu0 %v590
  %2505 = vmatpush1.msra.mxu0 %v589
  %2506 = vmatprep.subr.mxu0 %v626
  %2507 = vmatpush1.msra.mxu0 %v625
  %2508 = vmatprep.subr.mxu0 %v662
  %2509 = vmatpush1.msra.mxu0 %v661
  %2510 = vmatprep.subr.mxu0 %v698
  %2511 = vmatpush1.msra.mxu0 %v697
  %2512 = vmatprep.subr.mxu0 %v734
  %2513 = vmatpush1.msra.mxu0 %v733
  %2514 = vmatprep.subr.mxu0 %v770
  %2515 = vmatpush1.msra.mxu0 %v769
  %2516 = vmatprep.subr.mxu0 %v806
  %2517 = vmatpush1.msra.mxu0 %v805
  %2518 = vmatprep.subr.mxu0 %v842
  %2519 = vmatpush1.msra.mxu0 %v841
  %2520 = vmatprep.subr.mxu0 %v878
  %2521 = vmatpush1.msra.mxu0 %v877
  %2522 = vmatprep.subr.mxu0 %v914
  %2523 = vmatpush1.msra.mxu0 %v913
  %2524 = vmatprep.subr.mxu0 %v950
  %2525 = vmatpush1.msra.mxu0 %v949
  %2526 = vmatprep.subr.mxu0 %v986
  %2527 = vmatpush1.msra.mxu0 %v985
  %2528 = vmatprep.subr.mxu0 %v1022
  %2529 = vmatpush1.msra.mxu0 %v1021
  %2530 = vmatprep.subr.mxu0 %v1058
  %2531 = vmatpush1.msra.mxu0 %v1057
  %2532 = vmatprep.subr.mxu0 %v1094
  %2533 = vmatpush1.msra.mxu0 %v1093
  %2534 = vmatprep.subr.mxu0 %v1130
  %2535 = vmatpush1.msra.mxu0 %v1129
  %2536 = vmatprep.subr.mxu0 %v1166
  %2537 = vmatpush1.msra.mxu0 %v1165
  %2538 = vmatprep.mubr.f32.mxu0 %v33
  %2539 = vmatmul.mubr.f32.gmra.mrb[0].mxu0 %v32
  %v2540 = vpop.f32.mrb[0].mxu0
  %v2541 = vadd.f32 0.0, %v2540
  %v2542 = vpop.f32.mrb[0].mxu0
  %v2543 = vadd.f32 0.0, %v2542
  %2544 = vdwg.mxu0
  %2545 = vmatprep.subr.mxu0 %v1202
  %2546 = vmatpush1.msra.mxu0 %v1201
  %2547 = vmatprep.subr.mxu0 %v1238
  %2548 = vmatpush1.msra.mxu0 %v1237
  %2549 = vmatprep.subr.mxu0 %v1274
  %2550 = vmatpush1.msra.mxu0 %v1273
  %2551 = vmatprep.subr.mxu0 %v1310
  %2552 = vmatpush1.msra.mxu0 %v1309
  %2553 = vmatprep.subr.mxu0 %v1418
  %2554 = vmatpush1.msra.mxu0 %v1415
  %2555 = vmatprep.subr.mxu0 0.0
  %2556 = vmatpush1.msra.mxu0 0.0
  %2557 = vmatprep.subr.mxu0 0.0
  %2558 = vmatpush1.msra.mxu0 0.0
  %2559 = vmatprep.subr.mxu0 0.0
  %2560 = vmatpush1.msra.mxu0 0.0
  %2561 = vmatprep.subr.mxu0 0.0
  %2562 = vmatpush1.msra.mxu0 0.0
  %2563 = vmatprep.subr.mxu0 0.0
  %2564 = vmatpush1.msra.mxu0 0.0
  %2565 = vmatprep.subr.mxu0 0.0
  %2566 = vmatpush1.msra.mxu0 0.0
  %2567 = vmatprep.subr.mxu0 0.0
  %2568 = vmatpush1.msra.mxu0 0.0
  %2569 = vmatprep.subr.mxu0 0.0
  %2570 = vmatpush1.msra.mxu0 0.0
  %2571 = vmatprep.subr.mxu0 0.0
  %2572 = vmatpush1.msra.mxu0 0.0
  %2573 = vmatprep.subr.mxu0 0.0
  %2574 = vmatpush1.msra.mxu0 0.0
  %2575 = vmatprep.subr.mxu0 0.0
  %2576 = vmatpush1.msra.mxu0 0.0
  %2577 = vmatprep.subr.mxu0 0.0
  %2578 = vmatpush1.msra.mxu0 0.0
  %2579 = vmatprep.subr.mxu0 0.0
  %2580 = vmatpush1.msra.mxu0 0.0
  %2581 = vmatprep.subr.mxu0 0.0
  %2582 = vmatpush1.msra.mxu0 0.0
  %2583 = vmatprep.subr.mxu0 0.0
  %2584 = vmatpush1.msra.mxu0 0.0
  %2585 = vmatprep.subr.mxu0 0.0
  %2586 = vmatpush1.msra.mxu0 0.0
  %2587 = vmatprep.subr.mxu0 0.0
  %2588 = vmatpush1.msra.mxu0 0.0
  %2589 = vmatprep.subr.mxu0 0.0
  %2590 = vmatpush1.msra.mxu0 0.0
  %2591 = vmatprep.subr.mxu0 0.0
  %2592 = vmatpush1.msra.mxu0 0.0
  %2593 = vmatprep.subr.mxu0 0.0
  %2594 = vmatpush1.msra.mxu0 0.0
  %2595 = vmatprep.subr.mxu0 0.0
  %2596 = vmatpush1.msra.mxu0 0.0
  %2597 = vmatprep.subr.mxu0 0.0
  %2598 = vmatpush1.msra.mxu0 0.0
  %2599 = vmatprep.subr.mxu0 0.0
  %2600 = vmatpush1.msra.mxu0 0.0
  %2601 = vmatprep.subr.mxu0 0.0
  %2602 = vmatpush1.msra.mxu0 0.0
  %2603 = vmatprep.subr.mxu0 0.0
  %2604 = vmatpush1.msra.mxu0 0.0
  %2605 = vmatprep.subr.mxu0 0.0
  %2606 = vmatpush1.msra.mxu0 0.0
  %2607 = vmatprep.subr.mxu0 0.0
  %2608 = vmatpush1.msra.mxu0 0.0
  %2609 = vmatprep.mubr.f32.mxu0 0.0
  %2610 = vmatmul.mubr.f32.gmra.mrb[0].mxu0 %v1369
  %v2611 = vpop.f32.mrb[0].mxu0
  %v2612 = vadd.f32 %v2541, %v2611
  %v2613 = vpop.f32.mrb[0].mxu0
  %v2614 = vadd.f32 %v2543, %v2613
  %2615 = vdwg.mxu0
  %2616 = vmatprep.subr.mxu0 %v52
  %2617 = vmatpush1.msra.mxu0 %v51
  %2618 = vmatprep.subr.mxu0 %v88
  %2619 = vmatpush1.msra.mxu0 %v87
  %2620 = vmatprep.subr.mxu0 %v124
  %2621 = vmatpush1.msra.mxu0 %v123
  %2622 = vmatprep.subr.mxu0 %v160
  %2623 = vmatpush1.msra.mxu0 %v159
  %2624 = vmatprep.subr.mxu0 %v196
  %2625 = vmatpush1.msra.mxu0 %v195
  %2626 = vmatprep.subr.mxu0 %v232
  %2627 = vmatpush1.msra.mxu0 %v231
  %2628 = vmatprep.subr.mxu0 %v268
  %2629 = vmatpush1.msra.mxu0 %v267
  %2630 = vmatprep.subr.mxu0 %v304
  %2631 = vmatpush1.msra.mxu0 %v303
  %2632 = vmatprep.subr.mxu0 %v340
  %2633 = vmatpush1.msra.mxu0 %v339
  %2634 = vmatprep.subr.mxu0 %v376
  %2635 = vmatpush1.msra.mxu0 %v375
  %2636 = vmatprep.subr.mxu0 %v412
  %2637 = vmatpush1.msra.mxu0 %v411
  %2638 = vmatprep.subr.mxu0 %v448
  %2639 = vmatpush1.msra.mxu0 %v447
  %2640 = vmatprep.subr.mxu0 %v484
  %2641 = vmatpush1.msra.mxu0 %v483
  %2642 = vmatprep.subr.mxu0 %v520
  %2643 = vmatpush1.msra.mxu0 %v519
  %2644 = vmatprep.subr.mxu0 %v556
  %2645 = vmatpush1.msra.mxu0 %v555
  %2646 = vmatprep.subr.mxu0 %v592
  %2647 = vmatpush1.msra.mxu0 %v591
  %2648 = vmatprep.subr.mxu0 %v628
  %2649 = vmatpush1.msra.mxu0 %v627
  %2650 = vmatprep.subr.mxu0 %v664
  %2651 = vmatpush1.msra.mxu0 %v663
  %2652 = vmatprep.subr.mxu0 %v700
  %2653 = vmatpush1.msra.mxu0 %v699
  %2654 = vmatprep.subr.mxu0 %v736
  %2655 = vmatpush1.msra.mxu0 %v735
  %2656 = vmatprep.subr.mxu0 %v772
  %2657 = vmatpush1.msra.mxu0 %v771
  %2658 = vmatprep.subr.mxu0 %v808
  %2659 = vmatpush1.msra.mxu0 %v807
  %2660 = vmatprep.subr.mxu0 %v844
  %2661 = vmatpush1.msra.mxu0 %v843
  %2662 = vmatprep.subr.mxu0 %v880
  %2663 = vmatpush1.msra.mxu0 %v879
  %2664 = vmatprep.subr.mxu0 %v916
  %2665 = vmatpush1.msra.mxu0 %v915
  %2666 = vmatprep.subr.mxu0 %v952
  %2667 = vmatpush1.msra.mxu0 %v951
  %2668 = vmatprep.subr.mxu0 %v988
  %2669 = vmatpush1.msra.mxu0 %v987
  %2670 = vmatprep.subr.mxu0 %v1024
  %2671 = vmatpush1.msra.mxu0 %v1023
  %2672 = vmatprep.subr.mxu0 %v1060
  %2673 = vmatpush1.msra.mxu0 %v1059
  %2674 = vmatprep.subr.mxu0 %v1096
  %2675 = vmatpush1.msra.mxu0 %v1095
  %2676 = vmatprep.subr.mxu0 %v1132
  %2677 = vmatpush1.msra.mxu0 %v1131
  %2678 = vmatprep.subr.mxu0 %v1168
  %2679 = vmatpush1.msra.mxu0 %v1167
  %2680 = vmatprep.mubr.f32.mxu0 %v33
  %2681 = vmatmul.mubr.f32.gmra.mrb[0].mxu0 %v32
  %v2682 = vpop.f32.mrb[0].mxu0
  %v2683 = vadd.f32 0.0, %v2682
  %v2684 = vpop.f32.mrb[0].mxu0
  %v2685 = vadd.f32 0.0, %v2684
  %2686 = vdwg.mxu0
  %2687 = vmatprep.subr.mxu0 %v1204
  %2688 = vmatpush1.msra.mxu0 %v1203
  %2689 = vmatprep.subr.mxu0 %v1240
  %2690 = vmatpush1.msra.mxu0 %v1239
  %2691 = vmatprep.subr.mxu0 %v1276
  %2692 = vmatpush1.msra.mxu0 %v1275
  %2693 = vmatprep.subr.mxu0 %v1312
  %2694 = vmatpush1.msra.mxu0 %v1311
  %2695 = vmatprep.subr.mxu0 %v1424
  %2696 = vmatpush1.msra.mxu0 %v1421
  %2697 = vmatprep.subr.mxu0 0.0
  %2698 = vmatpush1.msra.mxu0 0.0
  %2699 = vmatprep.subr.mxu0 0.0
  %2700 = vmatpush1.msra.mxu0 0.0
  %2701 = vmatprep.subr.mxu0 0.0
  %2702 = vmatpush1.msra.mxu0 0.0
  %2703 = vmatprep.subr.mxu0 0.0
  %2704 = vmatpush1.msra.mxu0 0.0
  %2705 = vmatprep.subr.mxu0 0.0
  %2706 = vmatpush1.msra.mxu0 0.0
  %2707 = vmatprep.subr.mxu0 0.0
  %2708 = vmatpush1.msra.mxu0 0.0
  %2709 = vmatprep.subr.mxu0 0.0
  %2710 = vmatpush1.msra.mxu0 0.0
  %2711 = vmatprep.subr.mxu0 0.0
  %2712 = vmatpush1.msra.mxu0 0.0
  %2713 = vmatprep.subr.mxu0 0.0
  %2714 = vmatpush1.msra.mxu0 0.0
  %2715 = vmatprep.subr.mxu0 0.0
  %2716 = vmatpush1.msra.mxu0 0.0
  %2717 = vmatprep.subr.mxu0 0.0
  %2718 = vmatpush1.msra.mxu0 0.0
  %2719 = vmatprep.subr.mxu0 0.0
  %2720 = vmatpush1.msra.mxu0 0.0
  %2721 = vmatprep.subr.mxu0 0.0
  %2722 = vmatpush1.msra.mxu0 0.0
  %2723 = vmatprep.subr.mxu0 0.0
  %2724 = vmatpush1.msra.mxu0 0.0
  %2725 = vmatprep.subr.mxu0 0.0
  %2726 = vmatpush1.msra.mxu0 0.0
  %2727 = vmatprep.subr.mxu0 0.0
  %2728 = vmatpush1.msra.mxu0 0.0
  %2729 = vmatprep.subr.mxu0 0.0
  %2730 = vmatpush1.msra.mxu0 0.0
  %2731 = vmatprep.subr.mxu0 0.0
  %2732 = vmatpush1.msra.mxu0 0.0
  %2733 = vmatprep.subr.mxu0 0.0
  %2734 = vmatpush1.msra.mxu0 0.0
  %2735 = vmatprep.subr.mxu0 0.0
  %2736 = vmatpush1.msra.mxu0 0.0
  %2737 = vmatprep.subr.mxu0 0.0
  %2738 = vmatpush1.msra.mxu0 0.0
  %2739 = vmatprep.subr.mxu0 0.0
  %2740 = vmatpush1.msra.mxu0 0.0
  %2741 = vmatprep.subr.mxu0 0.0
  %2742 = vmatpush1.msra.mxu0 0.0
  %2743 = vmatprep.subr.mxu0 0.0
  %2744 = vmatpush1.msra.mxu0 0.0
  %2745 = vmatprep.subr.mxu0 0.0
  %2746 = vmatpush1.msra.mxu0 0.0
  %2747 = vmatprep.subr.mxu0 0.0
  %2748 = vmatpush1.msra.mxu0 0.0
  %2749 = vmatprep.subr.mxu0 0.0
  %2750 = vmatpush1.msra.mxu0 0.0
  %2751 = vmatprep.mubr.f32.mxu0 0.0
  %2752 = vmatmul.mubr.f32.gmra.mrb[0].mxu0 %v1369
  %v2753 = vpop.f32.mrb[0].mxu0
  %v2754 = vadd.f32 %v2683, %v2753
  %v2755 = vpop.f32.mrb[0].mxu0
  %v2756 = vadd.f32 %v2685, %v2755
  %2757 = vdwg.mxu0
  %2758 = vmatprep.subr.mxu0 %v54
  %2759 = vmatpush1.msra.mxu0 %v53
  %2760 = vmatprep.subr.mxu0 %v90
  %2761 = vmatpush1.msra.mxu0 %v89
  %2762 = vmatprep.subr.mxu0 %v126
  %2763 = vmatpush1.msra.mxu0 %v125
  %2764 = vmatprep.subr.mxu0 %v162
  %2765 = vmatpush1.msra.mxu0 %v161
  %2766 = vmatprep.subr.mxu0 %v198
  %2767 = vmatpush1.msra.mxu0 %v197
  %2768 = vmatprep.subr.mxu0 %v234
  %2769 = vmatpush1.msra.mxu0 %v233
  %2770 = vmatprep.subr.mxu0 %v270
  %2771 = vmatpush1.msra.mxu0 %v269
  %2772 = vmatprep.subr.mxu0 %v306
  %2773 = vmatpush1.msra.mxu0 %v305
  %2774 = vmatprep.subr.mxu0 %v342
  %2775 = vmatpush1.msra.mxu0 %v341
  %2776 = vmatprep.subr.mxu0 %v378
  %2777 = vmatpush1.msra.mxu0 %v377
  %2778 = vmatprep.subr.mxu0 %v414
  %2779 = vmatpush1.msra.mxu0 %v413
  %2780 = vmatprep.subr.mxu0 %v450
  %2781 = vmatpush1.msra.mxu0 %v449
  %2782 = vmatprep.subr.mxu0 %v486
  %2783 = vmatpush1.msra.mxu0 %v485
  %2784 = vmatprep.subr.mxu0 %v522
  %2785 = vmatpush1.msra.mxu0 %v521
  %2786 = vmatprep.subr.mxu0 %v558
  %2787 = vmatpush1.msra.mxu0 %v557
  %2788 = vmatprep.subr.mxu0 %v594
  %2789 = vmatpush1.msra.mxu0 %v593
  %2790 = vmatprep.subr.mxu0 %v630
  %2791 = vmatpush1.msra.mxu0 %v629
  %2792 = vmatprep.subr.mxu0 %v666
  %2793 = vmatpush1.msra.mxu0 %v665
  %2794 = vmatprep.subr.mxu0 %v702
  %2795 = vmatpush1.msra.mxu0 %v701
  %2796 = vmatprep.subr.mxu0 %v738
  %2797 = vmatpush1.msra.mxu0 %v737
  %2798 = vmatprep.subr.mxu0 %v774
  %2799 = vmatpush1.msra.mxu0 %v773
  %2800 = vmatprep.subr.mxu0 %v810
  %2801 = vmatpush1.msra.mxu0 %v809
  %2802 = vmatprep.subr.mxu0 %v846
  %2803 = vmatpush1.msra.mxu0 %v845
  %2804 = vmatprep.subr.mxu0 %v882
  %2805 = vmatpush1.msra.mxu0 %v881
  %2806 = vmatprep.subr.mxu0 %v918
  %2807 = vmatpush1.msra.mxu0 %v917
  %2808 = vmatprep.subr.mxu0 %v954
  %2809 = vmatpush1.msra.mxu0 %v953
  %2810 = vmatprep.subr.mxu0 %v990
  %2811 = vmatpush1.msra.mxu0 %v989
  %2812 = vmatprep.subr.mxu0 %v1026
  %2813 = vmatpush1.msra.mxu0 %v1025
  %2814 = vmatprep.subr.mxu0 %v1062
  %2815 = vmatpush1.msra.mxu0 %v1061
  %2816 = vmatprep.subr.mxu0 %v1098
  %2817 = vmatpush1.msra.mxu0 %v1097
  %2818 = vmatprep.subr.mxu0 %v1134
  %2819 = vmatpush1.msra.mxu0 %v1133
  %2820 = vmatprep.subr.mxu0 %v1170
  %2821 = vmatpush1.msra.mxu0 %v1169
  %2822 = vmatprep.mubr.f32.mxu0 %v33
  %2823 = vmatmul.mubr.f32.gmra.mrb[0].mxu0 %v32
  %v2824 = vpop.f32.mrb[0].mxu0
  %v2825 = vadd.f32 0.0, %v2824
  %v2826 = vpop.f32.mrb[0].mxu0
  %v2827 = vadd.f32 0.0, %v2826
  %2828 = vdwg.mxu0
  %2829 = vmatprep.subr.mxu0 %v1206
  %2830 = vmatpush1.msra.mxu0 %v1205
  %2831 = vmatprep.subr.mxu0 %v1242
  %2832 = vmatpush1.msra.mxu0 %v1241
  %2833 = vmatprep.subr.mxu0 %v1278
  %2834 = vmatpush1.msra.mxu0 %v1277
  %2835 = vmatprep.subr.mxu0 %v1314
  %2836 = vmatpush1.msra.mxu0 %v1313
  %2837 = vmatprep.subr.mxu0 %v1430
  %2838 = vmatpush1.msra.mxu0 %v1427
  %2839 = vmatprep.subr.mxu0 0.0
  %2840 = vmatpush1.msra.mxu0 0.0
  %2841 = vmatprep.subr.mxu0 0.0
  %2842 = vmatpush1.msra.mxu0 0.0
  %2843 = vmatprep.subr.mxu0 0.0
  %2844 = vmatpush1.msra.mxu0 0.0
  %2845 = vmatprep.subr.mxu0 0.0
  %2846 = vmatpush1.msra.mxu0 0.0
  %2847 = vmatprep.subr.mxu0 0.0
  %2848 = vmatpush1.msra.mxu0 0.0
  %2849 = vmatprep.subr.mxu0 0.0
  %2850 = vmatpush1.msra.mxu0 0.0
  %2851 = vmatprep.subr.mxu0 0.0
  %2852 = vmatpush1.msra.mxu0 0.0
  %2853 = vmatprep.subr.mxu0 0.0
  %2854 = vmatpush1.msra.mxu0 0.0
  %2855 = vmatprep.subr.mxu0 0.0
  %2856 = vmatpush1.msra.mxu0 0.0
  %2857 = vmatprep.subr.mxu0 0.0
  %2858 = vmatpush1.msra.mxu0 0.0
  %2859 = vmatprep.subr.mxu0 0.0
  %2860 = vmatpush1.msra.mxu0 0.0
  %2861 = vmatprep.subr.mxu0 0.0
  %2862 = vmatpush1.msra.mxu0 0.0
  %2863 = vmatprep.subr.mxu0 0.0
  %2864 = vmatpush1.msra.mxu0 0.0
  %2865 = vmatprep.subr.mxu0 0.0
  %2866 = vmatpush1.msra.mxu0 0.0
  %2867 = vmatprep.subr.mxu0 0.0
  %2868 = vmatpush1.msra.mxu0 0.0
  %2869 = vmatprep.subr.mxu0 0.0
  %2870 = vmatpush1.msra.mxu0 0.0
  %2871 = vmatprep.subr.mxu0 0.0
  %2872 = vmatpush1.msra.mxu0 0.0
  %2873 = vmatprep.subr.mxu0 0.0
  %2874 = vmatpush1.msra.mxu0 0.0
  %2875 = vmatprep.subr.mxu0 0.0
  %2876 = vmatpush1.msra.mxu0 0.0
  %2877 = vmatprep.subr.mxu0 0.0
  %2878 = vmatpush1.msra.mxu0 0.0
  %2879 = vmatprep.subr.mxu0 0.0
  %2880 = vmatpush1.msra.mxu0 0.0
  %2881 = vmatprep.subr.mxu0 0.0
  %2882 = vmatpush1.msra.mxu0 0.0
  %2883 = vmatprep.subr.mxu0 0.0
  %2884 = vmatpush1.msra.mxu0 0.0
  %2885 = vmatprep.subr.mxu0 0.0
  %2886 = vmatpush1.msra.mxu0 0.0
  %2887 = vmatprep.subr.mxu0 0.0
  %2888 = vmatpush1.msra.mxu0 0.0
  %2889 = vmatprep.subr.mxu0 0.0
  %2890 = vmatpush1.msra.mxu0 0.0
  %2891 = vmatprep.subr.mxu0 0.0
  %2892 = vmatpush1.msra.mxu0 0.0
  %2893 = vmatprep.mubr.f32.mxu0 0.0
  %2894 = vmatmul.mubr.f32.gmra.mrb[0].mxu0 %v1369
  %v2895 = vpop.f32.mrb[0].mxu0
  %v2896 = vadd.f32 %v2825, %v2895
  %v2897 = vpop.f32.mrb[0].mxu0
  %v2898 = vadd.f32 %v2827, %v2897
  %2899 = vdwg.mxu0
  %2900 = vmatprep.subr.mxu0 %v56
  %2901 = vmatpush1.msra.mxu0 %v55
  %2902 = vmatprep.subr.mxu0 %v92
  %2903 = vmatpush1.msra.mxu0 %v91
  %2904 = vmatprep.subr.mxu0 %v128
  %2905 = vmatpush1.msra.mxu0 %v127
  %2906 = vmatprep.subr.mxu0 %v164
  %2907 = vmatpush1.msra.mxu0 %v163
  %2908 = vmatprep.subr.mxu0 %v200
  %2909 = vmatpush1.msra.mxu0 %v199
  %2910 = vmatprep.subr.mxu0 %v236
  %2911 = vmatpush1.msra.mxu0 %v235
  %2912 = vmatprep.subr.mxu0 %v272
  %2913 = vmatpush1.msra.mxu0 %v271
  %2914 = vmatprep.subr.mxu0 %v308
  %2915 = vmatpush1.msra.mxu0 %v307
  %2916 = vmatprep.subr.mxu0 %v344
  %2917 = vmatpush1.msra.mxu0 %v343
  %2918 = vmatprep.subr.mxu0 %v380
  %2919 = vmatpush1.msra.mxu0 %v379
  %2920 = vmatprep.subr.mxu0 %v416
  %2921 = vmatpush1.msra.mxu0 %v415
  %2922 = vmatprep.subr.mxu0 %v452
  %2923 = vmatpush1.msra.mxu0 %v451
  %2924 = vmatprep.subr.mxu0 %v488
  %2925 = vmatpush1.msra.mxu0 %v487
  %2926 = vmatprep.subr.mxu0 %v524
  %2927 = vmatpush1.msra.mxu0 %v523
  %2928 = vmatprep.subr.mxu0 %v560
  %2929 = vmatpush1.msra.mxu0 %v559
  %2930 = vmatprep.subr.mxu0 %v596
  %2931 = vmatpush1.msra.mxu0 %v595
  %2932 = vmatprep.subr.mxu0 %v632
  %2933 = vmatpush1.msra.mxu0 %v631
  %2934 = vmatprep.subr.mxu0 %v668
  %2935 = vmatpush1.msra.mxu0 %v667
  %2936 = vmatprep.subr.mxu0 %v704
  %2937 = vmatpush1.msra.mxu0 %v703
  %2938 = vmatprep.subr.mxu0 %v740
  %2939 = vmatpush1.msra.mxu0 %v739
  %2940 = vmatprep.subr.mxu0 %v776
  %2941 = vmatpush1.msra.mxu0 %v775
  %2942 = vmatprep.subr.mxu0 %v812
  %2943 = vmatpush1.msra.mxu0 %v811
  %2944 = vmatprep.subr.mxu0 %v848
  %2945 = vmatpush1.msra.mxu0 %v847
  %2946 = vmatprep.subr.mxu0 %v884
  %2947 = vmatpush1.msra.mxu0 %v883
  %2948 = vmatprep.subr.mxu0 %v920
  %2949 = vmatpush1.msra.mxu0 %v919
  %2950 = vmatprep.subr.mxu0 %v956
  %2951 = vmatpush1.msra.mxu0 %v955
  %2952 = vmatprep.subr.mxu0 %v992
  %2953 = vmatpush1.msra.mxu0 %v991
  %2954 = vmatprep.subr.mxu0 %v1028
  %2955 = vmatpush1.msra.mxu0 %v1027
  %2956 = vmatprep.subr.mxu0 %v1064
  %2957 = vmatpush1.msra.mxu0 %v1063
  %2958 = vmatprep.subr.mxu0 %v1100
  %2959 = vmatpush1.msra.mxu0 %v1099
  %2960 = vmatprep.subr.mxu0 %v1136
  %2961 = vmatpush1.msra.mxu0 %v1135
  %2962 = vmatprep.subr.mxu0 %v1172
  %2963 = vmatpush1.msra.mxu0 %v1171
  %2964 = vmatprep.mubr.f32.mxu0 %v33
  %2965 = vmatmul.mubr.f32.gmra.mrb[0].mxu0 %v32
  %v2966 = vpop.f32.mrb[0].mxu0
  %v2967 = vadd.f32 0.0, %v2966
  %v2968 = vpop.f32.mrb[0].mxu0
  %v2969 = vadd.f32 0.0, %v2968
  %2970 = vdwg.mxu0
  %2971 = vmatprep.subr.mxu0 %v1208
  %2972 = vmatpush1.msra.mxu0 %v1207
  %2973 = vmatprep.subr.mxu0 %v1244
  %2974 = vmatpush1.msra.mxu0 %v1243
  %2975 = vmatprep.subr.mxu0 %v1280
  %2976 = vmatpush1.msra.mxu0 %v1279
  %2977 = vmatprep.subr.mxu0 %v1316
  %2978 = vmatpush1.msra.mxu0 %v1315
  %2979 = vmatprep.subr.mxu0 %v1436
  %2980 = vmatpush1.msra.mxu0 %v1433
  %2981 = vmatprep.subr.mxu0 0.0
  %2982 = vmatpush1.msra.mxu0 0.0
  %2983 = vmatprep.subr.mxu0 0.0
  %2984 = vmatpush1.msra.mxu0 0.0
  %2985 = vmatprep.subr.mxu0 0.0
  %2986 = vmatpush1.msra.mxu0 0.0
  %2987 = vmatprep.subr.mxu0 0.0
  %2988 = vmatpush1.msra.mxu0 0.0
  %2989 = vmatprep.subr.mxu0 0.0
  %2990 = vmatpush1.msra.mxu0 0.0
  %2991 = vmatprep.subr.mxu0 0.0
  %2992 = vmatpush1.msra.mxu0 0.0
  %2993 = vmatprep.subr.mxu0 0.0
  %2994 = vmatpush1.msra.mxu0 0.0
  %2995 = vmatprep.subr.mxu0 0.0
  %2996 = vmatpush1.msra.mxu0 0.0
  %2997 = vmatprep.subr.mxu0 0.0
  %2998 = vmatpush1.msra.mxu0 0.0
  %2999 = vmatprep.subr.mxu0 0.0
  %3000 = vmatpush1.msra.mxu0 0.0
  %3001 = vmatprep.subr.mxu0 0.0
  %3002 = vmatpush1.msra.mxu0 0.0
  %3003 = vmatprep.subr.mxu0 0.0
  %3004 = vmatpush1.msra.mxu0 0.0
  %3005 = vmatprep.subr.mxu0 0.0
  %3006 = vmatpush1.msra.mxu0 0.0
  %3007 = vmatprep.subr.mxu0 0.0
  %3008 = vmatpush1.msra.mxu0 0.0
  %3009 = vmatprep.subr.mxu0 0.0
  %3010 = vmatpush1.msra.mxu0 0.0
  %3011 = vmatprep.subr.mxu0 0.0
  %3012 = vmatpush1.msra.mxu0 0.0
  %3013 = vmatprep.subr.mxu0 0.0
  %3014 = vmatpush1.msra.mxu0 0.0
  %3015 = vmatprep.subr.mxu0 0.0
  %3016 = vmatpush1.msra.mxu0 0.0
  %3017 = vmatprep.subr.mxu0 0.0
  %3018 = vmatpush1.msra.mxu0 0.0
  %3019 = vmatprep.subr.mxu0 0.0
  %3020 = vmatpush1.msra.mxu0 0.0
  %3021 = vmatprep.subr.mxu0 0.0
  %3022 = vmatpush1.msra.mxu0 0.0
  %3023 = vmatprep.subr.mxu0 0.0
  %3024 = vmatpush1.msra.mxu0 0.0
  %3025 = vmatprep.subr.mxu0 0.0
  %3026 = vmatpush1.msra.mxu0 0.0
  %3027 = vmatprep.subr.mxu0 0.0
  %3028 = vmatpush1.msra.mxu0 0.0
  %3029 = vmatprep.subr.mxu0 0.0
  %3030 = vmatpush1.msra.mxu0 0.0
  %3031 = vmatprep.subr.mxu0 0.0
  %3032 = vmatpush1.msra.mxu0 0.0
  %3033 = vmatprep.subr.mxu0 0.0
  %3034 = vmatpush1.msra.mxu0 0.0
  %3035 = vmatprep.mubr.f32.mxu0 0.0
  %3036 = vmatmul.mubr.f32.gmra.mrb[0].mxu0 %v1369
  %v3037 = vpop.f32.mrb[0].mxu0
  %v3038 = vadd.f32 %v2967, %v3037
  %v3039 = vpop.f32.mrb[0].mxu0
  %v3040 = vadd.f32 %v2969, %v3039
  %3041 = vdwg.mxu0
  %3042 = vmatprep.subr.mxu0 %v58
  %3043 = vmatpush1.msra.mxu0 %v57
  %3044 = vmatprep.subr.mxu0 %v94
  %3045 = vmatpush1.msra.mxu0 %v93
  %3046 = vmatprep.subr.mxu0 %v130
  %3047 = vmatpush1.msra.mxu0 %v129
  %3048 = vmatprep.subr.mxu0 %v166
  %3049 = vmatpush1.msra.mxu0 %v165
  %3050 = vmatprep.subr.mxu0 %v202
  %3051 = vmatpush1.msra.mxu0 %v201
  %3052 = vmatprep.subr.mxu0 %v238
  %3053 = vmatpush1.msra.mxu0 %v237
  %3054 = vmatprep.subr.mxu0 %v274
  %3055 = vmatpush1.msra.mxu0 %v273
  %3056 = vmatprep.subr.mxu0 %v310
  %3057 = vmatpush1.msra.mxu0 %v309
  %3058 = vmatprep.subr.mxu0 %v346
  %3059 = vmatpush1.msra.mxu0 %v345
  %3060 = vmatprep.subr.mxu0 %v382
  %3061 = vmatpush1.msra.mxu0 %v381
  %3062 = vmatprep.subr.mxu0 %v418
  %3063 = vmatpush1.msra.mxu0 %v417
  %3064 = vmatprep.subr.mxu0 %v454
  %3065 = vmatpush1.msra.mxu0 %v453
  %3066 = vmatprep.subr.mxu0 %v490
  %3067 = vmatpush1.msra.mxu0 %v489
  %3068 = vmatprep.subr.mxu0 %v526
  %3069 = vmatpush1.msra.mxu0 %v525
  %3070 = vmatprep.subr.mxu0 %v562
  %3071 = vmatpush1.msra.mxu0 %v561
  %3072 = vmatprep.subr.mxu0 %v598
  %3073 = vmatpush1.msra.mxu0 %v597
  %3074 = vmatprep.subr.mxu0 %v634
  %3075 = vmatpush1.msra.mxu0 %v633
  %3076 = vmatprep.subr.mxu0 %v670
  %3077 = vmatpush1.msra.mxu0 %v669
  %3078 = vmatprep.subr.mxu0 %v706
  %3079 = vmatpush1.msra.mxu0 %v705
  %3080 = vmatprep.subr.mxu0 %v742
  %3081 = vmatpush1.msra.mxu0 %v741
  %3082 = vmatprep.subr.mxu0 %v778
  %3083 = vmatpush1.msra.mxu0 %v777
  %3084 = vmatprep.subr.mxu0 %v814
  %3085 = vmatpush1.msra.mxu0 %v813
  %3086 = vmatprep.subr.mxu0 %v850
  %3087 = vmatpush1.msra.mxu0 %v849
  %3088 = vmatprep.subr.mxu0 %v886
  %3089 = vmatpush1.msra.mxu0 %v885
  %3090 = vmatprep.subr.mxu0 %v922
  %3091 = vmatpush1.msra.mxu0 %v921
  %3092 = vmatprep.subr.mxu0 %v958
  %3093 = vmatpush1.msra.mxu0 %v957
  %3094 = vmatprep.subr.mxu0 %v994
  %3095 = vmatpush1.msra.mxu0 %v993
  %3096 = vmatprep.subr.mxu0 %v1030
  %3097 = vmatpush1.msra.mxu0 %v1029
  %3098 = vmatprep.subr.mxu0 %v1066
  %3099 = vmatpush1.msra.mxu0 %v1065
  %3100 = vmatprep.subr.mxu0 %v1102
  %3101 = vmatpush1.msra.mxu0 %v1101
  %3102 = vmatprep.subr.mxu0 %v1138
  %3103 = vmatpush1.msra.mxu0 %v1137
  %3104 = vmatprep.subr.mxu0 %v1174
  %3105 = vmatpush1.msra.mxu0 %v1173
  %3106 = vmatprep.mubr.f32.mxu0 %v33
  %3107 = vmatmul.mubr.f32.gmra.mrb[0].mxu0 %v32
  %v3108 = vpop.f32.mrb[0].mxu0
  %v3109 = vadd.f32 0.0, %v3108
  %v3110 = vpop.f32.mrb[0].mxu0
  %v3111 = vadd.f32 0.0, %v3110
  %3112 = vdwg.mxu0
  %3113 = vmatprep.subr.mxu0 %v1210
  %3114 = vmatpush1.msra.mxu0 %v1209
  %3115 = vmatprep.subr.mxu0 %v1246
  %3116 = vmatpush1.msra.mxu0 %v1245
  %3117 = vmatprep.subr.mxu0 %v1282
  %3118 = vmatpush1.msra.mxu0 %v1281
  %3119 = vmatprep.subr.mxu0 %v1318
  %3120 = vmatpush1.msra.mxu0 %v1317
  %3121 = vmatprep.subr.mxu0 %v1442
  %3122 = vmatpush1.msra.mxu0 %v1439
  %3123 = vmatprep.subr.mxu0 0.0
  %3124 = vmatpush1.msra.mxu0 0.0
  %3125 = vmatprep.subr.mxu0 0.0
  %3126 = vmatpush1.msra.mxu0 0.0
  %3127 = vmatprep.subr.mxu0 0.0
  %3128 = vmatpush1.msra.mxu0 0.0
  %3129 = vmatprep.subr.mxu0 0.0
  %3130 = vmatpush1.msra.mxu0 0.0
  %3131 = vmatprep.subr.mxu0 0.0
  %3132 = vmatpush1.msra.mxu0 0.0
  %3133 = vmatprep.subr.mxu0 0.0
  %3134 = vmatpush1.msra.mxu0 0.0
  %3135 = vmatprep.subr.mxu0 0.0
  %3136 = vmatpush1.msra.mxu0 0.0
  %3137 = vmatprep.subr.mxu0 0.0
  %3138 = vmatpush1.msra.mxu0 0.0
  %3139 = vmatprep.subr.mxu0 0.0
  %3140 = vmatpush1.msra.mxu0 0.0
  %3141 = vmatprep.subr.mxu0 0.0
  %3142 = vmatpush1.msra.mxu0 0.0
  %3143 = vmatprep.subr.mxu0 0.0
  %3144 = vmatpush1.msra.mxu0 0.0
  %3145 = vmatprep.subr.mxu0 0.0
  %3146 = vmatpush1.msra.mxu0 0.0
  %3147 = vmatprep.subr.mxu0 0.0
  %3148 = vmatpush1.msra.mxu0 0.0
  %3149 = vmatprep.subr.mxu0 0.0
  %3150 = vmatpush1.msra.mxu0 0.0
  %3151 = vmatprep.subr.mxu0 0.0
  %3152 = vmatpush1.msra.mxu0 0.0
  %3153 = vmatprep.subr.mxu0 0.0
  %3154 = vmatpush1.msra.mxu0 0.0
  %3155 = vmatprep.subr.mxu0 0.0
  %3156 = vmatpush1.msra.mxu0 0.0
  %3157 = vmatprep.subr.mxu0 0.0
  %3158 = vmatpush1.msra.mxu0 0.0
  %3159 = vmatprep.subr.mxu0 0.0
  %3160 = vmatpush1.msra.mxu0 0.0
  %3161 = vmatprep.subr.mxu0 0.0
  %3162 = vmatpush1.msra.mxu0 0.0
  %3163 = vmatprep.subr.mxu0 0.0
  %3164 = vmatpush1.msra.mxu0 0.0
  %3165 = vmatprep.subr.mxu0 0.0
  %3166 = vmatpush1.msra.mxu0 0.0
  %3167 = vmatprep.subr.mxu0 0.0
  %3168 = vmatpush1.msra.mxu0 0.0
  %3169 = vmatprep.subr.mxu0 0.0
  %3170 = vmatpush1.msra.mxu0 0.0
  %3171 = vmatprep.subr.mxu0 0.0
  %3172 = vmatpush1.msra.mxu0 0.0
  %3173 = vmatprep.subr.mxu0 0.0
  %3174 = vmatpush1.msra.mxu0 0.0
  %3175 = vmatprep.subr.mxu0 0.0
  %3176 = vmatpush1.msra.mxu0 0.0
  %3177 = vmatprep.mubr.f32.mxu0 0.0
  %3178 = vmatmul.mubr.f32.gmra.mrb[0].mxu0 %v1369
  %v3179 = vpop.f32.mrb[0].mxu0
  %v3180 = vadd.f32 %v3109, %v3179
  %v3181 = vpop.f32.mrb[0].mxu0
  %v3182 = vadd.f32 %v3111, %v3181
  %3183 = vdwg.mxu0
  %3184 = vmatprep.subr.mxu0 %v60
  %3185 = vmatpush1.msra.mxu0 %v59
  %3186 = vmatprep.subr.mxu0 %v96
  %3187 = vmatpush1.msra.mxu0 %v95
  %3188 = vmatprep.subr.mxu0 %v132
  %3189 = vmatpush1.msra.mxu0 %v131
  %3190 = vmatprep.subr.mxu0 %v168
  %3191 = vmatpush1.msra.mxu0 %v167
  %3192 = vmatprep.subr.mxu0 %v204
  %3193 = vmatpush1.msra.mxu0 %v203
  %3194 = vmatprep.subr.mxu0 %v240
  %3195 = vmatpush1.msra.mxu0 %v239
  %3196 = vmatprep.subr.mxu0 %v276
  %3197 = vmatpush1.msra.mxu0 %v275
  %3198 = vmatprep.subr.mxu0 %v312
  %3199 = vmatpush1.msra.mxu0 %v311
  %3200 = vmatprep.subr.mxu0 %v348
  %3201 = vmatpush1.msra.mxu0 %v347
  %3202 = vmatprep.subr.mxu0 %v384
  %3203 = vmatpush1.msra.mxu0 %v383
  %3204 = vmatprep.subr.mxu0 %v420
  %3205 = vmatpush1.msra.mxu0 %v419
  %3206 = vmatprep.subr.mxu0 %v456
  %3207 = vmatpush1.msra.mxu0 %v455
  %3208 = vmatprep.subr.mxu0 %v492
  %3209 = vmatpush1.msra.mxu0 %v491
  %3210 = vmatprep.subr.mxu0 %v528
  %3211 = vmatpush1.msra.mxu0 %v527
  %3212 = vmatprep.subr.mxu0 %v564
  %3213 = vmatpush1.msra.mxu0 %v563
  %3214 = vmatprep.subr.mxu0 %v600
  %3215 = vmatpush1.msra.mxu0 %v599
  %3216 = vmatprep.subr.mxu0 %v636
  %3217 = vmatpush1.msra.mxu0 %v635
  %3218 = vmatprep.subr.mxu0 %v672
  %3219 = vmatpush1.msra.mxu0 %v671
  %3220 = vmatprep.subr.mxu0 %v708
  %3221 = vmatpush1.msra.mxu0 %v707
  %3222 = vmatprep.subr.mxu0 %v744
  %3223 = vmatpush1.msra.mxu0 %v743
  %3224 = vmatprep.subr.mxu0 %v780
  %3225 = vmatpush1.msra.mxu0 %v779
  %3226 = vmatprep.subr.mxu0 %v816
  %3227 = vmatpush1.msra.mxu0 %v815
  %3228 = vmatprep.subr.mxu0 %v852
  %3229 = vmatpush1.msra.mxu0 %v851
  %3230 = vmatprep.subr.mxu0 %v888
  %3231 = vmatpush1.msra.mxu0 %v887
  %3232 = vmatprep.subr.mxu0 %v924
  %3233 = vmatpush1.msra.mxu0 %v923
  %3234 = vmatprep.subr.mxu0 %v960
  %3235 = vmatpush1.msra.mxu0 %v959
  %3236 = vmatprep.subr.mxu0 %v996
  %3237 = vmatpush1.msra.mxu0 %v995
  %3238 = vmatprep.subr.mxu0 %v1032
  %3239 = vmatpush1.msra.mxu0 %v1031
  %3240 = vmatprep.subr.mxu0 %v1068
  %3241 = vmatpush1.msra.mxu0 %v1067
  %3242 = vmatprep.subr.mxu0 %v1104
  %3243 = vmatpush1.msra.mxu0 %v1103
  %3244 = vmatprep.subr.mxu0 %v1140
  %3245 = vmatpush1.msra.mxu0 %v1139
  %3246 = vmatprep.subr.mxu0 %v1176
  %3247 = vmatpush1.msra.mxu0 %v1175
  %3248 = vmatprep.mubr.f32.mxu0 %v33
  %3249 = vmatmul.mubr.f32.gmra.mrb[0].mxu0 %v32
  %v3250 = vpop.f32.mrb[0].mxu0
  %v3251 = vadd.f32 0.0, %v3250
  %v3252 = vpop.f32.mrb[0].mxu0
  %v3253 = vadd.f32 0.0, %v3252
  %3254 = vdwg.mxu0
  %3255 = vmatprep.subr.mxu0 %v1212
  %3256 = vmatpush1.msra.mxu0 %v1211
  %3257 = vmatprep.subr.mxu0 %v1248
  %3258 = vmatpush1.msra.mxu0 %v1247
  %3259 = vmatprep.subr.mxu0 %v1284
  %3260 = vmatpush1.msra.mxu0 %v1283
  %3261 = vmatprep.subr.mxu0 %v1320
  %3262 = vmatpush1.msra.mxu0 %v1319
  %3263 = vmatprep.subr.mxu0 %v1448
  %3264 = vmatpush1.msra.mxu0 %v1445
  %3265 = vmatprep.subr.mxu0 0.0
  %3266 = vmatpush1.msra.mxu0 0.0
  %3267 = vmatprep.subr.mxu0 0.0
  %3268 = vmatpush1.msra.mxu0 0.0
  %3269 = vmatprep.subr.mxu0 0.0
  %3270 = vmatpush1.msra.mxu0 0.0
  %3271 = vmatprep.subr.mxu0 0.0
  %3272 = vmatpush1.msra.mxu0 0.0
  %3273 = vmatprep.subr.mxu0 0.0
  %3274 = vmatpush1.msra.mxu0 0.0
  %3275 = vmatprep.subr.mxu0 0.0
  %3276 = vmatpush1.msra.mxu0 0.0
  %3277 = vmatprep.subr.mxu0 0.0
  %3278 = vmatpush1.msra.mxu0 0.0
  %3279 = vmatprep.subr.mxu0 0.0
  %3280 = vmatpush1.msra.mxu0 0.0
  %3281 = vmatprep.subr.mxu0 0.0
  %3282 = vmatpush1.msra.mxu0 0.0
  %3283 = vmatprep.subr.mxu0 0.0
  %3284 = vmatpush1.msra.mxu0 0.0
  %3285 = vmatprep.subr.mxu0 0.0
  %3286 = vmatpush1.msra.mxu0 0.0
  %3287 = vmatprep.subr.mxu0 0.0
  %3288 = vmatpush1.msra.mxu0 0.0
  %3289 = vmatprep.subr.mxu0 0.0
  %3290 = vmatpush1.msra.mxu0 0.0
  %3291 = vmatprep.subr.mxu0 0.0
  %3292 = vmatpush1.msra.mxu0 0.0
  %3293 = vmatprep.subr.mxu0 0.0
  %3294 = vmatpush1.msra.mxu0 0.0
  %3295 = vmatprep.subr.mxu0 0.0
  %3296 = vmatpush1.msra.mxu0 0.0
  %3297 = vmatprep.subr.mxu0 0.0
  %3298 = vmatpush1.msra.mxu0 0.0
  %3299 = vmatprep.subr.mxu0 0.0
  %3300 = vmatpush1.msra.mxu0 0.0
  %3301 = vmatprep.subr.mxu0 0.0
  %3302 = vmatpush1.msra.mxu0 0.0
  %3303 = vmatprep.subr.mxu0 0.0
  %3304 = vmatpush1.msra.mxu0 0.0
  %3305 = vmatprep.subr.mxu0 0.0
  %3306 = vmatpush1.msra.mxu0 0.0
  %3307 = vmatprep.subr.mxu0 0.0
  %3308 = vmatpush1.msra.mxu0 0.0
  %3309 = vmatprep.subr.mxu0 0.0
  %3310 = vmatpush1.msra.mxu0 0.0
  %3311 = vmatprep.subr.mxu0 0.0
  %3312 = vmatpush1.msra.mxu0 0.0
  %3313 = vmatprep.subr.mxu0 0.0
  %3314 = vmatpush1.msra.mxu0 0.0
  %3315 = vmatprep.subr.mxu0 0.0
  %3316 = vmatpush1.msra.mxu0 0.0
  %3317 = vmatprep.subr.mxu0 0.0
  %3318 = vmatpush1.msra.mxu0 0.0
  %3319 = vmatprep.mubr.f32.mxu0 0.0
  %3320 = vmatmul.mubr.f32.gmra.mrb[0].mxu0 %v1369
  %v3321 = vpop.f32.mrb[0].mxu0
  %v3322 = vadd.f32 %v3251, %v3321
  %v3323 = vpop.f32.mrb[0].mxu0
  %v3324 = vadd.f32 %v3253, %v3323
  %3325 = vdwg.mxu0
  %3326 = vmatprep.subr.mxu0 %v62
  %3327 = vmatpush1.msra.mxu0 %v61
  %3328 = vmatprep.subr.mxu0 %v98
  %3329 = vmatpush1.msra.mxu0 %v97
  %3330 = vmatprep.subr.mxu0 %v134
  %3331 = vmatpush1.msra.mxu0 %v133
  %3332 = vmatprep.subr.mxu0 %v170
  %3333 = vmatpush1.msra.mxu0 %v169
  %3334 = vmatprep.subr.mxu0 %v206
  %3335 = vmatpush1.msra.mxu0 %v205
  %3336 = vmatprep.subr.mxu0 %v242
  %3337 = vmatpush1.msra.mxu0 %v241
  %3338 = vmatprep.subr.mxu0 %v278
  %3339 = vmatpush1.msra.mxu0 %v277
  %3340 = vmatprep.subr.mxu0 %v314
  %3341 = vmatpush1.msra.mxu0 %v313
  %3342 = vmatprep.subr.mxu0 %v350
  %3343 = vmatpush1.msra.mxu0 %v349
  %3344 = vmatprep.subr.mxu0 %v386
  %3345 = vmatpush1.msra.mxu0 %v385
  %3346 = vmatprep.subr.mxu0 %v422
  %3347 = vmatpush1.msra.mxu0 %v421
  %3348 = vmatprep.subr.mxu0 %v458
  %3349 = vmatpush1.msra.mxu0 %v457
  %3350 = vmatprep.subr.mxu0 %v494
  %3351 = vmatpush1.msra.mxu0 %v493
  %3352 = vmatprep.subr.mxu0 %v530
  %3353 = vmatpush1.msra.mxu0 %v529
  %3354 = vmatprep.subr.mxu0 %v566
  %3355 = vmatpush1.msra.mxu0 %v565
  %3356 = vmatprep.subr.mxu0 %v602
  %3357 = vmatpush1.msra.mxu0 %v601
  %3358 = vmatprep.subr.mxu0 %v638
  %3359 = vmatpush1.msra.mxu0 %v637
  %3360 = vmatprep.subr.mxu0 %v674
  %3361 = vmatpush1.msra.mxu0 %v673
  %3362 = vmatprep.subr.mxu0 %v710
  %3363 = vmatpush1.msra.mxu0 %v709
  %3364 = vmatprep.subr.mxu0 %v746
  %3365 = vmatpush1.msra.mxu0 %v745
  %3366 = vmatprep.subr.mxu0 %v782
  %3367 = vmatpush1.msra.mxu0 %v781
  %3368 = vmatprep.subr.mxu0 %v818
  %3369 = vmatpush1.msra.mxu0 %v817
  %3370 = vmatprep.subr.mxu0 %v854
  %3371 = vmatpush1.msra.mxu0 %v853
  %3372 = vmatprep.subr.mxu0 %v890
  %3373 = vmatpush1.msra.mxu0 %v889
  %3374 = vmatprep.subr.mxu0 %v926
  %3375 = vmatpush1.msra.mxu0 %v925
  %3376 = vmatprep.subr.mxu0 %v962
  %3377 = vmatpush1.msra.mxu0 %v961
  %3378 = vmatprep.subr.mxu0 %v998
  %3379 = vmatpush1.msra.mxu0 %v997
  %3380 = vmatprep.subr.mxu0 %v1034
  %3381 = vmatpush1.msra.mxu0 %v1033
  %3382 = vmatprep.subr.mxu0 %v1070
  %3383 = vmatpush1.msra.mxu0 %v1069
  %3384 = vmatprep.subr.mxu0 %v1106
  %3385 = vmatpush1.msra.mxu0 %v1105
  %3386 = vmatprep.subr.mxu0 %v1142
  %3387 = vmatpush1.msra.mxu0 %v1141
  %3388 = vmatprep.subr.mxu0 %v1178
  %3389 = vmatpush1.msra.mxu0 %v1177
  %3390 = vmatprep.mubr.f32.mxu0 %v33
  %3391 = vmatmul.mubr.f32.gmra.mrb[0].mxu0 %v32
  %v3392 = vpop.f32.mrb[0].mxu0
  %v3393 = vadd.f32 0.0, %v3392
  %v3394 = vpop.f32.mrb[0].mxu0
  %v3395 = vadd.f32 0.0, %v3394
  %3396 = vdwg.mxu0
  %3397 = vmatprep.subr.mxu0 %v1214
  %3398 = vmatpush1.msra.mxu0 %v1213
  %3399 = vmatprep.subr.mxu0 %v1250
  %3400 = vmatpush1.msra.mxu0 %v1249
  %3401 = vmatprep.subr.mxu0 %v1286
  %3402 = vmatpush1.msra.mxu0 %v1285
  %3403 = vmatprep.subr.mxu0 %v1322
  %3404 = vmatpush1.msra.mxu0 %v1321
  %3405 = vmatprep.subr.mxu0 %v1454
  %3406 = vmatpush1.msra.mxu0 %v1451
  %3407 = vmatprep.subr.mxu0 0.0
  %3408 = vmatpush1.msra.mxu0 0.0
  %3409 = vmatprep.subr.mxu0 0.0
  %3410 = vmatpush1.msra.mxu0 0.0
  %3411 = vmatprep.subr.mxu0 0.0
  %3412 = vmatpush1.msra.mxu0 0.0
  %3413 = vmatprep.subr.mxu0 0.0
  %3414 = vmatpush1.msra.mxu0 0.0
  %3415 = vmatprep.subr.mxu0 0.0
  %3416 = vmatpush1.msra.mxu0 0.0
  %3417 = vmatprep.subr.mxu0 0.0
  %3418 = vmatpush1.msra.mxu0 0.0
  %3419 = vmatprep.subr.mxu0 0.0
  %3420 = vmatpush1.msra.mxu0 0.0
  %3421 = vmatprep.subr.mxu0 0.0
  %3422 = vmatpush1.msra.mxu0 0.0
  %3423 = vmatprep.subr.mxu0 0.0
  %3424 = vmatpush1.msra.mxu0 0.0
  %3425 = vmatprep.subr.mxu0 0.0
  %3426 = vmatpush1.msra.mxu0 0.0
  %3427 = vmatprep.subr.mxu0 0.0
  %3428 = vmatpush1.msra.mxu0 0.0
  %3429 = vmatprep.subr.mxu0 0.0
  %3430 = vmatpush1.msra.mxu0 0.0
  %3431 = vmatprep.subr.mxu0 0.0
  %3432 = vmatpush1.msra.mxu0 0.0
  %3433 = vmatprep.subr.mxu0 0.0
  %3434 = vmatpush1.msra.mxu0 0.0
  %3435 = vmatprep.subr.mxu0 0.0
  %3436 = vmatpush1.msra.mxu0 0.0
  %3437 = vmatprep.subr.mxu0 0.0
  %3438 = vmatpush1.msra.mxu0 0.0
  %3439 = vmatprep.subr.mxu0 0.0
  %3440 = vmatpush1.msra.mxu0 0.0
  %3441 = vmatprep.subr.mxu0 0.0
  %3442 = vmatpush1.msra.mxu0 0.0
  %3443 = vmatprep.subr.mxu0 0.0
  %3444 = vmatpush1.msra.mxu0 0.0
  %3445 = vmatprep.subr.mxu0 0.0
  %3446 = vmatpush1.msra.mxu0 0.0
  %3447 = vmatprep.subr.mxu0 0.0
  %3448 = vmatpush1.msra.mxu0 0.0
  %3449 = vmatprep.subr.mxu0 0.0
  %3450 = vmatpush1.msra.mxu0 0.0
  %3451 = vmatprep.subr.mxu0 0.0
  %3452 = vmatpush1.msra.mxu0 0.0
  %3453 = vmatprep.subr.mxu0 0.0
  %3454 = vmatpush1.msra.mxu0 0.0
  %3455 = vmatprep.subr.mxu0 0.0
  %3456 = vmatpush1.msra.mxu0 0.0
  %3457 = vmatprep.subr.mxu0 0.0
  %3458 = vmatpush1.msra.mxu0 0.0
  %3459 = vmatprep.subr.mxu0 0.0
  %3460 = vmatpush1.msra.mxu0 0.0
  %3461 = vmatprep.mubr.f32.mxu0 0.0
  %3462 = vmatmul.mubr.f32.gmra.mrb[0].mxu0 %v1369
  %v3463 = vpop.f32.mrb[0].mxu0
  %v3464 = vadd.f32 %v3393, %v3463
  %v3465 = vpop.f32.mrb[0].mxu0
  %v3466 = vadd.f32 %v3395, %v3465
  %3467 = vdwg.mxu0
  %3468 = vmatprep.subr.mxu0 %v64
  %3469 = vmatpush1.msra.mxu0 %v63
  %3470 = vmatprep.subr.mxu0 %v100
  %3471 = vmatpush1.msra.mxu0 %v99
  %3472 = vmatprep.subr.mxu0 %v136
  %3473 = vmatpush1.msra.mxu0 %v135
  %3474 = vmatprep.subr.mxu0 %v172
  %3475 = vmatpush1.msra.mxu0 %v171
  %3476 = vmatprep.subr.mxu0 %v208
  %3477 = vmatpush1.msra.mxu0 %v207
  %3478 = vmatprep.subr.mxu0 %v244
  %3479 = vmatpush1.msra.mxu0 %v243
  %3480 = vmatprep.subr.mxu0 %v280
  %3481 = vmatpush1.msra.mxu0 %v279
  %3482 = vmatprep.subr.mxu0 %v316
  %3483 = vmatpush1.msra.mxu0 %v315
  %3484 = vmatprep.subr.mxu0 %v352
  %3485 = vmatpush1.msra.mxu0 %v351
  %3486 = vmatprep.subr.mxu0 %v388
  %3487 = vmatpush1.msra.mxu0 %v387
  %3488 = vmatprep.subr.mxu0 %v424
  %3489 = vmatpush1.msra.mxu0 %v423
  %3490 = vmatprep.subr.mxu0 %v460
  %3491 = vmatpush1.msra.mxu0 %v459
  %3492 = vmatprep.subr.mxu0 %v496
  %3493 = vmatpush1.msra.mxu0 %v495
  %3494 = vmatprep.subr.mxu0 %v532
  %3495 = vmatpush1.msra.mxu0 %v531
  %3496 = vmatprep.subr.mxu0 %v568
  %3497 = vmatpush1.msra.mxu0 %v567
  %3498 = vmatprep.subr.mxu0 %v604
  %3499 = vmatpush1.msra.mxu0 %v603
  %3500 = vmatprep.subr.mxu0 %v640
  %3501 = vmatpush1.msra.mxu0 %v639
  %3502 = vmatprep.subr.mxu0 %v676
  %3503 = vmatpush1.msra.mxu0 %v675
  %3504 = vmatprep.subr.mxu0 %v712
  %3505 = vmatpush1.msra.mxu0 %v711
  %3506 = vmatprep.subr.mxu0 %v748
  %3507 = vmatpush1.msra.mxu0 %v747
  %3508 = vmatprep.subr.mxu0 %v784
  %3509 = vmatpush1.msra.mxu0 %v783
  %3510 = vmatprep.subr.mxu0 %v820
  %3511 = vmatpush1.msra.mxu0 %v819
  %3512 = vmatprep.subr.mxu0 %v856
  %3513 = vmatpush1.msra.mxu0 %v855
  %3514 = vmatprep.subr.mxu0 %v892
  %3515 = vmatpush1.msra.mxu0 %v891
  %3516 = vmatprep.subr.mxu0 %v928
  %3517 = vmatpush1.msra.mxu0 %v927
  %3518 = vmatprep.subr.mxu0 %v964
  %3519 = vmatpush1.msra.mxu0 %v963
  %3520 = vmatprep.subr.mxu0 %v1000
  %3521 = vmatpush1.msra.mxu0 %v999
  %3522 = vmatprep.subr.mxu0 %v1036
  %3523 = vmatpush1.msra.mxu0 %v1035
  %3524 = vmatprep.subr.mxu0 %v1072
  %3525 = vmatpush1.msra.mxu0 %v1071
  %3526 = vmatprep.subr.mxu0 %v1108
  %3527 = vmatpush1.msra.mxu0 %v1107
  %3528 = vmatprep.subr.mxu0 %v1144
  %3529 = vmatpush1.msra.mxu0 %v1143
  %3530 = vmatprep.subr.mxu0 %v1180
  %3531 = vmatpush1.msra.mxu0 %v1179
  %3532 = vmatprep.mubr.f32.mxu0 %v33
  %3533 = vmatmul.mubr.f32.gmra.mrb[0].mxu0 %v32
  %v3534 = vpop.f32.mrb[0].mxu0
  %v3535 = vadd.f32 0.0, %v3534
  %v3536 = vpop.f32.mrb[0].mxu0
  %v3537 = vadd.f32 0.0, %v3536
  %3538 = vdwg.mxu0
  %3539 = vmatprep.subr.mxu0 %v1216
  %3540 = vmatpush1.msra.mxu0 %v1215
  %3541 = vmatprep.subr.mxu0 %v1252
  %3542 = vmatpush1.msra.mxu0 %v1251
  %3543 = vmatprep.subr.mxu0 %v1288
  %3544 = vmatpush1.msra.mxu0 %v1287
  %3545 = vmatprep.subr.mxu0 %v1324
  %3546 = vmatpush1.msra.mxu0 %v1323
  %3547 = vmatprep.subr.mxu0 %v1460
  %3548 = vmatpush1.msra.mxu0 %v1457
  %3549 = vmatprep.subr.mxu0 0.0
  %3550 = vmatpush1.msra.mxu0 0.0
  %3551 = vmatprep.subr.mxu0 0.0
  %3552 = vmatpush1.msra.mxu0 0.0
  %3553 = vmatprep.subr.mxu0 0.0
  %3554 = vmatpush1.msra.mxu0 0.0
  %3555 = vmatprep.subr.mxu0 0.0
  %3556 = vmatpush1.msra.mxu0 0.0
  %3557 = vmatprep.subr.mxu0 0.0
  %3558 = vmatpush1.msra.mxu0 0.0
  %3559 = vmatprep.subr.mxu0 0.0
  %3560 = vmatpush1.msra.mxu0 0.0
  %3561 = vmatprep.subr.mxu0 0.0
  %3562 = vmatpush1.msra.mxu0 0.0
  %3563 = vmatprep.subr.mxu0 0.0
  %3564 = vmatpush1.msra.mxu0 0.0
  %3565 = vmatprep.subr.mxu0 0.0
  %3566 = vmatpush1.msra.mxu0 0.0
  %3567 = vmatprep.subr.mxu0 0.0
  %3568 = vmatpush1.msra.mxu0 0.0
  %3569 = vmatprep.subr.mxu0 0.0
  %3570 = vmatpush1.msra.mxu0 0.0
  %3571 = vmatprep.subr.mxu0 0.0
  %3572 = vmatpush1.msra.mxu0 0.0
  %3573 = vmatprep.subr.mxu0 0.0
  %3574 = vmatpush1.msra.mxu0 0.0
  %3575 = vmatprep.subr.mxu0 0.0
  %3576 = vmatpush1.msra.mxu0 0.0
  %3577 = vmatprep.subr.mxu0 0.0
  %3578 = vmatpush1.msra.mxu0 0.0
  %3579 = vmatprep.subr.mxu0 0.0
  %3580 = vmatpush1.msra.mxu0 0.0
  %3581 = vmatprep.subr.mxu0 0.0
  %3582 = vmatpush1.msra.mxu0 0.0
  %3583 = vmatprep.subr.mxu0 0.0
  %3584 = vmatpush1.msra.mxu0 0.0
  %3585 = vmatprep.subr.mxu0 0.0
  %3586 = vmatpush1.msra.mxu0 0.0
  %3587 = vmatprep.subr.mxu0 0.0
  %3588 = vmatpush1.msra.mxu0 0.0
  %3589 = vmatprep.subr.mxu0 0.0
  %3590 = vmatpush1.msra.mxu0 0.0
  %3591 = vmatprep.subr.mxu0 0.0
  %3592 = vmatpush1.msra.mxu0 0.0
  %3593 = vmatprep.subr.mxu0 0.0
  %3594 = vmatpush1.msra.mxu0 0.0
  %3595 = vmatprep.subr.mxu0 0.0
  %3596 = vmatpush1.msra.mxu0 0.0
  %3597 = vmatprep.subr.mxu0 0.0
  %3598 = vmatpush1.msra.mxu0 0.0
  %3599 = vmatprep.subr.mxu0 0.0
  %3600 = vmatpush1.msra.mxu0 0.0
  %3601 = vmatprep.subr.mxu0 0.0
  %3602 = vmatpush1.msra.mxu0 0.0
  %3603 = vmatprep.mubr.f32.mxu0 0.0
  %3604 = vmatmul.mubr.f32.gmra.mrb[0].mxu0 %v1369
  %v3605 = vpop.f32.mrb[0].mxu0
  %v3606 = vadd.f32 %v3535, %v3605
  %v3607 = vpop.f32.mrb[0].mxu0
  %v3608 = vadd.f32 %v3537, %v3607
  %3609 = vdwg.mxu0
  %3610 = vmatprep.subr.mxu0 %v66
  %3611 = vmatpush1.msra.mxu0 %v65
  %3612 = vmatprep.subr.mxu0 %v102
  %3613 = vmatpush1.msra.mxu0 %v101
  %3614 = vmatprep.subr.mxu0 %v138
  %3615 = vmatpush1.msra.mxu0 %v137
  %3616 = vmatprep.subr.mxu0 %v174
  %3617 = vmatpush1.msra.mxu0 %v173
  %3618 = vmatprep.subr.mxu0 %v210
  %3619 = vmatpush1.msra.mxu0 %v209
  %3620 = vmatprep.subr.mxu0 %v246
  %3621 = vmatpush1.msra.mxu0 %v245
  %3622 = vmatprep.subr.mxu0 %v282
  %3623 = vmatpush1.msra.mxu0 %v281
  %3624 = vmatprep.subr.mxu0 %v318
  %3625 = vmatpush1.msra.mxu0 %v317
  %3626 = vmatprep.subr.mxu0 %v354
  %3627 = vmatpush1.msra.mxu0 %v353
  %3628 = vmatprep.subr.mxu0 %v390
  %3629 = vmatpush1.msra.mxu0 %v389
  %3630 = vmatprep.subr.mxu0 %v426
  %3631 = vmatpush1.msra.mxu0 %v425
  %3632 = vmatprep.subr.mxu0 %v462
  %3633 = vmatpush1.msra.mxu0 %v461
  %3634 = vmatprep.subr.mxu0 %v498
  %3635 = vmatpush1.msra.mxu0 %v497
  %3636 = vmatprep.subr.mxu0 %v534
  %3637 = vmatpush1.msra.mxu0 %v533
  %3638 = vmatprep.subr.mxu0 %v570
  %3639 = vmatpush1.msra.mxu0 %v569
  %3640 = vmatprep.subr.mxu0 %v606
  %3641 = vmatpush1.msra.mxu0 %v605
  %3642 = vmatprep.subr.mxu0 %v642
  %3643 = vmatpush1.msra.mxu0 %v641
  %3644 = vmatprep.subr.mxu0 %v678
  %3645 = vmatpush1.msra.mxu0 %v677
  %3646 = vmatprep.subr.mxu0 %v714
  %3647 = vmatpush1.msra.mxu0 %v713
  %3648 = vmatprep.subr.mxu0 %v750
  %3649 = vmatpush1.msra.mxu0 %v749
  %3650 = vmatprep.subr.mxu0 %v786
  %3651 = vmatpush1.msra.mxu0 %v785
  %3652 = vmatprep.subr.mxu0 %v822
  %3653 = vmatpush1.msra.mxu0 %v821
  %3654 = vmatprep.subr.mxu0 %v858
  %3655 = vmatpush1.msra.mxu0 %v857
  %3656 = vmatprep.subr.mxu0 %v894
  %3657 = vmatpush1.msra.mxu0 %v893
  %3658 = vmatprep.subr.mxu0 %v930
  %3659 = vmatpush1.msra.mxu0 %v929
  %3660 = vmatprep.subr.mxu0 %v966
  %3661 = vmatpush1.msra.mxu0 %v965
  %3662 = vmatprep.subr.mxu0 %v1002
  %3663 = vmatpush1.msra.mxu0 %v1001
  %3664 = vmatprep.subr.mxu0 %v1038
  %3665 = vmatpush1.msra.mxu0 %v1037
  %3666 = vmatprep.subr.mxu0 %v1074
  %3667 = vmatpush1.msra.mxu0 %v1073
  %3668 = vmatprep.subr.mxu0 %v1110
  %3669 = vmatpush1.msra.mxu0 %v1109
  %3670 = vmatprep.subr.mxu0 %v1146
  %3671 = vmatpush1.msra.mxu0 %v1145
  %3672 = vmatprep.subr.mxu0 %v1182
  %3673 = vmatpush1.msra.mxu0 %v1181
  %3674 = vmatprep.mubr.f32.mxu0 %v33
  %3675 = vmatmul.mubr.f32.gmra.mrb[0].mxu0 %v32
  %v3676 = vpop.f32.mrb[0].mxu0
  %v3677 = vadd.f32 0.0, %v3676
  %v3678 = vpop.f32.mrb[0].mxu0
  %v3679 = vadd.f32 0.0, %v3678
  %3680 = vdwg.mxu0
  %3681 = vmatprep.subr.mxu0 %v1218
  %3682 = vmatpush1.msra.mxu0 %v1217
  %3683 = vmatprep.subr.mxu0 %v1254
  %3684 = vmatpush1.msra.mxu0 %v1253
  %3685 = vmatprep.subr.mxu0 %v1290
  %3686 = vmatpush1.msra.mxu0 %v1289
  %3687 = vmatprep.subr.mxu0 %v1326
  %3688 = vmatpush1.msra.mxu0 %v1325
  %3689 = vmatprep.subr.mxu0 %v1466
  %3690 = vmatpush1.msra.mxu0 %v1463
  %3691 = vmatprep.subr.mxu0 0.0
  %3692 = vmatpush1.msra.mxu0 0.0
  %3693 = vmatprep.subr.mxu0 0.0
  %3694 = vmatpush1.msra.mxu0 0.0
  %3695 = vmatprep.subr.mxu0 0.0
  %3696 = vmatpush1.msra.mxu0 0.0
  %3697 = vmatprep.subr.mxu0 0.0
  %3698 = vmatpush1.msra.mxu0 0.0
  %3699 = vmatprep.subr.mxu0 0.0
  %3700 = vmatpush1.msra.mxu0 0.0
  %3701 = vmatprep.subr.mxu0 0.0
  %3702 = vmatpush1.msra.mxu0 0.0
  %3703 = vmatprep.subr.mxu0 0.0
  %3704 = vmatpush1.msra.mxu0 0.0
  %3705 = vmatprep.subr.mxu0 0.0
  %3706 = vmatpush1.msra.mxu0 0.0
  %3707 = vmatprep.subr.mxu0 0.0
  %3708 = vmatpush1.msra.mxu0 0.0
  %3709 = vmatprep.subr.mxu0 0.0
  %3710 = vmatpush1.msra.mxu0 0.0
  %3711 = vmatprep.subr.mxu0 0.0
  %3712 = vmatpush1.msra.mxu0 0.0
  %3713 = vmatprep.subr.mxu0 0.0
  %3714 = vmatpush1.msra.mxu0 0.0
  %3715 = vmatprep.subr.mxu0 0.0
  %3716 = vmatpush1.msra.mxu0 0.0
  %3717 = vmatprep.subr.mxu0 0.0
  %3718 = vmatpush1.msra.mxu0 0.0
  %3719 = vmatprep.subr.mxu0 0.0
  %3720 = vmatpush1.msra.mxu0 0.0
  %3721 = vmatprep.subr.mxu0 0.0
  %3722 = vmatpush1.msra.mxu0 0.0
  %3723 = vmatprep.subr.mxu0 0.0
  %3724 = vmatpush1.msra.mxu0 0.0
  %3725 = vmatprep.subr.mxu0 0.0
  %3726 = vmatpush1.msra.mxu0 0.0
  %3727 = vmatprep.subr.mxu0 0.0
  %3728 = vmatpush1.msra.mxu0 0.0
  %3729 = vmatprep.subr.mxu0 0.0
  %3730 = vmatpush1.msra.mxu0 0.0
  %3731 = vmatprep.subr.mxu0 0.0
  %3732 = vmatpush1.msra.mxu0 0.0
  %3733 = vmatprep.subr.mxu0 0.0
  %3734 = vmatpush1.msra.mxu0 0.0
  %3735 = vmatprep.subr.mxu0 0.0
  %3736 = vmatpush1.msra.mxu0 0.0
  %3737 = vmatprep.subr.mxu0 0.0
  %3738 = vmatpush1.msra.mxu0 0.0
  %3739 = vmatprep.subr.mxu0 0.0
  %3740 = vmatpush1.msra.mxu0 0.0
  %3741 = vmatprep.subr.mxu0 0.0
  %3742 = vmatpush1.msra.mxu0 0.0
  %3743 = vmatprep.subr.mxu0 0.0
  %3744 = vmatpush1.msra.mxu0 0.0
  %3745 = vmatprep.mubr.f32.mxu0 0.0
  %3746 = vmatmul.mubr.f32.gmra.mrb[0].mxu0 %v1369
  %v3747 = vpop.f32.mrb[0].mxu0
  %v3748 = vadd.f32 %v3677, %v3747
  %v3749 = vpop.f32.mrb[0].mxu0
  %v3750 = vadd.f32 %v3679, %v3749
  %3751 = vdwg.mxu0
  %3752 = vmatprep.subr.mxu0 %v68
  %3753 = vmatpush1.msra.mxu0 %v67
  %3754 = vmatprep.subr.mxu0 %v104
  %3755 = vmatpush1.msra.mxu0 %v103
  %3756 = vmatprep.subr.mxu0 %v140
  %3757 = vmatpush1.msra.mxu0 %v139
  %3758 = vmatprep.subr.mxu0 %v176
  %3759 = vmatpush1.msra.mxu0 %v175
  %3760 = vmatprep.subr.mxu0 %v212
  %3761 = vmatpush1.msra.mxu0 %v211
  %3762 = vmatprep.subr.mxu0 %v248
  %3763 = vmatpush1.msra.mxu0 %v247
  %3764 = vmatprep.subr.mxu0 %v284
  %3765 = vmatpush1.msra.mxu0 %v283
  %3766 = vmatprep.subr.mxu0 %v320
  %3767 = vmatpush1.msra.mxu0 %v319
  %3768 = vmatprep.subr.mxu0 %v356
  %3769 = vmatpush1.msra.mxu0 %v355
  %3770 = vmatprep.subr.mxu0 %v392
  %3771 = vmatpush1.msra.mxu0 %v391
  %3772 = vmatprep.subr.mxu0 %v428
  %3773 = vmatpush1.msra.mxu0 %v427
  %3774 = vmatprep.subr.mxu0 %v464
  %3775 = vmatpush1.msra.mxu0 %v463
  %3776 = vmatprep.subr.mxu0 %v500
  %3777 = vmatpush1.msra.mxu0 %v499
  %3778 = vmatprep.subr.mxu0 %v536
  %3779 = vmatpush1.msra.mxu0 %v535
  %3780 = vmatprep.subr.mxu0 %v572
  %3781 = vmatpush1.msra.mxu0 %v571
  %3782 = vmatprep.subr.mxu0 %v608
  %3783 = vmatpush1.msra.mxu0 %v607
  %3784 = vmatprep.subr.mxu0 %v644
  %3785 = vmatpush1.msra.mxu0 %v643
  %3786 = vmatprep.subr.mxu0 %v680
  %3787 = vmatpush1.msra.mxu0 %v679
  %3788 = vmatprep.subr.mxu0 %v716
  %3789 = vmatpush1.msra.mxu0 %v715
  %3790 = vmatprep.subr.mxu0 %v752
  %3791 = vmatpush1.msra.mxu0 %v751
  %3792 = vmatprep.subr.mxu0 %v788
  %3793 = vmatpush1.msra.mxu0 %v787
  %3794 = vmatprep.subr.mxu0 %v824
  %3795 = vmatpush1.msra.mxu0 %v823
  %3796 = vmatprep.subr.mxu0 %v860
  %3797 = vmatpush1.msra.mxu0 %v859
  %3798 = vmatprep.subr.mxu0 %v896
  %3799 = vmatpush1.msra.mxu0 %v895
  %3800 = vmatprep.subr.mxu0 %v932
  %3801 = vmatpush1.msra.mxu0 %v931
  %3802 = vmatprep.subr.mxu0 %v968
  %3803 = vmatpush1.msra.mxu0 %v967
  %3804 = vmatprep.subr.mxu0 %v1004
  %3805 = vmatpush1.msra.mxu0 %v1003
  %3806 = vmatprep.subr.mxu0 %v1040
  %3807 = vmatpush1.msra.mxu0 %v1039
  %3808 = vmatprep.subr.mxu0 %v1076
  %3809 = vmatpush1.msra.mxu0 %v1075
  %3810 = vmatprep.subr.mxu0 %v1112
  %3811 = vmatpush1.msra.mxu0 %v1111
  %3812 = vmatprep.subr.mxu0 %v1148
  %3813 = vmatpush1.msra.mxu0 %v1147
  %3814 = vmatprep.subr.mxu0 %v1184
  %3815 = vmatpush1.msra.mxu0 %v1183
  %3816 = vmatprep.mubr.f32.mxu0 %v33
  %3817 = vmatmul.mubr.f32.gmra.mrb[0].mxu0 %v32
  %v3818 = vpop.f32.mrb[0].mxu0
  %v3819 = vadd.f32 0.0, %v3818
  %v3820 = vpop.f32.mrb[0].mxu0
  %v3821 = vadd.f32 0.0, %v3820
  %3822 = vdwg.mxu0
  %3823 = vmatprep.subr.mxu0 %v1220
  %3824 = vmatpush1.msra.mxu0 %v1219
  %3825 = vmatprep.subr.mxu0 %v1256
  %3826 = vmatpush1.msra.mxu0 %v1255
  %3827 = vmatprep.subr.mxu0 %v1292
  %3828 = vmatpush1.msra.mxu0 %v1291
  %3829 = vmatprep.subr.mxu0 %v1328
  %3830 = vmatpush1.msra.mxu0 %v1327
  %3831 = vmatprep.subr.mxu0 %v1472
  %3832 = vmatpush1.msra.mxu0 %v1469
  %3833 = vmatprep.subr.mxu0 0.0
  %3834 = vmatpush1.msra.mxu0 0.0
  %3835 = vmatprep.subr.mxu0 0.0
  %3836 = vmatpush1.msra.mxu0 0.0
  %3837 = vmatprep.subr.mxu0 0.0
  %3838 = vmatpush1.msra.mxu0 0.0
  %3839 = vmatprep.subr.mxu0 0.0
  %3840 = vmatpush1.msra.mxu0 0.0
  %3841 = vmatprep.subr.mxu0 0.0
  %3842 = vmatpush1.msra.mxu0 0.0
  %3843 = vmatprep.subr.mxu0 0.0
  %3844 = vmatpush1.msra.mxu0 0.0
  %3845 = vmatprep.subr.mxu0 0.0
  %3846 = vmatpush1.msra.mxu0 0.0
  %3847 = vmatprep.subr.mxu0 0.0
  %3848 = vmatpush1.msra.mxu0 0.0
  %3849 = vmatprep.subr.mxu0 0.0
  %3850 = vmatpush1.msra.mxu0 0.0
  %3851 = vmatprep.subr.mxu0 0.0
  %3852 = vmatpush1.msra.mxu0 0.0
  %3853 = vmatprep.subr.mxu0 0.0
  %3854 = vmatpush1.msra.mxu0 0.0
  %3855 = vmatprep.subr.mxu0 0.0
  %3856 = vmatpush1.msra.mxu0 0.0
  %3857 = vmatprep.subr.mxu0 0.0
  %3858 = vmatpush1.msra.mxu0 0.0
  %3859 = vmatprep.subr.mxu0 0.0
  %3860 = vmatpush1.msra.mxu0 0.0
  %3861 = vmatprep.subr.mxu0 0.0
  %3862 = vmatpush1.msra.mxu0 0.0
  %3863 = vmatprep.subr.mxu0 0.0
  %3864 = vmatpush1.msra.mxu0 0.0
  %3865 = vmatprep.subr.mxu0 0.0
  %3866 = vmatpush1.msra.mxu0 0.0
  %3867 = vmatprep.subr.mxu0 0.0
  %3868 = vmatpush1.msra.mxu0 0.0
  %3869 = vmatprep.subr.mxu0 0.0
  %3870 = vmatpush1.msra.mxu0 0.0
  %3871 = vmatprep.subr.mxu0 0.0
  %3872 = vmatpush1.msra.mxu0 0.0
  %3873 = vmatprep.subr.mxu0 0.0
  %3874 = vmatpush1.msra.mxu0 0.0
  %3875 = vmatprep.subr.mxu0 0.0
  %3876 = vmatpush1.msra.mxu0 0.0
  %3877 = vmatprep.subr.mxu0 0.0
  %3878 = vmatpush1.msra.mxu0 0.0
  %3879 = vmatprep.subr.mxu0 0.0
  %3880 = vmatpush1.msra.mxu0 0.0
  %3881 = vmatprep.subr.mxu0 0.0
  %3882 = vmatpush1.msra.mxu0 0.0
  %3883 = vmatprep.subr.mxu0 0.0
  %3884 = vmatpush1.msra.mxu0 0.0
  %3885 = vmatprep.subr.mxu0 0.0
  %3886 = vmatpush1.msra.mxu0 0.0
  %3887 = vmatprep.mubr.f32.mxu0 0.0
  %3888 = vmatmul.mubr.f32.gmra.mrb[0].mxu0 %v1369
  %v3889 = vpop.f32.mrb[0].mxu0
  %v3890 = vadd.f32 %v3819, %v3889
  %v3891 = vpop.f32.mrb[0].mxu0
  %v3892 = vadd.f32 %v3821, %v3891
  %3893 = vdwg.mxu0
  %3894 = vmatprep.subr.mxu0 %v70
  %3895 = vmatpush1.msra.mxu0 %v69
  %3896 = vmatprep.subr.mxu0 %v106
  %3897 = vmatpush1.msra.mxu0 %v105
  %3898 = vmatprep.subr.mxu0 %v142
  %3899 = vmatpush1.msra.mxu0 %v141
  %3900 = vmatprep.subr.mxu0 %v178
  %3901 = vmatpush1.msra.mxu0 %v177
  %3902 = vmatprep.subr.mxu0 %v214
  %3903 = vmatpush1.msra.mxu0 %v213
  %3904 = vmatprep.subr.mxu0 %v250
  %3905 = vmatpush1.msra.mxu0 %v249
  %3906 = vmatprep.subr.mxu0 %v286
  %3907 = vmatpush1.msra.mxu0 %v285
  %3908 = vmatprep.subr.mxu0 %v322
  %3909 = vmatpush1.msra.mxu0 %v321
  %3910 = vmatprep.subr.mxu0 %v358
  %3911 = vmatpush1.msra.mxu0 %v357
  %3912 = vmatprep.subr.mxu0 %v394
  %3913 = vmatpush1.msra.mxu0 %v393
  %3914 = vmatprep.subr.mxu0 %v430
  %3915 = vmatpush1.msra.mxu0 %v429
  %3916 = vmatprep.subr.mxu0 %v466
  %3917 = vmatpush1.msra.mxu0 %v465
  %3918 = vmatprep.subr.mxu0 %v502
  %3919 = vmatpush1.msra.mxu0 %v501
  %3920 = vmatprep.subr.mxu0 %v538
  %3921 = vmatpush1.msra.mxu0 %v537
  %3922 = vmatprep.subr.mxu0 %v574
  %3923 = vmatpush1.msra.mxu0 %v573
  %3924 = vmatprep.subr.mxu0 %v610
  %3925 = vmatpush1.msra.mxu0 %v609
  %3926 = vmatprep.subr.mxu0 %v646
  %3927 = vmatpush1.msra.mxu0 %v645
  %3928 = vmatprep.subr.mxu0 %v682
  %3929 = vmatpush1.msra.mxu0 %v681
  %3930 = vmatprep.subr.mxu0 %v718
  %3931 = vmatpush1.msra.mxu0 %v717
  %3932 = vmatprep.subr.mxu0 %v754
  %3933 = vmatpush1.msra.mxu0 %v753
  %3934 = vmatprep.subr.mxu0 %v790
  %3935 = vmatpush1.msra.mxu0 %v789
  %3936 = vmatprep.subr.mxu0 %v826
  %3937 = vmatpush1.msra.mxu0 %v825
  %3938 = vmatprep.subr.mxu0 %v862
  %3939 = vmatpush1.msra.mxu0 %v861
  %3940 = vmatprep.subr.mxu0 %v898
  %3941 = vmatpush1.msra.mxu0 %v897
  %3942 = vmatprep.subr.mxu0 %v934
  %3943 = vmatpush1.msra.mxu0 %v933
  %3944 = vmatprep.subr.mxu0 %v970
  %3945 = vmatpush1.msra.mxu0 %v969
  %3946 = vmatprep.subr.mxu0 %v1006
  %3947 = vmatpush1.msra.mxu0 %v1005
  %3948 = vmatprep.subr.mxu0 %v1042
  %3949 = vmatpush1.msra.mxu0 %v1041
  %3950 = vmatprep.subr.mxu0 %v1078
  %3951 = vmatpush1.msra.mxu0 %v1077
  %3952 = vmatprep.subr.mxu0 %v1114
  %3953 = vmatpush1.msra.mxu0 %v1113
  %3954 = vmatprep.subr.mxu0 %v1150
  %3955 = vmatpush1.msra.mxu0 %v1149
  %3956 = vmatprep.subr.mxu0 %v1186
  %3957 = vmatpush1.msra.mxu0 %v1185
  %3958 = vmatprep.mubr.f32.mxu0 %v33
  %3959 = vmatmul.mubr.f32.gmra.mrb[0].mxu0 %v32
  %v3960 = vpop.f32.mrb[0].mxu0
  %v3961 = vadd.f32 0.0, %v3960
  %v3962 = vpop.f32.mrb[0].mxu0
  %v3963 = vadd.f32 0.0, %v3962
  %3964 = vdwg.mxu0
  %3965 = vmatprep.subr.mxu0 %v1222
  %3966 = vmatpush1.msra.mxu0 %v1221
  %3967 = vmatprep.subr.mxu0 %v1258
  %3968 = vmatpush1.msra.mxu0 %v1257
  %3969 = vmatprep.subr.mxu0 %v1294
  %3970 = vmatpush1.msra.mxu0 %v1293
  %3971 = vmatprep.subr.mxu0 %v1330
  %3972 = vmatpush1.msra.mxu0 %v1329
  %3973 = vmatprep.subr.mxu0 %v1478
  %3974 = vmatpush1.msra.mxu0 %v1475
  %3975 = vmatprep.subr.mxu0 0.0
  %3976 = vmatpush1.msra.mxu0 0.0
  %3977 = vmatprep.subr.mxu0 0.0
  %3978 = vmatpush1.msra.mxu0 0.0
  %3979 = vmatprep.subr.mxu0 0.0
  %3980 = vmatpush1.msra.mxu0 0.0
  %3981 = vmatprep.subr.mxu0 0.0
  %3982 = vmatpush1.msra.mxu0 0.0
  %3983 = vmatprep.subr.mxu0 0.0
  %3984 = vmatpush1.msra.mxu0 0.0
  %3985 = vmatprep.subr.mxu0 0.0
  %3986 = vmatpush1.msra.mxu0 0.0
  %3987 = vmatprep.subr.mxu0 0.0
  %3988 = vmatpush1.msra.mxu0 0.0
  %3989 = vmatprep.subr.mxu0 0.0
  %3990 = vmatpush1.msra.mxu0 0.0
  %3991 = vmatprep.subr.mxu0 0.0
  %3992 = vmatpush1.msra.mxu0 0.0
  %3993 = vmatprep.subr.mxu0 0.0
  %3994 = vmatpush1.msra.mxu0 0.0
  %3995 = vmatprep.subr.mxu0 0.0
  %3996 = vmatpush1.msra.mxu0 0.0
  %3997 = vmatprep.subr.mxu0 0.0
  %3998 = vmatpush1.msra.mxu0 0.0
  %3999 = vmatprep.subr.mxu0 0.0
  %4000 = vmatpush1.msra.mxu0 0.0
  %4001 = vmatprep.subr.mxu0 0.0
  %4002 = vmatpush1.msra.mxu0 0.0
  %4003 = vmatprep.subr.mxu0 0.0
  %4004 = vmatpush1.msra.mxu0 0.0
  %4005 = vmatprep.subr.mxu0 0.0
  %4006 = vmatpush1.msra.mxu0 0.0
  %4007 = vmatprep.subr.mxu0 0.0
  %4008 = vmatpush1.msra.mxu0 0.0
  %4009 = vmatprep.subr.mxu0 0.0
  %4010 = vmatpush1.msra.mxu0 0.0
  %4011 = vmatprep.subr.mxu0 0.0
  %4012 = vmatpush1.msra.mxu0 0.0
  %4013 = vmatprep.subr.mxu0 0.0
  %4014 = vmatpush1.msra.mxu0 0.0
  %4015 = vmatprep.subr.mxu0 0.0
  %4016 = vmatpush1.msra.mxu0 0.0
  %4017 = vmatprep.subr.mxu0 0.0
  %4018 = vmatpush1.msra.mxu0 0.0
  %4019 = vmatprep.subr.mxu0 0.0
  %4020 = vmatpush1.msra.mxu0 0.0
  %4021 = vmatprep.subr.mxu0 0.0
  %4022 = vmatpush1.msra.mxu0 0.0
  %4023 = vmatprep.subr.mxu0 0.0
  %4024 = vmatpush1.msra.mxu0 0.0
  %4025 = vmatprep.subr.mxu0 0.0
  %4026 = vmatpush1.msra.mxu0 0.0
  %4027 = vmatprep.subr.mxu0 0.0
  %4028 = vmatpush1.msra.mxu0 0.0
  %4029 = vmatprep.mubr.f32.mxu0 0.0
  %4030 = vmatmul.mubr.f32.gmra.mrb[0].mxu0 %v1369
  %v4031 = vpop.f32.mrb[0].mxu0
  %v4032 = vadd.f32 %v3961, %v4031
  %v4033 = vpop.f32.mrb[0].mxu0
  %v4034 = vadd.f32 %v3963, %v4033
  %4035 = vdwg.mxu0
  %v4036 = vmax.f32 %v1618, %v2188
  %v4037 = vmax.f32 %v1620, %v2328
  %v4038 = vmax.f32 %v1760, %v2330
  %v4039 = vmax.f32 %v1762, %v2470
  %v4040 = vmax.f32 %v1902, %v2472
  %v4041 = vmax.f32 %v1904, %v2612
  %v4042 = vmax.f32 %v2044, %v2614
  %v4043 = vmax.f32 %v2046, %v2754
  %v4044 = vmax.f32 %v2186, %v2756
  %v4045 = vmax.f32 %v2896, %v3466
  %v4046 = vmax.f32 %v2898, %v3606
  %v4047 = vmax.f32 %v3038, %v3608
  %v4048 = vmax.f32 %v3040, %v3748
  %v4049 = vmax.f32 %v3180, %v3750
  %v4050 = vmax.f32 %v3182, %v3890
  %v4051 = vmax.f32 %v3322, %v3892
  %v4052 = vmax.f32 %v3324, %v4032
  %v4053 = vmax.f32 %v3464, %v4034
  %v4054 = vmax.f32 %v4036, %v4045
  %v4055 = vmax.f32 %v4037, %v4046
  %v4056 = vmax.f32 %v4038, %v4047
  %v4057 = vmax.f32 %v4039, %v4048
  %v4058 = vmax.f32 %v4040, %v4049
  %v4059 = vmax.f32 %v4041, %v4050
  %v4060 = vmax.f32 %v4042, %v4051
  %v4061 = vmax.f32 %v4043, %v4052
  %v4062 = vmax.f32 %v4044, %v4053
  %v4063 = vld [vmem:[%s2] sm:$0xff]
  %4065 = vset.pattern.permute.xlu0 0
  %4066 = vperm.xlu0 %4065, %v4063
  %v4067 = vpop.permute.xlu0 %4066
  %v4069 = vadd.f32 %v4054, %v4067
  %v4070 = vadd.f32 %v4055, %v4067
  %v4071 = vadd.f32 %v4056, %v4067
  %v4072 = vadd.f32 %v4057, %v4067
  %v4073 = vadd.f32 %v4058, %v4067
  %v4074 = vadd.f32 %v4059, %v4067
  %v4075 = vadd.f32 %v4060, %v4067
  %v4076 = vadd.f32 %v4061, %v4067
  %v4077 = vadd.f32 %v4062, %v4067
  %v4078 = vmax.f32 %v4069, 0.0
  %v4079 = vmax.f32 %v4070, 0.0
  %v4080 = vmax.f32 %v4071, 0.0
  %v4081 = vmax.f32 %v4072, 0.0
  %v4082 = vmax.f32 %v4073, 0.0
  %v4083 = vmax.f32 %v4074, 0.0
  %v4084 = vmax.f32 %v4075, 0.0
  %v4085 = vmax.f32 %v4076, 0.0
  %v4086 = vmax.f32 %v4077, 0.0
  %v4089 = vcombine.low %v4078, %v4079
  %v4091 = vunpack.c.l.s4 1966171168
  %v4092 = vunpack.c.0.s8 %v4091
  %v4093 = vlaneseq
  %v4094 = vshrl.u32 %v4093, 7
  %v4095 = vsub.s32 %v4092, %v4094
  %v4096 = vrot.slane %v4089, %v4095
  %v4098 = vunpack.c.l.s4 1966171168
  %v4099 = vunpack.c.0.s8 %v4098
  %v4100 = vlaneseq
  %v4101 = vshrl.u32 %v4100, 7
  %v4102 = vsub.s32 %v4099, %v4101
  %v4103 = vrot.slane %v4096, %v4102
  %v4105 = vlaneseq
  %vm4106 = vcmp.ge.s32.totalorder %v4105, 0
  %vm4107 = vcmp.lt.s32.totalorder %v4105, 144
  %vm4108 = vmand %vm4106, %vm4107
  %4109 = vst.msk [vmem:[#allocation2] ss:$8 sm:$0x3] %vm4108, %v4103
  %4110 = vst.msk [vmem:[#allocation2] ss:$8 sm:$0x0] %vm4108, %v4103
  %v4111 = vcombine.high %v4096, %v4096
  %v4113 = vunpack.c.l.s4 1966171168
  %v4114 = vunpack.c.0.s8 %v4113
  %v4115 = vlaneseq
  %v4116 = vshrl.u32 %v4115, 7
  %v4117 = vsub.s32 %v4114, %v4116
  %v4118 = vrot.slane %v4111, %v4117
  %4119 = vrot.lane.b32.xlu0 %v4118, 16
  %v4120 = vpop.permute.xlu0 %4119
  %v4121 = vrot.slane %v4120, 7
  %vm4122 = vcmask 130048
  %v4123 = vsel %vm4122, %v4121, %v4120
  %vm4125 = vcmp.ge.s32.totalorder %v4105, 16
  %vm4126 = vcmp.lt.s32.totalorder %v4105, 160
  %vm4127 = vmand %vm4125, %vm4126
  %s4128 = scalar_lea.vmem [#allocation2], 8
  %4129 = vst.msk [vmem:[%s4128] ss:$8 sm:$0x3] %vm4127, %v4123
  %4130 = vst.msk [vmem:[%s4128] ss:$8 sm:$0x0] %vm4127, %v4123
  %v4131 = vcombine.high %v4103, %v4103
  %4132 = vrot.lane.b32.xlu0 %v4131, 32
  %v4133 = vpop.permute.xlu0 %4132
  %v4134 = vrot.slane %v4133, 7
  %vm4135 = vcmask 261120
  %v4136 = vsel %vm4135, %v4134, %v4133
  %vm4138 = vcmp.ge.s32.totalorder %v4105, 32
  %vm4139 = vcmp.lt.s32.totalorder %v4105, 176
  %vm4140 = vmand %vm4138, %vm4139
  %s4141 = scalar_lea.vmem [#allocation2], 16
  %4142 = vst.msk [vmem:[%s4141] ss:$8 sm:$0x3] %vm4140, %v4136
  %4143 = vst.msk [vmem:[%s4141] ss:$8 sm:$0x0] %vm4140, %v4136
  %v4144 = vcombine.high %v4118, %v4118
  %4145 = vrot.lane.b32.xlu0 %v4144, 48
  %v4146 = vpop.permute.xlu0 %4145
  %v4147 = vrot.slane %v4146, 7
  %vm4148 = vcmask 392192
  %v4149 = vsel %vm4148, %v4147, %v4146
  %vm4151 = vcmp.ge.s32.totalorder %v4105, 48
  %vm4152 = vcmp.lt.s32.totalorder %v4105, 192
  %vm4153 = vmand %vm4151, %vm4152
  %s4154 = scalar_lea.vmem [#allocation2], 24
  %4155 = vst.msk [vmem:[%s4154] ss:$8 sm:$0x3] %vm4153, %v4149
  %4156 = vst.msk [vmem:[%s4154] ss:$8 sm:$0x0] %vm4153, %v4149
  %v4157 = vcombine.high %v4078, %v4079
  %v4159 = vunpack.c.l.s4 1966171168
  %v4160 = vunpack.c.0.s8 %v4159
  %v4161 = vlaneseq
  %v4162 = vshrl.u32 %v4161, 7
  %v4163 = vsub.s32 %v4160, %v4162
  %v4164 = vrot.slane %v4157, %v4163
  %v4166 = vunpack.c.l.s4 1966171168
  %v4167 = vunpack.c.0.s8 %v4166
  %v4168 = vlaneseq
  %v4169 = vshrl.u32 %v4168, 7
  %v4170 = vsub.s32 %v4167, %v4169
  %v4171 = vrot.slane %v4164, %v4170
  %4172 = vrot.lane.b32.xlu0 %v4171, 64
  %v4173 = vpop.permute.xlu0 %4172
  %v4174 = vrot.slane %v4173, 7
  %vm4175 = vcmask 523264
  %v4176 = vsel %vm4175, %v4174, %v4173
  %vm4178 = vcmp.ge.s32.totalorder %v4105, 64
  %vm4179 = vcmp.lt.s32.totalorder %v4105, 208
  %vm4180 = vmand %vm4178, %vm4179
  %s4181 = scalar_lea.vmem [#allocation2], 32
  %4182 = vst.msk [vmem:[%s4181] ss:$8 sm:$0x3] %vm4180, %v4176
  %4183 = vst.msk [vmem:[%s4181] ss:$8 sm:$0x0] %vm4180, %v4176
  %v4184 = vcombine.high %v4164, %v4164
  %v4186 = vunpack.c.l.s4 1966171168
  %v4187 = vunpack.c.0.s8 %v4186
  %v4188 = vlaneseq
  %v4189 = vshrl.u32 %v4188, 7
  %v4190 = vsub.s32 %v4187, %v4189
  %v4191 = vrot.slane %v4184, %v4190
  %4192 = vrot.lane.b32.xlu0 %v4191, 80
  %v4193 = vpop.permute.xlu0 %4192
  %v4194 = vrot.slane %v4193, 7
  %vm4195 = vcmask 654336
  %v4196 = vsel %vm4195, %v4194, %v4193
  %vm4198 = vcmp.ge.s32.totalorder %v4105, 80
  %vm4199 = vcmp.lt.s32.totalorder %v4105, 224
  %vm4200 = vmand %vm4198, %vm4199
  %s4201 = scalar_lea.vmem [#allocation2], 40
  %4202 = vst.msk [vmem:[%s4201] ss:$8 sm:$0x3] %vm4200, %v4196
  %4203 = vst.msk [vmem:[%s4201] ss:$8 sm:$0x0] %vm4200, %v4196
  %v4204 = vcombine.high %v4171, %v4171
  %4205 = vrot.lane.b32.xlu0 %v4204, 96
  %v4206 = vpop.permute.xlu0 %4205
  %v4207 = vrot.slane %v4206, 7
  %vm4208 = vcmask 785408
  %v4209 = vsel %vm4208, %v4207, %v4206
  %vm4211 = vcmp.ge.s32.totalorder %v4105, 96
  %vm4212 = vcmp.lt.s32.totalorder %v4105, 240
  %vm4213 = vmand %vm4211, %vm4212
  %s4214 = scalar_lea.vmem [#allocation2], 48
  %4215 = vst.msk [vmem:[%s4214] ss:$8 sm:$0x3] %vm4213, %v4209
  %4216 = vst.msk [vmem:[%s4214] ss:$8 sm:$0x0] %vm4213, %v4209
  %v4217 = vcombine.high %v4191, %v4191
  %4218 = vrot.lane.b32.xlu0 %v4217, 112
  %v4219 = vpop.permute.xlu0 %4218
  %v4220 = vrot.slane %v4219, 7
  %vm4221 = vcmask 916480
  %v4222 = vsel %vm4221, %v4220, %v4219
  %vm4224 = vcmp.ge.s32.totalorder %v4105, 112
  %vm4225 = vcmp.lt.s32.totalorder %v4105, 256
  %vm4226 = vmand %vm4224, %vm4225
  %s4227 = scalar_lea.vmem [#allocation2], 56
  %4228 = vst.msk [vmem:[%s4227] ss:$8 sm:$0x3] %vm4226, %v4222
  %4229 = vst.msk [vmem:[%s4227] ss:$8 sm:$0x0] %vm4226, %v4222
  %v4231 = vcombine.low %v4079, %v4080
  %v4233 = vunpack.c.l.s4 1966171168
  %v4234 = vunpack.c.0.s8 %v4233
  %v4235 = vlaneseq
  %v4236 = vshrl.u32 %v4235, 7
  %v4237 = vsub.s32 %v4234, %v4236
  %v4238 = vrot.slane %v4231, %v4237
  %v4240 = vunpack.c.l.s4 1966171168
  %v4241 = vunpack.c.0.s8 %v4240
  %v4242 = vlaneseq
  %v4243 = vshrl.u32 %v4242, 7
  %v4244 = vsub.s32 %v4241, %v4243
  %v4245 = vrot.slane %v4238, %v4244
  %4246 = vrot.lane.b32.xlu0 %v4245, 112
  %v4247 = vpop.permute.xlu0 %4246
  %v4248 = vrot.slane %v4247, 1
  %v4249 = vsel %vm4221, %v4247, %v4248
  %s4251 = scalar_lea.vmem [#allocation2], 1
  %4252 = vst.msk [vmem:[%s4251] ss:$8 sm:$0x3] %vm4108, %v4249
  %4253 = vst.msk [vmem:[%s4251] ss:$8 sm:$0x0] %vm4108, %v4249
  %v4254 = vcombine.high %v4238, %v4238
  %v4256 = vunpack.c.l.s4 1966171168
  %v4257 = vunpack.c.0.s8 %v4256
  %v4258 = vlaneseq
  %v4259 = vshrl.u32 %v4258, 7
  %v4260 = vsub.s32 %v4257, %v4259
  %v4261 = vrot.slane %v4254, %v4260
  %s4263 = scalar_lea.vmem [#allocation2], 9
  %4264 = vst.msk [vmem:[%s4263] ss:$8 sm:$0x3] %vm4127, %v4261
  %4265 = vst.msk [vmem:[%s4263] ss:$8 sm:$0x0] %vm4127, %v4261
  %v4266 = vcombine.high %v4245, %v4245
  %4267 = vrot.lane.b32.xlu0 %v4266, 16
  %v4268 = vpop.permute.xlu0 %4267
  %v4269 = vrot.slane %v4268, 7
  %v4270 = vsel %vm4122, %v4269, %v4268
  %s4272 = scalar_lea.vmem [#allocation2], 17
  %4273 = vst.msk [vmem:[%s4272] ss:$8 sm:$0x3] %vm4140, %v4270
  %4274 = vst.msk [vmem:[%s4272] ss:$8 sm:$0x0] %vm4140, %v4270
  %v4275 = vcombine.high %v4261, %v4261
  %4276 = vrot.lane.b32.xlu0 %v4275, 32
  %v4277 = vpop.permute.xlu0 %4276
  %v4278 = vrot.slane %v4277, 7
  %v4279 = vsel %vm4135, %v4278, %v4277
  %s4281 = scalar_lea.vmem [#allocation2], 25
  %4282 = vst.msk [vmem:[%s4281] ss:$8 sm:$0x3] %vm4153, %v4279
  %4283 = vst.msk [vmem:[%s4281] ss:$8 sm:$0x0] %vm4153, %v4279
  %v4284 = vcombine.high %v4079, %v4080
  %v4286 = vunpack.c.l.s4 1966171168
  %v4287 = vunpack.c.0.s8 %v4286
  %v4288 = vlaneseq
  %v4289 = vshrl.u32 %v4288, 7
  %v4290 = vsub.s32 %v4287, %v4289
  %v4291 = vrot.slane %v4284, %v4290
  %v4293 = vunpack.c.l.s4 1966171168
  %v4294 = vunpack.c.0.s8 %v4293
  %v4295 = vlaneseq
  %v4296 = vshrl.u32 %v4295, 7
  %v4297 = vsub.s32 %v4294, %v4296
  %v4298 = vrot.slane %v4291, %v4297
  %4299 = vrot.lane.b32.xlu0 %v4298, 48
  %v4300 = vpop.permute.xlu0 %4299
  %v4301 = vrot.slane %v4300, 7
  %v4302 = vsel %vm4148, %v4301, %v4300
  %s4304 = scalar_lea.vmem [#allocation2], 33
  %4305 = vst.msk [vmem:[%s4304] ss:$8 sm:$0x3] %vm4180, %v4302
  %4306 = vst.msk [vmem:[%s4304] ss:$8 sm:$0x0] %vm4180, %v4302
  %v4307 = vcombine.high %v4291, %v4291
  %v4309 = vunpack.c.l.s4 1966171168
  %v4310 = vunpack.c.0.s8 %v4309
  %v4311 = vlaneseq
  %v4312 = vshrl.u32 %v4311, 7
  %v4313 = vsub.s32 %v4310, %v4312
  %v4314 = vrot.slane %v4307, %v4313
  %4315 = vrot.lane.b32.xlu0 %v4314, 64
  %v4316 = vpop.permute.xlu0 %4315
  %v4317 = vrot.slane %v4316, 7
  %v4318 = vsel %vm4175, %v4317, %v4316
  %s4320 = scalar_lea.vmem [#allocation2], 41
  %4321 = vst.msk [vmem:[%s4320] ss:$8 sm:$0x3] %vm4200, %v4318
  %4322 = vst.msk [vmem:[%s4320] ss:$8 sm:$0x0] %vm4200, %v4318
  %v4323 = vcombine.high %v4298, %v4298
  %4324 = vrot.lane.b32.xlu0 %v4323, 80
  %v4325 = vpop.permute.xlu0 %4324
  %v4326 = vrot.slane %v4325, 7
  %v4327 = vsel %vm4195, %v4326, %v4325
  %s4329 = scalar_lea.vmem [#allocation2], 49
  %4330 = vst.msk [vmem:[%s4329] ss:$8 sm:$0x3] %vm4213, %v4327
  %4331 = vst.msk [vmem:[%s4329] ss:$8 sm:$0x0] %vm4213, %v4327
  %v4332 = vcombine.high %v4314, %v4314
  %4333 = vrot.lane.b32.xlu0 %v4332, 96
  %v4334 = vpop.permute.xlu0 %4333
  %v4335 = vrot.slane %v4334, 7
  %v4336 = vsel %vm4208, %v4335, %v4334
  %s4338 = scalar_lea.vmem [#allocation2], 57
  %4339 = vst.msk [vmem:[%s4338] ss:$8 sm:$0x3] %vm4226, %v4336
  %4340 = vst.msk [vmem:[%s4338] ss:$8 sm:$0x0] %vm4226, %v4336
  %v4342 = vcombine.low %v4080, %v4081
  %v4344 = vunpack.c.l.s4 1966171168
  %v4345 = vunpack.c.0.s8 %v4344
  %v4346 = vlaneseq
  %v4347 = vshrl.u32 %v4346, 7
  %v4348 = vsub.s32 %v4345, %v4347
  %v4349 = vrot.slane %v4342, %v4348
  %v4351 = vunpack.c.l.s4 1966171168
  %v4352 = vunpack.c.0.s8 %v4351
  %v4353 = vlaneseq
  %v4354 = vshrl.u32 %v4353, 7
  %v4355 = vsub.s32 %v4352, %v4354
  %v4356 = vrot.slane %v4349, %v4355
  %4357 = vrot.lane.b32.xlu0 %v4356, 96
  %v4358 = vpop.permute.xlu0 %4357
  %v4359 = vrot.slane %v4358, 1
  %v4360 = vsel %vm4208, %v4358, %v4359
  %s4362 = scalar_lea.vmem [#allocation2], 2
  %4363 = vst.msk [vmem:[%s4362] ss:$8 sm:$0x3] %vm4108, %v4360
  %4364 = vst.msk [vmem:[%s4362] ss:$8 sm:$0x0] %vm4108, %v4360
  %v4365 = vcombine.high %v4349, %v4349
  %v4367 = vunpack.c.l.s4 1966171168
  %v4368 = vunpack.c.0.s8 %v4367
  %v4369 = vlaneseq
  %v4370 = vshrl.u32 %v4369, 7
  %v4371 = vsub.s32 %v4368, %v4370
  %v4372 = vrot.slane %v4365, %v4371
  %4373 = vrot.lane.b32.xlu0 %v4372, 112
  %v4374 = vpop.permute.xlu0 %4373
  %v4375 = vrot.slane %v4374, 1
  %v4376 = vsel %vm4221, %v4374, %v4375
  %s4378 = scalar_lea.vmem [#allocation2], 10
  %4379 = vst.msk [vmem:[%s4378] ss:$8 sm:$0x3] %vm4127, %v4376
  %4380 = vst.msk [vmem:[%s4378] ss:$8 sm:$0x0] %vm4127, %v4376
  %v4381 = vcombine.high %v4356, %v4356
  %s4383 = scalar_lea.vmem [#allocation2], 18
  %4384 = vst.msk [vmem:[%s4383] ss:$8 sm:$0x3] %vm4140, %v4381
  %4385 = vst.msk [vmem:[%s4383] ss:$8 sm:$0x0] %vm4140, %v4381
  %v4386 = vcombine.high %v4372, %v4372
  %4387 = vrot.lane.b32.xlu0 %v4386, 16
  %v4388 = vpop.permute.xlu0 %4387
  %v4389 = vrot.slane %v4388, 7
  %v4390 = vsel %vm4122, %v4389, %v4388
  %s4392 = scalar_lea.vmem [#allocation2], 26
  %4393 = vst.msk [vmem:[%s4392] ss:$8 sm:$0x3] %vm4153, %v4390
  %4394 = vst.msk [vmem:[%s4392] ss:$8 sm:$0x0] %vm4153, %v4390
  %v4395 = vcombine.high %v4080, %v4081
  %v4397 = vunpack.c.l.s4 1966171168
  %v4398 = vunpack.c.0.s8 %v4397
  %v4399 = vlaneseq
  %v4400 = vshrl.u32 %v4399, 7
  %v4401 = vsub.s32 %v4398, %v4400
  %v4402 = vrot.slane %v4395, %v4401
  %v4404 = vunpack.c.l.s4 1966171168
  %v4405 = vunpack.c.0.s8 %v4404
  %v4406 = vlaneseq
  %v4407 = vshrl.u32 %v4406, 7
  %v4408 = vsub.s32 %v4405, %v4407
  %v4409 = vrot.slane %v4402, %v4408
  %4410 = vrot.lane.b32.xlu0 %v4409, 32
  %v4411 = vpop.permute.xlu0 %4410
  %v4412 = vrot.slane %v4411, 7
  %v4413 = vsel %vm4135, %v4412, %v4411
  %s4415 = scalar_lea.vmem [#allocation2], 34
  %4416 = vst.msk [vmem:[%s4415] ss:$8 sm:$0x3] %vm4180, %v4413
  %4417 = vst.msk [vmem:[%s4415] ss:$8 sm:$0x0] %vm4180, %v4413
  %v4418 = vcombine.high %v4402, %v4402
  %v4420 = vunpack.c.l.s4 1966171168
  %v4421 = vunpack.c.0.s8 %v4420
  %v4422 = vlaneseq
  %v4423 = vshrl.u32 %v4422, 7
  %v4424 = vsub.s32 %v4421, %v4423
  %v4425 = vrot.slane %v4418, %v4424
  %4426 = vrot.lane.b32.xlu0 %v4425, 48
  %v4427 = vpop.permute.xlu0 %4426
  %v4428 = vrot.slane %v4427, 7
  %v4429 = vsel %vm4148, %v4428, %v4427
  %s4431 = scalar_lea.vmem [#allocation2], 42
  %4432 = vst.msk [vmem:[%s4431] ss:$8 sm:$0x3] %vm4200, %v4429
  %4433 = vst.msk [vmem:[%s4431] ss:$8 sm:$0x0] %vm4200, %v4429
  %v4434 = vcombine.high %v4409, %v4409
  %4435 = vrot.lane.b32.xlu0 %v4434, 64
  %v4436 = vpop.permute.xlu0 %4435
  %v4437 = vrot.slane %v4436, 7
  %v4438 = vsel %vm4175, %v4437, %v4436
  %s4440 = scalar_lea.vmem [#allocation2], 50
  %4441 = vst.msk [vmem:[%s4440] ss:$8 sm:$0x3] %vm4213, %v4438
  %4442 = vst.msk [vmem:[%s4440] ss:$8 sm:$0x0] %vm4213, %v4438
  %v4443 = vcombine.high %v4425, %v4425
  %4444 = vrot.lane.b32.xlu0 %v4443, 80
  %v4445 = vpop.permute.xlu0 %4444
  %v4446 = vrot.slane %v4445, 7
  %v4447 = vsel %vm4195, %v4446, %v4445
  %s4449 = scalar_lea.vmem [#allocation2], 58
  %4450 = vst.msk [vmem:[%s4449] ss:$8 sm:$0x3] %vm4226, %v4447
  %4451 = vst.msk [vmem:[%s4449] ss:$8 sm:$0x0] %vm4226, %v4447
  %v4453 = vcombine.low %v4081, %v4082
  %v4455 = vunpack.c.l.s4 1966171168
  %v4456 = vunpack.c.0.s8 %v4455
  %v4457 = vlaneseq
  %v4458 = vshrl.u32 %v4457, 7
  %v4459 = vsub.s32 %v4456, %v4458
  %v4460 = vrot.slane %v4453, %v4459
  %v4462 = vunpack.c.l.s4 1966171168
  %v4463 = vunpack.c.0.s8 %v4462
  %v4464 = vlaneseq
  %v4465 = vshrl.u32 %v4464, 7
  %v4466 = vsub.s32 %v4463, %v4465
  %v4467 = vrot.slane %v4460, %v4466
  %4468 = vrot.lane.b32.xlu0 %v4467, 80
  %v4469 = vpop.permute.xlu0 %4468
  %v4470 = vrot.slane %v4469, 1
  %v4471 = vsel %vm4195, %v4469, %v4470
  %s4473 = scalar_lea.vmem [#allocation2], 3
  %4474 = vst.msk [vmem:[%s4473] ss:$8 sm:$0x3] %vm4108, %v4471
  %4475 = vst.msk [vmem:[%s4473] ss:$8 sm:$0x0] %vm4108, %v4471
  %v4476 = vcombine.high %v4460, %v4460
  %v4478 = vunpack.c.l.s4 1966171168
  %v4479 = vunpack.c.0.s8 %v4478
  %v4480 = vlaneseq
  %v4481 = vshrl.u32 %v4480, 7
  %v4482 = vsub.s32 %v4479, %v4481
  %v4483 = vrot.slane %v4476, %v4482
  %4484 = vrot.lane.b32.xlu0 %v4483, 96
  %v4485 = vpop.permute.xlu0 %4484
  %v4486 = vrot.slane %v4485, 1
  %v4487 = vsel %vm4208, %v4485, %v4486
  %s4489 = scalar_lea.vmem [#allocation2], 11
  %4490 = vst.msk [vmem:[%s4489] ss:$8 sm:$0x3] %vm4127, %v4487
  %4491 = vst.msk [vmem:[%s4489] ss:$8 sm:$0x0] %vm4127, %v4487
  %v4492 = vcombine.high %v4467, %v4467
  %4493 = vrot.lane.b32.xlu0 %v4492, 112
  %v4494 = vpop.permute.xlu0 %4493
  %v4495 = vrot.slane %v4494, 1
  %v4496 = vsel %vm4221, %v4494, %v4495
  %s4498 = scalar_lea.vmem [#allocation2], 19
  %4499 = vst.msk [vmem:[%s4498] ss:$8 sm:$0x3] %vm4140, %v4496
  %4500 = vst.msk [vmem:[%s4498] ss:$8 sm:$0x0] %vm4140, %v4496
  %v4501 = vcombine.high %v4483, %v4483
  %s4503 = scalar_lea.vmem [#allocation2], 27
  %4504 = vst.msk [vmem:[%s4503] ss:$8 sm:$0x3] %vm4153, %v4501
  %4505 = vst.msk [vmem:[%s4503] ss:$8 sm:$0x0] %vm4153, %v4501
  %v4506 = vcombine.high %v4081, %v4082
  %v4508 = vunpack.c.l.s4 1966171168
  %v4509 = vunpack.c.0.s8 %v4508
  %v4510 = vlaneseq
  %v4511 = vshrl.u32 %v4510, 7
  %v4512 = vsub.s32 %v4509, %v4511
  %v4513 = vrot.slane %v4506, %v4512
  %v4515 = vunpack.c.l.s4 1966171168
  %v4516 = vunpack.c.0.s8 %v4515
  %v4517 = vlaneseq
  %v4518 = vshrl.u32 %v4517, 7
  %v4519 = vsub.s32 %v4516, %v4518
  %v4520 = vrot.slane %v4513, %v4519
  %4521 = vrot.lane.b32.xlu0 %v4520, 16
  %v4522 = vpop.permute.xlu0 %4521
  %v4523 = vrot.slane %v4522, 7
  %v4524 = vsel %vm4122, %v4523, %v4522
  %s4526 = scalar_lea.vmem [#allocation2], 35
  %4527 = vst.msk [vmem:[%s4526] ss:$8 sm:$0x3] %vm4180, %v4524
  %4528 = vst.msk [vmem:[%s4526] ss:$8 sm:$0x0] %vm4180, %v4524
  %v4529 = vcombine.high %v4513, %v4513
  %v4531 = vunpack.c.l.s4 1966171168
  %v4532 = vunpack.c.0.s8 %v4531
  %v4533 = vlaneseq
  %v4534 = vshrl.u32 %v4533, 7
  %v4535 = vsub.s32 %v4532, %v4534
  %v4536 = vrot.slane %v4529, %v4535
  %4537 = vrot.lane.b32.xlu0 %v4536, 32
  %v4538 = vpop.permute.xlu0 %4537
  %v4539 = vrot.slane %v4538, 7
  %v4540 = vsel %vm4135, %v4539, %v4538
  %s4542 = scalar_lea.vmem [#allocation2], 43
  %4543 = vst.msk [vmem:[%s4542] ss:$8 sm:$0x3] %vm4200, %v4540
  %4544 = vst.msk [vmem:[%s4542] ss:$8 sm:$0x0] %vm4200, %v4540
  %v4545 = vcombine.high %v4520, %v4520
  %4546 = vrot.lane.b32.xlu0 %v4545, 48
  %v4547 = vpop.permute.xlu0 %4546
  %v4548 = vrot.slane %v4547, 7
  %v4549 = vsel %vm4148, %v4548, %v4547
  %s4551 = scalar_lea.vmem [#allocation2], 51
  %4552 = vst.msk [vmem:[%s4551] ss:$8 sm:$0x3] %vm4213, %v4549
  %4553 = vst.msk [vmem:[%s4551] ss:$8 sm:$0x0] %vm4213, %v4549
  %v4554 = vcombine.high %v4536, %v4536
  %4555 = vrot.lane.b32.xlu0 %v4554, 64
  %v4556 = vpop.permute.xlu0 %4555
  %v4557 = vrot.slane %v4556, 7
  %v4558 = vsel %vm4175, %v4557, %v4556
  %s4560 = scalar_lea.vmem [#allocation2], 59
  %4561 = vst.msk [vmem:[%s4560] ss:$8 sm:$0x3] %vm4226, %v4558
  %4562 = vst.msk [vmem:[%s4560] ss:$8 sm:$0x0] %vm4226, %v4558
  %v4564 = vcombine.low %v4082, %v4083
  %v4566 = vunpack.c.l.s4 1966171168
  %v4567 = vunpack.c.0.s8 %v4566
  %v4568 = vlaneseq
  %v4569 = vshrl.u32 %v4568, 7
  %v4570 = vsub.s32 %v4567, %v4569
  %v4571 = vrot.slane %v4564, %v4570
  %v4573 = vunpack.c.l.s4 1966171168
  %v4574 = vunpack.c.0.s8 %v4573
  %v4575 = vlaneseq
  %v4576 = vshrl.u32 %v4575, 7
  %v4577 = vsub.s32 %v4574, %v4576
  %v4578 = vrot.slane %v4571, %v4577
  %4579 = vrot.lane.b32.xlu0 %v4578, 64
  %v4580 = vpop.permute.xlu0 %4579
  %v4581 = vrot.slane %v4580, 1
  %v4582 = vsel %vm4175, %v4580, %v4581
  %s4584 = scalar_lea.vmem [#allocation2], 4
  %4585 = vst.msk [vmem:[%s4584] ss:$8 sm:$0x3] %vm4108, %v4582
  %4586 = vst.msk [vmem:[%s4584] ss:$8 sm:$0x0] %vm4108, %v4582
  %v4587 = vcombine.high %v4571, %v4571
  %v4589 = vunpack.c.l.s4 1966171168
  %v4590 = vunpack.c.0.s8 %v4589
  %v4591 = vlaneseq
  %v4592 = vshrl.u32 %v4591, 7
  %v4593 = vsub.s32 %v4590, %v4592
  %v4594 = vrot.slane %v4587, %v4593
  %4595 = vrot.lane.b32.xlu0 %v4594, 80
  %v4596 = vpop.permute.xlu0 %4595
  %v4597 = vrot.slane %v4596, 1
  %v4598 = vsel %vm4195, %v4596, %v4597
  %s4600 = scalar_lea.vmem [#allocation2], 12
  %4601 = vst.msk [vmem:[%s4600] ss:$8 sm:$0x3] %vm4127, %v4598
  %4602 = vst.msk [vmem:[%s4600] ss:$8 sm:$0x0] %vm4127, %v4598
  %v4603 = vcombine.high %v4578, %v4578
  %4604 = vrot.lane.b32.xlu0 %v4603, 96
  %v4605 = vpop.permute.xlu0 %4604
  %v4606 = vrot.slane %v4605, 1
  %v4607 = vsel %vm4208, %v4605, %v4606
  %s4609 = scalar_lea.vmem [#allocation2], 20
  %4610 = vst.msk [vmem:[%s4609] ss:$8 sm:$0x3] %vm4140, %v4607
  %4611 = vst.msk [vmem:[%s4609] ss:$8 sm:$0x0] %vm4140, %v4607
  %v4612 = vcombine.high %v4594, %v4594
  %4613 = vrot.lane.b32.xlu0 %v4612, 112
  %v4614 = vpop.permute.xlu0 %4613
  %v4615 = vrot.slane %v4614, 1
  %v4616 = vsel %vm4221, %v4614, %v4615
  %s4618 = scalar_lea.vmem [#allocation2], 28
  %4619 = vst.msk [vmem:[%s4618] ss:$8 sm:$0x3] %vm4153, %v4616
  %4620 = vst.msk [vmem:[%s4618] ss:$8 sm:$0x0] %vm4153, %v4616
  %v4621 = vcombine.high %v4082, %v4083
  %v4623 = vunpack.c.l.s4 1966171168
  %v4624 = vunpack.c.0.s8 %v4623
  %v4625 = vlaneseq
  %v4626 = vshrl.u32 %v4625, 7
  %v4627 = vsub.s32 %v4624, %v4626
  %v4628 = vrot.slane %v4621, %v4627
  %v4630 = vunpack.c.l.s4 1966171168
  %v4631 = vunpack.c.0.s8 %v4630
  %v4632 = vlaneseq
  %v4633 = vshrl.u32 %v4632, 7
  %v4634 = vsub.s32 %v4631, %v4633
  %v4635 = vrot.slane %v4628, %v4634
  %s4637 = scalar_lea.vmem [#allocation2], 36
  %4638 = vst.msk [vmem:[%s4637] ss:$8 sm:$0x3] %vm4180, %v4635
  %4639 = vst.msk [vmem:[%s4637] ss:$8 sm:$0x0] %vm4180, %v4635
  %v4640 = vcombine.high %v4628, %v4628
  %v4642 = vunpack.c.l.s4 1966171168
  %v4643 = vunpack.c.0.s8 %v4642
  %v4644 = vlaneseq
  %v4645 = vshrl.u32 %v4644, 7
  %v4646 = vsub.s32 %v4643, %v4645
  %v4647 = vrot.slane %v4640, %v4646
  %4648 = vrot.lane.b32.xlu0 %v4647, 16
  %v4649 = vpop.permute.xlu0 %4648
  %v4650 = vrot.slane %v4649, 7
  %v4651 = vsel %vm4122, %v4650, %v4649
  %s4653 = scalar_lea.vmem [#allocation2], 44
  %4654 = vst.msk [vmem:[%s4653] ss:$8 sm:$0x3] %vm4200, %v4651
  %4655 = vst.msk [vmem:[%s4653] ss:$8 sm:$0x0] %vm4200, %v4651
  %v4656 = vcombine.high %v4635, %v4635
  %4657 = vrot.lane.b32.xlu0 %v4656, 32
  %v4658 = vpop.permute.xlu0 %4657
  %v4659 = vrot.slane %v4658, 7
  %v4660 = vsel %vm4135, %v4659, %v4658
  %s4662 = scalar_lea.vmem [#allocation2], 52
  %4663 = vst.msk [vmem:[%s4662] ss:$8 sm:$0x3] %vm4213, %v4660
  %4664 = vst.msk [vmem:[%s4662] ss:$8 sm:$0x0] %vm4213, %v4660
  %v4665 = vcombine.high %v4647, %v4647
  %4666 = vrot.lane.b32.xlu0 %v4665, 48
  %v4667 = vpop.permute.xlu0 %4666
  %v4668 = vrot.slane %v4667, 7
  %v4669 = vsel %vm4148, %v4668, %v4667
  %s4671 = scalar_lea.vmem [#allocation2], 60
  %4672 = vst.msk [vmem:[%s4671] ss:$8 sm:$0x3] %vm4226, %v4669
  %4673 = vst.msk [vmem:[%s4671] ss:$8 sm:$0x0] %vm4226, %v4669
  %v4675 = vcombine.low %v4083, %v4084
  %v4677 = vunpack.c.l.s4 1966171168
  %v4678 = vunpack.c.0.s8 %v4677
  %v4679 = vlaneseq
  %v4680 = vshrl.u32 %v4679, 7
  %v4681 = vsub.s32 %v4678, %v4680
  %v4682 = vrot.slane %v4675, %v4681
  %v4684 = vunpack.c.l.s4 1966171168
  %v4685 = vunpack.c.0.s8 %v4684
  %v4686 = vlaneseq
  %v4687 = vshrl.u32 %v4686, 7
  %v4688 = vsub.s32 %v4685, %v4687
  %v4689 = vrot.slane %v4682, %v4688
  %4690 = vrot.lane.b32.xlu0 %v4689, 48
  %v4691 = vpop.permute.xlu0 %4690
  %v4692 = vrot.slane %v4691, 1
  %v4693 = vsel %vm4148, %v4691, %v4692
  %s4695 = scalar_lea.vmem [#allocation2], 5
  %4696 = vst.msk [vmem:[%s4695] ss:$8 sm:$0x3] %vm4108, %v4693
  %4697 = vst.msk [vmem:[%s4695] ss:$8 sm:$0x0] %vm4108, %v4693
  %v4698 = vcombine.high %v4682, %v4682
  %v4700 = vunpack.c.l.s4 1966171168
  %v4701 = vunpack.c.0.s8 %v4700
  %v4702 = vlaneseq
  %v4703 = vshrl.u32 %v4702, 7
  %v4704 = vsub.s32 %v4701, %v4703
  %v4705 = vrot.slane %v4698, %v4704
  %4706 = vrot.lane.b32.xlu0 %v4705, 64
  %v4707 = vpop.permute.xlu0 %4706
  %v4708 = vrot.slane %v4707, 1
  %v4709 = vsel %vm4175, %v4707, %v4708
  %s4711 = scalar_lea.vmem [#allocation2], 13
  %4712 = vst.msk [vmem:[%s4711] ss:$8 sm:$0x3] %vm4127, %v4709
  %4713 = vst.msk [vmem:[%s4711] ss:$8 sm:$0x0] %vm4127, %v4709
  %v4714 = vcombine.high %v4689, %v4689
  %4715 = vrot.lane.b32.xlu0 %v4714, 80
  %v4716 = vpop.permute.xlu0 %4715
  %v4717 = vrot.slane %v4716, 1
  %v4718 = vsel %vm4195, %v4716, %v4717
  %s4720 = scalar_lea.vmem [#allocation2], 21
  %4721 = vst.msk [vmem:[%s4720] ss:$8 sm:$0x3] %vm4140, %v4718
  %4722 = vst.msk [vmem:[%s4720] ss:$8 sm:$0x0] %vm4140, %v4718
  %v4723 = vcombine.high %v4705, %v4705
  %4724 = vrot.lane.b32.xlu0 %v4723, 96
  %v4725 = vpop.permute.xlu0 %4724
  %v4726 = vrot.slane %v4725, 1
  %v4727 = vsel %vm4208, %v4725, %v4726
  %s4729 = scalar_lea.vmem [#allocation2], 29
  %4730 = vst.msk [vmem:[%s4729] ss:$8 sm:$0x3] %vm4153, %v4727
  %4731 = vst.msk [vmem:[%s4729] ss:$8 sm:$0x0] %vm4153, %v4727
  %v4732 = vcombine.high %v4083, %v4084
  %v4734 = vunpack.c.l.s4 1966171168
  %v4735 = vunpack.c.0.s8 %v4734
  %v4736 = vlaneseq
  %v4737 = vshrl.u32 %v4736, 7
  %v4738 = vsub.s32 %v4735, %v4737
  %v4739 = vrot.slane %v4732, %v4738
  %v4741 = vunpack.c.l.s4 1966171168
  %v4742 = vunpack.c.0.s8 %v4741
  %v4743 = vlaneseq
  %v4744 = vshrl.u32 %v4743, 7
  %v4745 = vsub.s32 %v4742, %v4744
  %v4746 = vrot.slane %v4739, %v4745
  %4747 = vrot.lane.b32.xlu0 %v4746, 112
  %v4748 = vpop.permute.xlu0 %4747
  %v4749 = vrot.slane %v4748, 1
  %v4750 = vsel %vm4221, %v4748, %v4749
  %s4752 = scalar_lea.vmem [#allocation2], 37
  %4753 = vst.msk [vmem:[%s4752] ss:$8 sm:$0x3] %vm4180, %v4750
  %4754 = vst.msk [vmem:[%s4752] ss:$8 sm:$0x0] %vm4180, %v4750
  %v4755 = vcombine.high %v4739, %v4739
  %v4757 = vunpack.c.l.s4 1966171168
  %v4758 = vunpack.c.0.s8 %v4757
  %v4759 = vlaneseq
  %v4760 = vshrl.u32 %v4759, 7
  %v4761 = vsub.s32 %v4758, %v4760
  %v4762 = vrot.slane %v4755, %v4761
  %s4764 = scalar_lea.vmem [#allocation2], 45
  %4765 = vst.msk [vmem:[%s4764] ss:$8 sm:$0x3] %vm4200, %v4762
  %4766 = vst.msk [vmem:[%s4764] ss:$8 sm:$0x0] %vm4200, %v4762
  %v4767 = vcombine.high %v4746, %v4746
  %4768 = vrot.lane.b32.xlu0 %v4767, 16
  %v4769 = vpop.permute.xlu0 %4768
  %v4770 = vrot.slane %v4769, 7
  %v4771 = vsel %vm4122, %v4770, %v4769
  %s4773 = scalar_lea.vmem [#allocation2], 53
  %4774 = vst.msk [vmem:[%s4773] ss:$8 sm:$0x3] %vm4213, %v4771
  %4775 = vst.msk [vmem:[%s4773] ss:$8 sm:$0x0] %vm4213, %v4771
  %v4776 = vcombine.high %v4762, %v4762
  %4777 = vrot.lane.b32.xlu0 %v4776, 32
  %v4778 = vpop.permute.xlu0 %4777
  %v4779 = vrot.slane %v4778, 7
  %v4780 = vsel %vm4135, %v4779, %v4778
  %s4782 = scalar_lea.vmem [#allocation2], 61
  %4783 = vst.msk [vmem:[%s4782] ss:$8 sm:$0x3] %vm4226, %v4780
  %4784 = vst.msk [vmem:[%s4782] ss:$8 sm:$0x0] %vm4226, %v4780
  %v4786 = vcombine.low %v4084, %v4085
  %v4788 = vunpack.c.l.s4 1966171168
  %v4789 = vunpack.c.0.s8 %v4788
  %v4790 = vlaneseq
  %v4791 = vshrl.u32 %v4790, 7
  %v4792 = vsub.s32 %v4789, %v4791
  %v4793 = vrot.slane %v4786, %v4792
  %v4795 = vunpack.c.l.s4 1966171168
  %v4796 = vunpack.c.0.s8 %v4795
  %v4797 = vlaneseq
  %v4798 = vshrl.u32 %v4797, 7
  %v4799 = vsub.s32 %v4796, %v4798
  %v4800 = vrot.slane %v4793, %v4799
  %4801 = vrot.lane.b32.xlu0 %v4800, 32
  %v4802 = vpop.permute.xlu0 %4801
  %v4803 = vrot.slane %v4802, 1
  %v4804 = vsel %vm4135, %v4802, %v4803
  %s4806 = scalar_lea.vmem [#allocation2], 6
  %4807 = vst.msk [vmem:[%s4806] ss:$8 sm:$0x3] %vm4108, %v4804
  %4808 = vst.msk [vmem:[%s4806] ss:$8 sm:$0x0] %vm4108, %v4804
  %v4809 = vcombine.high %v4793, %v4793
  %v4811 = vunpack.c.l.s4 1966171168
  %v4812 = vunpack.c.0.s8 %v4811
  %v4813 = vlaneseq
  %v4814 = vshrl.u32 %v4813, 7
  %v4815 = vsub.s32 %v4812, %v4814
  %v4816 = vrot.slane %v4809, %v4815
  %4817 = vrot.lane.b32.xlu0 %v4816, 48
  %v4818 = vpop.permute.xlu0 %4817
  %v4819 = vrot.slane %v4818, 1
  %v4820 = vsel %vm4148, %v4818, %v4819
  %s4822 = scalar_lea.vmem [#allocation2], 14
  %4823 = vst.msk [vmem:[%s4822] ss:$8 sm:$0x3] %vm4127, %v4820
  %4824 = vst.msk [vmem:[%s4822] ss:$8 sm:$0x0] %vm4127, %v4820
  %v4825 = vcombine.high %v4800, %v4800
  %4826 = vrot.lane.b32.xlu0 %v4825, 64
  %v4827 = vpop.permute.xlu0 %4826
  %v4828 = vrot.slane %v4827, 1
  %v4829 = vsel %vm4175, %v4827, %v4828
  %s4831 = scalar_lea.vmem [#allocation2], 22
  %4832 = vst.msk [vmem:[%s4831] ss:$8 sm:$0x3] %vm4140, %v4829
  %4833 = vst.msk [vmem:[%s4831] ss:$8 sm:$0x0] %vm4140, %v4829
  %v4834 = vcombine.high %v4816, %v4816
  %4835 = vrot.lane.b32.xlu0 %v4834, 80
  %v4836 = vpop.permute.xlu0 %4835
  %v4837 = vrot.slane %v4836, 1
  %v4838 = vsel %vm4195, %v4836, %v4837
  %s4840 = scalar_lea.vmem [#allocation2], 30
  %4841 = vst.msk [vmem:[%s4840] ss:$8 sm:$0x3] %vm4153, %v4838
  %4842 = vst.msk [vmem:[%s4840] ss:$8 sm:$0x0] %vm4153, %v4838
  %v4843 = vcombine.high %v4084, %v4085
  %v4845 = vunpack.c.l.s4 1966171168
  %v4846 = vunpack.c.0.s8 %v4845
  %v4847 = vlaneseq
  %v4848 = vshrl.u32 %v4847, 7
  %v4849 = vsub.s32 %v4846, %v4848
  %v4850 = vrot.slane %v4843, %v4849
  %v4852 = vunpack.c.l.s4 1966171168
  %v4853 = vunpack.c.0.s8 %v4852
  %v4854 = vlaneseq
  %v4855 = vshrl.u32 %v4854, 7
  %v4856 = vsub.s32 %v4853, %v4855
  %v4857 = vrot.slane %v4850, %v4856
  %4858 = vrot.lane.b32.xlu0 %v4857, 96
  %v4859 = vpop.permute.xlu0 %4858
  %v4860 = vrot.slane %v4859, 1
  %v4861 = vsel %vm4208, %v4859, %v4860
  %s4863 = scalar_lea.vmem [#allocation2], 38
  %4864 = vst.msk [vmem:[%s4863] ss:$8 sm:$0x3] %vm4180, %v4861
  %4865 = vst.msk [vmem:[%s4863] ss:$8 sm:$0x0] %vm4180, %v4861
  %v4866 = vcombine.high %v4850, %v4850
  %v4868 = vunpack.c.l.s4 1966171168
  %v4869 = vunpack.c.0.s8 %v4868
  %v4870 = vlaneseq
  %v4871 = vshrl.u32 %v4870, 7
  %v4872 = vsub.s32 %v4869, %v4871
  %v4873 = vrot.slane %v4866, %v4872
  %4874 = vrot.lane.b32.xlu0 %v4873, 112
  %v4875 = vpop.permute.xlu0 %4874
  %v4876 = vrot.slane %v4875, 1
  %v4877 = vsel %vm4221, %v4875, %v4876
  %s4879 = scalar_lea.vmem [#allocation2], 46
  %4880 = vst.msk [vmem:[%s4879] ss:$8 sm:$0x3] %vm4200, %v4877
  %4881 = vst.msk [vmem:[%s4879] ss:$8 sm:$0x0] %vm4200, %v4877
  %v4882 = vcombine.high %v4857, %v4857
  %s4884 = scalar_lea.vmem [#allocation2], 54
  %4885 = vst.msk [vmem:[%s4884] ss:$8 sm:$0x3] %vm4213, %v4882
  %4886 = vst.msk [vmem:[%s4884] ss:$8 sm:$0x0] %vm4213, %v4882
  %v4887 = vcombine.high %v4873, %v4873
  %4888 = vrot.lane.b32.xlu0 %v4887, 16
  %v4889 = vpop.permute.xlu0 %4888
  %v4890 = vrot.slane %v4889, 7
  %v4891 = vsel %vm4122, %v4890, %v4889
  %s4893 = scalar_lea.vmem [#allocation2], 62
  %4894 = vst.msk [vmem:[%s4893] ss:$8 sm:$0x3] %vm4226, %v4891
  %4895 = vst.msk [vmem:[%s4893] ss:$8 sm:$0x0] %vm4226, %v4891
  %v4897 = vcombine.low %v4085, %v4086
  %v4899 = vunpack.c.l.s4 1966171168
  %v4900 = vunpack.c.0.s8 %v4899
  %v4901 = vlaneseq
  %v4902 = vshrl.u32 %v4901, 7
  %v4903 = vsub.s32 %v4900, %v4902
  %v4904 = vrot.slane %v4897, %v4903
  %v4906 = vunpack.c.l.s4 1966171168
  %v4907 = vunpack.c.0.s8 %v4906
  %v4908 = vlaneseq
  %v4909 = vshrl.u32 %v4908, 7
  %v4910 = vsub.s32 %v4907, %v4909
  %v4911 = vrot.slane %v4904, %v4910
  %4912 = vrot.lane.b32.xlu0 %v4911, 16
  %v4913 = vpop.permute.xlu0 %4912
  %v4914 = vrot.slane %v4913, 1
  %v4915 = vsel %vm4122, %v4913, %v4914
  %s4917 = scalar_lea.vmem [#allocation2], 7
  %4918 = vst.msk [vmem:[%s4917] ss:$8 sm:$0x3] %vm4108, %v4915
  %4919 = vst.msk [vmem:[%s4917] ss:$8 sm:$0x0] %vm4108, %v4915
  %v4920 = vcombine.high %v4904, %v4904
  %v4922 = vunpack.c.l.s4 1966171168
  %v4923 = vunpack.c.0.s8 %v4922
  %v4924 = vlaneseq
  %v4925 = vshrl.u32 %v4924, 7
  %v4926 = vsub.s32 %v4923, %v4925
  %v4927 = vrot.slane %v4920, %v4926
  %4928 = vrot.lane.b32.xlu0 %v4927, 32
  %v4929 = vpop.permute.xlu0 %4928
  %v4930 = vrot.slane %v4929, 1
  %v4931 = vsel %vm4135, %v4929, %v4930
  %s4933 = scalar_lea.vmem [#allocation2], 15
  %4934 = vst.msk [vmem:[%s4933] ss:$8 sm:$0x3] %vm4127, %v4931
  %4935 = vst.msk [vmem:[%s4933] ss:$8 sm:$0x0] %vm4127, %v4931
  %v4936 = vcombine.high %v4911, %v4911
  %4937 = vrot.lane.b32.xlu0 %v4936, 48
  %v4938 = vpop.permute.xlu0 %4937
  %v4939 = vrot.slane %v4938, 1
  %v4940 = vsel %vm4148, %v4938, %v4939
  %s4942 = scalar_lea.vmem [#allocation2], 23
  %4943 = vst.msk [vmem:[%s4942] ss:$8 sm:$0x3] %vm4140, %v4940
  %4944 = vst.msk [vmem:[%s4942] ss:$8 sm:$0x0] %vm4140, %v4940
  %v4945 = vcombine.high %v4927, %v4927
  %4946 = vrot.lane.b32.xlu0 %v4945, 64
  %v4947 = vpop.permute.xlu0 %4946
  %v4948 = vrot.slane %v4947, 1
  %v4949 = vsel %vm4175, %v4947, %v4948
  %s4951 = scalar_lea.vmem [#allocation2], 31
  %4952 = vst.msk [vmem:[%s4951] ss:$8 sm:$0x3] %vm4153, %v4949
  %4953 = vst.msk [vmem:[%s4951] ss:$8 sm:$0x0] %vm4153, %v4949
  %v4954 = vcombine.high %v4085, %v4086
  %v4956 = vunpack.c.l.s4 1966171168
  %v4957 = vunpack.c.0.s8 %v4956
  %v4958 = vlaneseq
  %v4959 = vshrl.u32 %v4958, 7
  %v4960 = vsub.s32 %v4957, %v4959
  %v4961 = vrot.slane %v4954, %v4960
  %v4963 = vunpack.c.l.s4 1966171168
  %v4964 = vunpack.c.0.s8 %v4963
  %v4965 = vlaneseq
  %v4966 = vshrl.u32 %v4965, 7
  %v4967 = vsub.s32 %v4964, %v4966
  %v4968 = vrot.slane %v4961, %v4967
  %4969 = vrot.lane.b32.xlu0 %v4968, 80
  %v4970 = vpop.permute.xlu0 %4969
  %v4971 = vrot.slane %v4970, 1
  %v4972 = vsel %vm4195, %v4970, %v4971
  %s4974 = scalar_lea.vmem [#allocation2], 39
  %4975 = vst.msk [vmem:[%s4974] ss:$8 sm:$0x3] %vm4180, %v4972
  %4976 = vst.msk [vmem:[%s4974] ss:$8 sm:$0x0] %vm4180, %v4972
  %v4977 = vcombine.high %v4961, %v4961
  %v4979 = vunpack.c.l.s4 1966171168
  %v4980 = vunpack.c.0.s8 %v4979
  %v4981 = vlaneseq
  %v4982 = vshrl.u32 %v4981, 7
  %v4983 = vsub.s32 %v4980, %v4982
  %v4984 = vrot.slane %v4977, %v4983
  %4985 = vrot.lane.b32.xlu0 %v4984, 96
  %v4986 = vpop.permute.xlu0 %4985
  %v4987 = vrot.slane %v4986, 1
  %v4988 = vsel %vm4208, %v4986, %v4987
  %s4990 = scalar_lea.vmem [#allocation2], 47
  %4991 = vst.msk [vmem:[%s4990] ss:$8 sm:$0x3] %vm4200, %v4988
  %4992 = vst.msk [vmem:[%s4990] ss:$8 sm:$0x0] %vm4200, %v4988
  %v4993 = vcombine.high %v4968, %v4968
  %4994 = vrot.lane.b32.xlu0 %v4993, 112
  %v4995 = vpop.permute.xlu0 %4994
  %v4996 = vrot.slane %v4995, 1
  %v4997 = vsel %vm4221, %v4995, %v4996
  %s4999 = scalar_lea.vmem [#allocation2], 55
  %5000 = vst.msk [vmem:[%s4999] ss:$8 sm:$0x3] %vm4213, %v4997
  %5001 = vst.msk [vmem:[%s4999] ss:$8 sm:$0x0] %vm4213, %v4997
  %v5002 = vcombine.high %v4984, %v4984
  %s5004 = scalar_lea.vmem [#allocation2], 63
  %5005 = vst.msk [vmem:[%s5004] ss:$8 sm:$0x3] %vm4226, %v5002
  %5006 = vst.msk [vmem:[%s5004] ss:$8 sm:$0x0] %vm4226, %v5002
  %v5007 = vld [vmem:[#allocation2] sm:$0xff]
  %v5008 = vld [vmem:[#allocation2 + $0x8] sm:$0xff]
  %v5009 = vld [vmem:[#allocation2 + $0x10] sm:$0xff]
  %v5010 = vld [vmem:[#allocation2 + $0x18] sm:$0xff]
  %v5011 = vld [vmem:[#allocation2 + $0x20] sm:$0xff]
  %v5012 = vld [vmem:[#allocation2 + $0x28] sm:$0xff]
  %v5013 = vld [vmem:[#allocation2 + $0x30] sm:$0xff]
  %v5014 = vld [vmem:[#allocation2 + $0x38] sm:$0xff]
  %v5015 = vld [vmem:[#allocation2 + $0x40] sm:$0xff]
  %v5016 = vld [vmem:[%s3] sm:$0xff]
  %v5017 = vld [vmem:[%s3 + $0x8] sm:$0xff]
  %v5018 = vld [vmem:[%s3 + $0x10] sm:$0xff]
  %v5019 = vld [vmem:[%s3 + $0x18] sm:$0xff]
  %v5020 = vld [vmem:[%s3 + $0x20] sm:$0xff]
  %v5021 = vld [vmem:[%s3 + $0x28] sm:$0xff]
  %v5022 = vld [vmem:[%s3 + $0x30] sm:$0xff]
  %v5023 = vld [vmem:[%s3 + $0x38] sm:$0xff]
  %v5024 = vld [vmem:[%s3 + $0x40] sm:$0xff]
  %v5025 = vld [vmem:[%s3 + $0x48] sm:$0xff]
  %v5026 = vld [vmem:[%s3 + $0x50] sm:$0xff]
  %v5027 = vld [vmem:[%s3 + $0x58] sm:$0xff]
  %v5028 = vld [vmem:[%s3 + $0x60] sm:$0xff]
  %v5029 = vld [vmem:[%s3 + $0x68] sm:$0xff]
  %v5030 = vld [vmem:[%s3 + $0x70] sm:$0xff]
  %v5031 = vld [vmem:[%s3 + $0x78] sm:$0xff]
  %v5032 = vld [vmem:[%s3 + $0x80] sm:$0xff]
  %v5033 = vld [vmem:[%s3 + $0x88] sm:$0xff]
  %v5034 = vld [vmem:[%s3 + $0x90] sm:$0xff]
  %v5035 = vld [vmem:[%s3 + $0x98] sm:$0xff]
  %v5036 = vld [vmem:[%s3 + $0xa0] sm:$0xff]
  %v5037 = vld [vmem:[%s3 + $0xa8] sm:$0xff]
  %v5038 = vld [vmem:[%s3 + $0xb0] sm:$0xff]
  %v5039 = vld [vmem:[%s3 + $0xb8] sm:$0xff]
  %v5040 = vld [vmem:[%s3 + $0xc0] sm:$0xff]
  %v5041 = vld [vmem:[%s3 + $0xc8] sm:$0xff]
  %v5042 = vld [vmem:[%s3 + $0xd0] sm:$0xff]
  %v5043 = vld [vmem:[%s3 + $0xd8] sm:$0xff]
  %v5044 = vld [vmem:[%s3 + $0xe0] sm:$0xff]
  %v5045 = vld [vmem:[%s3 + $0xe8] sm:$0xff]
  %v5046 = vld [vmem:[%s3 + $0xf0] sm:$0xff]
  %v5047 = vld [vmem:[%s3 + $0xf8] sm:$0xff]
  %v5048 = vld [vmem:[%s3 + $0x100] sm:$0xff]
  %v5049 = vld [vmem:[%s3 + $0x108] sm:$0xff]
  %v5050 = vld [vmem:[%s3 + $0x110] sm:$0xff]
  %v5051 = vld [vmem:[%s3 + $0x118] sm:$0xff]
  %v5052 = vld [vmem:[%s3 + $0x120] sm:$0xff]
  %v5053 = vld [vmem:[%s3 + $0x128] sm:$0xff]
  %v5054 = vld [vmem:[%s3 + $0x130] sm:$0xff]
  %v5055 = vld [vmem:[%s3 + $0x138] sm:$0xff]
  %v5056 = vld [vmem:[%s3 + $0x140] sm:$0xff]
  %v5057 = vld [vmem:[%s3 + $0x148] sm:$0xff]
  %v5058 = vld [vmem:[%s3 + $0x150] sm:$0xff]
  %v5059 = vld [vmem:[%s3 + $0x158] sm:$0xff]
  %v5060 = vld [vmem:[%s3 + $0x160] sm:$0xff]
  %v5061 = vld [vmem:[%s3 + $0x168] sm:$0xff]
  %v5062 = vld [vmem:[%s3 + $0x170] sm:$0xff]
  %v5063 = vld [vmem:[%s3 + $0x178] sm:$0xff]
  %v5064 = vld [vmem:[%s3 + $0x180] sm:$0xff]
  %v5065 = vld [vmem:[%s3 + $0x188] sm:$0xff]
  %v5066 = vld [vmem:[%s3 + $0x190] sm:$0xff]
  %v5067 = vld [vmem:[%s3 + $0x198] sm:$0xff]
  %v5068 = vld [vmem:[%s3 + $0x1a0] sm:$0xff]
  %v5069 = vld [vmem:[%s3 + $0x1a8] sm:$0xff]
  %v5070 = vld [vmem:[%s3 + $0x1b0] sm:$0xff]
  %v5071 = vld [vmem:[%s3 + $0x1b8] sm:$0xff]
  %v5072 = vld [vmem:[%s3 + $0x1c0] sm:$0xff]
  %v5073 = vld [vmem:[%s3 + $0x1c8] sm:$0xff]
  %v5074 = vld [vmem:[%s3 + $0x1d0] sm:$0xff]
  %v5075 = vld [vmem:[%s3 + $0x1d8] sm:$0xff]
  %v5076 = vld [vmem:[%s3 + $0x1e0] sm:$0xff]
  %v5077 = vld [vmem:[%s3 + $0x1e8] sm:$0xff]
  %v5078 = vld [vmem:[%s3 + $0x1f0] sm:$0xff]
  %v5079 = vld [vmem:[%s3 + $0x1f8] sm:$0xff]
  %v5080 = vld [vmem:[%s3 + $0x200] sm:$0xff]
  %v5081 = vld [vmem:[%s3 + $0x208] sm:$0xff]
  %v5082 = vld [vmem:[%s3 + $0x210] sm:$0xff]
  %v5083 = vld [vmem:[%s3 + $0x218] sm:$0xff]
  %v5084 = vld [vmem:[%s3 + $0x220] sm:$0xff]
  %v5085 = vld [vmem:[%s3 + $0x228] sm:$0xff]
  %v5086 = vld [vmem:[%s3 + $0x230] sm:$0xff]
  %v5087 = vld [vmem:[%s3 + $0x238] sm:$0xff]
  %v5088 = vld [vmem:[%s3 + $0x240] sm:$0xff]
  %v5089 = vld [vmem:[%s3 + $0x248] sm:$0xff]
  %v5090 = vld [vmem:[%s3 + $0x250] sm:$0xff]
  %v5091 = vld [vmem:[%s3 + $0x258] sm:$0xff]
  %v5092 = vld [vmem:[%s3 + $0x260] sm:$0xff]
  %v5093 = vld [vmem:[%s3 + $0x268] sm:$0xff]
  %v5094 = vld [vmem:[%s3 + $0x270] sm:$0xff]
  %v5095 = vld [vmem:[%s3 + $0x278] sm:$0xff]
  %v5096 = vld [vmem:[%s3 + $0x280] sm:$0xff]
  %v5097 = vld [vmem:[%s3 + $0x288] sm:$0xff]
  %v5098 = vld [vmem:[%s3 + $0x290] sm:$0xff]
  %v5099 = vld [vmem:[%s3 + $0x298] sm:$0xff]
  %v5100 = vld [vmem:[%s3 + $0x2a0] sm:$0xff]
  %v5101 = vld [vmem:[%s3 + $0x2a8] sm:$0xff]
  %v5102 = vld [vmem:[%s3 + $0x2b0] sm:$0xff]
  %v5103 = vld [vmem:[%s3 + $0x2b8] sm:$0xff]
  %v5104 = vld [vmem:[%s3 + $0x2c0] sm:$0xff]
  %v5105 = vld [vmem:[%s3 + $0x2c8] sm:$0xff]
  %v5106 = vld [vmem:[%s3 + $0x2d0] sm:$0xff]
  %v5107 = vld [vmem:[%s3 + $0x2d8] sm:$0xff]
  %v5108 = vld [vmem:[%s3 + $0x2e0] sm:$0xff]
  %v5109 = vld [vmem:[%s3 + $0x2e8] sm:$0xff]
  %v5110 = vld [vmem:[%s3 + $0x2f0] sm:$0xff]
  %v5111 = vld [vmem:[%s3 + $0x2f8] sm:$0xff]
  %v5112 = vld [vmem:[%s3 + $0x300] sm:$0xff]
  %v5113 = vld [vmem:[%s3 + $0x308] sm:$0xff]
  %v5114 = vld [vmem:[%s3 + $0x310] sm:$0xff]
  %v5115 = vld [vmem:[%s3 + $0x318] sm:$0xff]
  %v5116 = vld [vmem:[%s3 + $0x320] sm:$0xff]
  %v5117 = vld [vmem:[%s3 + $0x328] sm:$0xff]
  %v5118 = vld [vmem:[%s3 + $0x330] sm:$0xff]
  %v5119 = vld [vmem:[%s3 + $0x338] sm:$0xff]
  %v5120 = vld [vmem:[%s3 + $0x340] sm:$0xff]
  %v5121 = vld [vmem:[%s3 + $0x348] sm:$0xff]
  %v5122 = vld [vmem:[%s3 + $0x350] sm:$0xff]
  %v5123 = vld [vmem:[%s3 + $0x358] sm:$0xff]
  %v5124 = vld [vmem:[%s3 + $0x360] sm:$0xff]
  %v5125 = vld [vmem:[%s3 + $0x368] sm:$0xff]
  %v5126 = vld [vmem:[%s3 + $0x370] sm:$0xff]
  %v5127 = vld [vmem:[%s3 + $0x378] sm:$0xff]
  %v5128 = vld [vmem:[%s3 + $0x380] sm:$0xff]
  %v5129 = vld [vmem:[%s3 + $0x388] sm:$0xff]
  %v5130 = vld [vmem:[%s3 + $0x390] sm:$0xff]
  %v5131 = vld [vmem:[%s3 + $0x398] sm:$0xff]
  %v5132 = vld [vmem:[%s3 + $0x3a0] sm:$0xff]
  %v5133 = vld [vmem:[%s3 + $0x3a8] sm:$0xff]
  %v5134 = vld [vmem:[%s3 + $0x3b0] sm:$0xff]
  %v5135 = vld [vmem:[%s3 + $0x3b8] sm:$0xff]
  %v5136 = vld [vmem:[%s3 + $0x3c0] sm:$0xff]
  %v5137 = vld [vmem:[%s3 + $0x3c8] sm:$0xff]
  %v5138 = vld [vmem:[%s3 + $0x3d0] sm:$0xff]
  %v5139 = vld [vmem:[%s3 + $0x3d8] sm:$0xff]
  %v5140 = vld [vmem:[%s3 + $0x3e0] sm:$0xff]
  %v5141 = vld [vmem:[%s3 + $0x3e8] sm:$0xff]
  %v5142 = vld [vmem:[%s3 + $0x3f0] sm:$0xff]
  %v5143 = vld [vmem:[%s3 + $0x3f8] sm:$0xff]
  %v5144 = vld [vmem:[%s3 + $0x400] sm:$0xff]
  %v5145 = vld [vmem:[%s3 + $0x408] sm:$0xff]
  %v5146 = vld [vmem:[%s3 + $0x410] sm:$0xff]
  %v5147 = vld [vmem:[%s3 + $0x418] sm:$0xff]
  %v5148 = vld [vmem:[%s3 + $0x420] sm:$0xff]
  %v5149 = vld [vmem:[%s3 + $0x428] sm:$0xff]
  %v5150 = vld [vmem:[%s3 + $0x430] sm:$0xff]
  %v5151 = vld [vmem:[%s3 + $0x438] sm:$0xff]
  %v5152 = vld [vmem:[%s3 + $0x440] sm:$0xff]
  %v5153 = vld [vmem:[%s3 + $0x448] sm:$0xff]
  %v5154 = vld [vmem:[%s3 + $0x450] sm:$0xff]
  %v5155 = vld [vmem:[%s3 + $0x458] sm:$0xff]
  %v5156 = vld [vmem:[%s3 + $0x460] sm:$0xff]
  %v5157 = vld [vmem:[%s3 + $0x468] sm:$0xff]
  %v5158 = vld [vmem:[%s3 + $0x470] sm:$0xff]
  %v5159 = vld [vmem:[%s3 + $0x478] sm:$0xff]
  %v5160 = vld [vmem:[%s3 + $0x480] sm:$0xff]
  %v5161 = vld [vmem:[%s3 + $0x488] sm:$0xff]
  %v5162 = vld [vmem:[%s3 + $0x490] sm:$0xff]
  %v5163 = vld [vmem:[%s3 + $0x498] sm:$0xff]
  %v5164 = vld [vmem:[%s3 + $0x4a0] sm:$0xff]
  %v5165 = vld [vmem:[%s3 + $0x4a8] sm:$0xff]
  %v5166 = vld [vmem:[%s3 + $0x4b0] sm:$0xff]
  %v5167 = vld [vmem:[%s3 + $0x4b8] sm:$0xff]
  %v5168 = vld [vmem:[%s3 + $0x4c0] sm:$0xff]
  %v5169 = vld [vmem:[%s3 + $0x4c8] sm:$0xff]
  %v5170 = vld [vmem:[%s3 + $0x4d0] sm:$0xff]
  %v5171 = vld [vmem:[%s3 + $0x4d8] sm:$0xff]
  %v5172 = vld [vmem:[%s3 + $0x4e0] sm:$0xff]
  %v5173 = vld [vmem:[%s3 + $0x4e8] sm:$0xff]
  %v5174 = vld [vmem:[%s3 + $0x4f0] sm:$0xff]
  %v5175 = vld [vmem:[%s3 + $0x4f8] sm:$0xff]
  %v5176 = vld [vmem:[%s3 + $0x500] sm:$0xff]
  %v5177 = vld [vmem:[%s3 + $0x508] sm:$0xff]
  %v5178 = vld [vmem:[%s3 + $0x510] sm:$0xff]
  %v5179 = vld [vmem:[%s3 + $0x518] sm:$0xff]
  %v5180 = vld [vmem:[%s3 + $0x520] sm:$0xff]
  %v5181 = vld [vmem:[%s3 + $0x528] sm:$0xff]
  %v5182 = vld [vmem:[%s3 + $0x530] sm:$0xff]
  %v5183 = vld [vmem:[%s3 + $0x538] sm:$0xff]
  %v5184 = vld [vmem:[%s3 + $0x540] sm:$0xff]
  %v5185 = vld [vmem:[%s3 + $0x548] sm:$0xff]
  %v5186 = vld [vmem:[%s3 + $0x550] sm:$0xff]
  %v5187 = vld [vmem:[%s3 + $0x558] sm:$0xff]
  %v5188 = vld [vmem:[%s3 + $0x560] sm:$0xff]
  %v5189 = vld [vmem:[%s3 + $0x568] sm:$0xff]
  %v5190 = vld [vmem:[%s3 + $0x570] sm:$0xff]
  %v5191 = vld [vmem:[%s3 + $0x578] sm:$0xff]
  %v5192 = vld [vmem:[%s3 + $0x580] sm:$0xff]
  %v5193 = vld [vmem:[%s3 + $0x588] sm:$0xff]
  %v5194 = vld [vmem:[%s3 + $0x590] sm:$0xff]
  %v5195 = vld [vmem:[%s3 + $0x598] sm:$0xff]
  %v5196 = vld [vmem:[%s3 + $0x5a0] sm:$0xff]
  %v5197 = vld [vmem:[%s3 + $0x5a8] sm:$0xff]
  %v5198 = vld [vmem:[%s3 + $0x5b0] sm:$0xff]
  %v5199 = vld [vmem:[%s3 + $0x5b8] sm:$0xff]
  %v5200 = vld [vmem:[%s3 + $0x5c0] sm:$0xff]
  %v5201 = vld [vmem:[%s3 + $0x5c8] sm:$0xff]
  %v5202 = vld [vmem:[%s3 + $0x5d0] sm:$0xff]
  %v5203 = vld [vmem:[%s3 + $0x5d8] sm:$0xff]
  %v5204 = vld [vmem:[%s3 + $0x5e0] sm:$0xff]
  %v5205 = vld [vmem:[%s3 + $0x5e8] sm:$0xff]
  %v5206 = vld [vmem:[%s3 + $0x5f0] sm:$0xff]
  %v5207 = vld [vmem:[%s3 + $0x5f8] sm:$0xff]
  %v5208 = vld [vmem:[%s3 + $0x600] sm:$0xff]
  %v5209 = vld [vmem:[%s3 + $0x608] sm:$0xff]
  %v5210 = vld [vmem:[%s3 + $0x610] sm:$0xff]
  %v5211 = vld [vmem:[%s3 + $0x618] sm:$0xff]
  %v5212 = vld [vmem:[%s3 + $0x620] sm:$0xff]
  %v5213 = vld [vmem:[%s3 + $0x628] sm:$0xff]
  %v5214 = vld [vmem:[%s3 + $0x630] sm:$0xff]
  %v5215 = vld [vmem:[%s3 + $0x638] sm:$0xff]
  %v5216 = vld [vmem:[%s3 + $0x640] sm:$0xff]
  %v5217 = vld [vmem:[%s3 + $0x648] sm:$0xff]
  %v5218 = vld [vmem:[%s3 + $0x650] sm:$0xff]
  %v5219 = vld [vmem:[%s3 + $0x658] sm:$0xff]
  %v5220 = vld [vmem:[%s3 + $0x660] sm:$0xff]
  %v5221 = vld [vmem:[%s3 + $0x668] sm:$0xff]
  %v5222 = vld [vmem:[%s3 + $0x670] sm:$0xff]
  %v5223 = vld [vmem:[%s3 + $0x678] sm:$0xff]
  %v5224 = vld [vmem:[%s3 + $0x680] sm:$0xff]
  %v5225 = vld [vmem:[%s3 + $0x688] sm:$0xff]
  %v5226 = vld [vmem:[%s3 + $0x690] sm:$0xff]
  %v5227 = vld [vmem:[%s3 + $0x698] sm:$0xff]
  %v5228 = vld [vmem:[%s3 + $0x6a0] sm:$0xff]
  %v5229 = vld [vmem:[%s3 + $0x6a8] sm:$0xff]
  %v5230 = vld [vmem:[%s3 + $0x6b0] sm:$0xff]
  %v5231 = vld [vmem:[%s3 + $0x6b8] sm:$0xff]
  %v5232 = vld [vmem:[%s3 + $0x6c0] sm:$0xff]
  %v5233 = vld [vmem:[%s3 + $0x6c8] sm:$0xff]
  %v5234 = vld [vmem:[%s3 + $0x6d0] sm:$0xff]
  %v5235 = vld [vmem:[%s3 + $0x6d8] sm:$0xff]
  %v5236 = vld [vmem:[%s3 + $0x6e0] sm:$0xff]
  %v5237 = vld [vmem:[%s3 + $0x6e8] sm:$0xff]
  %v5238 = vld [vmem:[%s3 + $0x6f0] sm:$0xff]
  %v5239 = vld [vmem:[%s3 + $0x6f8] sm:$0xff]
  %v5240 = vld [vmem:[%s3 + $0x700] sm:$0xff]
  %v5241 = vld [vmem:[%s3 + $0x708] sm:$0xff]
  %v5242 = vld [vmem:[%s3 + $0x710] sm:$0xff]
  %v5243 = vld [vmem:[%s3 + $0x718] sm:$0xff]
  %v5244 = vld [vmem:[%s3 + $0x720] sm:$0xff]
  %v5245 = vld [vmem:[%s3 + $0x728] sm:$0xff]
  %v5246 = vld [vmem:[%s3 + $0x730] sm:$0xff]
  %v5247 = vld [vmem:[%s3 + $0x738] sm:$0xff]
  %v5248 = vld [vmem:[%s3 + $0x740] sm:$0xff]
  %v5249 = vld [vmem:[%s3 + $0x748] sm:$0xff]
  %v5250 = vld [vmem:[%s3 + $0x750] sm:$0xff]
  %v5251 = vld [vmem:[%s3 + $0x758] sm:$0xff]
  %v5252 = vld [vmem:[%s3 + $0x760] sm:$0xff]
  %v5253 = vld [vmem:[%s3 + $0x768] sm:$0xff]
  %v5254 = vld [vmem:[%s3 + $0x770] sm:$0xff]
  %v5255 = vld [vmem:[%s3 + $0x778] sm:$0xff]
  %v5256 = vld [vmem:[%s3 + $0x780] sm:$0xff]
  %v5257 = vld [vmem:[%s3 + $0x788] sm:$0xff]
  %v5258 = vld [vmem:[%s3 + $0x790] sm:$0xff]
  %v5259 = vld [vmem:[%s3 + $0x798] sm:$0xff]
  %v5260 = vld [vmem:[%s3 + $0x7a0] sm:$0xff]
  %v5261 = vld [vmem:[%s3 + $0x7a8] sm:$0xff]
  %v5262 = vld [vmem:[%s3 + $0x7b0] sm:$0xff]
  %v5263 = vld [vmem:[%s3 + $0x7b8] sm:$0xff]
  %v5264 = vld [vmem:[%s3 + $0x7c0] sm:$0xff]
  %v5265 = vld [vmem:[%s3 + $0x7c8] sm:$0xff]
  %v5266 = vld [vmem:[%s3 + $0x7d0] sm:$0xff]
  %v5267 = vld [vmem:[%s3 + $0x7d8] sm:$0xff]
  %v5268 = vld [vmem:[%s3 + $0x7e0] sm:$0xff]
  %v5269 = vld [vmem:[%s3 + $0x7e8] sm:$0xff]
  %v5270 = vld [vmem:[%s3 + $0x7f0] sm:$0xff]
  %v5271 = vld [vmem:[%s3 + $0x7f8] sm:$0xff]
  %v5272 = vld [vmem:[%s3 + $0x800] sm:$0xff]
  %v5273 = vld [vmem:[%s3 + $0x808] sm:$0xff]
  %v5274 = vld [vmem:[%s3 + $0x810] sm:$0xff]
  %v5275 = vld [vmem:[%s3 + $0x818] sm:$0xff]
  %v5276 = vld [vmem:[%s3 + $0x820] sm:$0xff]
  %v5277 = vld [vmem:[%s3 + $0x828] sm:$0xff]
  %v5278 = vld [vmem:[%s3 + $0x830] sm:$0xff]
  %v5279 = vld [vmem:[%s3 + $0x838] sm:$0xff]
  %v5280 = vld [vmem:[%s3 + $0x840] sm:$0xff]
  %v5281 = vld [vmem:[%s3 + $0x848] sm:$0xff]
  %v5282 = vld [vmem:[%s3 + $0x850] sm:$0xff]
  %v5283 = vld [vmem:[%s3 + $0x858] sm:$0xff]
  %v5284 = vld [vmem:[%s3 + $0x860] sm:$0xff]
  %v5285 = vld [vmem:[%s3 + $0x868] sm:$0xff]
  %v5286 = vld [vmem:[%s3 + $0x870] sm:$0xff]
  %v5287 = vld [vmem:[%s3 + $0x878] sm:$0xff]
  %v5288 = vld [vmem:[%s3 + $0x880] sm:$0xff]
  %v5289 = vld [vmem:[%s3 + $0x888] sm:$0xff]
  %v5290 = vld [vmem:[%s3 + $0x890] sm:$0xff]
  %v5291 = vld [vmem:[%s3 + $0x898] sm:$0xff]
  %v5292 = vld [vmem:[%s3 + $0x8a0] sm:$0xff]
  %v5293 = vld [vmem:[%s3 + $0x8a8] sm:$0xff]
  %v5294 = vld [vmem:[%s3 + $0x8b0] sm:$0xff]
  %v5295 = vld [vmem:[%s3 + $0x8b8] sm:$0xff]
  %v5296 = vld [vmem:[%s3 + $0x8c0] sm:$0xff]
  %v5297 = vld [vmem:[%s3 + $0x8c8] sm:$0xff]
  %v5298 = vld [vmem:[%s3 + $0x8d0] sm:$0xff]
  %v5299 = vld [vmem:[%s3 + $0x8d8] sm:$0xff]
  %v5300 = vld [vmem:[%s3 + $0x8e0] sm:$0xff]
  %v5301 = vld [vmem:[%s3 + $0x8e8] sm:$0xff]
  %v5302 = vld [vmem:[%s3 + $0x8f0] sm:$0xff]
  %v5303 = vld [vmem:[%s3 + $0x8f8] sm:$0xff]
  %v5304 = vld [vmem:[%s3 + $0x900] sm:$0xff]
  %v5305 = vld [vmem:[%s3 + $0x908] sm:$0xff]
  %v5306 = vld [vmem:[%s3 + $0x910] sm:$0xff]
  %v5307 = vld [vmem:[%s3 + $0x918] sm:$0xff]
  %v5308 = vld [vmem:[%s3 + $0x920] sm:$0xff]
  %v5309 = vld [vmem:[%s3 + $0x928] sm:$0xff]
  %v5310 = vld [vmem:[%s3 + $0x930] sm:$0xff]
  %v5311 = vld [vmem:[%s3 + $0x938] sm:$0xff]
  %v5312 = vld [vmem:[%s3 + $0x940] sm:$0xff]
  %v5313 = vld [vmem:[%s3 + $0x948] sm:$0xff]
  %v5314 = vld [vmem:[%s3 + $0x950] sm:$0xff]
  %v5315 = vld [vmem:[%s3 + $0x958] sm:$0xff]
  %v5316 = vld [vmem:[%s3 + $0x960] sm:$0xff]
  %v5317 = vld [vmem:[%s3 + $0x968] sm:$0xff]
  %v5318 = vld [vmem:[%s3 + $0x970] sm:$0xff]
  %v5319 = vld [vmem:[%s3 + $0x978] sm:$0xff]
  %v5320 = vld [vmem:[%s3 + $0x980] sm:$0xff]
  %v5321 = vld [vmem:[%s3 + $0x988] sm:$0xff]
  %v5322 = vld [vmem:[%s3 + $0x990] sm:$0xff]
  %v5323 = vld [vmem:[%s3 + $0x998] sm:$0xff]
  %v5324 = vld [vmem:[%s3 + $0x9a0] sm:$0xff]
  %v5325 = vld [vmem:[%s3 + $0x9a8] sm:$0xff]
  %v5326 = vld [vmem:[%s3 + $0x9b0] sm:$0xff]
  %v5327 = vld [vmem:[%s3 + $0x9b8] sm:$0xff]
  %v5328 = vld [vmem:[%s3 + $0x9c0] sm:$0xff]
  %v5329 = vld [vmem:[%s3 + $0x9c8] sm:$0xff]
  %v5330 = vld [vmem:[%s3 + $0x9d0] sm:$0xff]
  %v5331 = vld [vmem:[%s3 + $0x9d8] sm:$0xff]
  %v5332 = vld [vmem:[%s3 + $0x9e0] sm:$0xff]
  %v5333 = vld [vmem:[%s3 + $0x9e8] sm:$0xff]
  %v5334 = vld [vmem:[%s3 + $0x9f0] sm:$0xff]
  %v5335 = vld [vmem:[%s3 + $0x9f8] sm:$0xff]
  %v5336 = vld [vmem:[%s3 + $0xa00] sm:$0xff]
  %v5337 = vld [vmem:[%s3 + $0xa08] sm:$0xff]
  %v5338 = vld [vmem:[%s3 + $0xa10] sm:$0xff]
  %v5339 = vld [vmem:[%s3 + $0xa18] sm:$0xff]
  %v5340 = vld [vmem:[%s3 + $0xa20] sm:$0xff]
  %v5341 = vld [vmem:[%s3 + $0xa28] sm:$0xff]
  %v5342 = vld [vmem:[%s3 + $0xa30] sm:$0xff]
  %v5343 = vld [vmem:[%s3 + $0xa38] sm:$0xff]
  %v5344 = vld [vmem:[%s3 + $0xa40] sm:$0xff]
  %v5345 = vld [vmem:[%s3 + $0xa48] sm:$0xff]
  %v5346 = vld [vmem:[%s3 + $0xa50] sm:$0xff]
  %v5347 = vld [vmem:[%s3 + $0xa58] sm:$0xff]
  %v5348 = vld [vmem:[%s3 + $0xa60] sm:$0xff]
  %v5349 = vld [vmem:[%s3 + $0xa68] sm:$0xff]
  %v5350 = vld [vmem:[%s3 + $0xa70] sm:$0xff]
  %v5351 = vld [vmem:[%s3 + $0xa78] sm:$0xff]
  %v5352 = vld [vmem:[%s3 + $0xa80] sm:$0xff]
  %v5353 = vld [vmem:[%s3 + $0xa88] sm:$0xff]
  %v5354 = vld [vmem:[%s3 + $0xa90] sm:$0xff]
  %v5355 = vld [vmem:[%s3 + $0xa98] sm:$0xff]
  %v5356 = vld [vmem:[%s3 + $0xaa0] sm:$0xff]
  %v5357 = vld [vmem:[%s3 + $0xaa8] sm:$0xff]
  %v5358 = vld [vmem:[%s3 + $0xab0] sm:$0xff]
  %v5359 = vld [vmem:[%s3 + $0xab8] sm:$0xff]
  %v5360 = vld [vmem:[%s3 + $0xac0] sm:$0xff]
  %v5361 = vld [vmem:[%s3 + $0xac8] sm:$0xff]
  %v5362 = vld [vmem:[%s3 + $0xad0] sm:$0xff]
  %v5363 = vld [vmem:[%s3 + $0xad8] sm:$0xff]
  %v5364 = vld [vmem:[%s3 + $0xae0] sm:$0xff]
  %v5365 = vld [vmem:[%s3 + $0xae8] sm:$0xff]
  %v5366 = vld [vmem:[%s3 + $0xaf0] sm:$0xff]
  %v5367 = vld [vmem:[%s3 + $0xaf8] sm:$0xff]
  %v5368 = vld [vmem:[%s3 + $0xb00] sm:$0xff]
  %v5369 = vld [vmem:[%s3 + $0xb08] sm:$0xff]
  %v5370 = vld [vmem:[%s3 + $0xb10] sm:$0xff]
  %v5371 = vld [vmem:[%s3 + $0xb18] sm:$0xff]
  %v5372 = vld [vmem:[%s3 + $0xb20] sm:$0xff]
  %v5373 = vld [vmem:[%s3 + $0xb28] sm:$0xff]
  %v5374 = vld [vmem:[%s3 + $0xb30] sm:$0xff]
  %v5375 = vld [vmem:[%s3 + $0xb38] sm:$0xff]
  %v5376 = vld [vmem:[%s3 + $0xb40] sm:$0xff]
  %v5377 = vld [vmem:[%s3 + $0xb48] sm:$0xff]
  %v5378 = vld [vmem:[%s3 + $0xb50] sm:$0xff]
  %v5379 = vld [vmem:[%s3 + $0xb58] sm:$0xff]
  %v5380 = vld [vmem:[%s3 + $0xb60] sm:$0xff]
  %v5381 = vld [vmem:[%s3 + $0xb68] sm:$0xff]
  %v5382 = vld [vmem:[%s3 + $0xb70] sm:$0xff]
  %v5383 = vld [vmem:[%s3 + $0xb78] sm:$0xff]
  %v5384 = vld [vmem:[%s3 + $0xb80] sm:$0xff]
  %v5385 = vld [vmem:[%s3 + $0xb88] sm:$0xff]
  %v5386 = vld [vmem:[%s3 + $0xb90] sm:$0xff]
  %v5387 = vld [vmem:[%s3 + $0xb98] sm:$0xff]
  %v5388 = vld [vmem:[%s3 + $0xba0] sm:$0xff]
  %v5389 = vld [vmem:[%s3 + $0xba8] sm:$0xff]
  %v5390 = vld [vmem:[%s3 + $0xbb0] sm:$0xff]
  %v5391 = vld [vmem:[%s3 + $0xbb8] sm:$0xff]
  %v5392 = vld [vmem:[%s3 + $0xbc0] sm:$0xff]
  %v5393 = vld [vmem:[%s3 + $0xbc8] sm:$0xff]
  %v5394 = vld [vmem:[%s3 + $0xbd0] sm:$0xff]
  %v5395 = vld [vmem:[%s3 + $0xbd8] sm:$0xff]
  %v5396 = vld [vmem:[%s3 + $0xbe0] sm:$0xff]
  %v5397 = vld [vmem:[%s3 + $0xbe8] sm:$0xff]
  %v5398 = vld [vmem:[%s3 + $0xbf0] sm:$0xff]
  %v5399 = vld [vmem:[%s3 + $0xbf8] sm:$0xff]
  %v5400 = vld [vmem:[%s3 + $0xc00] sm:$0xff]
  %v5401 = vld [vmem:[%s3 + $0xc08] sm:$0xff]
  %v5402 = vld [vmem:[%s3 + $0xc10] sm:$0xff]
  %v5403 = vld [vmem:[%s3 + $0xc18] sm:$0xff]
  %v5404 = vld [vmem:[%s3 + $0xc20] sm:$0xff]
  %v5405 = vld [vmem:[%s3 + $0xc28] sm:$0xff]
  %v5406 = vld [vmem:[%s3 + $0xc30] sm:$0xff]
  %v5407 = vld [vmem:[%s3 + $0xc38] sm:$0xff]
  %v5408 = vld [vmem:[%s3 + $0xc40] sm:$0xff]
  %v5409 = vld [vmem:[%s3 + $0xc48] sm:$0xff]
  %v5410 = vld [vmem:[%s3 + $0xc50] sm:$0xff]
  %v5411 = vld [vmem:[%s3 + $0xc58] sm:$0xff]
  %v5412 = vld [vmem:[%s3 + $0xc60] sm:$0xff]
  %v5413 = vld [vmem:[%s3 + $0xc68] sm:$0xff]
  %v5414 = vld [vmem:[%s3 + $0xc70] sm:$0xff]
  %v5415 = vld [vmem:[%s3 + $0xc78] sm:$0xff]
  %v5416 = vld [vmem:[%s3 + $0xc80] sm:$0xff]
  %v5417 = vld [vmem:[%s3 + $0xc88] sm:$0xff]
  %v5418 = vld [vmem:[%s3 + $0xc90] sm:$0xff]
  %v5419 = vld [vmem:[%s3 + $0xc98] sm:$0xff]
  %v5420 = vld [vmem:[%s3 + $0xca0] sm:$0xff]
  %v5421 = vld [vmem:[%s3 + $0xca8] sm:$0xff]
  %v5422 = vld [vmem:[%s3 + $0xcb0] sm:$0xff]
  %v5423 = vld [vmem:[%s3 + $0xcb8] sm:$0xff]
  %v5424 = vld [vmem:[%s3 + $0xcc0] sm:$0xff]
  %v5425 = vld [vmem:[%s3 + $0xcc8] sm:$0xff]
  %v5426 = vld [vmem:[%s3 + $0xcd0] sm:$0xff]
  %v5427 = vld [vmem:[%s3 + $0xcd8] sm:$0xff]
  %v5428 = vld [vmem:[%s3 + $0xce0] sm:$0xff]
  %v5429 = vld [vmem:[%s3 + $0xce8] sm:$0xff]
  %v5430 = vld [vmem:[%s3 + $0xcf0] sm:$0xff]
  %v5431 = vld [vmem:[%s3 + $0xcf8] sm:$0xff]
  %v5432 = vld [vmem:[%s3 + $0xd00] sm:$0xff]
  %v5433 = vld [vmem:[%s3 + $0xd08] sm:$0xff]
  %v5434 = vld [vmem:[%s3 + $0xd10] sm:$0xff]
  %v5435 = vld [vmem:[%s3 + $0xd18] sm:$0xff]
  %v5436 = vld [vmem:[%s3 + $0xd20] sm:$0xff]
  %v5437 = vld [vmem:[%s3 + $0xd28] sm:$0xff]
  %v5438 = vld [vmem:[%s3 + $0xd30] sm:$0xff]
  %v5439 = vld [vmem:[%s3 + $0xd38] sm:$0xff]
  %v5440 = vld [vmem:[%s3 + $0xd40] sm:$0xff]
  %v5441 = vld [vmem:[%s3 + $0xd48] sm:$0xff]
  %v5442 = vld [vmem:[%s3 + $0xd50] sm:$0xff]
  %v5443 = vld [vmem:[%s3 + $0xd58] sm:$0xff]
  %v5444 = vld [vmem:[%s3 + $0xd60] sm:$0xff]
  %v5445 = vld [vmem:[%s3 + $0xd68] sm:$0xff]
  %v5446 = vld [vmem:[%s3 + $0xd70] sm:$0xff]
  %v5447 = vld [vmem:[%s3 + $0xd78] sm:$0xff]
  %v5448 = vld [vmem:[%s3 + $0xd80] sm:$0xff]
  %v5449 = vld [vmem:[%s3 + $0xd88] sm:$0xff]
  %v5450 = vld [vmem:[%s3 + $0xd90] sm:$0xff]
  %v5451 = vld [vmem:[%s3 + $0xd98] sm:$0xff]
  %v5452 = vld [vmem:[%s3 + $0xda0] sm:$0xff]
  %v5453 = vld [vmem:[%s3 + $0xda8] sm:$0xff]
  %v5454 = vld [vmem:[%s3 + $0xdb0] sm:$0xff]
  %v5455 = vld [vmem:[%s3 + $0xdb8] sm:$0xff]
  %v5456 = vld [vmem:[%s3 + $0xdc0] sm:$0xff]
  %v5457 = vld [vmem:[%s3 + $0xdc8] sm:$0xff]
  %v5458 = vld [vmem:[%s3 + $0xdd0] sm:$0xff]
  %v5459 = vld [vmem:[%s3 + $0xdd8] sm:$0xff]
  %v5460 = vld [vmem:[%s3 + $0xde0] sm:$0xff]
  %v5461 = vld [vmem:[%s3 + $0xde8] sm:$0xff]
  %v5462 = vld [vmem:[%s3 + $0xdf0] sm:$0xff]
  %v5463 = vld [vmem:[%s3 + $0xdf8] sm:$0xff]
  %v5464 = vld [vmem:[%s3 + $0xe00] sm:$0xff]
  %v5465 = vld [vmem:[%s3 + $0xe08] sm:$0xff]
  %v5466 = vld [vmem:[%s3 + $0xe10] sm:$0xff]
  %v5467 = vld [vmem:[%s3 + $0xe18] sm:$0xff]
  %v5468 = vld [vmem:[%s3 + $0xe20] sm:$0xff]
  %v5469 = vld [vmem:[%s3 + $0xe28] sm:$0xff]
  %v5470 = vld [vmem:[%s3 + $0xe30] sm:$0xff]
  %v5471 = vld [vmem:[%s3 + $0xe38] sm:$0xff]
  %v5472 = vld [vmem:[%s3 + $0xe40] sm:$0xff]
  %v5473 = vld [vmem:[%s3 + $0xe48] sm:$0xff]
  %v5474 = vld [vmem:[%s3 + $0xe50] sm:$0xff]
  %v5475 = vld [vmem:[%s3 + $0xe58] sm:$0xff]
  %v5476 = vld [vmem:[%s3 + $0xe60] sm:$0xff]
  %v5477 = vld [vmem:[%s3 + $0xe68] sm:$0xff]
  %v5478 = vld [vmem:[%s3 + $0xe70] sm:$0xff]
  %v5479 = vld [vmem:[%s3 + $0xe78] sm:$0xff]
  %v5480 = vld [vmem:[%s3 + $0xe80] sm:$0xff]
  %v5481 = vld [vmem:[%s3 + $0xe88] sm:$0xff]
  %v5482 = vld [vmem:[%s3 + $0xe90] sm:$0xff]
  %v5483 = vld [vmem:[%s3 + $0xe98] sm:$0xff]
  %v5484 = vld [vmem:[%s3 + $0xea0] sm:$0xff]
  %v5485 = vld [vmem:[%s3 + $0xea8] sm:$0xff]
  %v5486 = vld [vmem:[%s3 + $0xeb0] sm:$0xff]
  %v5487 = vld [vmem:[%s3 + $0xeb8] sm:$0xff]
  %v5488 = vld [vmem:[%s3 + $0xec0] sm:$0xff]
  %v5489 = vld [vmem:[%s3 + $0xec8] sm:$0xff]
  %v5490 = vld [vmem:[%s3 + $0xed0] sm:$0xff]
  %v5491 = vld [vmem:[%s3 + $0xed8] sm:$0xff]
  %v5492 = vld [vmem:[%s3 + $0xee0] sm:$0xff]
  %v5493 = vld [vmem:[%s3 + $0xee8] sm:$0xff]
  %v5494 = vld [vmem:[%s3 + $0xef0] sm:$0xff]
  %v5495 = vld [vmem:[%s3 + $0xef8] sm:$0xff]
  %v5496 = vld [vmem:[%s3 + $0xf00] sm:$0xff]
  %v5497 = vld [vmem:[%s3 + $0xf08] sm:$0xff]
  %v5498 = vld [vmem:[%s3 + $0xf10] sm:$0xff]
  %v5499 = vld [vmem:[%s3 + $0xf18] sm:$0xff]
  %v5500 = vld [vmem:[%s3 + $0xf20] sm:$0xff]
  %v5501 = vld [vmem:[%s3 + $0xf28] sm:$0xff]
  %v5502 = vld [vmem:[%s3 + $0xf30] sm:$0xff]
  %v5503 = vld [vmem:[%s3 + $0xf38] sm:$0xff]
  %v5504 = vld [vmem:[%s3 + $0xf40] sm:$0xff]
  %v5505 = vld [vmem:[%s3 + $0xf48] sm:$0xff]
  %v5506 = vld [vmem:[%s3 + $0xf50] sm:$0xff]
  %v5507 = vld [vmem:[%s3 + $0xf58] sm:$0xff]
  %v5508 = vld [vmem:[%s3 + $0xf60] sm:$0xff]
  %v5509 = vld [vmem:[%s3 + $0xf68] sm:$0xff]
  %v5510 = vld [vmem:[%s3 + $0xf70] sm:$0xff]
  %v5511 = vld [vmem:[%s3 + $0xf78] sm:$0xff]
  %v5512 = vld [vmem:[%s3 + $0xf80] sm:$0xff]
  %v5513 = vld [vmem:[%s3 + $0xf88] sm:$0xff]
  %v5514 = vld [vmem:[%s3 + $0xf90] sm:$0xff]
  %v5515 = vld [vmem:[%s3 + $0xf98] sm:$0xff]
  %v5516 = vld [vmem:[%s3 + $0xfa0] sm:$0xff]
  %v5517 = vld [vmem:[%s3 + $0xfa8] sm:$0xff]
  %v5518 = vld [vmem:[%s3 + $0xfb0] sm:$0xff]
  %v5519 = vld [vmem:[%s3 + $0xfb8] sm:$0xff]
  %v5520 = vld [vmem:[%s3 + $0xfc0] sm:$0xff]
  %v5521 = vld [vmem:[%s3 + $0xfc8] sm:$0xff]
  %v5522 = vld [vmem:[%s3 + $0xfd0] sm:$0xff]
  %v5523 = vld [vmem:[%s3 + $0xfd8] sm:$0xff]
  %v5524 = vld [vmem:[%s3 + $0xfe0] sm:$0xff]
  %v5525 = vld [vmem:[%s3 + $0xfe8] sm:$0xff]
  %v5526 = vld [vmem:[%s3 + $0xff0] sm:$0xff]
  %v5527 = vld [vmem:[%s3 + $0xff8] sm:$0xff]
  %v5528 = vld [vmem:[%s3 + $0x1000] sm:$0xff]
  %v5529 = vld [vmem:[%s3 + $0x1008] sm:$0xff]
  %v5530 = vld [vmem:[%s3 + $0x1010] sm:$0xff]
  %v5531 = vld [vmem:[%s3 + $0x1018] sm:$0xff]
  %v5532 = vld [vmem:[%s3 + $0x1020] sm:$0xff]
  %v5533 = vld [vmem:[%s3 + $0x1028] sm:$0xff]
  %v5534 = vld [vmem:[%s3 + $0x1030] sm:$0xff]
  %v5535 = vld [vmem:[%s3 + $0x1038] sm:$0xff]
  %v5536 = vld [vmem:[%s3 + $0x1040] sm:$0xff]
  %v5537 = vld [vmem:[%s3 + $0x1048] sm:$0xff]
  %v5538 = vld [vmem:[%s3 + $0x1050] sm:$0xff]
  %v5539 = vld [vmem:[%s3 + $0x1058] sm:$0xff]
  %v5540 = vld [vmem:[%s3 + $0x1060] sm:$0xff]
  %v5541 = vld [vmem:[%s3 + $0x1068] sm:$0xff]
  %v5542 = vld [vmem:[%s3 + $0x1070] sm:$0xff]
  %v5543 = vld [vmem:[%s3 + $0x1078] sm:$0xff]
  %v5544 = vld [vmem:[%s3 + $0x1080] sm:$0xff]
  %v5545 = vld [vmem:[%s3 + $0x1088] sm:$0xff]
  %v5546 = vld [vmem:[%s3 + $0x1090] sm:$0xff]
  %v5547 = vld [vmem:[%s3 + $0x1098] sm:$0xff]
  %v5548 = vld [vmem:[%s3 + $0x10a0] sm:$0xff]
  %v5549 = vld [vmem:[%s3 + $0x10a8] sm:$0xff]
  %v5550 = vld [vmem:[%s3 + $0x10b0] sm:$0xff]
  %v5551 = vld [vmem:[%s3 + $0x10b8] sm:$0xff]
  %v5552 = vld [vmem:[%s3 + $0x10c0] sm:$0xff]
  %v5553 = vld [vmem:[%s3 + $0x10c8] sm:$0xff]
  %v5554 = vld [vmem:[%s3 + $0x10d0] sm:$0xff]
  %v5555 = vld [vmem:[%s3 + $0x10d8] sm:$0xff]
  %v5556 = vld [vmem:[%s3 + $0x10e0] sm:$0xff]
  %v5557 = vld [vmem:[%s3 + $0x10e8] sm:$0xff]
  %v5558 = vld [vmem:[%s3 + $0x10f0] sm:$0xff]
  %v5559 = vld [vmem:[%s3 + $0x10f8] sm:$0xff]
  %v5560 = vld [vmem:[%s3 + $0x1100] sm:$0xff]
  %v5561 = vld [vmem:[%s3 + $0x1108] sm:$0xff]
  %v5562 = vld [vmem:[%s3 + $0x1110] sm:$0xff]
  %v5563 = vld [vmem:[%s3 + $0x1118] sm:$0xff]
  %v5564 = vld [vmem:[%s3 + $0x1120] sm:$0xff]
  %v5565 = vld [vmem:[%s3 + $0x1128] sm:$0xff]
  %v5566 = vld [vmem:[%s3 + $0x1130] sm:$0xff]
  %v5567 = vld [vmem:[%s3 + $0x1138] sm:$0xff]
  %v5568 = vld [vmem:[%s3 + $0x1140] sm:$0xff]
  %v5569 = vld [vmem:[%s3 + $0x1148] sm:$0xff]
  %v5570 = vld [vmem:[%s3 + $0x1150] sm:$0xff]
  %v5571 = vld [vmem:[%s3 + $0x1158] sm:$0xff]
  %v5572 = vld [vmem:[%s3 + $0x1160] sm:$0xff]
  %v5573 = vld [vmem:[%s3 + $0x1168] sm:$0xff]
  %v5574 = vld [vmem:[%s3 + $0x1170] sm:$0xff]
  %v5575 = vld [vmem:[%s3 + $0x1178] sm:$0xff]
  %v5576 = vld [vmem:[%s3 + $0x1180] sm:$0xff]
  %v5577 = vld [vmem:[%s3 + $0x1188] sm:$0xff]
  %v5578 = vld [vmem:[%s3 + $0x1190] sm:$0xff]
  %v5579 = vld [vmem:[%s3 + $0x1198] sm:$0xff]
  %v5580 = vld [vmem:[%s3 + $0x11a0] sm:$0xff]
  %v5581 = vld [vmem:[%s3 + $0x11a8] sm:$0xff]
  %v5582 = vld [vmem:[%s3 + $0x11b0] sm:$0xff]
  %v5583 = vld [vmem:[%s3 + $0x11b8] sm:$0xff]
  %v5584 = vld [vmem:[%s3 + $0x11c0] sm:$0xff]
  %v5585 = vld [vmem:[%s3 + $0x11c8] sm:$0xff]
  %v5586 = vld [vmem:[%s3 + $0x11d0] sm:$0xff]
  %v5587 = vld [vmem:[%s3 + $0x11d8] sm:$0xff]
  %v5588 = vld [vmem:[%s3 + $0x11e0] sm:$0xff]
  %v5589 = vld [vmem:[%s3 + $0x11e8] sm:$0xff]
  %v5590 = vld [vmem:[%s3 + $0x11f0] sm:$0xff]
  %v5591 = vld [vmem:[%s3 + $0x11f8] sm:$0xff]
  %v5592 = vld [vmem:[%s3 + $0x1200] sm:$0xff]
  %v5593 = vld [vmem:[%s3 + $0x1208] sm:$0xff]
  %v5594 = vld [vmem:[%s3 + $0x1210] sm:$0xff]
  %v5595 = vld [vmem:[%s3 + $0x1218] sm:$0xff]
  %v5596 = vld [vmem:[%s3 + $0x1220] sm:$0xff]
  %v5597 = vld [vmem:[%s3 + $0x1228] sm:$0xff]
  %v5598 = vld [vmem:[%s3 + $0x1230] sm:$0xff]
  %v5599 = vld [vmem:[%s3 + $0x1238] sm:$0xff]
  %v5600 = vld [vmem:[%s3 + $0x1240] sm:$0xff]
  %v5601 = vld [vmem:[%s3 + $0x1248] sm:$0xff]
  %v5602 = vld [vmem:[%s3 + $0x1250] sm:$0xff]
  %v5603 = vld [vmem:[%s3 + $0x1258] sm:$0xff]
  %v5604 = vld [vmem:[%s3 + $0x1260] sm:$0xff]
  %v5605 = vld [vmem:[%s3 + $0x1268] sm:$0xff]
  %v5606 = vld [vmem:[%s3 + $0x1270] sm:$0xff]
  %v5607 = vld [vmem:[%s3 + $0x1278] sm:$0xff]
  %v5608 = vld [vmem:[%s3 + $0x1280] sm:$0xff]
  %v5609 = vld [vmem:[%s3 + $0x1288] sm:$0xff]
  %v5610 = vld [vmem:[%s3 + $0x1290] sm:$0xff]
  %v5611 = vld [vmem:[%s3 + $0x1298] sm:$0xff]
  %v5612 = vld [vmem:[%s3 + $0x12a0] sm:$0xff]
  %v5613 = vld [vmem:[%s3 + $0x12a8] sm:$0xff]
  %v5614 = vld [vmem:[%s3 + $0x12b0] sm:$0xff]
  %v5615 = vld [vmem:[%s3 + $0x12b8] sm:$0xff]
  %v5616 = vld [vmem:[%s3 + $0x12c0] sm:$0xff]
  %v5617 = vld [vmem:[%s3 + $0x12c8] sm:$0xff]
  %v5618 = vld [vmem:[%s3 + $0x12d0] sm:$0xff]
  %v5619 = vld [vmem:[%s3 + $0x12d8] sm:$0xff]
  %v5620 = vld [vmem:[%s3 + $0x12e0] sm:$0xff]
  %v5621 = vld [vmem:[%s3 + $0x12e8] sm:$0xff]
  %v5622 = vld [vmem:[%s3 + $0x12f0] sm:$0xff]
  %v5623 = vld [vmem:[%s3 + $0x12f8] sm:$0xff]
  %v5624 = vld [vmem:[%s3 + $0x1300] sm:$0xff]
  %v5625 = vld [vmem:[%s3 + $0x1308] sm:$0xff]
  %v5626 = vld [vmem:[%s3 + $0x1310] sm:$0xff]
  %v5627 = vld [vmem:[%s3 + $0x1318] sm:$0xff]
  %v5628 = vld [vmem:[%s3 + $0x1320] sm:$0xff]
  %v5629 = vld [vmem:[%s3 + $0x1328] sm:$0xff]
  %v5630 = vld [vmem:[%s3 + $0x1330] sm:$0xff]
  %v5631 = vld [vmem:[%s3 + $0x1338] sm:$0xff]
  %v5632 = vld [vmem:[%s3 + $0x1340] sm:$0xff]
  %v5633 = vld [vmem:[%s3 + $0x1348] sm:$0xff]
  %v5634 = vld [vmem:[%s3 + $0x1350] sm:$0xff]
  %v5635 = vld [vmem:[%s3 + $0x1358] sm:$0xff]
  %v5636 = vld [vmem:[%s3 + $0x1360] sm:$0xff]
  %v5637 = vld [vmem:[%s3 + $0x1368] sm:$0xff]
  %v5638 = vld [vmem:[%s3 + $0x1370] sm:$0xff]
  %v5639 = vld [vmem:[%s3 + $0x1378] sm:$0xff]
  %v5640 = vld [vmem:[%s3 + $0x1380] sm:$0xff]
  %v5641 = vld [vmem:[%s3 + $0x1388] sm:$0xff]
  %v5642 = vld [vmem:[%s3 + $0x1390] sm:$0xff]
  %v5643 = vld [vmem:[%s3 + $0x1398] sm:$0xff]
  %v5644 = vld [vmem:[%s3 + $0x13a0] sm:$0xff]
  %v5645 = vld [vmem:[%s3 + $0x13a8] sm:$0xff]
  %v5646 = vld [vmem:[%s3 + $0x13b0] sm:$0xff]
  %v5647 = vld [vmem:[%s3 + $0x13b8] sm:$0xff]
  %v5648 = vld [vmem:[%s3 + $0x13c0] sm:$0xff]
  %v5649 = vld [vmem:[%s3 + $0x13c8] sm:$0xff]
  %v5650 = vld [vmem:[%s3 + $0x13d0] sm:$0xff]
  %v5651 = vld [vmem:[%s3 + $0x13d8] sm:$0xff]
  %v5652 = vld [vmem:[%s3 + $0x13e0] sm:$0xff]
  %v5653 = vld [vmem:[%s3 + $0x13e8] sm:$0xff]
  %v5654 = vld [vmem:[%s3 + $0x13f0] sm:$0xff]
  %v5655 = vld [vmem:[%s3 + $0x13f8] sm:$0xff]
  %v5656 = vld [vmem:[%s3 + $0x1400] sm:$0xff]
  %v5657 = vld [vmem:[%s3 + $0x1408] sm:$0xff]
  %v5658 = vld [vmem:[%s3 + $0x1410] sm:$0xff]
  %v5659 = vld [vmem:[%s3 + $0x1418] sm:$0xff]
  %v5660 = vld [vmem:[%s3 + $0x1420] sm:$0xff]
  %v5661 = vld [vmem:[%s3 + $0x1428] sm:$0xff]
  %v5662 = vld [vmem:[%s3 + $0x1430] sm:$0xff]
  %v5663 = vld [vmem:[%s3 + $0x1438] sm:$0xff]
  %v5664 = vld [vmem:[%s3 + $0x1440] sm:$0xff]
  %v5665 = vld [vmem:[%s3 + $0x1448] sm:$0xff]
  %v5666 = vld [vmem:[%s3 + $0x1450] sm:$0xff]
  %v5667 = vld [vmem:[%s3 + $0x1458] sm:$0xff]
  %v5668 = vld [vmem:[%s3 + $0x1460] sm:$0xff]
  %v5669 = vld [vmem:[%s3 + $0x1468] sm:$0xff]
  %v5670 = vld [vmem:[%s3 + $0x1470] sm:$0xff]
  %v5671 = vld [vmem:[%s3 + $0x1478] sm:$0xff]
  %v5672 = vld [vmem:[%s3 + $0x1480] sm:$0xff]
  %v5673 = vld [vmem:[%s3 + $0x1488] sm:$0xff]
  %v5674 = vld [vmem:[%s3 + $0x1490] sm:$0xff]
  %v5675 = vld [vmem:[%s3 + $0x1498] sm:$0xff]
  %v5676 = vld [vmem:[%s3 + $0x14a0] sm:$0xff]
  %v5677 = vld [vmem:[%s3 + $0x14a8] sm:$0xff]
  %v5678 = vld [vmem:[%s3 + $0x14b0] sm:$0xff]
  %v5679 = vld [vmem:[%s3 + $0x14b8] sm:$0xff]
  %v5680 = vld [vmem:[%s3 + $0x14c0] sm:$0xff]
  %v5681 = vld [vmem:[%s3 + $0x14c8] sm:$0xff]
  %v5682 = vld [vmem:[%s3 + $0x14d0] sm:$0xff]
  %v5683 = vld [vmem:[%s3 + $0x14d8] sm:$0xff]
  %v5684 = vld [vmem:[%s3 + $0x14e0] sm:$0xff]
  %v5685 = vld [vmem:[%s3 + $0x14e8] sm:$0xff]
  %v5686 = vld [vmem:[%s3 + $0x14f0] sm:$0xff]
  %v5687 = vld [vmem:[%s3 + $0x14f8] sm:$0xff]
  %v5688 = vld [vmem:[%s3 + $0x1500] sm:$0xff]
  %v5689 = vld [vmem:[%s3 + $0x1508] sm:$0xff]
  %v5690 = vld [vmem:[%s3 + $0x1510] sm:$0xff]
  %v5691 = vld [vmem:[%s3 + $0x1518] sm:$0xff]
  %v5692 = vld [vmem:[%s3 + $0x1520] sm:$0xff]
  %v5693 = vld [vmem:[%s3 + $0x1528] sm:$0xff]
  %v5694 = vld [vmem:[%s3 + $0x1530] sm:$0xff]
  %v5695 = vld [vmem:[%s3 + $0x1538] sm:$0xff]
  %v5696 = vld [vmem:[%s3 + $0x1540] sm:$0xff]
  %v5697 = vld [vmem:[%s3 + $0x1548] sm:$0xff]
  %v5698 = vld [vmem:[%s3 + $0x1550] sm:$0xff]
  %v5699 = vld [vmem:[%s3 + $0x1558] sm:$0xff]
  %v5700 = vld [vmem:[%s3 + $0x1560] sm:$0xff]
  %v5701 = vld [vmem:[%s3 + $0x1568] sm:$0xff]
  %v5702 = vld [vmem:[%s3 + $0x1570] sm:$0xff]
  %v5703 = vld [vmem:[%s3 + $0x1578] sm:$0xff]
  %v5704 = vld [vmem:[%s3 + $0x1580] sm:$0xff]
  %v5705 = vld [vmem:[%s3 + $0x1588] sm:$0xff]
  %v5706 = vld [vmem:[%s3 + $0x1590] sm:$0xff]
  %v5707 = vld [vmem:[%s3 + $0x1598] sm:$0xff]
  %v5708 = vld [vmem:[%s3 + $0x15a0] sm:$0xff]
  %v5709 = vld [vmem:[%s3 + $0x15a8] sm:$0xff]
  %v5710 = vld [vmem:[%s3 + $0x15b0] sm:$0xff]
  %v5711 = vld [vmem:[%s3 + $0x15b8] sm:$0xff]
  %v5712 = vld [vmem:[%s3 + $0x15c0] sm:$0xff]
  %v5713 = vld [vmem:[%s3 + $0x15c8] sm:$0xff]
  %v5714 = vld [vmem:[%s3 + $0x15d0] sm:$0xff]
  %v5715 = vld [vmem:[%s3 + $0x15d8] sm:$0xff]
  %v5716 = vld [vmem:[%s3 + $0x15e0] sm:$0xff]
  %v5717 = vld [vmem:[%s3 + $0x15e8] sm:$0xff]
  %v5718 = vld [vmem:[%s3 + $0x15f0] sm:$0xff]
  %v5719 = vld [vmem:[%s3 + $0x15f8] sm:$0xff]
  %v5720 = vld [vmem:[%s3 + $0x1600] sm:$0xff]
  %v5721 = vld [vmem:[%s3 + $0x1608] sm:$0xff]
  %v5722 = vld [vmem:[%s3 + $0x1610] sm:$0xff]
  %v5723 = vld [vmem:[%s3 + $0x1618] sm:$0xff]
  %v5724 = vld [vmem:[%s3 + $0x1620] sm:$0xff]
  %v5725 = vld [vmem:[%s3 + $0x1628] sm:$0xff]
  %v5726 = vld [vmem:[%s3 + $0x1630] sm:$0xff]
  %v5727 = vld [vmem:[%s3 + $0x1638] sm:$0xff]
  %v5728 = vld [vmem:[%s3 + $0x1640] sm:$0xff]
  %v5729 = vld [vmem:[%s3 + $0x1648] sm:$0xff]
  %v5730 = vld [vmem:[%s3 + $0x1650] sm:$0xff]
  %v5731 = vld [vmem:[%s3 + $0x1658] sm:$0xff]
  %v5732 = vld [vmem:[%s3 + $0x1660] sm:$0xff]
  %v5733 = vld [vmem:[%s3 + $0x1668] sm:$0xff]
  %v5734 = vld [vmem:[%s3 + $0x1670] sm:$0xff]
  %v5735 = vld [vmem:[%s3 + $0x1678] sm:$0xff]
  %5736 = vmatprep.subr.mxu0 %v5017
  %5737 = vmatpush1.msra.mxu0 %v5016
  %5738 = vmatprep.subr.mxu0 %v5022
  %5739 = vmatpush1.msra.mxu0 %v5021
  %5740 = vmatprep.subr.mxu0 %v5027
  %5741 = vmatpush1.msra.mxu0 %v5026
  %5742 = vmatprep.subr.mxu0 %v5032
  %5743 = vmatpush1.msra.mxu0 %v5031
  %5744 = vmatprep.subr.mxu0 %v5037
  %5745 = vmatpush1.msra.mxu0 %v5036
  %5746 = vmatprep.subr.mxu0 %v5042
  %5747 = vmatpush1.msra.mxu0 %v5041
  %5748 = vmatprep.subr.mxu0 %v5047
  %5749 = vmatpush1.msra.mxu0 %v5046
  %5750 = vmatprep.subr.mxu0 %v5052
  %5751 = vmatpush1.msra.mxu0 %v5051
  %5752 = vmatprep.subr.mxu0 %v5057
  %5753 = vmatpush1.msra.mxu0 %v5056
  %5754 = vmatprep.subr.mxu0 %v5062
  %5755 = vmatpush1.msra.mxu0 %v5061
  %5756 = vmatprep.subr.mxu0 %v5067
  %5757 = vmatpush1.msra.mxu0 %v5066
  %5758 = vmatprep.subr.mxu0 %v5072
  %5759 = vmatpush1.msra.mxu0 %v5071
  %5760 = vmatprep.subr.mxu0 %v5077
  %5761 = vmatpush1.msra.mxu0 %v5076
  %5762 = vmatprep.subr.mxu0 %v5082
  %5763 = vmatpush1.msra.mxu0 %v5081
  %5764 = vmatprep.subr.mxu0 %v5087
  %5765 = vmatpush1.msra.mxu0 %v5086
  %5766 = vmatprep.subr.mxu0 %v5092
  %5767 = vmatpush1.msra.mxu0 %v5091
  %5768 = vmatprep.subr.mxu0 %v5097
  %5769 = vmatpush1.msra.mxu0 %v5096
  %5770 = vmatprep.subr.mxu0 %v5102
  %5771 = vmatpush1.msra.mxu0 %v5101
  %5772 = vmatprep.subr.mxu0 %v5107
  %5773 = vmatpush1.msra.mxu0 %v5106
  %5774 = vmatprep.subr.mxu0 %v5112
  %5775 = vmatpush1.msra.mxu0 %v5111
  %5776 = vmatprep.subr.mxu0 %v5117
  %5777 = vmatpush1.msra.mxu0 %v5116
  %5778 = vmatprep.subr.mxu0 %v5122
  %5779 = vmatpush1.msra.mxu0 %v5121
  %5780 = vmatprep.subr.mxu0 %v5127
  %5781 = vmatpush1.msra.mxu0 %v5126
  %5782 = vmatprep.subr.mxu0 %v5132
  %5783 = vmatpush1.msra.mxu0 %v5131
  %5784 = vmatprep.subr.mxu0 %v5137
  %5785 = vmatpush1.msra.mxu0 %v5136
  %5786 = vmatprep.subr.mxu0 %v5142
  %5787 = vmatpush1.msra.mxu0 %v5141
  %5788 = vmatprep.subr.mxu0 %v5147
  %5789 = vmatpush1.msra.mxu0 %v5146
  %5790 = vmatprep.subr.mxu0 %v5152
  %5791 = vmatpush1.msra.mxu0 %v5151
  %5792 = vmatprep.subr.mxu0 %v5157
  %5793 = vmatpush1.msra.mxu0 %v5156
  %5794 = vmatprep.subr.mxu0 %v5162
  %5795 = vmatpush1.msra.mxu0 %v5161
  %5796 = vmatprep.subr.mxu0 %v5167
  %5797 = vmatpush1.msra.mxu0 %v5166
  %5798 = vmatprep.subr.mxu0 %v5172
  %5799 = vmatpush1.msra.mxu0 %v5171
  %5800 = vmatprep.mubr.f32.mxu0 %v5008
  %5801 = vmatmul.mubr.f32.gmra.mrb[0].mxu0 %v5007
  %v5802 = vpop.f32.mrb[0].mxu0
  %v5803 = vadd.f32 0.0, %v5802
  %v5804 = vpop.f32.mrb[0].mxu0
  %v5805 = vadd.f32 0.0, %v5804
  %5806 = vdwg.mxu0
  %5807 = vmatprep.subr.mxu0 %v5177
  %5808 = vmatpush1.msra.mxu0 %v5176
  %5809 = vmatprep.subr.mxu0 %v5182
  %5810 = vmatpush1.msra.mxu0 %v5181
  %5811 = vmatprep.subr.mxu0 %v5187
  %5812 = vmatpush1.msra.mxu0 %v5186
  %5813 = vmatprep.subr.mxu0 %v5192
  %5814 = vmatpush1.msra.mxu0 %v5191
  %5815 = vmatprep.subr.mxu0 %v5197
  %5816 = vmatpush1.msra.mxu0 %v5196
  %5817 = vmatprep.subr.mxu0 %v5202
  %5818 = vmatpush1.msra.mxu0 %v5201
  %5819 = vmatprep.subr.mxu0 %v5207
  %5820 = vmatpush1.msra.mxu0 %v5206
  %5821 = vmatprep.subr.mxu0 %v5212
  %5822 = vmatpush1.msra.mxu0 %v5211
  %5823 = vmatprep.subr.mxu0 %v5217
  %5824 = vmatpush1.msra.mxu0 %v5216
  %5825 = vmatprep.subr.mxu0 %v5222
  %5826 = vmatpush1.msra.mxu0 %v5221
  %5827 = vmatprep.subr.mxu0 %v5227
  %5828 = vmatpush1.msra.mxu0 %v5226
  %5829 = vmatprep.subr.mxu0 %v5232
  %5830 = vmatpush1.msra.mxu0 %v5231
  %5831 = vmatprep.subr.mxu0 %v5237
  %5832 = vmatpush1.msra.mxu0 %v5236
  %5833 = vmatprep.subr.mxu0 %v5242
  %5834 = vmatpush1.msra.mxu0 %v5241
  %5835 = vmatprep.subr.mxu0 %v5247
  %5836 = vmatpush1.msra.mxu0 %v5246
  %5837 = vmatprep.subr.mxu0 %v5252
  %5838 = vmatpush1.msra.mxu0 %v5251
  %5839 = vmatprep.subr.mxu0 %v5257
  %5840 = vmatpush1.msra.mxu0 %v5256
  %5841 = vmatprep.subr.mxu0 %v5262
  %5842 = vmatpush1.msra.mxu0 %v5261
  %5843 = vmatprep.subr.mxu0 %v5267
  %5844 = vmatpush1.msra.mxu0 %v5266
  %5845 = vmatprep.subr.mxu0 %v5272
  %5846 = vmatpush1.msra.mxu0 %v5271
  %5847 = vmatprep.subr.mxu0 %v5277
  %5848 = vmatpush1.msra.mxu0 %v5276
  %5849 = vmatprep.subr.mxu0 %v5282
  %5850 = vmatpush1.msra.mxu0 %v5281
  %5851 = vmatprep.subr.mxu0 %v5287
  %5852 = vmatpush1.msra.mxu0 %v5286
  %5853 = vmatprep.subr.mxu0 %v5292
  %5854 = vmatpush1.msra.mxu0 %v5291
  %5855 = vmatprep.subr.mxu0 %v5297
  %5856 = vmatpush1.msra.mxu0 %v5296
  %5857 = vmatprep.subr.mxu0 %v5302
  %5858 = vmatpush1.msra.mxu0 %v5301
  %5859 = vmatprep.subr.mxu0 %v5307
  %5860 = vmatpush1.msra.mxu0 %v5306
  %5861 = vmatprep.subr.mxu0 %v5312
  %5862 = vmatpush1.msra.mxu0 %v5311
  %5863 = vmatprep.subr.mxu0 %v5317
  %5864 = vmatpush1.msra.mxu0 %v5316
  %5865 = vmatprep.subr.mxu0 %v5322
  %5866 = vmatpush1.msra.mxu0 %v5321
  %5867 = vmatprep.subr.mxu0 %v5327
  %5868 = vmatpush1.msra.mxu0 %v5326
  %5869 = vmatprep.subr.mxu0 %v5332
  %5870 = vmatpush1.msra.mxu0 %v5331
  %5871 = vmatprep.mubr.f32.mxu0 %v5010
  %5872 = vmatmul.mubr.f32.gmra.mrb[0].mxu0 %v5009
  %v5873 = vpop.f32.mrb[0].mxu0
  %v5874 = vadd.f32 %v5803, %v5873
  %v5875 = vpop.f32.mrb[0].mxu0
  %v5876 = vadd.f32 %v5805, %v5875
  %5877 = vdwg.mxu0
  %5878 = vmatprep.subr.mxu0 %v5337
  %5879 = vmatpush1.msra.mxu0 %v5336
  %5880 = vmatprep.subr.mxu0 %v5342
  %5881 = vmatpush1.msra.mxu0 %v5341
  %5882 = vmatprep.subr.mxu0 %v5347
  %5883 = vmatpush1.msra.mxu0 %v5346
  %5884 = vmatprep.subr.mxu0 %v5352
  %5885 = vmatpush1.msra.mxu0 %v5351
  %5886 = vmatprep.subr.mxu0 %v5357
  %5887 = vmatpush1.msra.mxu0 %v5356
  %5888 = vmatprep.subr.mxu0 %v5362
  %5889 = vmatpush1.msra.mxu0 %v5361
  %5890 = vmatprep.subr.mxu0 %v5367
  %5891 = vmatpush1.msra.mxu0 %v5366
  %5892 = vmatprep.subr.mxu0 %v5372
  %5893 = vmatpush1.msra.mxu0 %v5371
  %5894 = vmatprep.subr.mxu0 %v5377
  %5895 = vmatpush1.msra.mxu0 %v5376
  %5896 = vmatprep.subr.mxu0 %v5382
  %5897 = vmatpush1.msra.mxu0 %v5381
  %5898 = vmatprep.subr.mxu0 %v5387
  %5899 = vmatpush1.msra.mxu0 %v5386
  %5900 = vmatprep.subr.mxu0 %v5392
  %5901 = vmatpush1.msra.mxu0 %v5391
  %5902 = vmatprep.subr.mxu0 %v5397
  %5903 = vmatpush1.msra.mxu0 %v5396
  %5904 = vmatprep.subr.mxu0 %v5402
  %5905 = vmatpush1.msra.mxu0 %v5401
  %5906 = vmatprep.subr.mxu0 %v5407
  %5907 = vmatpush1.msra.mxu0 %v5406
  %5908 = vmatprep.subr.mxu0 %v5412
  %5909 = vmatpush1.msra.mxu0 %v5411
  %5910 = vmatprep.subr.mxu0 %v5417
  %5911 = vmatpush1.msra.mxu0 %v5416
  %5912 = vmatprep.subr.mxu0 %v5422
  %5913 = vmatpush1.msra.mxu0 %v5421
  %5914 = vmatprep.subr.mxu0 %v5427
  %5915 = vmatpush1.msra.mxu0 %v5426
  %5916 = vmatprep.subr.mxu0 %v5432
  %5917 = vmatpush1.msra.mxu0 %v5431
  %5918 = vmatprep.subr.mxu0 %v5437
  %5919 = vmatpush1.msra.mxu0 %v5436
  %5920 = vmatprep.subr.mxu0 %v5442
  %5921 = vmatpush1.msra.mxu0 %v5441
  %5922 = vmatprep.subr.mxu0 %v5447
  %5923 = vmatpush1.msra.mxu0 %v5446
  %5924 = vmatprep.subr.mxu0 %v5452
  %5925 = vmatpush1.msra.mxu0 %v5451
  %5926 = vmatprep.subr.mxu0 %v5457
  %5927 = vmatpush1.msra.mxu0 %v5456
  %5928 = vmatprep.subr.mxu0 %v5462
  %5929 = vmatpush1.msra.mxu0 %v5461
  %5930 = vmatprep.subr.mxu0 %v5467
  %5931 = vmatpush1.msra.mxu0 %v5466
  %5932 = vmatprep.subr.mxu0 %v5472
  %5933 = vmatpush1.msra.mxu0 %v5471
  %5934 = vmatprep.subr.mxu0 %v5477
  %5935 = vmatpush1.msra.mxu0 %v5476
  %5936 = vmatprep.subr.mxu0 %v5482
  %5937 = vmatpush1.msra.mxu0 %v5481
  %5938 = vmatprep.subr.mxu0 %v5487
  %5939 = vmatpush1.msra.mxu0 %v5486
  %5940 = vmatprep.subr.mxu0 %v5492
  %5941 = vmatpush1.msra.mxu0 %v5491
  %5942 = vmatprep.mubr.f32.mxu0 %v5012
  %5943 = vmatmul.mubr.f32.gmra.mrb[0].mxu0 %v5011
  %v5944 = vpop.f32.mrb[0].mxu0
  %v5945 = vadd.f32 %v5874, %v5944
  %v5946 = vpop.f32.mrb[0].mxu0
  %v5947 = vadd.f32 %v5876, %v5946
  %5948 = vdwg.mxu0
  %5949 = vmatprep.subr.mxu0 %v5497
  %5950 = vmatpush1.msra.mxu0 %v5496
  %5951 = vmatprep.subr.mxu0 %v5502
  %5952 = vmatpush1.msra.mxu0 %v5501
  %5953 = vmatprep.subr.mxu0 %v5507
  %5954 = vmatpush1.msra.mxu0 %v5506
  %5955 = vmatprep.subr.mxu0 %v5512
  %5956 = vmatpush1.msra.mxu0 %v5511
  %5957 = vmatprep.subr.mxu0 %v5517
  %5958 = vmatpush1.msra.mxu0 %v5516
  %5959 = vmatprep.subr.mxu0 %v5522
  %5960 = vmatpush1.msra.mxu0 %v5521
  %5961 = vmatprep.subr.mxu0 %v5527
  %5962 = vmatpush1.msra.mxu0 %v5526
  %5963 = vmatprep.subr.mxu0 %v5532
  %5964 = vmatpush1.msra.mxu0 %v5531
  %5965 = vmatprep.subr.mxu0 %v5537
  %5966 = vmatpush1.msra.mxu0 %v5536
  %5967 = vmatprep.subr.mxu0 %v5542
  %5968 = vmatpush1.msra.mxu0 %v5541
  %5969 = vmatprep.subr.mxu0 %v5547
  %5970 = vmatpush1.msra.mxu0 %v5546
  %5971 = vmatprep.subr.mxu0 %v5552
  %5972 = vmatpush1.msra.mxu0 %v5551
  %5973 = vmatprep.subr.mxu0 %v5557
  %5974 = vmatpush1.msra.mxu0 %v5556
  %5975 = vmatprep.subr.mxu0 %v5562
  %5976 = vmatpush1.msra.mxu0 %v5561
  %5977 = vmatprep.subr.mxu0 %v5567
  %5978 = vmatpush1.msra.mxu0 %v5566
  %5979 = vmatprep.subr.mxu0 %v5572
  %5980 = vmatpush1.msra.mxu0 %v5571
  %5981 = vmatprep.subr.mxu0 %v5577
  %5982 = vmatpush1.msra.mxu0 %v5576
  %5983 = vmatprep.subr.mxu0 %v5582
  %5984 = vmatpush1.msra.mxu0 %v5581
  %5985 = vmatprep.subr.mxu0 %v5587
  %5986 = vmatpush1.msra.mxu0 %v5586
  %5987 = vmatprep.subr.mxu0 %v5592
  %5988 = vmatpush1.msra.mxu0 %v5591
  %5989 = vmatprep.subr.mxu0 %v5597
  %5990 = vmatpush1.msra.mxu0 %v5596
  %5991 = vmatprep.subr.mxu0 %v5602
  %5992 = vmatpush1.msra.mxu0 %v5601
  %5993 = vmatprep.subr.mxu0 %v5607
  %5994 = vmatpush1.msra.mxu0 %v5606
  %5995 = vmatprep.subr.mxu0 %v5612
  %5996 = vmatpush1.msra.mxu0 %v5611
  %5997 = vmatprep.subr.mxu0 %v5617
  %5998 = vmatpush1.msra.mxu0 %v5616
  %5999 = vmatprep.subr.mxu0 %v5622
  %6000 = vmatpush1.msra.mxu0 %v5621
  %6001 = vmatprep.subr.mxu0 %v5627
  %6002 = vmatpush1.msra.mxu0 %v5626
  %6003 = vmatprep.subr.mxu0 %v5632
  %6004 = vmatpush1.msra.mxu0 %v5631
  %6005 = vmatprep.subr.mxu0 %v5637
  %6006 = vmatpush1.msra.mxu0 %v5636
  %6007 = vmatprep.subr.mxu0 %v5642
  %6008 = vmatpush1.msra.mxu0 %v5641
  %6009 = vmatprep.subr.mxu0 %v5647
  %6010 = vmatpush1.msra.mxu0 %v5646
  %6011 = vmatprep.subr.mxu0 %v5652
  %6012 = vmatpush1.msra.mxu0 %v5651
  %6013 = vmatprep.mubr.f32.mxu0 %v5014
  %6014 = vmatmul.mubr.f32.gmra.mrb[0].mxu0 %v5013
  %v6015 = vpop.f32.mrb[0].mxu0
  %v6016 = vadd.f32 %v5945, %v6015
  %v6017 = vpop.f32.mrb[0].mxu0
  %v6018 = vadd.f32 %v5947, %v6017
  %6019 = vdwg.mxu0
  %6020 = vmatprep.subr.mxu0 %v5657
  %6021 = vmatpush1.msra.mxu0 %v5656
  %6022 = vmatprep.subr.mxu0 %v5662
  %6023 = vmatpush1.msra.mxu0 %v5661
  %6024 = vmatprep.subr.mxu0 %v5667
  %6025 = vmatpush1.msra.mxu0 %v5666
  %6026 = vmatprep.subr.mxu0 %v5672
  %6027 = vmatpush1.msra.mxu0 %v5671
  %6028 = vmatprep.subr.mxu0 %v5677
  %6029 = vmatpush1.msra.mxu0 %v5676
  %6030 = vmatprep.subr.mxu0 %v5682
  %6031 = vmatpush1.msra.mxu0 %v5681
  %6032 = vmatprep.subr.mxu0 %v5687
  %6033 = vmatpush1.msra.mxu0 %v5686
  %6034 = vmatprep.subr.mxu0 %v5692
  %6035 = vmatpush1.msra.mxu0 %v5691
  %6036 = vmatprep.subr.mxu0 %v5697
  %6037 = vmatpush1.msra.mxu0 %v5696
  %6038 = vmatprep.subr.mxu0 %v5702
  %6039 = vmatpush1.msra.mxu0 %v5701
  %6040 = vmatprep.subr.mxu0 %v5707
  %6041 = vmatpush1.msra.mxu0 %v5706
  %6042 = vmatprep.subr.mxu0 %v5712
  %6043 = vmatpush1.msra.mxu0 %v5711
  %6044 = vmatprep.subr.mxu0 %v5717
  %6045 = vmatpush1.msra.mxu0 %v5716
  %6046 = vmatprep.subr.mxu0 %v5722
  %6047 = vmatpush1.msra.mxu0 %v5721
  %6048 = vmatprep.subr.mxu0 %v5727
  %6049 = vmatpush1.msra.mxu0 %v5726
  %6050 = vmatprep.subr.mxu0 %v5732
  %6051 = vmatpush1.msra.mxu0 %v5731
  %6052 = vmatprep.subr.mxu0 0.0
  %6053 = vmatpush1.msra.mxu0 0.0
  %6054 = vmatprep.subr.mxu0 0.0
  %6055 = vmatpush1.msra.mxu0 0.0
  %6056 = vmatprep.subr.mxu0 0.0
  %6057 = vmatpush1.msra.mxu0 0.0
  %6058 = vmatprep.subr.mxu0 0.0
  %6059 = vmatpush1.msra.mxu0 0.0
  %6060 = vmatprep.subr.mxu0 0.0
  %6061 = vmatpush1.msra.mxu0 0.0
  %6062 = vmatprep.subr.mxu0 0.0
  %6063 = vmatpush1.msra.mxu0 0.0
  %6064 = vmatprep.subr.mxu0 0.0
  %6065 = vmatpush1.msra.mxu0 0.0
  %6066 = vmatprep.subr.mxu0 0.0
  %6067 = vmatpush1.msra.mxu0 0.0
  %6068 = vmatprep.subr.mxu0 0.0
  %6069 = vmatpush1.msra.mxu0 0.0
  %6070 = vmatprep.subr.mxu0 0.0
  %6071 = vmatpush1.msra.mxu0 0.0
  %6072 = vmatprep.subr.mxu0 0.0
  %6073 = vmatpush1.msra.mxu0 0.0
  %6074 = vmatprep.subr.mxu0 0.0
  %6075 = vmatpush1.msra.mxu0 0.0
  %6076 = vmatprep.subr.mxu0 0.0
  %6077 = vmatpush1.msra.mxu0 0.0
  %6078 = vmatprep.subr.mxu0 0.0
  %6079 = vmatpush1.msra.mxu0 0.0
  %6080 = vmatprep.subr.mxu0 0.0
  %6081 = vmatpush1.msra.mxu0 0.0
  %6082 = vmatprep.subr.mxu0 0.0
  %6083 = vmatpush1.msra.mxu0 0.0
  %6084 = vmatprep.mubr.f32.mxu0 0.0
  %6085 = vmatmul.mubr.f32.gmra.mrb[0].mxu0 %v5015
  %v6086 = vpop.f32.mrb[0].mxu0
  %v6087 = vadd.f32 %v6016, %v6086
  %v6088 = vpop.f32.mrb[0].mxu0
  %v6089 = vadd.f32 %v6018, %v6088
  %6090 = vdwg.mxu0
  %6091 = vmatprep.subr.mxu0 %v5019
  %6092 = vmatpush1.msra.mxu0 %v5018
  %6093 = vmatprep.subr.mxu0 %v5024
  %6094 = vmatpush1.msra.mxu0 %v5023
  %6095 = vmatprep.subr.mxu0 %v5029
  %6096 = vmatpush1.msra.mxu0 %v5028
  %6097 = vmatprep.subr.mxu0 %v5034
  %6098 = vmatpush1.msra.mxu0 %v5033
  %6099 = vmatprep.subr.mxu0 %v5039
  %6100 = vmatpush1.msra.mxu0 %v5038
  %6101 = vmatprep.subr.mxu0 %v5044
  %6102 = vmatpush1.msra.mxu0 %v5043
  %6103 = vmatprep.subr.mxu0 %v5049
  %6104 = vmatpush1.msra.mxu0 %v5048
  %6105 = vmatprep.subr.mxu0 %v5054
  %6106 = vmatpush1.msra.mxu0 %v5053
  %6107 = vmatprep.subr.mxu0 %v5059
  %6108 = vmatpush1.msra.mxu0 %v5058
  %6109 = vmatprep.subr.mxu0 %v5064
  %6110 = vmatpush1.msra.mxu0 %v5063
  %6111 = vmatprep.subr.mxu0 %v5069
  %6112 = vmatpush1.msra.mxu0 %v5068
  %6113 = vmatprep.subr.mxu0 %v5074
  %6114 = vmatpush1.msra.mxu0 %v5073
  %6115 = vmatprep.subr.mxu0 %v5079
  %6116 = vmatpush1.msra.mxu0 %v5078
  %6117 = vmatprep.subr.mxu0 %v5084
  %6118 = vmatpush1.msra.mxu0 %v5083
  %6119 = vmatprep.subr.mxu0 %v5089
  %6120 = vmatpush1.msra.mxu0 %v5088
  %6121 = vmatprep.subr.mxu0 %v5094
  %6122 = vmatpush1.msra.mxu0 %v5093
  %6123 = vmatprep.subr.mxu0 %v5099
  %6124 = vmatpush1.msra.mxu0 %v5098
  %6125 = vmatprep.subr.mxu0 %v5104
  %6126 = vmatpush1.msra.mxu0 %v5103
  %6127 = vmatprep.subr.mxu0 %v5109
  %6128 = vmatpush1.msra.mxu0 %v5108
  %6129 = vmatprep.subr.mxu0 %v5114
  %6130 = vmatpush1.msra.mxu0 %v5113
  %6131 = vmatprep.subr.mxu0 %v5119
  %6132 = vmatpush1.msra.mxu0 %v5118
  %6133 = vmatprep.subr.mxu0 %v5124
  %6134 = vmatpush1.msra.mxu0 %v5123
  %6135 = vmatprep.subr.mxu0 %v5129
  %6136 = vmatpush1.msra.mxu0 %v5128
  %6137 = vmatprep.subr.mxu0 %v5134
  %6138 = vmatpush1.msra.mxu0 %v5133
  %6139 = vmatprep.subr.mxu0 %v5139
  %6140 = vmatpush1.msra.mxu0 %v5138
  %6141 = vmatprep.subr.mxu0 %v5144
  %6142 = vmatpush1.msra.mxu0 %v5143
  %6143 = vmatprep.subr.mxu0 %v5149
  %6144 = vmatpush1.msra.mxu0 %v5148
  %6145 = vmatprep.subr.mxu0 %v5154
  %6146 = vmatpush1.msra.mxu0 %v5153
  %6147 = vmatprep.subr.mxu0 %v5159
  %6148 = vmatpush1.msra.mxu0 %v5158
  %6149 = vmatprep.subr.mxu0 %v5164
  %6150 = vmatpush1.msra.mxu0 %v5163
  %6151 = vmatprep.subr.mxu0 %v5169
  %6152 = vmatpush1.msra.mxu0 %v5168
  %6153 = vmatprep.subr.mxu0 %v5174
  %6154 = vmatpush1.msra.mxu0 %v5173
  %6155 = vmatprep.mubr.f32.mxu0 %v5008
  %6156 = vmatmul.mubr.f32.gmra.mrb[0].mxu0 %v5007
  %v6157 = vpop.f32.mrb[0].mxu0
  %v6158 = vadd.f32 0.0, %v6157
  %v6159 = vpop.f32.mrb[0].mxu0
  %v6160 = vadd.f32 0.0, %v6159
  %6161 = vdwg.mxu0
  %6162 = vmatprep.subr.mxu0 %v5179
  %6163 = vmatpush1.msra.mxu0 %v5178
  %6164 = vmatprep.subr.mxu0 %v5184
  %6165 = vmatpush1.msra.mxu0 %v5183
  %6166 = vmatprep.subr.mxu0 %v5189
  %6167 = vmatpush1.msra.mxu0 %v5188
  %6168 = vmatprep.subr.mxu0 %v5194
  %6169 = vmatpush1.msra.mxu0 %v5193
  %6170 = vmatprep.subr.mxu0 %v5199
  %6171 = vmatpush1.msra.mxu0 %v5198
  %6172 = vmatprep.subr.mxu0 %v5204
  %6173 = vmatpush1.msra.mxu0 %v5203
  %6174 = vmatprep.subr.mxu0 %v5209
  %6175 = vmatpush1.msra.mxu0 %v5208
  %6176 = vmatprep.subr.mxu0 %v5214
  %6177 = vmatpush1.msra.mxu0 %v5213
  %6178 = vmatprep.subr.mxu0 %v5219
  %6179 = vmatpush1.msra.mxu0 %v5218
  %6180 = vmatprep.subr.mxu0 %v5224
  %6181 = vmatpush1.msra.mxu0 %v5223
  %6182 = vmatprep.subr.mxu0 %v5229
  %6183 = vmatpush1.msra.mxu0 %v5228
  %6184 = vmatprep.subr.mxu0 %v5234
  %6185 = vmatpush1.msra.mxu0 %v5233
  %6186 = vmatprep.subr.mxu0 %v5239
  %6187 = vmatpush1.msra.mxu0 %v5238
  %6188 = vmatprep.subr.mxu0 %v5244
  %6189 = vmatpush1.msra.mxu0 %v5243
  %6190 = vmatprep.subr.mxu0 %v5249
  %6191 = vmatpush1.msra.mxu0 %v5248
  %6192 = vmatprep.subr.mxu0 %v5254
  %6193 = vmatpush1.msra.mxu0 %v5253
  %6194 = vmatprep.subr.mxu0 %v5259
  %6195 = vmatpush1.msra.mxu0 %v5258
  %6196 = vmatprep.subr.mxu0 %v5264
  %6197 = vmatpush1.msra.mxu0 %v5263
  %6198 = vmatprep.subr.mxu0 %v5269
  %6199 = vmatpush1.msra.mxu0 %v5268
  %6200 = vmatprep.subr.mxu0 %v5274
  %6201 = vmatpush1.msra.mxu0 %v5273
  %6202 = vmatprep.subr.mxu0 %v5279
  %6203 = vmatpush1.msra.mxu0 %v5278
  %6204 = vmatprep.subr.mxu0 %v5284
  %6205 = vmatpush1.msra.mxu0 %v5283
  %6206 = vmatprep.subr.mxu0 %v5289
  %6207 = vmatpush1.msra.mxu0 %v5288
  %6208 = vmatprep.subr.mxu0 %v5294
  %6209 = vmatpush1.msra.mxu0 %v5293
  %6210 = vmatprep.subr.mxu0 %v5299
  %6211 = vmatpush1.msra.mxu0 %v5298
  %6212 = vmatprep.subr.mxu0 %v5304
  %6213 = vmatpush1.msra.mxu0 %v5303
  %6214 = vmatprep.subr.mxu0 %v5309
  %6215 = vmatpush1.msra.mxu0 %v5308
  %6216 = vmatprep.subr.mxu0 %v5314
  %6217 = vmatpush1.msra.mxu0 %v5313
  %6218 = vmatprep.subr.mxu0 %v5319
  %6219 = vmatpush1.msra.mxu0 %v5318
  %6220 = vmatprep.subr.mxu0 %v5324
  %6221 = vmatpush1.msra.mxu0 %v5323
  %6222 = vmatprep.subr.mxu0 %v5329
  %6223 = vmatpush1.msra.mxu0 %v5328
  %6224 = vmatprep.subr.mxu0 %v5334
  %6225 = vmatpush1.msra.mxu0 %v5333
  %6226 = vmatprep.mubr.f32.mxu0 %v5010
  %6227 = vmatmul.mubr.f32.gmra.mrb[0].mxu0 %v5009
  %v6228 = vpop.f32.mrb[0].mxu0
  %v6229 = vadd.f32 %v6158, %v6228
  %v6230 = vpop.f32.mrb[0].mxu0
  %v6231 = vadd.f32 %v6160, %v6230
  %6232 = vdwg.mxu0
  %6233 = vmatprep.subr.mxu0 %v5339
  %6234 = vmatpush1.msra.mxu0 %v5338
  %6235 = vmatprep.subr.mxu0 %v5344
  %6236 = vmatpush1.msra.mxu0 %v5343
  %6237 = vmatprep.subr.mxu0 %v5349
  %6238 = vmatpush1.msra.mxu0 %v5348
  %6239 = vmatprep.subr.mxu0 %v5354
  %6240 = vmatpush1.msra.mxu0 %v5353
  %6241 = vmatprep.subr.mxu0 %v5359
  %6242 = vmatpush1.msra.mxu0 %v5358
  %6243 = vmatprep.subr.mxu0 %v5364
  %6244 = vmatpush1.msra.mxu0 %v5363
  %6245 = vmatprep.subr.mxu0 %v5369
  %6246 = vmatpush1.msra.mxu0 %v5368
  %6247 = vmatprep.subr.mxu0 %v5374
  %6248 = vmatpush1.msra.mxu0 %v5373
  %6249 = vmatprep.subr.mxu0 %v5379
  %6250 = vmatpush1.msra.mxu0 %v5378
  %6251 = vmatprep.subr.mxu0 %v5384
  %6252 = vmatpush1.msra.mxu0 %v5383
  %6253 = vmatprep.subr.mxu0 %v5389
  %6254 = vmatpush1.msra.mxu0 %v5388
  %6255 = vmatprep.subr.mxu0 %v5394
  %6256 = vmatpush1.msra.mxu0 %v5393
  %6257 = vmatprep.subr.mxu0 %v5399
  %6258 = vmatpush1.msra.mxu0 %v5398
  %6259 = vmatprep.subr.mxu0 %v5404
  %6260 = vmatpush1.msra.mxu0 %v5403
  %6261 = vmatprep.subr.mxu0 %v5409
  %6262 = vmatpush1.msra.mxu0 %v5408
  %6263 = vmatprep.subr.mxu0 %v5414
  %6264 = vmatpush1.msra.mxu0 %v5413
  %6265 = vmatprep.subr.mxu0 %v5419
  %6266 = vmatpush1.msra.mxu0 %v5418
  %6267 = vmatprep.subr.mxu0 %v5424
  %6268 = vmatpush1.msra.mxu0 %v5423
  %6269 = vmatprep.subr.mxu0 %v5429
  %6270 = vmatpush1.msra.mxu0 %v5428
  %6271 = vmatprep.subr.mxu0 %v5434
  %6272 = vmatpush1.msra.mxu0 %v5433
  %6273 = vmatprep.subr.mxu0 %v5439
  %6274 = vmatpush1.msra.mxu0 %v5438
  %6275 = vmatprep.subr.mxu0 %v5444
  %6276 = vmatpush1.msra.mxu0 %v5443
  %6277 = vmatprep.subr.mxu0 %v5449
  %6278 = vmatpush1.msra.mxu0 %v5448
  %6279 = vmatprep.subr.mxu0 %v5454
  %6280 = vmatpush1.msra.mxu0 %v5453
  %6281 = vmatprep.subr.mxu0 %v5459
  %6282 = vmatpush1.msra.mxu0 %v5458
  %6283 = vmatprep.subr.mxu0 %v5464
  %6284 = vmatpush1.msra.mxu0 %v5463
  %6285 = vmatprep.subr.mxu0 %v5469
  %6286 = vmatpush1.msra.mxu0 %v5468
  %6287 = vmatprep.subr.mxu0 %v5474
  %6288 = vmatpush1.msra.mxu0 %v5473
  %6289 = vmatprep.subr.mxu0 %v5479
  %6290 = vmatpush1.msra.mxu0 %v5478
  %6291 = vmatprep.subr.mxu0 %v5484
  %6292 = vmatpush1.msra.mxu0 %v5483
  %6293 = vmatprep.subr.mxu0 %v5489
  %6294 = vmatpush1.msra.mxu0 %v5488
  %6295 = vmatprep.subr.mxu0 %v5494
  %6296 = vmatpush1.msra.mxu0 %v5493
  %6297 = vmatprep.mubr.f32.mxu0 %v5012
  %6298 = vmatmul.mubr.f32.gmra.mrb[0].mxu0 %v5011
  %v6299 = vpop.f32.mrb[0].mxu0
  %v6300 = vadd.f32 %v6229, %v6299
  %v6301 = vpop.f32.mrb[0].mxu0
  %v6302 = vadd.f32 %v6231, %v6301
  %6303 = vdwg.mxu0
  %6304 = vmatprep.subr.mxu0 %v5499
  %6305 = vmatpush1.msra.mxu0 %v5498
  %6306 = vmatprep.subr.mxu0 %v5504
  %6307 = vmatpush1.msra.mxu0 %v5503
  %6308 = vmatprep.subr.mxu0 %v5509
  %6309 = vmatpush1.msra.mxu0 %v5508
  %6310 = vmatprep.subr.mxu0 %v5514
  %6311 = vmatpush1.msra.mxu0 %v5513
  %6312 = vmatprep.subr.mxu0 %v5519
  %6313 = vmatpush1.msra.mxu0 %v5518
  %6314 = vmatprep.subr.mxu0 %v5524
  %6315 = vmatpush1.msra.mxu0 %v5523
  %6316 = vmatprep.subr.mxu0 %v5529
  %6317 = vmatpush1.msra.mxu0 %v5528
  %6318 = vmatprep.subr.mxu0 %v5534
  %6319 = vmatpush1.msra.mxu0 %v5533
  %6320 = vmatprep.subr.mxu0 %v5539
  %6321 = vmatpush1.msra.mxu0 %v5538
  %6322 = vmatprep.subr.mxu0 %v5544
  %6323 = vmatpush1.msra.mxu0 %v5543
  %6324 = vmatprep.subr.mxu0 %v5549
  %6325 = vmatpush1.msra.mxu0 %v5548
  %6326 = vmatprep.subr.mxu0 %v5554
  %6327 = vmatpush1.msra.mxu0 %v5553
  %6328 = vmatprep.subr.mxu0 %v5559
  %6329 = vmatpush1.msra.mxu0 %v5558
  %6330 = vmatprep.subr.mxu0 %v5564
  %6331 = vmatpush1.msra.mxu0 %v5563
  %6332 = vmatprep.subr.mxu0 %v5569
  %6333 = vmatpush1.msra.mxu0 %v5568
  %6334 = vmatprep.subr.mxu0 %v5574
  %6335 = vmatpush1.msra.mxu0 %v5573
  %6336 = vmatprep.subr.mxu0 %v5579
  %6337 = vmatpush1.msra.mxu0 %v5578
  %6338 = vmatprep.subr.mxu0 %v5584
  %6339 = vmatpush1.msra.mxu0 %v5583
  %6340 = vmatprep.subr.mxu0 %v5589
  %6341 = vmatpush1.msra.mxu0 %v5588
  %6342 = vmatprep.subr.mxu0 %v5594
  %6343 = vmatpush1.msra.mxu0 %v5593
  %6344 = vmatprep.subr.mxu0 %v5599
  %6345 = vmatpush1.msra.mxu0 %v5598
  %6346 = vmatprep.subr.mxu0 %v5604
  %6347 = vmatpush1.msra.mxu0 %v5603
  %6348 = vmatprep.subr.mxu0 %v5609
  %6349 = vmatpush1.msra.mxu0 %v5608
  %6350 = vmatprep.subr.mxu0 %v5614
  %6351 = vmatpush1.msra.mxu0 %v5613
  %6352 = vmatprep.subr.mxu0 %v5619
  %6353 = vmatpush1.msra.mxu0 %v5618
  %6354 = vmatprep.subr.mxu0 %v5624
  %6355 = vmatpush1.msra.mxu0 %v5623
  %6356 = vmatprep.subr.mxu0 %v5629
  %6357 = vmatpush1.msra.mxu0 %v5628
  %6358 = vmatprep.subr.mxu0 %v5634
  %6359 = vmatpush1.msra.mxu0 %v5633
  %6360 = vmatprep.subr.mxu0 %v5639
  %6361 = vmatpush1.msra.mxu0 %v5638
  %6362 = vmatprep.subr.mxu0 %v5644
  %6363 = vmatpush1.msra.mxu0 %v5643
  %6364 = vmatprep.subr.mxu0 %v5649
  %6365 = vmatpush1.msra.mxu0 %v5648
  %6366 = vmatprep.subr.mxu0 %v5654
  %6367 = vmatpush1.msra.mxu0 %v5653
  %6368 = vmatprep.mubr.f32.mxu0 %v5014
  %6369 = vmatmul.mubr.f32.gmra.mrb[0].mxu0 %v5013
  %v6370 = vpop.f32.mrb[0].mxu0
  %v6371 = vadd.f32 %v6300, %v6370
  %v6372 = vpop.f32.mrb[0].mxu0
  %v6373 = vadd.f32 %v6302, %v6372
  %6374 = vdwg.mxu0
  %6375 = vmatprep.subr.mxu0 %v5659
  %6376 = vmatpush1.msra.mxu0 %v5658
  %6377 = vmatprep.subr.mxu0 %v5664
  %6378 = vmatpush1.msra.mxu0 %v5663
  %6379 = vmatprep.subr.mxu0 %v5669
  %6380 = vmatpush1.msra.mxu0 %v5668
  %6381 = vmatprep.subr.mxu0 %v5674
  %6382 = vmatpush1.msra.mxu0 %v5673
  %6383 = vmatprep.subr.mxu0 %v5679
  %6384 = vmatpush1.msra.mxu0 %v5678
  %6385 = vmatprep.subr.mxu0 %v5684
  %6386 = vmatpush1.msra.mxu0 %v5683
  %6387 = vmatprep.subr.mxu0 %v5689
  %6388 = vmatpush1.msra.mxu0 %v5688
  %6389 = vmatprep.subr.mxu0 %v5694
  %6390 = vmatpush1.msra.mxu0 %v5693
  %6391 = vmatprep.subr.mxu0 %v5699
  %6392 = vmatpush1.msra.mxu0 %v5698
  %6393 = vmatprep.subr.mxu0 %v5704
  %6394 = vmatpush1.msra.mxu0 %v5703
  %6395 = vmatprep.subr.mxu0 %v5709
  %6396 = vmatpush1.msra.mxu0 %v5708
  %6397 = vmatprep.subr.mxu0 %v5714
  %6398 = vmatpush1.msra.mxu0 %v5713
  %6399 = vmatprep.subr.mxu0 %v5719
  %6400 = vmatpush1.msra.mxu0 %v5718
  %6401 = vmatprep.subr.mxu0 %v5724
  %6402 = vmatpush1.msra.mxu0 %v5723
  %6403 = vmatprep.subr.mxu0 %v5729
  %6404 = vmatpush1.msra.mxu0 %v5728
  %6405 = vmatprep.subr.mxu0 %v5734
  %6406 = vmatpush1.msra.mxu0 %v5733
  %6407 = vmatprep.subr.mxu0 0.0
  %6408 = vmatpush1.msra.mxu0 0.0
  %6409 = vmatprep.subr.mxu0 0.0
  %6410 = vmatpush1.msra.mxu0 0.0
  %6411 = vmatprep.subr.mxu0 0.0
  %6412 = vmatpush1.msra.mxu0 0.0
  %6413 = vmatprep.subr.mxu0 0.0
  %6414 = vmatpush1.msra.mxu0 0.0
  %6415 = vmatprep.subr.mxu0 0.0
  %6416 = vmatpush1.msra.mxu0 0.0
  %6417 = vmatprep.subr.mxu0 0.0
  %6418 = vmatpush1.msra.mxu0 0.0
  %6419 = vmatprep.subr.mxu0 0.0
  %6420 = vmatpush1.msra.mxu0 0.0
  %6421 = vmatprep.subr.mxu0 0.0
  %6422 = vmatpush1.msra.mxu0 0.0
  %6423 = vmatprep.subr.mxu0 0.0
  %6424 = vmatpush1.msra.mxu0 0.0
  %6425 = vmatprep.subr.mxu0 0.0
  %6426 = vmatpush1.msra.mxu0 0.0
  %6427 = vmatprep.subr.mxu0 0.0
  %6428 = vmatpush1.msra.mxu0 0.0
  %6429 = vmatprep.subr.mxu0 0.0
  %6430 = vmatpush1.msra.mxu0 0.0
  %6431 = vmatprep.subr.mxu0 0.0
  %6432 = vmatpush1.msra.mxu0 0.0
  %6433 = vmatprep.subr.mxu0 0.0
  %6434 = vmatpush1.msra.mxu0 0.0
  %6435 = vmatprep.subr.mxu0 0.0
  %6436 = vmatpush1.msra.mxu0 0.0
  %6437 = vmatprep.subr.mxu0 0.0
  %6438 = vmatpush1.msra.mxu0 0.0
  %6439 = vmatprep.mubr.f32.mxu0 0.0
  %6440 = vmatmul.mubr.f32.gmra.mrb[0].mxu0 %v5015
  %v6441 = vpop.f32.mrb[0].mxu0
  %v6442 = vadd.f32 %v6371, %v6441
  %v6443 = vpop.f32.mrb[0].mxu0
  %v6444 = vadd.f32 %v6373, %v6443
  %6445 = vdwg.mxu0
  %6446 = vmatprep.subr.mxu0 0.0
  %6447 = vmatpush1.msra.mxu0 %v5020
  %6448 = vmatprep.subr.mxu0 0.0
  %6449 = vmatpush1.msra.mxu0 %v5025
  %6450 = vmatprep.subr.mxu0 0.0
  %6451 = vmatpush1.msra.mxu0 %v5030
  %6452 = vmatprep.subr.mxu0 0.0
  %6453 = vmatpush1.msra.mxu0 %v5035
  %6454 = vmatprep.subr.mxu0 0.0
  %6455 = vmatpush1.msra.mxu0 %v5040
  %6456 = vmatprep.subr.mxu0 0.0
  %6457 = vmatpush1.msra.mxu0 %v5045
  %6458 = vmatprep.subr.mxu0 0.0
  %6459 = vmatpush1.msra.mxu0 %v5050
  %6460 = vmatprep.subr.mxu0 0.0
  %6461 = vmatpush1.msra.mxu0 %v5055
  %6462 = vmatprep.subr.mxu0 0.0
  %6463 = vmatpush1.msra.mxu0 %v5060
  %6464 = vmatprep.subr.mxu0 0.0
  %6465 = vmatpush1.msra.mxu0 %v5065
  %6466 = vmatprep.subr.mxu0 0.0
  %6467 = vmatpush1.msra.mxu0 %v5070
  %6468 = vmatprep.subr.mxu0 0.0
  %6469 = vmatpush1.msra.mxu0 %v5075
  %6470 = vmatprep.subr.mxu0 0.0
  %6471 = vmatpush1.msra.mxu0 %v5080
  %6472 = vmatprep.subr.mxu0 0.0
  %6473 = vmatpush1.msra.mxu0 %v5085
  %6474 = vmatprep.subr.mxu0 0.0
  %6475 = vmatpush1.msra.mxu0 %v5090
  %6476 = vmatprep.subr.mxu0 0.0
  %6477 = vmatpush1.msra.mxu0 %v5095
  %6478 = vmatprep.subr.mxu0 0.0
  %6479 = vmatpush1.msra.mxu0 %v5100
  %6480 = vmatprep.subr.mxu0 0.0
  %6481 = vmatpush1.msra.mxu0 %v5105
  %6482 = vmatprep.subr.mxu0 0.0
  %6483 = vmatpush1.msra.mxu0 %v5110
  %6484 = vmatprep.subr.mxu0 0.0
  %6485 = vmatpush1.msra.mxu0 %v5115
  %6486 = vmatprep.subr.mxu0 0.0
  %6487 = vmatpush1.msra.mxu0 %v5120
  %6488 = vmatprep.subr.mxu0 0.0
  %6489 = vmatpush1.msra.mxu0 %v5125
  %6490 = vmatprep.subr.mxu0 0.0
  %6491 = vmatpush1.msra.mxu0 %v5130
  %6492 = vmatprep.subr.mxu0 0.0
  %6493 = vmatpush1.msra.mxu0 %v5135
  %6494 = vmatprep.subr.mxu0 0.0
  %6495 = vmatpush1.msra.mxu0 %v5140
  %6496 = vmatprep.subr.mxu0 0.0
  %6497 = vmatpush1.msra.mxu0 %v5145
  %6498 = vmatprep.subr.mxu0 0.0
  %6499 = vmatpush1.msra.mxu0 %v5150
  %6500 = vmatprep.subr.mxu0 0.0
  %6501 = vmatpush1.msra.mxu0 %v5155
  %6502 = vmatprep.subr.mxu0 0.0
  %6503 = vmatpush1.msra.mxu0 %v5160
  %6504 = vmatprep.subr.mxu0 0.0
  %6505 = vmatpush1.msra.mxu0 %v5165
  %6506 = vmatprep.subr.mxu0 0.0
  %6507 = vmatpush1.msra.mxu0 %v5170
  %6508 = vmatprep.subr.mxu0 0.0
  %6509 = vmatpush1.msra.mxu0 %v5175
  %6510 = vmatprep.mubr.f32.mxu0 %v5008
  %6511 = vmatmul.mubr.f32.gmra.mrb[0].mxu0 %v5007
  %v6512 = vpop.f32.mrb[0].mxu0
  %v6513 = vadd.f32 0.0, %v6512
  %v6514 = vpop.f32.mrb[0].mxu0
  %6515 = vdwg.mxu0
  %6516 = vmatprep.subr.mxu0 0.0
  %6517 = vmatpush1.msra.mxu0 %v5180
  %6518 = vmatprep.subr.mxu0 0.0
  %6519 = vmatpush1.msra.mxu0 %v5185
  %6520 = vmatprep.subr.mxu0 0.0
  %6521 = vmatpush1.msra.mxu0 %v5190
  %6522 = vmatprep.subr.mxu0 0.0
  %6523 = vmatpush1.msra.mxu0 %v5195
  %6524 = vmatprep.subr.mxu0 0.0
  %6525 = vmatpush1.msra.mxu0 %v5200
  %6526 = vmatprep.subr.mxu0 0.0
  %6527 = vmatpush1.msra.mxu0 %v5205
  %6528 = vmatprep.subr.mxu0 0.0
  %6529 = vmatpush1.msra.mxu0 %v5210
  %6530 = vmatprep.subr.mxu0 0.0
  %6531 = vmatpush1.msra.mxu0 %v5215
  %6532 = vmatprep.subr.mxu0 0.0
  %6533 = vmatpush1.msra.mxu0 %v5220
  %6534 = vmatprep.subr.mxu0 0.0
  %6535 = vmatpush1.msra.mxu0 %v5225
  %6536 = vmatprep.subr.mxu0 0.0
  %6537 = vmatpush1.msra.mxu0 %v5230
  %6538 = vmatprep.subr.mxu0 0.0
  %6539 = vmatpush1.msra.mxu0 %v5235
  %6540 = vmatprep.subr.mxu0 0.0
  %6541 = vmatpush1.msra.mxu0 %v5240
  %6542 = vmatprep.subr.mxu0 0.0
  %6543 = vmatpush1.msra.mxu0 %v5245
  %6544 = vmatprep.subr.mxu0 0.0
  %6545 = vmatpush1.msra.mxu0 %v5250
  %6546 = vmatprep.subr.mxu0 0.0
  %6547 = vmatpush1.msra.mxu0 %v5255
  %6548 = vmatprep.subr.mxu0 0.0
  %6549 = vmatpush1.msra.mxu0 %v5260
  %6550 = vmatprep.subr.mxu0 0.0
  %6551 = vmatpush1.msra.mxu0 %v5265
  %6552 = vmatprep.subr.mxu0 0.0
  %6553 = vmatpush1.msra.mxu0 %v5270
  %6554 = vmatprep.subr.mxu0 0.0
  %6555 = vmatpush1.msra.mxu0 %v5275
  %6556 = vmatprep.subr.mxu0 0.0
  %6557 = vmatpush1.msra.mxu0 %v5280
  %6558 = vmatprep.subr.mxu0 0.0
  %6559 = vmatpush1.msra.mxu0 %v5285
  %6560 = vmatprep.subr.mxu0 0.0
  %6561 = vmatpush1.msra.mxu0 %v5290
  %6562 = vmatprep.subr.mxu0 0.0
  %6563 = vmatpush1.msra.mxu0 %v5295
  %6564 = vmatprep.subr.mxu0 0.0
  %6565 = vmatpush1.msra.mxu0 %v5300
  %6566 = vmatprep.subr.mxu0 0.0
  %6567 = vmatpush1.msra.mxu0 %v5305
  %6568 = vmatprep.subr.mxu0 0.0
  %6569 = vmatpush1.msra.mxu0 %v5310
  %6570 = vmatprep.subr.mxu0 0.0
  %6571 = vmatpush1.msra.mxu0 %v5315
  %6572 = vmatprep.subr.mxu0 0.0
  %6573 = vmatpush1.msra.mxu0 %v5320
  %6574 = vmatprep.subr.mxu0 0.0
  %6575 = vmatpush1.msra.mxu0 %v5325
  %6576 = vmatprep.subr.mxu0 0.0
  %6577 = vmatpush1.msra.mxu0 %v5330
  %6578 = vmatprep.subr.mxu0 0.0
  %6579 = vmatpush1.msra.mxu0 %v5335
  %6580 = vmatprep.mubr.f32.mxu0 %v5010
  %6581 = vmatmul.mubr.f32.gmra.mrb[0].mxu0 %v5009
  %v6582 = vpop.f32.mrb[0].mxu0
  %v6583 = vadd.f32 %v6513, %v6582
  %v6584 = vpop.f32.mrb[0].mxu0
  %6585 = vdwg.mxu0
  %6586 = vmatprep.subr.mxu0 0.0
  %6587 = vmatpush1.msra.mxu0 %v5340
  %6588 = vmatprep.subr.mxu0 0.0
  %6589 = vmatpush1.msra.mxu0 %v5345
  %6590 = vmatprep.subr.mxu0 0.0
  %6591 = vmatpush1.msra.mxu0 %v5350
  %6592 = vmatprep.subr.mxu0 0.0
  %6593 = vmatpush1.msra.mxu0 %v5355
  %6594 = vmatprep.subr.mxu0 0.0
  %6595 = vmatpush1.msra.mxu0 %v5360
  %6596 = vmatprep.subr.mxu0 0.0
  %6597 = vmatpush1.msra.mxu0 %v5365
  %6598 = vmatprep.subr.mxu0 0.0
  %6599 = vmatpush1.msra.mxu0 %v5370
  %6600 = vmatprep.subr.mxu0 0.0
  %6601 = vmatpush1.msra.mxu0 %v5375
  %6602 = vmatprep.subr.mxu0 0.0
  %6603 = vmatpush1.msra.mxu0 %v5380
  %6604 = vmatprep.subr.mxu0 0.0
  %6605 = vmatpush1.msra.mxu0 %v5385
  %6606 = vmatprep.subr.mxu0 0.0
  %6607 = vmatpush1.msra.mxu0 %v5390
  %6608 = vmatprep.subr.mxu0 0.0
  %6609 = vmatpush1.msra.mxu0 %v5395
  %6610 = vmatprep.subr.mxu0 0.0
  %6611 = vmatpush1.msra.mxu0 %v5400
  %6612 = vmatprep.subr.mxu0 0.0
  %6613 = vmatpush1.msra.mxu0 %v5405
  %6614 = vmatprep.subr.mxu0 0.0
  %6615 = vmatpush1.msra.mxu0 %v5410
  %6616 = vmatprep.subr.mxu0 0.0
  %6617 = vmatpush1.msra.mxu0 %v5415
  %6618 = vmatprep.subr.mxu0 0.0
  %6619 = vmatpush1.msra.mxu0 %v5420
  %6620 = vmatprep.subr.mxu0 0.0
  %6621 = vmatpush1.msra.mxu0 %v5425
  %6622 = vmatprep.subr.mxu0 0.0
  %6623 = vmatpush1.msra.mxu0 %v5430
  %6624 = vmatprep.subr.mxu0 0.0
  %6625 = vmatpush1.msra.mxu0 %v5435
  %6626 = vmatprep.subr.mxu0 0.0
  %6627 = vmatpush1.msra.mxu0 %v5440
  %6628 = vmatprep.subr.mxu0 0.0
  %6629 = vmatpush1.msra.mxu0 %v5445
  %6630 = vmatprep.subr.mxu0 0.0
  %6631 = vmatpush1.msra.mxu0 %v5450
  %6632 = vmatprep.subr.mxu0 0.0
  %6633 = vmatpush1.msra.mxu0 %v5455
  %6634 = vmatprep.subr.mxu0 0.0
  %6635 = vmatpush1.msra.mxu0 %v5460
  %6636 = vmatprep.subr.mxu0 0.0
  %6637 = vmatpush1.msra.mxu0 %v5465
  %6638 = vmatprep.subr.mxu0 0.0
  %6639 = vmatpush1.msra.mxu0 %v5470
  %6640 = vmatprep.subr.mxu0 0.0
  %6641 = vmatpush1.msra.mxu0 %v5475
  %6642 = vmatprep.subr.mxu0 0.0
  %6643 = vmatpush1.msra.mxu0 %v5480
  %6644 = vmatprep.subr.mxu0 0.0
  %6645 = vmatpush1.msra.mxu0 %v5485
  %6646 = vmatprep.subr.mxu0 0.0
  %6647 = vmatpush1.msra.mxu0 %v5490
  %6648 = vmatprep.subr.mxu0 0.0
  %6649 = vmatpush1.msra.mxu0 %v5495
  %6650 = vmatprep.mubr.f32.mxu0 %v5012
  %6651 = vmatmul.mubr.f32.gmra.mrb[0].mxu0 %v5011
  %v6652 = vpop.f32.mrb[0].mxu0
  %v6653 = vadd.f32 %v6583, %v6652
  %v6654 = vpop.f32.mrb[0].mxu0
  %6655 = vdwg.mxu0
  %6656 = vmatprep.subr.mxu0 0.0
  %6657 = vmatpush1.msra.mxu0 %v5500
  %6658 = vmatprep.subr.mxu0 0.0
  %6659 = vmatpush1.msra.mxu0 %v5505
  %6660 = vmatprep.subr.mxu0 0.0
  %6661 = vmatpush1.msra.mxu0 %v5510
  %6662 = vmatprep.subr.mxu0 0.0
  %6663 = vmatpush1.msra.mxu0 %v5515
  %6664 = vmatprep.subr.mxu0 0.0
  %6665 = vmatpush1.msra.mxu0 %v5520
  %6666 = vmatprep.subr.mxu0 0.0
  %6667 = vmatpush1.msra.mxu0 %v5525
  %6668 = vmatprep.subr.mxu0 0.0
  %6669 = vmatpush1.msra.mxu0 %v5530
  %6670 = vmatprep.subr.mxu0 0.0
  %6671 = vmatpush1.msra.mxu0 %v5535
  %6672 = vmatprep.subr.mxu0 0.0
  %6673 = vmatpush1.msra.mxu0 %v5540
  %6674 = vmatprep.subr.mxu0 0.0
  %6675 = vmatpush1.msra.mxu0 %v5545
  %6676 = vmatprep.subr.mxu0 0.0
  %6677 = vmatpush1.msra.mxu0 %v5550
  %6678 = vmatprep.subr.mxu0 0.0
  %6679 = vmatpush1.msra.mxu0 %v5555
  %6680 = vmatprep.subr.mxu0 0.0
  %6681 = vmatpush1.msra.mxu0 %v5560
  %6682 = vmatprep.subr.mxu0 0.0
  %6683 = vmatpush1.msra.mxu0 %v5565
  %6684 = vmatprep.subr.mxu0 0.0
  %6685 = vmatpush1.msra.mxu0 %v5570
  %6686 = vmatprep.subr.mxu0 0.0
  %6687 = vmatpush1.msra.mxu0 %v5575
  %6688 = vmatprep.subr.mxu0 0.0
  %6689 = vmatpush1.msra.mxu0 %v5580
  %6690 = vmatprep.subr.mxu0 0.0
  %6691 = vmatpush1.msra.mxu0 %v5585
  %6692 = vmatprep.subr.mxu0 0.0
  %6693 = vmatpush1.msra.mxu0 %v5590
  %6694 = vmatprep.subr.mxu0 0.0
  %6695 = vmatpush1.msra.mxu0 %v5595
  %6696 = vmatprep.subr.mxu0 0.0
  %6697 = vmatpush1.msra.mxu0 %v5600
  %6698 = vmatprep.subr.mxu0 0.0
  %6699 = vmatpush1.msra.mxu0 %v5605
  %6700 = vmatprep.subr.mxu0 0.0
  %6701 = vmatpush1.msra.mxu0 %v5610
  %6702 = vmatprep.subr.mxu0 0.0
  %6703 = vmatpush1.msra.mxu0 %v5615
  %6704 = vmatprep.subr.mxu0 0.0
  %6705 = vmatpush1.msra.mxu0 %v5620
  %6706 = vmatprep.subr.mxu0 0.0
  %6707 = vmatpush1.msra.mxu0 %v5625
  %6708 = vmatprep.subr.mxu0 0.0
  %6709 = vmatpush1.msra.mxu0 %v5630
  %6710 = vmatprep.subr.mxu0 0.0
  %6711 = vmatpush1.msra.mxu0 %v5635
  %6712 = vmatprep.subr.mxu0 0.0
  %6713 = vmatpush1.msra.mxu0 %v5640
  %6714 = vmatprep.subr.mxu0 0.0
  %6715 = vmatpush1.msra.mxu0 %v5645
  %6716 = vmatprep.subr.mxu0 0.0
  %6717 = vmatpush1.msra.mxu0 %v5650
  %6718 = vmatprep.subr.mxu0 0.0
  %6719 = vmatpush1.msra.mxu0 %v5655
  %6720 = vmatprep.mubr.f32.mxu0 %v5014
  %6721 = vmatmul.mubr.f32.gmra.mrb[0].mxu0 %v5013
  %v6722 = vpop.f32.mrb[0].mxu0
  %v6723 = vadd.f32 %v6653, %v6722
  %v6724 = vpop.f32.mrb[0].mxu0
  %6725 = vdwg.mxu0
  %6726 = vmatprep.subr.mxu0 0.0
  %6727 = vmatpush1.msra.mxu0 %v5660
  %6728 = vmatprep.subr.mxu0 0.0
  %6729 = vmatpush1.msra.mxu0 %v5665
  %6730 = vmatprep.subr.mxu0 0.0
  %6731 = vmatpush1.msra.mxu0 %v5670
  %6732 = vmatprep.subr.mxu0 0.0
  %6733 = vmatpush1.msra.mxu0 %v5675
  %6734 = vmatprep.subr.mxu0 0.0
  %6735 = vmatpush1.msra.mxu0 %v5680
  %6736 = vmatprep.subr.mxu0 0.0
  %6737 = vmatpush1.msra.mxu0 %v5685
  %6738 = vmatprep.subr.mxu0 0.0
  %6739 = vmatpush1.msra.mxu0 %v5690
  %6740 = vmatprep.subr.mxu0 0.0
  %6741 = vmatpush1.msra.mxu0 %v5695
  %6742 = vmatprep.subr.mxu0 0.0
  %6743 = vmatpush1.msra.mxu0 %v5700
  %6744 = vmatprep.subr.mxu0 0.0
  %6745 = vmatpush1.msra.mxu0 %v5705
  %6746 = vmatprep.subr.mxu0 0.0
  %6747 = vmatpush1.msra.mxu0 %v5710
  %6748 = vmatprep.subr.mxu0 0.0
  %6749 = vmatpush1.msra.mxu0 %v5715
  %6750 = vmatprep.subr.mxu0 0.0
  %6751 = vmatpush1.msra.mxu0 %v5720
  %6752 = vmatprep.subr.mxu0 0.0
  %6753 = vmatpush1.msra.mxu0 %v5725
  %6754 = vmatprep.subr.mxu0 0.0
  %6755 = vmatpush1.msra.mxu0 %v5730
  %6756 = vmatprep.subr.mxu0 0.0
  %6757 = vmatpush1.msra.mxu0 %v5735
  %6758 = vmatprep.subr.mxu0 0.0
  %6759 = vmatpush1.msra.mxu0 0.0
  %6760 = vmatprep.subr.mxu0 0.0
  %6761 = vmatpush1.msra.mxu0 0.0
  %6762 = vmatprep.subr.mxu0 0.0
  %6763 = vmatpush1.msra.mxu0 0.0
  %6764 = vmatprep.subr.mxu0 0.0
  %6765 = vmatpush1.msra.mxu0 0.0
  %6766 = vmatprep.subr.mxu0 0.0
  %6767 = vmatpush1.msra.mxu0 0.0
  %6768 = vmatprep.subr.mxu0 0.0
  %6769 = vmatpush1.msra.mxu0 0.0
  %6770 = vmatprep.subr.mxu0 0.0
  %6771 = vmatpush1.msra.mxu0 0.0
  %6772 = vmatprep.subr.mxu0 0.0
  %6773 = vmatpush1.msra.mxu0 0.0
  %6774 = vmatprep.subr.mxu0 0.0
  %6775 = vmatpush1.msra.mxu0 0.0
  %6776 = vmatprep.subr.mxu0 0.0
  %6777 = vmatpush1.msra.mxu0 0.0
  %6778 = vmatprep.subr.mxu0 0.0
  %6779 = vmatpush1.msra.mxu0 0.0
  %6780 = vmatprep.subr.mxu0 0.0
  %6781 = vmatpush1.msra.mxu0 0.0
  %6782 = vmatprep.subr.mxu0 0.0
  %6783 = vmatpush1.msra.mxu0 0.0
  %6784 = vmatprep.subr.mxu0 0.0
  %6785 = vmatpush1.msra.mxu0 0.0
  %6786 = vmatprep.subr.mxu0 0.0
  %6787 = vmatpush1.msra.mxu0 0.0
  %6788 = vmatprep.subr.mxu0 0.0
  %6789 = vmatpush1.msra.mxu0 0.0
  %6790 = vmatprep.mubr.f32.mxu0 0.0
  %6791 = vmatmul.mubr.f32.gmra.mrb[0].mxu0 %v5015
  %v6792 = vpop.f32.mrb[0].mxu0
  %v6793 = vadd.f32 %v6723, %v6792
  %v6794 = vpop.f32.mrb[0].mxu0
  %6795 = vdwg.mxu0
  %6798 = vrot.lane.b32.xlu0 %v6089, 96
  %v6799 = vpop.permute.xlu0 %6798
  %6800 = vrot.lane.b32.xlu0 %v6442, 96
  %v6801 = vpop.permute.xlu0 %6800
  %v6802 = vsel %vm4208, %v6799, %v6801
  %v6805 = vmax.f32 %v6087, %v6802
  %v6806 = vmax.f32 %v6089, %v6801
  %6809 = vrot.lane.b32.xlu0 %v6444, 96
  %v6810 = vpop.permute.xlu0 %6809
  %6811 = vrot.lane.b32.xlu0 %v6793, 96
  %v6812 = vpop.permute.xlu0 %6811
  %v6813 = vsel %vm4208, %v6810, %v6812
  %v6816 = vmax.f32 %v6442, %v6813
  %v6817 = vmax.f32 %v6444, %v6812
  %6820 = vrot.lane.b32.xlu0 %v6816, 64
  %v6821 = vpop.permute.xlu0 %6820
  %6822 = vrot.lane.b32.xlu0 %v6817, 64
  %v6823 = vpop.permute.xlu0 %6822
  %v6824 = vsel %vm4175, %v6821, %v6823
  %v6827 = vmax.f32 %v6805, %v6824
  %v6828 = vmax.f32 %v6806, %v6823
  %v6829 = vld [vmem:[%s4] sm:$0x3]
  %v6831 = vlaneseq
  %v6832 = vshrl.u32 %v6831, 7
  %v6833 = vsub.s32 0, %v6832
  %v6834 = vrot.slane %v6829, %v6833
  %v6835 = vlaneseq
  %v6836 = vshrl.u32 %v6835, 7
  %v6837 = vsub.s32 1, %v6836
  %v6838 = vrot.slane %v6829, %v6837
  %v6841 = vadd.f32 %v6827, %v6834
  %v6842 = vadd.f32 %v6828, %v6838
  %v6843 = vmax.f32 %v6841, 0.0
  %v6844 = vmax.f32 %v6842, 0.0
  %v6845 = vld [vmem:[%s5] sm:$0xff]
  %v6846 = vld [vmem:[%s5 + $0x8] sm:$0xff]
  %v6847 = vld [vmem:[%s5 + $0x10] sm:$0xff]
  %v6848 = vld [vmem:[%s5 + $0x18] sm:$0xff]
  %v6849 = vld [vmem:[%s5 + $0x20] sm:$0xff]
  %v6850 = vld [vmem:[%s5 + $0x28] sm:$0xff]
  %v6851 = vld [vmem:[%s5 + $0x30] sm:$0xff]
  %v6852 = vld [vmem:[%s5 + $0x38] sm:$0xff]
  %v6853 = vld [vmem:[%s5 + $0x40] sm:$0xff]
  %v6854 = vld [vmem:[%s5 + $0x48] sm:$0xff]
  %v6855 = vld [vmem:[%s5 + $0x50] sm:$0xff]
  %v6856 = vld [vmem:[%s5 + $0x58] sm:$0xff]
  %v6857 = vld [vmem:[%s5 + $0x60] sm:$0xff]
  %v6858 = vld [vmem:[%s5 + $0x68] sm:$0xff]
  %v6859 = vld [vmem:[%s5 + $0x70] sm:$0xff]
  %v6860 = vld [vmem:[%s5 + $0x78] sm:$0xff]
  %v6861 = vld [vmem:[%s5 + $0x80] sm:$0xff]
  %v6862 = vld [vmem:[%s5 + $0x88] sm:$0xff]
  %v6863 = vld [vmem:[%s5 + $0x90] sm:$0xff]
  %v6864 = vld [vmem:[%s5 + $0x98] sm:$0xff]
  %v6865 = vld [vmem:[%s6] sm:$0x1]
  %v6867 = vlaneseq
  %v6868 = vshrl.u32 %v6867, 7
  %v6869 = vsub.s32 0, %v6868
  %v6870 = vrot.slane %v6865, %v6869
  %v6873 = vsel %vm4135, %v6844, 0
  %6875 = vmatprep.subr.mxu0 0.0
  %6876 = vmatpush1.msra.mxu0 %v6845
  %6877 = vmatprep.subr.mxu0 0.0
  %6878 = vmatpush1.msra.mxu0 %v6846
  %6879 = vmatprep.subr.mxu0 0.0
  %6880 = vmatpush1.msra.mxu0 %v6847
  %6881 = vmatprep.subr.mxu0 0.0
  %6882 = vmatpush1.msra.mxu0 %v6848
  %6883 = vmatprep.subr.mxu0 0.0
  %6884 = vmatpush1.msra.mxu0 %v6849
  %6885 = vmatprep.subr.mxu0 0.0
  %6886 = vmatpush1.msra.mxu0 %v6850
  %6887 = vmatprep.subr.mxu0 0.0
  %6888 = vmatpush1.msra.mxu0 %v6851
  %6889 = vmatprep.subr.mxu0 0.0
  %6890 = vmatpush1.msra.mxu0 %v6852
  %6891 = vmatprep.subr.mxu0 0.0
  %6892 = vmatpush1.msra.mxu0 %v6853
  %6893 = vmatprep.subr.mxu0 0.0
  %6894 = vmatpush1.msra.mxu0 %v6854
  %6895 = vmatprep.subr.mxu0 0.0
  %6896 = vmatpush1.msra.mxu0 %v6855
  %6897 = vmatprep.subr.mxu0 0.0
  %6898 = vmatpush1.msra.mxu0 %v6856
  %6899 = vmatprep.subr.mxu0 0.0
  %6900 = vmatpush1.msra.mxu0 %v6857
  %6901 = vmatprep.subr.mxu0 0.0
  %6902 = vmatpush1.msra.mxu0 %v6858
  %6903 = vmatprep.subr.mxu0 0.0
  %6904 = vmatpush1.msra.mxu0 %v6859
  %6905 = vmatprep.subr.mxu0 0.0
  %6906 = vmatpush1.msra.mxu0 %v6860
  %6907 = vmatprep.subr.mxu0 0.0
  %6908 = vmatpush1.msra.mxu0 %v6861
  %6909 = vmatprep.subr.mxu0 0.0
  %6910 = vmatpush1.msra.mxu0 %v6862
  %6911 = vmatprep.subr.mxu0 0.0
  %6912 = vmatpush1.msra.mxu0 %v6863
  %6913 = vmatprep.subr.mxu0 0.0
  %6914 = vmatpush1.msra.mxu0 %v6864
  %6915 = vmatprep.subr.mxu0 0.0
  %6916 = vmatpush1.msra.mxu0 0.0
  %6917 = vmatprep.subr.mxu0 0.0
  %6918 = vmatpush1.msra.mxu0 0.0
  %6919 = vmatprep.subr.mxu0 0.0
  %6920 = vmatpush1.msra.mxu0 0.0
  %6921 = vmatprep.subr.mxu0 0.0
  %6922 = vmatpush1.msra.mxu0 0.0
  %6923 = vmatprep.subr.mxu0 0.0
  %6924 = vmatpush1.msra.mxu0 0.0
  %6925 = vmatprep.subr.mxu0 0.0
  %6926 = vmatpush1.msra.mxu0 0.0
  %6927 = vmatprep.subr.mxu0 0.0
  %6928 = vmatpush1.msra.mxu0 0.0
  %6929 = vmatprep.subr.mxu0 0.0
  %6930 = vmatpush1.msra.mxu0 0.0
  %6931 = vmatprep.subr.mxu0 0.0
  %6932 = vmatpush1.msra.mxu0 0.0
  %6933 = vmatprep.subr.mxu0 0.0
  %6934 = vmatpush1.msra.mxu0 0.0
  %6935 = vmatprep.subr.mxu0 0.0
  %6936 = vmatpush1.msra.mxu0 0.0
  %6937 = vmatprep.subr.mxu0 0.0
  %6938 = vmatpush1.msra.mxu0 0.0
  %6939 = vmatprep.mubr.f32.mxu0 %v6873
  %6940 = vmatmul.mubr.f32.gmra.mrb[0].mxu0 %v6843
  %v6941 = vpop.f32.mrb[0].mxu0
  %v6942 = vadd.f32 %v6870, %v6941
  %v6943 = vpop.f32.mrb[0].mxu0
  %6944 = vdwg.mxu0
  %v6945 = vmax.f32 %v6942, 0.0
  %v6946 = vld [vmem:[%s7] sm:$0xff]
  %v6947 = vld [vmem:[%s7 + $0x8] sm:$0xff]
  %v6948 = vld [vmem:[%s7 + $0x10] sm:$0xff]
  %v6949 = vld [vmem:[%s7 + $0x18] sm:$0xff]
  %v6950 = vld [vmem:[%s8] sm:$0x1]
  %v6952 = vlaneseq
  %v6953 = vshrl.u32 %v6952, 7
  %v6954 = vsub.s32 0, %v6953
  %v6955 = vrot.slane %v6950, %v6954
  %v6958 = vsel %vm4135, %v6945, 0
  %6960 = vmatprep.subr.mxu0 0.0
  %6961 = vmatpush1.msra.mxu0 %v6946
  %6962 = vmatprep.subr.mxu0 0.0
  %6963 = vmatpush1.msra.mxu0 %v6947
  %6964 = vmatprep.subr.mxu0 0.0
  %6965 = vmatpush1.msra.mxu0 %v6948
  %6966 = vmatprep.subr.mxu0 0.0
  %6967 = vmatpush1.msra.mxu0 %v6949
  %6968 = vmatprep.subr.mxu0 0.0
  %6969 = vmatpush1.msra.mxu0 0.0
  %6970 = vmatprep.subr.mxu0 0.0
  %6971 = vmatpush1.msra.mxu0 0.0
  %6972 = vmatprep.subr.mxu0 0.0
  %6973 = vmatpush1.msra.mxu0 0.0
  %6974 = vmatprep.subr.mxu0 0.0
  %6975 = vmatpush1.msra.mxu0 0.0
  %6976 = vmatprep.subr.mxu0 0.0
  %6977 = vmatpush1.msra.mxu0 0.0
  %6978 = vmatprep.subr.mxu0 0.0
  %6979 = vmatpush1.msra.mxu0 0.0
  %6980 = vmatprep.subr.mxu0 0.0
  %6981 = vmatpush1.msra.mxu0 0.0
  %6982 = vmatprep.subr.mxu0 0.0
  %6983 = vmatpush1.msra.mxu0 0.0
  %6984 = vmatprep.subr.mxu0 0.0
  %6985 = vmatpush1.msra.mxu0 0.0
  %6986 = vmatprep.subr.mxu0 0.0
  %6987 = vmatpush1.msra.mxu0 0.0
  %6988 = vmatprep.subr.mxu0 0.0
  %6989 = vmatpush1.msra.mxu0 0.0
  %6990 = vmatprep.subr.mxu0 0.0
  %6991 = vmatpush1.msra.mxu0 0.0
  %6992 = vmatprep.subr.mxu0 0.0
  %6993 = vmatpush1.msra.mxu0 0.0
  %6994 = vmatprep.subr.mxu0 0.0
  %6995 = vmatpush1.msra.mxu0 0.0
  %6996 = vmatprep.subr.mxu0 0.0
  %6997 = vmatpush1.msra.mxu0 0.0
  %6998 = vmatprep.subr.mxu0 0.0
  %6999 = vmatpush1.msra.mxu0 0.0
  %7000 = vmatprep.subr.mxu0 0.0
  %7001 = vmatpush1.msra.mxu0 0.0
  %7002 = vmatprep.subr.mxu0 0.0
  %7003 = vmatpush1.msra.mxu0 0.0
  %7004 = vmatprep.subr.mxu0 0.0
  %7005 = vmatpush1.msra.mxu0 0.0
  %7006 = vmatprep.subr.mxu0 0.0
  %7007 = vmatpush1.msra.mxu0 0.0
  %7008 = vmatprep.subr.mxu0 0.0
  %7009 = vmatpush1.msra.mxu0 0.0
  %7010 = vmatprep.subr.mxu0 0.0
  %7011 = vmatpush1.msra.mxu0 0.0
  %7012 = vmatprep.subr.mxu0 0.0
  %7013 = vmatpush1.msra.mxu0 0.0
  %7014 = vmatprep.subr.mxu0 0.0
  %7015 = vmatpush1.msra.mxu0 0.0
  %7016 = vmatprep.subr.mxu0 0.0
  %7017 = vmatpush1.msra.mxu0 0.0
  %7018 = vmatprep.subr.mxu0 0.0
  %7019 = vmatpush1.msra.mxu0 0.0
  %7020 = vmatprep.subr.mxu0 0.0
  %7021 = vmatpush1.msra.mxu0 0.0
  %7022 = vmatprep.subr.mxu0 0.0
  %7023 = vmatpush1.msra.mxu0 0.0
  %7024 = vmatprep.mubr.f32.mxu0 0.0
  %7025 = vmatmul.mubr.f32.gmra.mrb[0].mxu0 %v6958
  %v7026 = vpop.f32.mrb[0].mxu0
  %v7027 = vadd.f32 %v6955, %v7026
  %v7028 = vpop.f32.mrb[0].mxu0
  %7029 = vdwg.mxu0
  %vm7030 = vcmask 48128
  %7031 = vst.msk [vmem:[%s9] sm:$0xff] %vm7030, %v7027
  // Predicated region
  $region38: #{affine_regression_forward.1} parent=0 // pred_check
    _
  $region39: #{affine_regression_forward.1} parent=0 // pred_check_branch
    %7033 = sbr.rel (0) target = $region41
  $region40: #{affine_regression_forward.1} parent=0 // pred_region
    _
  $region41: #{affine_regression_forward.1} parent=0 // pred_fallthru
    _
  // Predicated region
  $region42: #{affine_regression_forward.1} parent=0 // pred_check
    _
  $region43: #{affine_regression_forward.1} parent=0 // pred_check_branch
    %7035 = sbr.rel (0) target = $region45
  $region44: #{affine_regression_forward.1} parent=0 // pred_region
    _
  $region45: #{affine_regression_forward.1} parent=0 // pred_fallthru
    _

</llo_original>
